<compile_context>
chip_gen: v7x
topology: tpu7x:2x2x1
jax: 0.10.0
libtpu: 0.0.40
codegen_flags: <defaults>
</compile_context>

<pallas_src>
import numpy as np
import jax
import jax.numpy as jnp
from jax.experimental import pallas as pl
from jax.experimental.pallas import tpu as pltpu


# ----------------------------------------------------------------------------
# Fused Pallas kernel: one batch element per grid step.
# ----------------------------------------------------------------------------
def _inception_aux_kernel(x_ref, pt_ref, w0_ref, s0_ref, b0_ref,
                          w1_ref, s1_ref, b1_ref,
                          w1h_ref, b1h_ref, w2h_ref, b2h_ref, o_ref):
    # x_ref : (1, HW, C)     bf16  one batch element, NHWC-flattened
    # pt_ref: (P, HW)        bf16  transposed 0/1 pooling matrix (P = 5*5)
    # w0_ref: (C, 128)       bf16  conv0 1x1 weight
    # s0/b0 : (1, 128)       f32   folded BN0 scale (incl. 1/25) / bias
    # w1_ref: (P, 128, 768)  bf16  conv1 5x5 weight, tap p = kh*5 + kw
    # s1/b1 : (1, 768)       f32   folded BN1 scale / bias
    # w1h   : (768, A*E)     bf16  concatenated head layer-1 weights
    # b1h   : (1, A*E)       f32
    # w2h   : (A*E, A_pad)   bf16  block-diagonal head layer-2 weights
    # b2h   : (1, A_pad)     f32
    # o_ref : (1, 1, A_pad)  f32
    x = x_ref[0]                                                       # (HW, C)

    # avg_pool2d(k=5, s=3) as a lane-dense matmul (un-normalized sum; the 1/25
    # averaging factor is folded into s0).
    pooled = jnp.dot(pt_ref[...], x, preferred_element_type=jnp.float32)   # (P, C)

    # conv0 (1x1) + BN + ReLU.
    y0 = jnp.dot(pooled.astype(jnp.bfloat16), w0_ref[...],
                 preferred_element_type=jnp.float32)                   # (P, 128)
    y0 = jnp.maximum(y0 * s0_ref[...] + b0_ref[...], 0.0)

    # conv1 (5x5 VALID over the 5x5 map -> 1x1 output) + BN + ReLU, expressed
    # as an accumulated sum of per-tap matmuls (no in-kernel reshape needed).
    n_taps = w1_ref.shape[0]
    acc = jnp.zeros((1, w1_ref.shape[2]), jnp.float32)
    for p in range(n_taps):
        acc = acc + jnp.dot(y0[p:p + 1, :].astype(jnp.bfloat16), w1_ref[p],
                            preferred_element_type=jnp.float32)
    y1 = jnp.maximum(acc * s1_ref[...] + b1_ref[...], 0.0)             # (1, 768)

    # F.adaptive_avg_pool2d((1,1)) + flatten: spatial is already 1x1 -> identity.

    # All attribute heads at once: Linear(768 -> A*E) + ReLU, then a
    # block-diagonal Linear(A*E -> A_pad) so the output row is lane-dense.
    h = jnp.dot(y1.astype(jnp.bfloat16), w1h_ref[...],
                preferred_element_type=jnp.float32) + b1h_ref[...]
    h = jnp.maximum(h, 0.0)                                            # (1, A*E)
    o = jnp.dot(h.astype(jnp.bfloat16), w2h_ref[...],
                preferred_element_type=jnp.float32) + b2h_ref[...]     # (1, A_pad)
    o_ref[0] = o.astype(o_ref.dtype)


# ----------------------------------------------------------------------------
# Wrapper
# ----------------------------------------------------------------------------
def inception_aux_forward(x, kp):
    """Fused InceptionAux forward. x: (N, C, H, W) f32. Returns list of (N,1)."""
    N, C, H, W = x.shape
    A = kp["n_attributes"]
    A_pad = kp["w2h"].shape[1]

    xf = jnp.transpose(x, (0, 2, 3, 1)).reshape(N, H * W, C).astype(jnp.bfloat16)

    def _const(arr):
        zeros = (0,) * arr.ndim
        return pl.BlockSpec(arr.shape, lambda n, _z=zeros: _z)

    weights = (kp["pt"], kp["w0"], kp["s0"], kp["b0"],
               kp["w1"], kp["s1"], kp["b1"],
               kp["w1h"], kp["b1h"], kp["w2h"], kp["b2h"])

    out = pl.pallas_call(
        _inception_aux_kernel,
        grid=(N,),
        in_specs=[pl.BlockSpec((1, H * W, C), lambda n: (n, 0, 0))]
                 + [_const(w) for w in weights],
        out_specs=pl.BlockSpec((1, 1, A_pad), lambda n: (n, 0, 0)),
        out_shape=jax.ShapeDtypeStruct((N, 1, A_pad), jnp.float32),
        compiler_params=pltpu.CompilerParams(dimension_semantics=("parallel",)),
    )(xf, *weights)

    logits = out.reshape(N, A_pad)[:, :A]          # single lane-dense slab
    # The PyTorch module's API is a python list of per-attribute (N, 1) tensors.
    return [logits[:, a:a + 1] for a in range(A)]


# ----------------------------------------------------------------------------
# Parameter setup (PyTorch-layout raw params -> fused-kernel layout)
# ----------------------------------------------------------------------------
def _fold_bn(gamma, beta, mean, var, eps=1e-3):
    scale = gamma * jax.lax.rsqrt(var + eps)
    return scale, beta - mean * scale


def _pool_matrix_t(H, W, k, s):
    """PT (OH*OW, H*W) with 0/1 entries: PT @ x_flat = un-normalized sum pool."""
    OH, OW = (H - k) // s + 1, (W - k) // s + 1
    pt = np.zeros((OH * OW, H * W), dtype=np.float32)
    for oh in range(OH):
        for ow in range(OW):
            for dh in range(k):
                for dw in range(k):
                    pt[oh * OW + ow, (oh * s + dh) * W + (ow * s + dw)] = 1.0
    return pt, OH, OW


def init_raw_params(key, in_channels, n_attributes, expand_dim):
    ks = jax.random.split(key, 14)
    nrm = jax.random.normal
    return dict(
        conv0_w=0.05 * nrm(ks[0], (128, in_channels, 1, 1), jnp.float32),
        bn0_gamma=1.0 + 0.1 * nrm(ks[1], (128,), jnp.float32),
        bn0_beta=0.1 * nrm(ks[2], (128,), jnp.float32),
        bn0_mean=0.1 * nrm(ks[3], (128,), jnp.float32),
        bn0_var=1.0 + 0.1 * jnp.abs(nrm(ks[4], (128,), jnp.float32)),
        conv1_w=0.02 * nrm(ks[5], (768, 128, 5, 5), jnp.float32),
        bn1_gamma=1.0 + 0.1 * nrm(ks[6], (768,), jnp.float32),
        bn1_beta=0.1 * nrm(ks[7], (768,), jnp.float32),
        bn1_mean=0.1 * nrm(ks[8], (768,), jnp.float32),
        bn1_var=1.0 + 0.1 * jnp.abs(nrm(ks[9], (768,), jnp.float32)),
        fc_w1=0.05 * nrm(ks[10], (n_attributes, 768, expand_dim), jnp.float32),
        fc_b1=0.05 * nrm(ks[11], (n_attributes, expand_dim), jnp.float32),
        fc_w2=0.05 * nrm(ks[12], (n_attributes, expand_dim), jnp.float32),
        fc_b2=0.05 * nrm(ks[13], (n_attributes,), jnp.float32),
    )


def pack_kernel_params(raw, H, W):
    """Repack PyTorch-layout weights into the fused-kernel layout
    (bf16 matmul operands, f32 folded BN scale/bias, batched heads)."""
    pt_np, OH, OW = _pool_matrix_t(H, W, 5, 3)
    assert OH == 5 and OW == 5, "conv1(5x5)->1x1 assumes a 5x5 pooled map"
    taps = OH * OW

    A, K, E = raw["fc_w1"].shape
    A_pad = ((A + 127) // 128) * 128

    s0, b0 = _fold_bn(raw["bn0_gamma"], raw["bn0_beta"], raw["bn0_mean"], raw["bn0_var"])
    s1, b1 = _fold_bn(raw["bn1_gamma"], raw["bn1_beta"], raw["bn1_mean"], raw["bn1_var"])

    # conv0: (128, C, 1, 1) -> (C, 128); the 1/25 averaging is folded into s0.
    w0 = jnp.transpose(raw["conv0_w"][:, :, 0, 0], (1, 0))
    # conv1: (768, 128, 5, 5) -> (25, 128, 768), tap index p = kh*5 + kw.
    w1 = jnp.transpose(raw["conv1_w"], (2, 3, 1, 0)).reshape(taps, 128, 768)
    # Heads: concatenate layer-1, block-diagonal layer-2 padded to A_pad lanes.
    w1h = jnp.transpose(raw["fc_w1"], (1, 0, 2)).reshape(K, A * E)
    b1h = raw["fc_b1"].reshape(1, A * E)
    row_head = jnp.repeat(jnp.arange(A), E)
    w2h = jnp.where(row_head[:, None] == jnp.arange(A_pad)[None, :],
                    raw["fc_w2"].reshape(A * E, 1), 0.0)
    b2h = jnp.zeros((1, A_pad), jnp.float32).at[0, :A].set(raw["fc_b2"])

    bf16 = lambda a: a.astype(jnp.bfloat16)
    return dict(
        n_attributes=A, expand_dim=E,
        pt=bf16(jnp.asarray(pt_np)),
        w0=bf16(w0),
        s0=(s0 / float(taps)).reshape(1, 128), b0=b0.reshape(1, 128),
        w1=bf16(w1),
        s1=s1.reshape(1, 768), b1=b1.reshape(1, 768),
        w1h=bf16(w1h), b1h=b1h, w2h=bf16(w2h), b2h=b2h,
    )


# ----------------------------------------------------------------------------
# Pure-JAX f32 reference (implements the PyTorch module directly)
# ----------------------------------------------------------------------------
def inception_aux_reference(x, raw):
    hi = jax.lax.Precision.HIGHEST
    s0, b0 = _fold_bn(raw["bn0_gamma"], raw["bn0_beta"], raw["bn0_mean"], raw["bn0_var"])
    s1, b1 = _fold_bn(raw["bn1_gamma"], raw["bn1_beta"], raw["bn1_mean"], raw["bn1_var"])

    p = jax.lax.reduce_window(x, 0.0, jax.lax.add,
                              (1, 1, 5, 5), (1, 1, 3, 3), "VALID") / 25.0
    y0 = jax.lax.conv_general_dilated(p, raw["conv0_w"], (1, 1), "VALID",
                                      dimension_numbers=("NCHW", "OIHW", "NCHW"),
                                      precision=hi)
    y0 = jnp.maximum(y0 * s0[None, :, None, None] + b0[None, :, None, None], 0.0)
    y1 = jax.lax.conv_general_dilated(y0, raw["conv1_w"], (1, 1), "VALID",
                                      dimension_numbers=("NCHW", "OIHW", "NCHW"),
                                      precision=hi)
    y1 = jnp.maximum(y1 * s1[None, :, None, None] + b1[None, :, None, None], 0.0)
    feat = jnp.mean(y1, axis=(2, 3))                    # adaptive_avg_pool2d((1,1))
    outs = []
    for a in range(raw["fc_w1"].shape[0]):
        h = jnp.maximum(jnp.dot(feat, raw["fc_w1"][a], precision=hi)
                        + raw["fc_b1"][a], 0.0)
        outs.append(jnp.dot(h, raw["fc_w2"][a][:, None], precision=hi)
                    + raw["fc_b2"][a])
    return outs


if __name__ == "__main__":
    N, C, H, W = 2, 4, 17, 17           # 17x17 -> pool(5,3) -> 5x5 -> conv1(5x5) -> 1x1
    n_attributes, expand_dim = 8, 32

    key = jax.random.PRNGKey(0)
    kx, kp = jax.random.split(key)
    x = jax.random.normal(kx, (N, C, H, W), jnp.float32)

    raw = init_raw_params(kp, C, n_attributes, expand_dim)
    kparams = pack_kernel_params(raw, H, W)

    outs = inception_aux_forward(x, kparams)
    outs = [jax.block_until_ready(o) for o in outs]
    assert len(outs) == n_attributes
    assert all(o.shape == (N, 1) for o in outs)

    # Numerical sanity check vs. a pure-JAX f32 reference (kernel uses bf16
    # matmul operands -> loose tolerance).
    ref = jnp.concatenate(inception_aux_reference(x, raw), axis=1)
    got = jnp.concatenate(outs, axis=1)
    max_err = float(jnp.max(jnp.abs(got - ref)))
    ref_scale = float(jnp.max(jnp.abs(ref)))
    assert max_err <= 0.1 * ref_scale + 1e-3, f"mismatch: {max_err} (ref {ref_scale})"

    print("KERNEL_OK")
</pallas_src>

<mosaic_0001>
module attributes {stable_mosaic.version = 11 : i64} {
  func.func @_inception_aux_kernel(%arg0: i32, %arg1: memref<1x289x4xbf16, #tpu.memory_space<vmem>>, %arg2: memref<25x289xbf16, #tpu.memory_space<vmem>>, %arg3: memref<4x128xbf16, #tpu.memory_space<vmem>>, %arg4: memref<1x128xf32, #tpu.memory_space<vmem>>, %arg5: memref<1x128xf32, #tpu.memory_space<vmem>>, %arg6: memref<25x128x768xbf16, #tpu.memory_space<vmem>>, %arg7: memref<1x768xf32, #tpu.memory_space<vmem>>, %arg8: memref<1x768xf32, #tpu.memory_space<vmem>>, %arg9: memref<768x256xbf16, #tpu.memory_space<vmem>>, %arg10: memref<1x256xf32, #tpu.memory_space<vmem>>, %arg11: memref<256x128xbf16, #tpu.memory_space<vmem>>, %arg12: memref<1x128xf32, #tpu.memory_space<vmem>>, %arg13: memref<1x1x128xf32, #tpu.memory_space<vmem>>) attributes {dimension_semantics = [#tpu.dimension_semantics<parallel>], iteration_bounds = array<i64: 2>, scalar_prefetch = 0 : i64, scratch_operands = 0 : i64, tpu.core_type = #tpu.core_type<tc>, window_params = [{transform_indices = @transform_0, window_bounds = array<i64: 1, 289, 4>}, {pipeline_mode = #tpu.pipeline_mode<synchronous>, transform_indices = @transform_1, window_bounds = array<i64: 25, 289>}, {pipeline_mode = #tpu.pipeline_mode<synchronous>, transform_indices = @transform_2, window_bounds = array<i64: 4, 128>}, {pipeline_mode = #tpu.pipeline_mode<synchronous>, transform_indices = @transform_3, window_bounds = array<i64: 1, 128>}, {pipeline_mode = #tpu.pipeline_mode<synchronous>, transform_indices = @transform_4, window_bounds = array<i64: 1, 128>}, {pipeline_mode = #tpu.pipeline_mode<synchronous>, transform_indices = @transform_5, window_bounds = array<i64: 25, 128, 768>}, {pipeline_mode = #tpu.pipeline_mode<synchronous>, transform_indices = @transform_6, window_bounds = array<i64: 1, 768>}, {pipeline_mode = #tpu.pipeline_mode<synchronous>, transform_indices = @transform_7, window_bounds = array<i64: 1, 768>}, {pipeline_mode = #tpu.pipeline_mode<synchronous>, transform_indices = @transform_8, window_bounds = array<i64: 768, 256>}, {pipeline_mode = #tpu.pipeline_mode<synchronous>, transform_indices = @transform_9, window_bounds = array<i64: 1, 256>}, {pipeline_mode = #tpu.pipeline_mode<synchronous>, transform_indices = @transform_10, window_bounds = array<i64: 256, 128>}, {pipeline_mode = #tpu.pipeline_mode<synchronous>, transform_indices = @transform_11, window_bounds = array<i64: 1, 128>}, {transform_indices = @transform_12, window_bounds = array<i64: 1, 1, 128>}]} {
    %c0 = arith.constant 0 : index
    %c0_0 = arith.constant 0 : index
    %c0_1 = arith.constant 0 : index
    %0 = vector.load %arg1[%c0, %c0_0, %c0_1] : memref<1x289x4xbf16, #tpu.memory_space<vmem>>, vector<1x289x4xbf16>
    %1 = vector.shape_cast %0 : vector<1x289x4xbf16> to vector<289x4xbf16>
    %c0_2 = arith.constant 0 : index
    %c0_3 = arith.constant 0 : index
    %2 = vector.load %arg2[%c0_2, %c0_3] : memref<25x289xbf16, #tpu.memory_space<vmem>>, vector<25x289xbf16>
    %cst = arith.constant dense<0.000000e+00> : vector<25x4xf32>
    %3 = tpu.matmul %2, %1, %cst {dimension_numbers = #tpu.dot_dimension_numbers<[1], [0], [0], [1], [0, 0, 1, 1], [], []>} : vector<25x289xbf16>, vector<289x4xbf16>, vector<25x4xf32> -> vector<25x4xf32>
    %4 = arith.truncf %3 : vector<25x4xf32> to vector<25x4xbf16>
    %c0_4 = arith.constant 0 : index
    %c0_5 = arith.constant 0 : index
    %5 = vector.load %arg3[%c0_4, %c0_5] : memref<4x128xbf16, #tpu.memory_space<vmem>>, vector<4x128xbf16>
    %cst_6 = arith.constant dense<0.000000e+00> : vector<25x128xf32>
    %6 = tpu.matmul %4, %5, %cst_6 {dimension_numbers = #tpu.dot_dimension_numbers<[1], [0], [0], [1], [0, 0, 1, 1], [], []>} : vector<25x4xbf16>, vector<4x128xbf16>, vector<25x128xf32> -> vector<25x128xf32>
    %c0_7 = arith.constant 0 : index
    %c0_8 = arith.constant 0 : index
    %7 = vector.load %arg4[%c0_7, %c0_8] : memref<1x128xf32, #tpu.memory_space<vmem>>, vector<1x128xf32>
    %8 = vector.broadcast %7 : vector<1x128xf32> to vector<25x128xf32>
    %9 = arith.mulf %6, %8 : vector<25x128xf32>
    %c0_9 = arith.constant 0 : index
    %c0_10 = arith.constant 0 : index
    %10 = vector.load %arg5[%c0_9, %c0_10] : memref<1x128xf32, #tpu.memory_space<vmem>>, vector<1x128xf32>
    %11 = vector.broadcast %10 : vector<1x128xf32> to vector<25x128xf32>
    %12 = arith.addf %9, %11 : vector<25x128xf32>
    %cst_11 = arith.constant 0.000000e+00 : f32
    %13 = vector.broadcast %cst_11 : f32 to vector<25x128xf32>
    %14 = arith.maximumf %12, %13 : vector<25x128xf32>
    %cst_12 = arith.constant 0.000000e+00 : f32
    %15 = vector.broadcast %cst_12 : f32 to vector<1x768xf32>
    %16 = vector.extract_strided_slice %14 {offsets = [0, 0], sizes = [1, 128], strides = [1, 1]} : vector<25x128xf32> to vector<1x128xf32>
    %17 = arith.truncf %16 : vector<1x128xf32> to vector<1x128xbf16>
    %c0_13 = arith.constant 0 : index
    %c0_14 = arith.constant 0 : index
    %c0_15 = arith.constant 0 : index
    %18 = vector.load %arg6[%c0_13, %c0_14, %c0_15] : memref<25x128x768xbf16, #tpu.memory_space<vmem>>, vector<1x128x768xbf16>
    %19 = vector.shape_cast %18 : vector<1x128x768xbf16> to vector<128x768xbf16>
    %cst_16 = arith.constant dense<0.000000e+00> : vector<1x768xf32>
    %20 = tpu.matmul %17, %19, %cst_16 {dimension_numbers = #tpu.dot_dimension_numbers<[1], [0], [0], [1], [0, 0, 1, 1], [], []>} : vector<1x128xbf16>, vector<128x768xbf16>, vector<1x768xf32> -> vector<1x768xf32>
    %21 = arith.addf %15, %20 : vector<1x768xf32>
    %22 = vector.extract_strided_slice %14 {offsets = [1, 0], sizes = [1, 128], strides = [1, 1]} : vector<25x128xf32> to vector<1x128xf32>
    %23 = arith.truncf %22 : vector<1x128xf32> to vector<1x128xbf16>
    %c1 = arith.constant 1 : index
    %c0_17 = arith.constant 0 : index
    %c0_18 = arith.constant 0 : index
    %24 = vector.load %arg6[%c1, %c0_17, %c0_18] : memref<25x128x768xbf16, #tpu.memory_space<vmem>>, vector<1x128x768xbf16>
    %25 = vector.shape_cast %24 : vector<1x128x768xbf16> to vector<128x768xbf16>
    %cst_19 = arith.constant dense<0.000000e+00> : vector<1x768xf32>
    %26 = tpu.matmul %23, %25, %cst_19 {dimension_numbers = #tpu.dot_dimension_numbers<[1], [0], [0], [1], [0, 0, 1, 1], [], []>} : vector<1x128xbf16>, vector<128x768xbf16>, vector<1x768xf32> -> vector<1x768xf32>
    %27 = arith.addf %21, %26 : vector<1x768xf32>
    %28 = vector.extract_strided_slice %14 {offsets = [2, 0], sizes = [1, 128], strides = [1, 1]} : vector<25x128xf32> to vector<1x128xf32>
    %29 = arith.truncf %28 : vector<1x128xf32> to vector<1x128xbf16>
    %c2 = arith.constant 2 : index
    %c0_20 = arith.constant 0 : index
    %c0_21 = arith.constant 0 : index
    %30 = vector.load %arg6[%c2, %c0_20, %c0_21] : memref<25x128x768xbf16, #tpu.memory_space<vmem>>, vector<1x128x768xbf16>
    %31 = vector.shape_cast %30 : vector<1x128x768xbf16> to vector<128x768xbf16>
    %cst_22 = arith.constant dense<0.000000e+00> : vector<1x768xf32>
    %32 = tpu.matmul %29, %31, %cst_22 {dimension_numbers = #tpu.dot_dimension_numbers<[1], [0], [0], [1], [0, 0, 1, 1], [], []>} : vector<1x128xbf16>, vector<128x768xbf16>, vector<1x768xf32> -> vector<1x768xf32>
    %33 = arith.addf %27, %32 : vector<1x768xf32>
    %34 = vector.extract_strided_slice %14 {offsets = [3, 0], sizes = [1, 128], strides = [1, 1]} : vector<25x128xf32> to vector<1x128xf32>
    %35 = arith.truncf %34 : vector<1x128xf32> to vector<1x128xbf16>
    %c3 = arith.constant 3 : index
    %c0_23 = arith.constant 0 : index
    %c0_24 = arith.constant 0 : index
    %36 = vector.load %arg6[%c3, %c0_23, %c0_24] : memref<25x128x768xbf16, #tpu.memory_space<vmem>>, vector<1x128x768xbf16>
    %37 = vector.shape_cast %36 : vector<1x128x768xbf16> to vector<128x768xbf16>
    %cst_25 = arith.constant dense<0.000000e+00> : vector<1x768xf32>
    %38 = tpu.matmul %35, %37, %cst_25 {dimension_numbers = #tpu.dot_dimension_numbers<[1], [0], [0], [1], [0, 0, 1, 1], [], []>} : vector<1x128xbf16>, vector<128x768xbf16>, vector<1x768xf32> -> vector<1x768xf32>
    %39 = arith.addf %33, %38 : vector<1x768xf32>
    %40 = vector.extract_strided_slice %14 {offsets = [4, 0], sizes = [1, 128], strides = [1, 1]} : vector<25x128xf32> to vector<1x128xf32>
    %41 = arith.truncf %40 : vector<1x128xf32> to vector<1x128xbf16>
    %c4 = arith.constant 4 : index
    %c0_26 = arith.constant 0 : index
    %c0_27 = arith.constant 0 : index
    %42 = vector.load %arg6[%c4, %c0_26, %c0_27] : memref<25x128x768xbf16, #tpu.memory_space<vmem>>, vector<1x128x768xbf16>
    %43 = vector.shape_cast %42 : vector<1x128x768xbf16> to vector<128x768xbf16>
    %cst_28 = arith.constant dense<0.000000e+00> : vector<1x768xf32>
    %44 = tpu.matmul %41, %43, %cst_28 {dimension_numbers = #tpu.dot_dimension_numbers<[1], [0], [0], [1], [0, 0, 1, 1], [], []>} : vector<1x128xbf16>, vector<128x768xbf16>, vector<1x768xf32> -> vector<1x768xf32>
    %45 = arith.addf %39, %44 : vector<1x768xf32>
    %46 = vector.extract_strided_slice %14 {offsets = [5, 0], sizes = [1, 128], strides = [1, 1]} : vector<25x128xf32> to vector<1x128xf32>
    %47 = arith.truncf %46 : vector<1x128xf32> to vector<1x128xbf16>
    %c5 = arith.constant 5 : index
    %c0_29 = arith.constant 0 : index
    %c0_30 = arith.constant 0 : index
    %48 = vector.load %arg6[%c5, %c0_29, %c0_30] : memref<25x128x768xbf16, #tpu.memory_space<vmem>>, vector<1x128x768xbf16>
    %49 = vector.shape_cast %48 : vector<1x128x768xbf16> to vector<128x768xbf16>
    %cst_31 = arith.constant dense<0.000000e+00> : vector<1x768xf32>
    %50 = tpu.matmul %47, %49, %cst_31 {dimension_numbers = #tpu.dot_dimension_numbers<[1], [0], [0], [1], [0, 0, 1, 1], [], []>} : vector<1x128xbf16>, vector<128x768xbf16>, vector<1x768xf32> -> vector<1x768xf32>
    %51 = arith.addf %45, %50 : vector<1x768xf32>
    %52 = vector.extract_strided_slice %14 {offsets = [6, 0], sizes = [1, 128], strides = [1, 1]} : vector<25x128xf32> to vector<1x128xf32>
    %53 = arith.truncf %52 : vector<1x128xf32> to vector<1x128xbf16>
    %c6 = arith.constant 6 : index
    %c0_32 = arith.constant 0 : index
    %c0_33 = arith.constant 0 : index
    %54 = vector.load %arg6[%c6, %c0_32, %c0_33] : memref<25x128x768xbf16, #tpu.memory_space<vmem>>, vector<1x128x768xbf16>
    %55 = vector.shape_cast %54 : vector<1x128x768xbf16> to vector<128x768xbf16>
    %cst_34 = arith.constant dense<0.000000e+00> : vector<1x768xf32>
    %56 = tpu.matmul %53, %55, %cst_34 {dimension_numbers = #tpu.dot_dimension_numbers<[1], [0], [0], [1], [0, 0, 1, 1], [], []>} : vector<1x128xbf16>, vector<128x768xbf16>, vector<1x768xf32> -> vector<1x768xf32>
    %57 = arith.addf %51, %56 : vector<1x768xf32>
    %58 = vector.extract_strided_slice %14 {offsets = [7, 0], sizes = [1, 128], strides = [1, 1]} : vector<25x128xf32> to vector<1x128xf32>
    %59 = arith.truncf %58 : vector<1x128xf32> to vector<1x128xbf16>
    %c7 = arith.constant 7 : index
    %c0_35 = arith.constant 0 : index
    %c0_36 = arith.constant 0 : index
    %60 = vector.load %arg6[%c7, %c0_35, %c0_36] : memref<25x128x768xbf16, #tpu.memory_space<vmem>>, vector<1x128x768xbf16>
    %61 = vector.shape_cast %60 : vector<1x128x768xbf16> to vector<128x768xbf16>
    %cst_37 = arith.constant dense<0.000000e+00> : vector<1x768xf32>
    %62 = tpu.matmul %59, %61, %cst_37 {dimension_numbers = #tpu.dot_dimension_numbers<[1], [0], [0], [1], [0, 0, 1, 1], [], []>} : vector<1x128xbf16>, vector<128x768xbf16>, vector<1x768xf32> -> vector<1x768xf32>
    %63 = arith.addf %57, %62 : vector<1x768xf32>
    %64 = vector.extract_strided_slice %14 {offsets = [8, 0], sizes = [1, 128], strides = [1, 1]} : vector<25x128xf32> to vector<1x128xf32>
    %65 = arith.truncf %64 : vector<1x128xf32> to vector<1x128xbf16>
    %c8 = arith.constant 8 : index
    %c0_38 = arith.constant 0 : index
    %c0_39 = arith.constant 0 : index
    %66 = vector.load %arg6[%c8, %c0_38, %c0_39] : memref<25x128x768xbf16, #tpu.memory_space<vmem>>, vector<1x128x768xbf16>
    %67 = vector.shape_cast %66 : vector<1x128x768xbf16> to vector<128x768xbf16>
    %cst_40 = arith.constant dense<0.000000e+00> : vector<1x768xf32>
    %68 = tpu.matmul %65, %67, %cst_40 {dimension_numbers = #tpu.dot_dimension_numbers<[1], [0], [0], [1], [0, 0, 1, 1], [], []>} : vector<1x128xbf16>, vector<128x768xbf16>, vector<1x768xf32> -> vector<1x768xf32>
    %69 = arith.addf %63, %68 : vector<1x768xf32>
    %70 = vector.extract_strided_slice %14 {offsets = [9, 0], sizes = [1, 128], strides = [1, 1]} : vector<25x128xf32> to vector<1x128xf32>
    %71 = arith.truncf %70 : vector<1x128xf32> to vector<1x128xbf16>
    %c9 = arith.constant 9 : index
    %c0_41 = arith.constant 0 : index
    %c0_42 = arith.constant 0 : index
    %72 = vector.load %arg6[%c9, %c0_41, %c0_42] : memref<25x128x768xbf16, #tpu.memory_space<vmem>>, vector<1x128x768xbf16>
    %73 = vector.shape_cast %72 : vector<1x128x768xbf16> to vector<128x768xbf16>
    %cst_43 = arith.constant dense<0.000000e+00> : vector<1x768xf32>
    %74 = tpu.matmul %71, %73, %cst_43 {dimension_numbers = #tpu.dot_dimension_numbers<[1], [0], [0], [1], [0, 0, 1, 1], [], []>} : vector<1x128xbf16>, vector<128x768xbf16>, vector<1x768xf32> -> vector<1x768xf32>
    %75 = arith.addf %69, %74 : vector<1x768xf32>
    %76 = vector.extract_strided_slice %14 {offsets = [10, 0], sizes = [1, 128], strides = [1, 1]} : vector<25x128xf32> to vector<1x128xf32>
    %77 = arith.truncf %76 : vector<1x128xf32> to vector<1x128xbf16>
    %c10 = arith.constant 10 : index
    %c0_44 = arith.constant 0 : index
    %c0_45 = arith.constant 0 : index
    %78 = vector.load %arg6[%c10, %c0_44, %c0_45] : memref<25x128x768xbf16, #tpu.memory_space<vmem>>, vector<1x128x768xbf16>
    %79 = vector.shape_cast %78 : vector<1x128x768xbf16> to vector<128x768xbf16>
    %cst_46 = arith.constant dense<0.000000e+00> : vector<1x768xf32>
    %80 = tpu.matmul %77, %79, %cst_46 {dimension_numbers = #tpu.dot_dimension_numbers<[1], [0], [0], [1], [0, 0, 1, 1], [], []>} : vector<1x128xbf16>, vector<128x768xbf16>, vector<1x768xf32> -> vector<1x768xf32>
    %81 = arith.addf %75, %80 : vector<1x768xf32>
    %82 = vector.extract_strided_slice %14 {offsets = [11, 0], sizes = [1, 128], strides = [1, 1]} : vector<25x128xf32> to vector<1x128xf32>
    %83 = arith.truncf %82 : vector<1x128xf32> to vector<1x128xbf16>
    %c11 = arith.constant 11 : index
    %c0_47 = arith.constant 0 : index
    %c0_48 = arith.constant 0 : index
    %84 = vector.load %arg6[%c11, %c0_47, %c0_48] : memref<25x128x768xbf16, #tpu.memory_space<vmem>>, vector<1x128x768xbf16>
    %85 = vector.shape_cast %84 : vector<1x128x768xbf16> to vector<128x768xbf16>
    %cst_49 = arith.constant dense<0.000000e+00> : vector<1x768xf32>
    %86 = tpu.matmul %83, %85, %cst_49 {dimension_numbers = #tpu.dot_dimension_numbers<[1], [0], [0], [1], [0, 0, 1, 1], [], []>} : vector<1x128xbf16>, vector<128x768xbf16>, vector<1x768xf32> -> vector<1x768xf32>
    %87 = arith.addf %81, %86 : vector<1x768xf32>
    %88 = vector.extract_strided_slice %14 {offsets = [12, 0], sizes = [1, 128], strides = [1, 1]} : vector<25x128xf32> to vector<1x128xf32>
    %89 = arith.truncf %88 : vector<1x128xf32> to vector<1x128xbf16>
    %c12 = arith.constant 12 : index
    %c0_50 = arith.constant 0 : index
    %c0_51 = arith.constant 0 : index
    %90 = vector.load %arg6[%c12, %c0_50, %c0_51] : memref<25x128x768xbf16, #tpu.memory_space<vmem>>, vector<1x128x768xbf16>
    %91 = vector.shape_cast %90 : vector<1x128x768xbf16> to vector<128x768xbf16>
    %cst_52 = arith.constant dense<0.000000e+00> : vector<1x768xf32>
    %92 = tpu.matmul %89, %91, %cst_52 {dimension_numbers = #tpu.dot_dimension_numbers<[1], [0], [0], [1], [0, 0, 1, 1], [], []>} : vector<1x128xbf16>, vector<128x768xbf16>, vector<1x768xf32> -> vector<1x768xf32>
    %93 = arith.addf %87, %92 : vector<1x768xf32>
    %94 = vector.extract_strided_slice %14 {offsets = [13, 0], sizes = [1, 128], strides = [1, 1]} : vector<25x128xf32> to vector<1x128xf32>
    %95 = arith.truncf %94 : vector<1x128xf32> to vector<1x128xbf16>
    %c13 = arith.constant 13 : index
    %c0_53 = arith.constant 0 : index
    %c0_54 = arith.constant 0 : index
    %96 = vector.load %arg6[%c13, %c0_53, %c0_54] : memref<25x128x768xbf16, #tpu.memory_space<vmem>>, vector<1x128x768xbf16>
    %97 = vector.shape_cast %96 : vector<1x128x768xbf16> to vector<128x768xbf16>
    %cst_55 = arith.constant dense<0.000000e+00> : vector<1x768xf32>
    %98 = tpu.matmul %95, %97, %cst_55 {dimension_numbers = #tpu.dot_dimension_numbers<[1], [0], [0], [1], [0, 0, 1, 1], [], []>} : vector<1x128xbf16>, vector<128x768xbf16>, vector<1x768xf32> -> vector<1x768xf32>
    %99 = arith.addf %93, %98 : vector<1x768xf32>
    %100 = vector.extract_strided_slice %14 {offsets = [14, 0], sizes = [1, 128], strides = [1, 1]} : vector<25x128xf32> to vector<1x128xf32>
    %101 = arith.truncf %100 : vector<1x128xf32> to vector<1x128xbf16>
    %c14 = arith.constant 14 : index
    %c0_56 = arith.constant 0 : index
    %c0_57 = arith.constant 0 : index
    %102 = vector.load %arg6[%c14, %c0_56, %c0_57] : memref<25x128x768xbf16, #tpu.memory_space<vmem>>, vector<1x128x768xbf16>
    %103 = vector.shape_cast %102 : vector<1x128x768xbf16> to vector<128x768xbf16>
    %cst_58 = arith.constant dense<0.000000e+00> : vector<1x768xf32>
    %104 = tpu.matmul %101, %103, %cst_58 {dimension_numbers = #tpu.dot_dimension_numbers<[1], [0], [0], [1], [0, 0, 1, 1], [], []>} : vector<1x128xbf16>, vector<128x768xbf16>, vector<1x768xf32> -> vector<1x768xf32>
    %105 = arith.addf %99, %104 : vector<1x768xf32>
    %106 = vector.extract_strided_slice %14 {offsets = [15, 0], sizes = [1, 128], strides = [1, 1]} : vector<25x128xf32> to vector<1x128xf32>
    %107 = arith.truncf %106 : vector<1x128xf32> to vector<1x128xbf16>
    %c15 = arith.constant 15 : index
    %c0_59 = arith.constant 0 : index
    %c0_60 = arith.constant 0 : index
    %108 = vector.load %arg6[%c15, %c0_59, %c0_60] : memref<25x128x768xbf16, #tpu.memory_space<vmem>>, vector<1x128x768xbf16>
    %109 = vector.shape_cast %108 : vector<1x128x768xbf16> to vector<128x768xbf16>
    %cst_61 = arith.constant dense<0.000000e+00> : vector<1x768xf32>
    %110 = tpu.matmul %107, %109, %cst_61 {dimension_numbers = #tpu.dot_dimension_numbers<[1], [0], [0], [1], [0, 0, 1, 1], [], []>} : vector<1x128xbf16>, vector<128x768xbf16>, vector<1x768xf32> -> vector<1x768xf32>
    %111 = arith.addf %105, %110 : vector<1x768xf32>
    %112 = vector.extract_strided_slice %14 {offsets = [16, 0], sizes = [1, 128], strides = [1, 1]} : vector<25x128xf32> to vector<1x128xf32>
    %113 = arith.truncf %112 : vector<1x128xf32> to vector<1x128xbf16>
    %c16 = arith.constant 16 : index
    %c0_62 = arith.constant 0 : index
    %c0_63 = arith.constant 0 : index
    %114 = vector.load %arg6[%c16, %c0_62, %c0_63] : memref<25x128x768xbf16, #tpu.memory_space<vmem>>, vector<1x128x768xbf16>
    %115 = vector.shape_cast %114 : vector<1x128x768xbf16> to vector<128x768xbf16>
    %cst_64 = arith.constant dense<0.000000e+00> : vector<1x768xf32>
    %116 = tpu.matmul %113, %115, %cst_64 {dimension_numbers = #tpu.dot_dimension_numbers<[1], [0], [0], [1], [0, 0, 1, 1], [], []>} : vector<1x128xbf16>, vector<128x768xbf16>, vector<1x768xf32> -> vector<1x768xf32>
    %117 = arith.addf %111, %116 : vector<1x768xf32>
    %118 = vector.extract_strided_slice %14 {offsets = [17, 0], sizes = [1, 128], strides = [1, 1]} : vector<25x128xf32> to vector<1x128xf32>
    %119 = arith.truncf %118 : vector<1x128xf32> to vector<1x128xbf16>
    %c17 = arith.constant 17 : index
    %c0_65 = arith.constant 0 : index
    %c0_66 = arith.constant 0 : index
    %120 = vector.load %arg6[%c17, %c0_65, %c0_66] : memref<25x128x768xbf16, #tpu.memory_space<vmem>>, vector<1x128x768xbf16>
    %121 = vector.shape_cast %120 : vector<1x128x768xbf16> to vector<128x768xbf16>
    %cst_67 = arith.constant dense<0.000000e+00> : vector<1x768xf32>
    %122 = tpu.matmul %119, %121, %cst_67 {dimension_numbers = #tpu.dot_dimension_numbers<[1], [0], [0], [1], [0, 0, 1, 1], [], []>} : vector<1x128xbf16>, vector<128x768xbf16>, vector<1x768xf32> -> vector<1x768xf32>
    %123 = arith.addf %117, %122 : vector<1x768xf32>
    %124 = vector.extract_strided_slice %14 {offsets = [18, 0], sizes = [1, 128], strides = [1, 1]} : vector<25x128xf32> to vector<1x128xf32>
    %125 = arith.truncf %124 : vector<1x128xf32> to vector<1x128xbf16>
    %c18 = arith.constant 18 : index
    %c0_68 = arith.constant 0 : index
    %c0_69 = arith.constant 0 : index
    %126 = vector.load %arg6[%c18, %c0_68, %c0_69] : memref<25x128x768xbf16, #tpu.memory_space<vmem>>, vector<1x128x768xbf16>
    %127 = vector.shape_cast %126 : vector<1x128x768xbf16> to vector<128x768xbf16>
    %cst_70 = arith.constant dense<0.000000e+00> : vector<1x768xf32>
    %128 = tpu.matmul %125, %127, %cst_70 {dimension_numbers = #tpu.dot_dimension_numbers<[1], [0], [0], [1], [0, 0, 1, 1], [], []>} : vector<1x128xbf16>, vector<128x768xbf16>, vector<1x768xf32> -> vector<1x768xf32>
    %129 = arith.addf %123, %128 : vector<1x768xf32>
    %130 = vector.extract_strided_slice %14 {offsets = [19, 0], sizes = [1, 128], strides = [1, 1]} : vector<25x128xf32> to vector<1x128xf32>
    %131 = arith.truncf %130 : vector<1x128xf32> to vector<1x128xbf16>
    %c19 = arith.constant 19 : index
    %c0_71 = arith.constant 0 : index
    %c0_72 = arith.constant 0 : index
    %132 = vector.load %arg6[%c19, %c0_71, %c0_72] : memref<25x128x768xbf16, #tpu.memory_space<vmem>>, vector<1x128x768xbf16>
    %133 = vector.shape_cast %132 : vector<1x128x768xbf16> to vector<128x768xbf16>
    %cst_73 = arith.constant dense<0.000000e+00> : vector<1x768xf32>
    %134 = tpu.matmul %131, %133, %cst_73 {dimension_numbers = #tpu.dot_dimension_numbers<[1], [0], [0], [1], [0, 0, 1, 1], [], []>} : vector<1x128xbf16>, vector<128x768xbf16>, vector<1x768xf32> -> vector<1x768xf32>
    %135 = arith.addf %129, %134 : vector<1x768xf32>
    %136 = vector.extract_strided_slice %14 {offsets = [20, 0], sizes = [1, 128], strides = [1, 1]} : vector<25x128xf32> to vector<1x128xf32>
    %137 = arith.truncf %136 : vector<1x128xf32> to vector<1x128xbf16>
    %c20 = arith.constant 20 : index
    %c0_74 = arith.constant 0 : index
    %c0_75 = arith.constant 0 : index
    %138 = vector.load %arg6[%c20, %c0_74, %c0_75] : memref<25x128x768xbf16, #tpu.memory_space<vmem>>, vector<1x128x768xbf16>
    %139 = vector.shape_cast %138 : vector<1x128x768xbf16> to vector<128x768xbf16>
    %cst_76 = arith.constant dense<0.000000e+00> : vector<1x768xf32>
    %140 = tpu.matmul %137, %139, %cst_76 {dimension_numbers = #tpu.dot_dimension_numbers<[1], [0], [0], [1], [0, 0, 1, 1], [], []>} : vector<1x128xbf16>, vector<128x768xbf16>, vector<1x768xf32> -> vector<1x768xf32>
    %141 = arith.addf %135, %140 : vector<1x768xf32>
    %142 = vector.extract_strided_slice %14 {offsets = [21, 0], sizes = [1, 128], strides = [1, 1]} : vector<25x128xf32> to vector<1x128xf32>
    %143 = arith.truncf %142 : vector<1x128xf32> to vector<1x128xbf16>
    %c21 = arith.constant 21 : index
    %c0_77 = arith.constant 0 : index
    %c0_78 = arith.constant 0 : index
    %144 = vector.load %arg6[%c21, %c0_77, %c0_78] : memref<25x128x768xbf16, #tpu.memory_space<vmem>>, vector<1x128x768xbf16>
    %145 = vector.shape_cast %144 : vector<1x128x768xbf16> to vector<128x768xbf16>
    %cst_79 = arith.constant dense<0.000000e+00> : vector<1x768xf32>
    %146 = tpu.matmul %143, %145, %cst_79 {dimension_numbers = #tpu.dot_dimension_numbers<[1], [0], [0], [1], [0, 0, 1, 1], [], []>} : vector<1x128xbf16>, vector<128x768xbf16>, vector<1x768xf32> -> vector<1x768xf32>
    %147 = arith.addf %141, %146 : vector<1x768xf32>
    %148 = vector.extract_strided_slice %14 {offsets = [22, 0], sizes = [1, 128], strides = [1, 1]} : vector<25x128xf32> to vector<1x128xf32>
    %149 = arith.truncf %148 : vector<1x128xf32> to vector<1x128xbf16>
    %c22 = arith.constant 22 : index
    %c0_80 = arith.constant 0 : index
    %c0_81 = arith.constant 0 : index
    %150 = vector.load %arg6[%c22, %c0_80, %c0_81] : memref<25x128x768xbf16, #tpu.memory_space<vmem>>, vector<1x128x768xbf16>
    %151 = vector.shape_cast %150 : vector<1x128x768xbf16> to vector<128x768xbf16>
    %cst_82 = arith.constant dense<0.000000e+00> : vector<1x768xf32>
    %152 = tpu.matmul %149, %151, %cst_82 {dimension_numbers = #tpu.dot_dimension_numbers<[1], [0], [0], [1], [0, 0, 1, 1], [], []>} : vector<1x128xbf16>, vector<128x768xbf16>, vector<1x768xf32> -> vector<1x768xf32>
    %153 = arith.addf %147, %152 : vector<1x768xf32>
    %154 = vector.extract_strided_slice %14 {offsets = [23, 0], sizes = [1, 128], strides = [1, 1]} : vector<25x128xf32> to vector<1x128xf32>
    %155 = arith.truncf %154 : vector<1x128xf32> to vector<1x128xbf16>
    %c23 = arith.constant 23 : index
    %c0_83 = arith.constant 0 : index
    %c0_84 = arith.constant 0 : index
    %156 = vector.load %arg6[%c23, %c0_83, %c0_84] : memref<25x128x768xbf16, #tpu.memory_space<vmem>>, vector<1x128x768xbf16>
    %157 = vector.shape_cast %156 : vector<1x128x768xbf16> to vector<128x768xbf16>
    %cst_85 = arith.constant dense<0.000000e+00> : vector<1x768xf32>
    %158 = tpu.matmul %155, %157, %cst_85 {dimension_numbers = #tpu.dot_dimension_numbers<[1], [0], [0], [1], [0, 0, 1, 1], [], []>} : vector<1x128xbf16>, vector<128x768xbf16>, vector<1x768xf32> -> vector<1x768xf32>
    %159 = arith.addf %153, %158 : vector<1x768xf32>
    %160 = vector.extract_strided_slice %14 {offsets = [24, 0], sizes = [1, 128], strides = [1, 1]} : vector<25x128xf32> to vector<1x128xf32>
    %161 = arith.truncf %160 : vector<1x128xf32> to vector<1x128xbf16>
    %c24 = arith.constant 24 : index
    %c0_86 = arith.constant 0 : index
    %c0_87 = arith.constant 0 : index
    %162 = vector.load %arg6[%c24, %c0_86, %c0_87] : memref<25x128x768xbf16, #tpu.memory_space<vmem>>, vector<1x128x768xbf16>
    %163 = vector.shape_cast %162 : vector<1x128x768xbf16> to vector<128x768xbf16>
    %cst_88 = arith.constant dense<0.000000e+00> : vector<1x768xf32>
    %164 = tpu.matmul %161, %163, %cst_88 {dimension_numbers = #tpu.dot_dimension_numbers<[1], [0], [0], [1], [0, 0, 1, 1], [], []>} : vector<1x128xbf16>, vector<128x768xbf16>, vector<1x768xf32> -> vector<1x768xf32>
    %165 = arith.addf %159, %164 : vector<1x768xf32>
    %c0_89 = arith.constant 0 : index
    %c0_90 = arith.constant 0 : index
    %166 = vector.load %arg7[%c0_89, %c0_90] : memref<1x768xf32, #tpu.memory_space<vmem>>, vector<1x768xf32>
    %167 = arith.mulf %165, %166 : vector<1x768xf32>
    %c0_91 = arith.constant 0 : index
    %c0_92 = arith.constant 0 : index
    %168 = vector.load %arg8[%c0_91, %c0_92] : memref<1x768xf32, #tpu.memory_space<vmem>>, vector<1x768xf32>
    %169 = arith.addf %167, %168 : vector<1x768xf32>
    %cst_93 = arith.constant 0.000000e+00 : f32
    %170 = vector.broadcast %cst_93 : f32 to vector<1x768xf32>
    %171 = arith.maximumf %169, %170 : vector<1x768xf32>
    %172 = arith.truncf %171 : vector<1x768xf32> to vector<1x768xbf16>
    %c0_94 = arith.constant 0 : index
    %c0_95 = arith.constant 0 : index
    %173 = vector.load %arg9[%c0_94, %c0_95] : memref<768x256xbf16, #tpu.memory_space<vmem>>, vector<768x256xbf16>
    %cst_96 = arith.constant dense<0.000000e+00> : vector<1x256xf32>
    %174 = tpu.matmul %172, %173, %cst_96 {dimension_numbers = #tpu.dot_dimension_numbers<[1], [0], [0], [1], [0, 0, 1, 1], [], []>} : vector<1x768xbf16>, vector<768x256xbf16>, vector<1x256xf32> -> vector<1x256xf32>
    %c0_97 = arith.constant 0 : index
    %c0_98 = arith.constant 0 : index
    %175 = vector.load %arg10[%c0_97, %c0_98] : memref<1x256xf32, #tpu.memory_space<vmem>>, vector<1x256xf32>
    %176 = arith.addf %174, %175 : vector<1x256xf32>
    %cst_99 = arith.constant 0.000000e+00 : f32
    %177 = vector.broadcast %cst_99 : f32 to vector<1x256xf32>
    %178 = arith.maximumf %176, %177 : vector<1x256xf32>
    %179 = arith.truncf %178 : vector<1x256xf32> to vector<1x256xbf16>
    %c0_100 = arith.constant 0 : index
    %c0_101 = arith.constant 0 : index
    %180 = vector.load %arg11[%c0_100, %c0_101] : memref<256x128xbf16, #tpu.memory_space<vmem>>, vector<256x128xbf16>
    %cst_102 = arith.constant dense<0.000000e+00> : vector<1x128xf32>
    %181 = tpu.matmul %179, %180, %cst_102 {dimension_numbers = #tpu.dot_dimension_numbers<[1], [0], [0], [1], [0, 0, 1, 1], [], []>} : vector<1x256xbf16>, vector<256x128xbf16>, vector<1x128xf32> -> vector<1x128xf32>
    %c0_103 = arith.constant 0 : index
    %c0_104 = arith.constant 0 : index
    %182 = vector.load %arg12[%c0_103, %c0_104] : memref<1x128xf32, #tpu.memory_space<vmem>>, vector<1x128xf32>
    %183 = arith.addf %181, %182 : vector<1x128xf32>
    %c0_105 = arith.constant 0 : index
    %c0_106 = arith.constant 0 : index
    %c0_107 = arith.constant 0 : index
    %184 = vector.load %arg13[%c0_105, %c0_106, %c0_107] : memref<1x1x128xf32, #tpu.memory_space<vmem>>, vector<1x1x128xf32>
    %185 = vector.shape_cast %184 : vector<1x1x128xf32> to vector<1x128xf32>
    %186 = vector.shape_cast %183 : vector<1x128xf32> to vector<1x1x128xf32>
    tpu.vector_store %arg13[%c0_105, %c0_106, %c0_107], %186 {strides = array<i32>} : memref<1x1x128xf32, #tpu.memory_space<vmem>>, vector<1x1x128xf32>,
    return
  }
  func.func @transform_0(%arg0: i32) -> (i32, i32, i32) {
    %c0_i32 = arith.constant 0 : i32
    %c0_i32_0 = arith.constant 0 : i32
    %c0_i32_1 = arith.constant 0 : i32
    return %arg0, %c0_i32, %c0_i32_0 : i32, i32, i32
  }
  func.func @transform_1(%arg0: i32) -> (i32, i32) {
    %c0_i32 = arith.constant 0 : i32
    %c0_i32_0 = arith.constant 0 : i32
    %c0_i32_1 = arith.constant 0 : i32
    return %c0_i32, %c0_i32_0 : i32, i32
  }
  func.func @transform_2(%arg0: i32) -> (i32, i32) {
    %c0_i32 = arith.constant 0 : i32
    %c0_i32_0 = arith.constant 0 : i32
    %c0_i32_1 = arith.constant 0 : i32
    return %c0_i32, %c0_i32_0 : i32, i32
  }
  func.func @transform_3(%arg0: i32) -> (i32, i32) {
    %c0_i32 = arith.constant 0 : i32
    %c0_i32_0 = arith.constant 0 : i32
    %c0_i32_1 = arith.constant 0 : i32
    return %c0_i32, %c0_i32_0 : i32, i32
  }
  func.func @transform_4(%arg0: i32) -> (i32, i32) {
    %c0_i32 = arith.constant 0 : i32
    %c0_i32_0 = arith.constant 0 : i32
    %c0_i32_1 = arith.constant 0 : i32
    return %c0_i32, %c0_i32_0 : i32, i32
  }
  func.func @transform_5(%arg0: i32) -> (i32, i32, i32) {
    %c0_i32 = arith.constant 0 : i32
    %c0_i32_0 = arith.constant 0 : i32
    %c0_i32_1 = arith.constant 0 : i32
    %c0_i32_2 = arith.constant 0 : i32
    return %c0_i32, %c0_i32_0, %c0_i32_1 : i32, i32, i32
  }
  func.func @transform_6(%arg0: i32) -> (i32, i32) {
    %c0_i32 = arith.constant 0 : i32
    %c0_i32_0 = arith.constant 0 : i32
    %c0_i32_1 = arith.constant 0 : i32
    return %c0_i32, %c0_i32_0 : i32, i32
  }
  func.func @transform_7(%arg0: i32) -> (i32, i32) {
    %c0_i32 = arith.constant 0 : i32
    %c0_i32_0 = arith.constant 0 : i32
    %c0_i32_1 = arith.constant 0 : i32
    return %c0_i32, %c0_i32_0 : i32, i32
  }
  func.func @transform_8(%arg0: i32) -> (i32, i32) {
    %c0_i32 = arith.constant 0 : i32
    %c0_i32_0 = arith.constant 0 : i32
    %c0_i32_1 = arith.constant 0 : i32
    return %c0_i32, %c0_i32_0 : i32, i32
  }
  func.func @transform_9(%arg0: i32) -> (i32, i32) {
    %c0_i32 = arith.constant 0 : i32
    %c0_i32_0 = arith.constant 0 : i32
    %c0_i32_1 = arith.constant 0 : i32
    return %c0_i32, %c0_i32_0 : i32, i32
  }
  func.func @transform_10(%arg0: i32) -> (i32, i32) {
    %c0_i32 = arith.constant 0 : i32
    %c0_i32_0 = arith.constant 0 : i32
    %c0_i32_1 = arith.constant 0 : i32
    return %c0_i32, %c0_i32_0 : i32, i32
  }
  func.func @transform_11(%arg0: i32) -> (i32, i32) {
    %c0_i32 = arith.constant 0 : i32
    %c0_i32_0 = arith.constant 0 : i32
    %c0_i32_1 = arith.constant 0 : i32
    return %c0_i32, %c0_i32_0 : i32, i32
  }
  func.func @transform_12(%arg0: i32) -> (i32, i32, i32) {
    %c0_i32 = arith.constant 0 : i32
    %c0_i32_0 = arith.constant 0 : i32
    %c0_i32_1 = arith.constant 0 : i32
    return %arg0, %c0_i32, %c0_i32_0 : i32, i32, i32
  }
}

</mosaic_0001>

<llo_original>
// kernel: tpu_custom_call.1
$region0: #{tpu_custom_call.1}
  #allocation0 [shape = 'u32[]', space=smem, size = 0x4, offset = 0x4, fixed_abs, tag = 'smem constant byte address 0x4 - core index']
  #allocation1 [shape = 'u32[144,128]{1,0:T(1,128)}', space=vmem, size = 0x12000, scoped, tag = 'internal scratch']
  %s0 = inlined_call_operand.vmem [shape: bf16[2,289,4], index: 0, kind: input, shape index: {}]
  %s1 = inlined_call_operand.hbm [shape: bf16[25,289], index: 1, kind: input, shape index: {}]
  %s2 = inlined_call_operand.hbm [shape: bf16[4,128], index: 2, kind: input, shape index: {}]
  %s3 = inlined_call_operand.hbm [shape: f32[1,128], index: 3, kind: input, shape index: {}]
  %s4 = inlined_call_operand.hbm [shape: f32[1,128], index: 4, kind: input, shape index: {}]
  %s5 = inlined_call_operand.hbm [shape: bf16[25,128,768], index: 5, kind: input, shape index: {}]
  %s6 = inlined_call_operand.hbm [shape: f32[1,768], index: 6, kind: input, shape index: {}]
  %s7 = inlined_call_operand.hbm [shape: f32[1,768], index: 7, kind: input, shape index: {}]
  %s8 = inlined_call_operand.hbm [shape: bf16[768,256], index: 8, kind: input, shape index: {}]
  %s9 = inlined_call_operand.hbm [shape: f32[1,256], index: 9, kind: input, shape index: {}]
  %s10 = inlined_call_operand.hbm [shape: bf16[256,128], index: 10, kind: input, shape index: {}]
  %s11 = inlined_call_operand.hbm [shape: f32[1,128], index: 11, kind: input, shape index: {}]
  %s12 = inlined_call_operand.hbm [shape: f32[2,1,128], index: 12, kind: output, shape index: {}]
  %s13 = sld [smem:[#allocation0]]
  $region125: #{tpu_custom_call.1} parent=0
    _
  %s15 = ssub.s32 1, %s13
  %s16 = scalar_select 0, %s15, %s13
  $region1: #{tpu_custom_call.1} parent=0
    #allocation2 [shape = 'u8[24576]{0}', space=vmem, size = 0x6000, scoped, tag = 'input window, operand 1, single buffered']
    #allocation3 [shape = 's32[2]{0}', space=sflag, size = 0x8, scoped, tag = 'scoped memory for tpu_custom_call.1']
    #allocation4 [shape = 's32[2]{0}', space=sflag, size = 0x8, scoped, tag = 'scoped memory for tpu_custom_call.1']
    #allocation5 [shape = 'u8[1024]{0}', space=vmem, size = 0x400, scoped, tag = 'input window, operand 2, single buffered']
    #allocation6 [shape = 's32[1]{0}', space=sflag, size = 0x4, scoped, tag = 'scoped memory for tpu_custom_call.1']
    #allocation7 [shape = 'u8[512]{0}', space=vmem, size = 0x400, scoped, tag = 'input window, operand 3, single buffered']
    #allocation8 [shape = 'u8[512]{0}', space=vmem, size = 0x400, scoped, tag = 'input window, operand 4, single buffered']
    #allocation9 [shape = 's32[1]{0}', space=sflag, size = 0x4, scoped, tag = 'scoped memory for tpu_custom_call.1']
    #allocation10 [shape = 'u8[4915200]{0}', space=vmem, size = 0x4b0000, scoped, tag = 'input window, operand 5, single buffered']
    #allocation11 [shape = 'u8[3072]{0}', space=vmem, size = 0xc00, scoped, tag = 'input window, operand 6, single buffered']
    #allocation12 [shape = 's32[1]{0}', space=sflag, size = 0x4, scoped, tag = 'scoped memory for tpu_custom_call.1']
    #allocation13 [shape = 'u8[3072]{0}', space=vmem, size = 0xc00, scoped, tag = 'input window, operand 7, single buffered']
    #allocation14 [shape = 'u8[393216]{0}', space=vmem, size = 0x60000, scoped, tag = 'input window, operand 8, single buffered']
    #allocation15 [shape = 's32[1]{0}', space=sflag, size = 0x4, scoped, tag = 'scoped memory for tpu_custom_call.1']
    #allocation16 [shape = 'u8[1024]{0}', space=vmem, size = 0x400, scoped, tag = 'input window, operand 9, single buffered']
    #allocation17 [shape = 'u8[65536]{0}', space=vmem, size = 0x10000, scoped, tag = 'input window, operand 10, single buffered']
    #allocation18 [shape = 's32[1]{0}', space=sflag, size = 0x4, scoped, tag = 'scoped memory for tpu_custom_call.1']
    #allocation19 [shape = 'u8[512]{0}', space=vmem, size = 0x400, scoped, tag = 'input window, operand 11, single buffered']
    #allocation20 [shape = 'u8[1024]{0}', space=vmem, size = 0x400, scoped, tag = 'output window, operand 0']
    %17 = vsyncpa [#allocation3], 0
    %18 = vsyncpa [#allocation6], 0
    %19 = vsyncpa [#allocation9], 0
    %20 = vsyncpa [#allocation12], 0
    %21 = vsyncpa [#allocation15], 0
    %22 = vsyncpa [#allocation18], 0
    %23 = vsyncpa [#allocation4], 0
    %s24 = scalar_lea.sflag [#allocation4], 1
    %25 = vsyncpa %s24, 0
    loop: start=0, step=1, limit=4
    $region2: #{tpu_custom_call.1} parent=1 // loop_pre_header
      _
    $region3: #{tpu_custom_call.1} parent=1 // loop_header
      %s27 = sphi 0, %s31
      %p28 = scmp.ge.s32.totalorder %s27, 4
      %s37 = sphi 0, %s39
      %s40 = sphi 0, %s37
      %s41 = sphi 0, %s40
      %s57 = sphi 0, %s41
      %s61 = sphi 0, %s61
      %s63 = sphi 0, %s61
      %s64 = sphi 0, %s63
      %s78 = sphi 0, %s64
      %s82 = sphi 0, %s82
      %s84 = sphi 0, %s82
      %s85 = sphi 0, %s84
      %s99 = sphi 0, %s85
      %s103 = sphi 0, %s103
      %s105 = sphi 0, %s103
      %s106 = sphi 0, %s105
      %s120 = sphi 0, %s106
      %s124 = sphi 0, %s124
      %s126 = sphi 0, %s124
      %s127 = sphi 0, %s126
      %s141 = sphi 0, %s127
      %s145 = sphi 0, %s145
      %s147 = sphi 0, %s145
      %s148 = sphi 0, %s147
      %s162 = sphi 0, %s148
      %s166 = sphi 0, %s166
      %s168 = sphi 0, %s166
      %s169 = sphi 0, %s168
      %s183 = sphi 0, %s169
      %s187 = sphi 0, %s187
      %s189 = sphi 0, %s187
      %s190 = sphi 0, %s189
      %s204 = sphi 0, %s190
      %s208 = sphi 0, %s208
      %s210 = sphi 0, %s208
      %s211 = sphi 0, %s210
      %s225 = sphi 0, %s211
      %s229 = sphi 0, %s229
      %s231 = sphi 0, %s229
      %s232 = sphi 0, %s231
      %s246 = sphi 0, %s232
      %s250 = sphi 0, %s250
      %s252 = sphi 0, %s250
      %s253 = sphi 0, %s252
      %s267 = sphi 0, %s253
      %s271 = sphi 0, %s271
      %s273 = sphi 0, %s271
      %s274 = sphi 0, %s273
      %s288 = sphi 0, %s274
      %s294 = sphi 0, %s296
      %s297 = sphi 0, %s294
      %s298 = sphi 0, %s297
      %s314 = sphi 0, %s298
    $region4: #{tpu_custom_call.1} parent=1 // loop_header_branch
      %30 = sbr.rel (%p28) target = $region8
    $region5: #{tpu_custom_call.1} parent=1 // loop_body
      %s32 = ssub.s32 %s27, 1
      %s33 = ssub.s32 %s27, 2
      %s34 = sadd.s32 %s27, 1
      %s35 = ssub.s32 %s27, %s34
      %p36 = scmp.eq.s32.totalorder %s35, 0
      %s38 = sadd.s32 %s37, 1
      %s39 = scalar_select %p36, %s37, %s38
      %p42 = pneg %p36
      %p43 = scmp.eq.s32.totalorder %s27, 1
      %p44 = por %p42, %p43
      %p45 = scmp.ne.s32.totalorder %s37, %s40
      %p46 = scmp.eq.s32.totalorder %s27, 0
      %p47 = por %p45, %p46
      %p48 = scmp.ne.s32.totalorder %s37, %s40
      %p49 = scmp.eq.s32.totalorder %s32, 1
      %p50 = por %p48, %p49
      %p51 = scmp.ne.s32.totalorder %s40, %s41
      %p52 = scmp.eq.s32.totalorder %s32, 0
      %p53 = por %p51, %p52
      %p54 = scmp.ne.s32.totalorder %s40, %s41
      %p55 = scmp.eq.s32.totalorder %s33, 1
      %p56 = por %p54, %p55
      %p58 = scmp.ne.s32.totalorder %s41, %s57
      %p59 = scmp.eq.s32.totalorder %s33, 0
      %p60 = por %p58, %p59
      %s62 = sadd.s32 %s61, 1
      %p65 = scmp.eq.s32.totalorder %s27, 1
      %p66 = scmp.ne.s32.totalorder %s61, %s63
      %p67 = scmp.eq.s32.totalorder %s27, 0
      %p68 = por %p66, %p67
      %p69 = scmp.ne.s32.totalorder %s61, %s63
      %p70 = scmp.eq.s32.totalorder %s32, 1
      %p71 = por %p69, %p70
      %p72 = scmp.ne.s32.totalorder %s63, %s64
      %p73 = scmp.eq.s32.totalorder %s32, 0
      %p74 = por %p72, %p73
      %p75 = scmp.ne.s32.totalorder %s63, %s64
      %p76 = scmp.eq.s32.totalorder %s33, 1
      %p77 = por %p75, %p76
      %p79 = scmp.ne.s32.totalorder %s64, %s78
      %p80 = scmp.eq.s32.totalorder %s33, 0
      %p81 = por %p79, %p80
      %s83 = sadd.s32 %s82, 1
      %p86 = scmp.eq.s32.totalorder %s27, 1
      %p87 = scmp.ne.s32.totalorder %s82, %s84
      %p88 = scmp.eq.s32.totalorder %s27, 0
      %p89 = por %p87, %p88
      %p90 = scmp.ne.s32.totalorder %s82, %s84
      %p91 = scmp.eq.s32.totalorder %s32, 1
      %p92 = por %p90, %p91
      %p93 = scmp.ne.s32.totalorder %s84, %s85
      %p94 = scmp.eq.s32.totalorder %s32, 0
      %p95 = por %p93, %p94
      %p96 = scmp.ne.s32.totalorder %s84, %s85
      %p97 = scmp.eq.s32.totalorder %s33, 1
      %p98 = por %p96, %p97
      %p100 = scmp.ne.s32.totalorder %s85, %s99
      %p101 = scmp.eq.s32.totalorder %s33, 0
      %p102 = por %p100, %p101
      %s104 = sadd.s32 %s103, 1
      %p107 = scmp.eq.s32.totalorder %s27, 1
      %p108 = scmp.ne.s32.totalorder %s103, %s105
      %p109 = scmp.eq.s32.totalorder %s27, 0
      %p110 = por %p108, %p109
      %p111 = scmp.ne.s32.totalorder %s103, %s105
      %p112 = scmp.eq.s32.totalorder %s32, 1
      %p113 = por %p111, %p112
      %p114 = scmp.ne.s32.totalorder %s105, %s106
      %p115 = scmp.eq.s32.totalorder %s32, 0
      %p116 = por %p114, %p115
      %p117 = scmp.ne.s32.totalorder %s105, %s106
      %p118 = scmp.eq.s32.totalorder %s33, 1
      %p119 = por %p117, %p118
      %p121 = scmp.ne.s32.totalorder %s106, %s120
      %p122 = scmp.eq.s32.totalorder %s33, 0
      %p123 = por %p121, %p122
      %s125 = sadd.s32 %s124, 1
      %p128 = scmp.eq.s32.totalorder %s27, 1
      %p129 = scmp.ne.s32.totalorder %s124, %s126
      %p130 = scmp.eq.s32.totalorder %s27, 0
      %p131 = por %p129, %p130
      %p132 = scmp.ne.s32.totalorder %s124, %s126
      %p133 = scmp.eq.s32.totalorder %s32, 1
      %p134 = por %p132, %p133
      %p135 = scmp.ne.s32.totalorder %s126, %s127
      %p136 = scmp.eq.s32.totalorder %s32, 0
      %p137 = por %p135, %p136
      %p138 = scmp.ne.s32.totalorder %s126, %s127
      %p139 = scmp.eq.s32.totalorder %s33, 1
      %p140 = por %p138, %p139
      %p142 = scmp.ne.s32.totalorder %s127, %s141
      %p143 = scmp.eq.s32.totalorder %s33, 0
      %p144 = por %p142, %p143
      %s146 = sadd.s32 %s145, 1
      %p149 = scmp.eq.s32.totalorder %s27, 1
      %p150 = scmp.ne.s32.totalorder %s145, %s147
      %p151 = scmp.eq.s32.totalorder %s27, 0
      %p152 = por %p150, %p151
      %p153 = scmp.ne.s32.totalorder %s145, %s147
      %p154 = scmp.eq.s32.totalorder %s32, 1
      %p155 = por %p153, %p154
      %p156 = scmp.ne.s32.totalorder %s147, %s148
      %p157 = scmp.eq.s32.totalorder %s32, 0
      %p158 = por %p156, %p157
      %p159 = scmp.ne.s32.totalorder %s147, %s148
      %p160 = scmp.eq.s32.totalorder %s33, 1
      %p161 = por %p159, %p160
      %p163 = scmp.ne.s32.totalorder %s148, %s162
      %p164 = scmp.eq.s32.totalorder %s33, 0
      %p165 = por %p163, %p164
      %s167 = sadd.s32 %s166, 1
      %p170 = scmp.eq.s32.totalorder %s27, 1
      %p171 = scmp.ne.s32.totalorder %s166, %s168
      %p172 = scmp.eq.s32.totalorder %s27, 0
      %p173 = por %p171, %p172
      %p174 = scmp.ne.s32.totalorder %s166, %s168
      %p175 = scmp.eq.s32.totalorder %s32, 1
      %p176 = por %p174, %p175
      %p177 = scmp.ne.s32.totalorder %s168, %s169
      %p178 = scmp.eq.s32.totalorder %s32, 0
      %p179 = por %p177, %p178
      %p180 = scmp.ne.s32.totalorder %s168, %s169
      %p181 = scmp.eq.s32.totalorder %s33, 1
      %p182 = por %p180, %p181
      %p184 = scmp.ne.s32.totalorder %s169, %s183
      %p185 = scmp.eq.s32.totalorder %s33, 0
      %p186 = por %p184, %p185
      %s188 = sadd.s32 %s187, 1
      %p191 = scmp.eq.s32.totalorder %s27, 1
      %p192 = scmp.ne.s32.totalorder %s187, %s189
      %p193 = scmp.eq.s32.totalorder %s27, 0
      %p194 = por %p192, %p193
      %p195 = scmp.ne.s32.totalorder %s187, %s189
      %p196 = scmp.eq.s32.totalorder %s32, 1
      %p197 = por %p195, %p196
      %p198 = scmp.ne.s32.totalorder %s189, %s190
      %p199 = scmp.eq.s32.totalorder %s32, 0
      %p200 = por %p198, %p199
      %p201 = scmp.ne.s32.totalorder %s189, %s190
      %p202 = scmp.eq.s32.totalorder %s33, 1
      %p203 = por %p201, %p202
      %p205 = scmp.ne.s32.totalorder %s190, %s204
      %p206 = scmp.eq.s32.totalorder %s33, 0
      %p207 = por %p205, %p206
      %s209 = sadd.s32 %s208, 1
      %p212 = scmp.eq.s32.totalorder %s27, 1
      %p213 = scmp.ne.s32.totalorder %s208, %s210
      %p214 = scmp.eq.s32.totalorder %s27, 0
      %p215 = por %p213, %p214
      %p216 = scmp.ne.s32.totalorder %s208, %s210
      %p217 = scmp.eq.s32.totalorder %s32, 1
      %p218 = por %p216, %p217
      %p219 = scmp.ne.s32.totalorder %s210, %s211
      %p220 = scmp.eq.s32.totalorder %s32, 0
      %p221 = por %p219, %p220
      %p222 = scmp.ne.s32.totalorder %s210, %s211
      %p223 = scmp.eq.s32.totalorder %s33, 1
      %p224 = por %p222, %p223
      %p226 = scmp.ne.s32.totalorder %s211, %s225
      %p227 = scmp.eq.s32.totalorder %s33, 0
      %p228 = por %p226, %p227
      %s230 = sadd.s32 %s229, 1
      %p233 = scmp.eq.s32.totalorder %s27, 1
      %p234 = scmp.ne.s32.totalorder %s229, %s231
      %p235 = scmp.eq.s32.totalorder %s27, 0
      %p236 = por %p234, %p235
      %p237 = scmp.ne.s32.totalorder %s229, %s231
      %p238 = scmp.eq.s32.totalorder %s32, 1
      %p239 = por %p237, %p238
      %p240 = scmp.ne.s32.totalorder %s231, %s232
      %p241 = scmp.eq.s32.totalorder %s32, 0
      %p242 = por %p240, %p241
      %p243 = scmp.ne.s32.totalorder %s231, %s232
      %p244 = scmp.eq.s32.totalorder %s33, 1
      %p245 = por %p243, %p244
      %p247 = scmp.ne.s32.totalorder %s232, %s246
      %p248 = scmp.eq.s32.totalorder %s33, 0
      %p249 = por %p247, %p248
      %s251 = sadd.s32 %s250, 1
      %p254 = scmp.eq.s32.totalorder %s27, 1
      %p255 = scmp.ne.s32.totalorder %s250, %s252
      %p256 = scmp.eq.s32.totalorder %s27, 0
      %p257 = por %p255, %p256
      %p258 = scmp.ne.s32.totalorder %s250, %s252
      %p259 = scmp.eq.s32.totalorder %s32, 1
      %p260 = por %p258, %p259
      %p261 = scmp.ne.s32.totalorder %s252, %s253
      %p262 = scmp.eq.s32.totalorder %s32, 0
      %p263 = por %p261, %p262
      %p264 = scmp.ne.s32.totalorder %s252, %s253
      %p265 = scmp.eq.s32.totalorder %s33, 1
      %p266 = por %p264, %p265
      %p268 = scmp.ne.s32.totalorder %s253, %s267
      %p269 = scmp.eq.s32.totalorder %s33, 0
      %p270 = por %p268, %p269
      %s272 = sadd.s32 %s271, 1
      %p275 = scmp.eq.s32.totalorder %s27, 1
      %p276 = scmp.ne.s32.totalorder %s271, %s273
      %p277 = scmp.eq.s32.totalorder %s27, 0
      %p278 = por %p276, %p277
      %p279 = scmp.ne.s32.totalorder %s271, %s273
      %p280 = scmp.eq.s32.totalorder %s32, 1
      %p281 = por %p279, %p280
      %p282 = scmp.ne.s32.totalorder %s273, %s274
      %p283 = scmp.eq.s32.totalorder %s32, 0
      %p284 = por %p282, %p283
      %p285 = scmp.ne.s32.totalorder %s273, %s274
      %p286 = scmp.eq.s32.totalorder %s33, 1
      %p287 = por %p285, %p286
      %p289 = scmp.ne.s32.totalorder %s274, %s288
      %p290 = scmp.eq.s32.totalorder %s33, 0
      %p291 = por %p289, %p290
      %s292 = ssub.s32 %s27, %s34
      %p293 = scmp.eq.s32.totalorder %s292, 0
      %s295 = sadd.s32 %s294, 1
      %s296 = scalar_select %p293, %s294, %s295
      %p299 = pneg %p293
      %p300 = scmp.eq.s32.totalorder %s27, 1
      %p301 = por %p299, %p300
      %p302 = scmp.ne.s32.totalorder %s294, %s297
      %p303 = scmp.eq.s32.totalorder %s27, 0
      %p304 = por %p302, %p303
      %p305 = scmp.ne.s32.totalorder %s294, %s297
      %p306 = scmp.eq.s32.totalorder %s32, 1
      %p307 = por %p305, %p306
      %p308 = scmp.ne.s32.totalorder %s297, %s298
      %p309 = scmp.eq.s32.totalorder %s32, 0
      %p310 = por %p308, %p309
      %p311 = scmp.ne.s32.totalorder %s297, %s298
      %p312 = scmp.eq.s32.totalorder %s33, 1
      %p313 = por %p311, %p312
      %p315 = scmp.ne.s32.totalorder %s298, %s314
      %p316 = scmp.eq.s32.totalorder %s33, 0
      %p317 = por %p315, %p316
      %p318 = scmp.le.s32.totalorder 1, %s27
      %p319 = scmp.lt.s32.totalorder %s27, 3
      %p320 = pnand %p318, %p319
      %p321 = pneg %p320
      // Predicated region
      $region9: #{tpu_custom_call.1} parent=5 // pred_check
        _
      $region10: #{tpu_custom_call.1} parent=5 // pred_check_branch
        %323 = sbr.rel (%p320) target = $region12
      $region11: #{tpu_custom_call.1} parent=5 // pred_region
        %s324 = ssub.s32 %s27, 1
        // Predicated region
        $region13: #{tpu_custom_call.1} parent=11 // pred_check
          %p325 = pneg %p74
        $region14: #{tpu_custom_call.1} parent=11 // pred_check_branch
          %327 = sbr.rel (%p325) target = $region16
        $region15: #{tpu_custom_call.1} parent=11 // pred_region
          %s329 = ssub.s32 768, 768
          %330 = vsyncadd [#allocation3], %s329
          %s331 = sshll.u32 [#allocation2], 4
          %s332 = int_to_ptr.vmem [resolvable:$true] %s331
          %337 = dma.hbm_to_vmem [thread:$0]  %s1, 768, %s332, [#allocation3], 192, 192, 12
        $region16: #{tpu_custom_call.1} parent=11 // pred_fallthru
          _
        // Predicated region
        $region17: #{tpu_custom_call.1} parent=11 // pred_check
          %p338 = pneg %p95
        $region18: #{tpu_custom_call.1} parent=11 // pred_check_branch
          %340 = sbr.rel (%p338) target = $region20
        $region19: #{tpu_custom_call.1} parent=11 // pred_region
          %s342 = ssub.s32 32, 32
          %343 = vsyncadd [#allocation6], %s342
          %s345 = sshll.u32 [#allocation5], 4
          %s346 = int_to_ptr.vmem [resolvable:$true] %s345
          %348 = dma.hbm_to_vmem [thread:$0]  %s2, 32, %s346, [#allocation6]
        $region20: #{tpu_custom_call.1} parent=11 // pred_fallthru
          _
        // Predicated region
        $region21: #{tpu_custom_call.1} parent=11 // pred_check
          %p349 = pneg %p116
        $region22: #{tpu_custom_call.1} parent=11 // pred_check_branch
          %351 = sbr.rel (%p349) target = $region24
        $region23: #{tpu_custom_call.1} parent=11 // pred_region
          %s353 = ssub.s32 16, 16
          %354 = vsyncadd [#allocation6], %s353
          %s356 = sshll.u32 [#allocation7], 4
          %s357 = int_to_ptr.vmem [resolvable:$true] %s356
          %359 = dma.hbm_to_vmem [thread:$0]  %s3, 16, %s357, [#allocation6]
        $region24: #{tpu_custom_call.1} parent=11 // pred_fallthru
          _
        // Predicated region
        $region25: #{tpu_custom_call.1} parent=11 // pred_check
          %p360 = pneg %p137
        $region26: #{tpu_custom_call.1} parent=11 // pred_check_branch
          %362 = sbr.rel (%p360) target = $region28
        $region27: #{tpu_custom_call.1} parent=11 // pred_region
          %s364 = ssub.s32 16, 16
          %365 = vsyncadd [#allocation9], %s364
          %s367 = sshll.u32 [#allocation8], 4
          %s368 = int_to_ptr.vmem [resolvable:$true] %s367
          %370 = dma.hbm_to_vmem [thread:$0]  %s4, 16, %s368, [#allocation9]
        $region28: #{tpu_custom_call.1} parent=11 // pred_fallthru
          _
        // Predicated region
        $region29: #{tpu_custom_call.1} parent=11 // pred_check
          %p371 = pneg %p158
        $region30: #{tpu_custom_call.1} parent=11 // pred_check_branch
          %373 = sbr.rel (%p371) target = $region32
        $region31: #{tpu_custom_call.1} parent=11 // pred_region
          %s375 = ssub.s32 153600, 153600
          %376 = vsyncadd [#allocation9], %s375
          %s377 = sshll.u32 [#allocation10], 4
          %s378 = int_to_ptr.vmem [resolvable:$true] %s377
          %383 = dma.hbm_to_vmem [thread:$0]  %s5, 153600, %s378, [#allocation9], 384, 384, 24
        $region32: #{tpu_custom_call.1} parent=11 // pred_fallthru
          _
        // Predicated region
        $region33: #{tpu_custom_call.1} parent=11 // pred_check
          %p384 = pneg %p179
        $region34: #{tpu_custom_call.1} parent=11 // pred_check_branch
          %386 = sbr.rel (%p384) target = $region36
        $region35: #{tpu_custom_call.1} parent=11 // pred_region
          %s388 = ssub.s32 96, 96
          %389 = vsyncadd [#allocation12], %s388
          %s391 = sshll.u32 [#allocation11], 4
          %s392 = int_to_ptr.vmem [resolvable:$true] %s391
          %394 = dma.hbm_to_vmem [thread:$0]  %s6, 96, %s392, [#allocation12]
        $region36: #{tpu_custom_call.1} parent=11 // pred_fallthru
          _
        // Predicated region
        $region37: #{tpu_custom_call.1} parent=11 // pred_check
          %p395 = pneg %p200
        $region38: #{tpu_custom_call.1} parent=11 // pred_check_branch
          %397 = sbr.rel (%p395) target = $region40
        $region39: #{tpu_custom_call.1} parent=11 // pred_region
          %s399 = ssub.s32 96, 96
          %400 = vsyncadd [#allocation12], %s399
          %s402 = sshll.u32 [#allocation13], 4
          %s403 = int_to_ptr.vmem [resolvable:$true] %s402
          %405 = dma.hbm_to_vmem [thread:$0]  %s7, 96, %s403, [#allocation12]
        $region40: #{tpu_custom_call.1} parent=11 // pred_fallthru
          _
        // Predicated region
        $region41: #{tpu_custom_call.1} parent=11 // pred_check
          %p406 = pneg %p221
        $region42: #{tpu_custom_call.1} parent=11 // pred_check_branch
          %408 = sbr.rel (%p406) target = $region44
        $region43: #{tpu_custom_call.1} parent=11 // pred_region
          %s410 = ssub.s32 12288, 12288
          %411 = vsyncadd [#allocation15], %s410
          %s412 = sshll.u32 [#allocation14], 4
          %s413 = int_to_ptr.vmem [resolvable:$true] %s412
          %418 = dma.hbm_to_vmem [thread:$0]  %s8, 12288, %s413, [#allocation15], 128, 128, 8
        $region44: #{tpu_custom_call.1} parent=11 // pred_fallthru
          _
        // Predicated region
        $region45: #{tpu_custom_call.1} parent=11 // pred_check
          %p419 = pneg %p242
        $region46: #{tpu_custom_call.1} parent=11 // pred_check_branch
          %421 = sbr.rel (%p419) target = $region48
        $region47: #{tpu_custom_call.1} parent=11 // pred_region
          %s423 = ssub.s32 32, 32
          %424 = vsyncadd [#allocation15], %s423
          %s426 = sshll.u32 [#allocation16], 4
          %s427 = int_to_ptr.vmem [resolvable:$true] %s426
          %429 = dma.hbm_to_vmem [thread:$0]  %s9, 32, %s427, [#allocation15]
        $region48: #{tpu_custom_call.1} parent=11 // pred_fallthru
          _
        // Predicated region
        $region49: #{tpu_custom_call.1} parent=11 // pred_check
          %p430 = pneg %p263
        $region50: #{tpu_custom_call.1} parent=11 // pred_check_branch
          %432 = sbr.rel (%p430) target = $region52
        $region51: #{tpu_custom_call.1} parent=11 // pred_region
          %s434 = ssub.s32 2048, 2048
          %435 = vsyncadd [#allocation18], %s434
          %s436 = sshll.u32 [#allocation17], 4
          %s437 = int_to_ptr.vmem [resolvable:$true] %s436
          %442 = dma.hbm_to_vmem [thread:$0]  %s10, 2048, %s437, [#allocation18], 64, 64, 4
        $region52: #{tpu_custom_call.1} parent=11 // pred_fallthru
          _
        // Predicated region
        $region53: #{tpu_custom_call.1} parent=11 // pred_check
          %p443 = pneg %p284
        $region54: #{tpu_custom_call.1} parent=11 // pred_check_branch
          %445 = sbr.rel (%p443) target = $region56
        $region55: #{tpu_custom_call.1} parent=11 // pred_region
          %s447 = ssub.s32 16, 16
          %448 = vsyncadd [#allocation18], %s447
          %s450 = sshll.u32 [#allocation19], 4
          %s451 = int_to_ptr.vmem [resolvable:$true] %s450
          %453 = dma.hbm_to_vmem [thread:$0]  %s11, 16, %s451, [#allocation18]
        $region56: #{tpu_custom_call.1} parent=11 // pred_fallthru
          _
      $region12: #{tpu_custom_call.1} parent=5 // pred_fallthru
        _
      %p454 = scmp.lt.s32.totalorder %s27, 2
      // Predicated region
      $region57: #{tpu_custom_call.1} parent=5 // pred_check
        %p455 = pneg %p454
      $region58: #{tpu_custom_call.1} parent=5 // pred_check_branch
        %457 = sbr.rel (%p455) target = $region60
      $region59: #{tpu_custom_call.1} parent=5 // pred_region
        // Predicated region
        $region61: #{tpu_custom_call.1} parent=59 // pred_check
          %p458 = pneg %p47
        $region62: #{tpu_custom_call.1} parent=59 // pred_check_branch
          %460 = sbr.rel (%p458) target = $region64
        $region63: #{tpu_custom_call.1} parent=59 // pred_region
          %p461 = scmp.lt.s32.totalorder %s27, 1
          %s462 = scalar_select %p461, %s27, 1
          %s463 = smul.addr %s462, 37
          %s464 = smul.addr %s463, 4
          %s465 = scalar_lea.vmem %s0, %s464
        $region64: #{tpu_custom_call.1} parent=59 // pred_fallthru
          _
      $region60: #{tpu_custom_call.1} parent=5 // pred_fallthru
        _
      %p466 = scmp.le.s32.totalorder 1, %s27
      %p467 = scmp.lt.s32.totalorder %s27, 3
      %p468 = pnand %p466, %p467
      %p469 = pneg %p468
      // Predicated region
      $region65: #{tpu_custom_call.1} parent=5 // pred_check
        _
      $region66: #{tpu_custom_call.1} parent=5 // pred_check_branch
        %471 = sbr.rel (%p468) target = $region68
      $region67: #{tpu_custom_call.1} parent=5 // pred_region
        %s472 = ssub.s32 %s27, 1
        // Predicated region
        $region69: #{tpu_custom_call.1} parent=67 // pred_check
          %p473 = pneg %p74
        $region70: #{tpu_custom_call.1} parent=67 // pred_check_branch
          %475 = sbr.rel (%p473) target = $region72
        $region71: #{tpu_custom_call.1} parent=67 // pred_region
          %476 = dma.done [#allocation3], 768
        $region72: #{tpu_custom_call.1} parent=67 // pred_fallthru
          _
        // Predicated region
        $region73: #{tpu_custom_call.1} parent=67 // pred_check
          %p477 = pneg %p95
        $region74: #{tpu_custom_call.1} parent=67 // pred_check_branch
          %479 = sbr.rel (%p477) target = $region76
        $region75: #{tpu_custom_call.1} parent=67 // pred_region
          %480 = dma.done [#allocation6], 32
        $region76: #{tpu_custom_call.1} parent=67 // pred_fallthru
          _
        // Predicated region
        $region77: #{tpu_custom_call.1} parent=67 // pred_check
          %p481 = pneg %p116
        $region78: #{tpu_custom_call.1} parent=67 // pred_check_branch
          %483 = sbr.rel (%p481) target = $region80
        $region79: #{tpu_custom_call.1} parent=67 // pred_region
          %484 = dma.done [#allocation6], 16
        $region80: #{tpu_custom_call.1} parent=67 // pred_fallthru
          _
        // Predicated region
        $region81: #{tpu_custom_call.1} parent=67 // pred_check
          %p485 = pneg %p137
        $region82: #{tpu_custom_call.1} parent=67 // pred_check_branch
          %487 = sbr.rel (%p485) target = $region84
        $region83: #{tpu_custom_call.1} parent=67 // pred_region
          %488 = dma.done [#allocation9], 16
        $region84: #{tpu_custom_call.1} parent=67 // pred_fallthru
          _
        // Predicated region
        $region85: #{tpu_custom_call.1} parent=67 // pred_check
          %p489 = pneg %p158
        $region86: #{tpu_custom_call.1} parent=67 // pred_check_branch
          %491 = sbr.rel (%p489) target = $region88
        $region87: #{tpu_custom_call.1} parent=67 // pred_region
          %492 = dma.done [#allocation9], 153600
        $region88: #{tpu_custom_call.1} parent=67 // pred_fallthru
          _
        // Predicated region
        $region89: #{tpu_custom_call.1} parent=67 // pred_check
          %p493 = pneg %p179
        $region90: #{tpu_custom_call.1} parent=67 // pred_check_branch
          %495 = sbr.rel (%p493) target = $region92
        $region91: #{tpu_custom_call.1} parent=67 // pred_region
          %496 = dma.done [#allocation12], 96
        $region92: #{tpu_custom_call.1} parent=67 // pred_fallthru
          _
        // Predicated region
        $region93: #{tpu_custom_call.1} parent=67 // pred_check
          %p497 = pneg %p200
        $region94: #{tpu_custom_call.1} parent=67 // pred_check_branch
          %499 = sbr.rel (%p497) target = $region96
        $region95: #{tpu_custom_call.1} parent=67 // pred_region
          %500 = dma.done [#allocation12], 96
        $region96: #{tpu_custom_call.1} parent=67 // pred_fallthru
          _
        // Predicated region
        $region97: #{tpu_custom_call.1} parent=67 // pred_check
          %p501 = pneg %p221
        $region98: #{tpu_custom_call.1} parent=67 // pred_check_branch
          %503 = sbr.rel (%p501) target = $region100
        $region99: #{tpu_custom_call.1} parent=67 // pred_region
          %504 = dma.done [#allocation15], 12288
        $region100: #{tpu_custom_call.1} parent=67 // pred_fallthru
          _
        // Predicated region
        $region101: #{tpu_custom_call.1} parent=67 // pred_check
          %p505 = pneg %p242
        $region102: #{tpu_custom_call.1} parent=67 // pred_check_branch
          %507 = sbr.rel (%p505) target = $region104
        $region103: #{tpu_custom_call.1} parent=67 // pred_region
          %508 = dma.done [#allocation15], 32
        $region104: #{tpu_custom_call.1} parent=67 // pred_fallthru
          _
        // Predicated region
        $region105: #{tpu_custom_call.1} parent=67 // pred_check
          %p509 = pneg %p263
        $region106: #{tpu_custom_call.1} parent=67 // pred_check_branch
          %511 = sbr.rel (%p509) target = $region108
        $region107: #{tpu_custom_call.1} parent=67 // pred_region
          %512 = dma.done [#allocation18], 2048
        $region108: #{tpu_custom_call.1} parent=67 // pred_fallthru
          _
        // Predicated region
        $region109: #{tpu_custom_call.1} parent=67 // pred_check
          %p513 = pneg %p284
        $region110: #{tpu_custom_call.1} parent=67 // pred_check_branch
          %515 = sbr.rel (%p513) target = $region112
        $region111: #{tpu_custom_call.1} parent=67 // pred_region
          %516 = dma.done [#allocation18], 16
        $region112: #{tpu_custom_call.1} parent=67 // pred_fallthru
          _
        %p517 = scmp.lt.s32.totalorder %s32, 1
        %s518 = scalar_select %p517, %s32, 1
        %s519 = smul.addr %s518, 37
        %s520 = smul.addr %s519, 4
        %s521 = scalar_lea.vmem %s0, %s520
        %p522 = pneg %p53
        %p523 = pneg %p50
        %p524 = pneg %p74
        %p525 = pneg %p71
        %p526 = pneg %p95
        %p527 = pneg %p92
        %p528 = pneg %p116
        %p529 = pneg %p113
        %p530 = pneg %p137
        %p531 = pneg %p134
        %p532 = pneg %p158
        %p533 = pneg %p155
        %p534 = pneg %p179
        %p535 = pneg %p176
        %p536 = pneg %p200
        %p537 = pneg %p197
        %p538 = pneg %p221
        %p539 = pneg %p218
        %p540 = pneg %p242
        %p541 = pneg %p239
        %p542 = pneg %p263
        %p543 = pneg %p260
        %p544 = pneg %p284
        %p545 = pneg %p281
        %p546 = pneg %p310
        %p547 = pneg %p307
        %s548 = sand.u32 %s297, 1
        %s549 = scalar_lea.sflag [#allocation4], %s548
        %s550 = sand.u32 %s297, 1
        %s551 = scalar_lea.vmem [#allocation20], %s550
        %p552 = scmp.lt.s32.totalorder %s32, 1
        %s553 = scalar_select %p552, %s32, 1
        %s554 = smul.addr %s553, 37
        %s555 = smul.addr %s554, 4
        %s556 = scalar_lea.vmem %s0, %s555
        %v558 = vld [vmem:[%s556] sm:$0xf]
        %v559 = vld [vmem:[%s556 + $0x4] sm:$0xf]
        %v560 = vld [vmem:[%s556 + $0x8] sm:$0xf]
        %v561 = vld [vmem:[%s556 + $0xc] sm:$0xf]
        %v562 = vld [vmem:[%s556 + $0x10] sm:$0xf]
        %v563 = vld [vmem:[%s556 + $0x14] sm:$0xf]
        %v564 = vld [vmem:[%s556 + $0x18] sm:$0xf]
        %v565 = vld [vmem:[%s556 + $0x1c] sm:$0xf]
        %v566 = vld [vmem:[%s556 + $0x20] sm:$0xf]
        %v567 = vld [vmem:[%s556 + $0x24] sm:$0xf]
        %v568 = vld [vmem:[%s556 + $0x28] sm:$0xf]
        %v569 = vld [vmem:[%s556 + $0x2c] sm:$0xf]
        %v570 = vld [vmem:[%s556 + $0x30] sm:$0xf]
        %v571 = vld [vmem:[%s556 + $0x34] sm:$0xf]
        %v572 = vld [vmem:[%s556 + $0x38] sm:$0xf]
        %v573 = vld [vmem:[%s556 + $0x3c] sm:$0xf]
        %v574 = vld [vmem:[%s556 + $0x40] sm:$0xf]
        %v575 = vld [vmem:[%s556 + $0x44] sm:$0xf]
        %v576 = vld [vmem:[%s556 + $0x48] sm:$0xf]
        %v577 = vld [vmem:[%s556 + $0x4c] sm:$0xf]
        %v578 = vld [vmem:[%s556 + $0x50] sm:$0xf]
        %v579 = vld [vmem:[%s556 + $0x54] sm:$0xf]
        %v580 = vld [vmem:[%s556 + $0x58] sm:$0xf]
        %v581 = vld [vmem:[%s556 + $0x5c] sm:$0xf]
        %v582 = vld [vmem:[%s556 + $0x60] sm:$0xf]
        %v583 = vld [vmem:[%s556 + $0x64] sm:$0xf]
        %v584 = vld [vmem:[%s556 + $0x68] sm:$0xf]
        %v585 = vld [vmem:[%s556 + $0x6c] sm:$0xf]
        %v586 = vld [vmem:[%s556 + $0x70] sm:$0xf]
        %v587 = vld [vmem:[%s556 + $0x74] sm:$0xf]
        %v588 = vld [vmem:[%s556 + $0x78] sm:$0xf]
        %v589 = vld [vmem:[%s556 + $0x7c] sm:$0xf]
        %v590 = vld [vmem:[%s556 + $0x80] sm:$0xf]
        %v591 = vld [vmem:[%s556 + $0x84] sm:$0xf]
        %v592 = vld [vmem:[%s556 + $0x88] sm:$0xf]
        %v593 = vld [vmem:[%s556 + $0x8c] sm:$0xf]
        %v594 = vld [vmem:[%s556 + $0x90] sm:$0x1]
        %v595 = vld [vmem:[#allocation2] sm:$0xff]
        %v596 = vld [vmem:[#allocation2 + $0x8] sm:$0xf]
        %v597 = vld [vmem:[#allocation2 + $0xc] sm:$0xff]
        %v598 = vld [vmem:[#allocation2 + $0x14] sm:$0xf]
        %v599 = vld [vmem:[#allocation2 + $0x18] sm:$0xff]
        %v600 = vld [vmem:[#allocation2 + $0x20] sm:$0xf]
        %v601 = vld [vmem:[#allocation2 + $0x24] sm:$0x11]
        %v602 = vld [vmem:[#allocation2 + $0x2c] sm:$0x1]
        %v611 = vunpack.c.l.b16 %v595
        %v612 = vunpack.c.h.b16 %v595
        %v613 = vunpack.c.l.b16 %v596
        %v614 = vunpack.c.l.b16 %v597
        %v615 = vunpack.c.h.b16 %v597
        %v616 = vunpack.c.l.b16 %v598
        %v617 = vunpack.c.l.b16 %v599
        %v618 = vunpack.c.h.b16 %v599
        %v619 = vunpack.c.l.b16 %v600
        %v620 = vunpack.c.l.b16 %v601
        %v621 = vunpack.c.h.b16 %v601
        %v622 = vunpack.c.l.b16 %v602
        %v623 = vpack.c.b16 %v614, %v611
        %v624 = vpack.c.b16 %v615, %v612
        %v625 = vpack.c.b16 %v616, %v613
        %v626 = vpack.c.b16 %v620, %v617
        %v627 = vpack.c.b16 %v621, %v618
        %v628 = vpack.c.b16 %v622, %v619
        %v670 = vunpack.c.l.b16 %v558
        %v671 = vunpack.c.l.b16 %v559
        %v672 = vunpack.c.l.b16 %v560
        %v673 = vunpack.c.l.b16 %v561
        %v674 = vunpack.c.l.b16 %v562
        %v675 = vunpack.c.l.b16 %v563
        %v676 = vunpack.c.l.b16 %v564
        %v677 = vunpack.c.l.b16 %v565
        %v678 = vunpack.c.l.b16 %v566
        %v679 = vunpack.c.l.b16 %v567
        %v680 = vunpack.c.l.b16 %v568
        %v681 = vunpack.c.l.b16 %v569
        %v682 = vunpack.c.l.b16 %v570
        %v683 = vunpack.c.l.b16 %v571
        %v684 = vunpack.c.l.b16 %v572
        %v685 = vunpack.c.l.b16 %v573
        %v686 = vunpack.c.l.b16 %v574
        %v687 = vunpack.c.l.b16 %v575
        %v688 = vunpack.c.l.b16 %v576
        %v689 = vunpack.c.l.b16 %v577
        %v690 = vunpack.c.l.b16 %v578
        %v691 = vunpack.c.l.b16 %v579
        %v692 = vunpack.c.l.b16 %v580
        %v693 = vunpack.c.l.b16 %v581
        %v694 = vunpack.c.l.b16 %v582
        %v695 = vunpack.c.l.b16 %v583
        %v696 = vunpack.c.l.b16 %v584
        %v697 = vunpack.c.l.b16 %v585
        %v698 = vunpack.c.l.b16 %v586
        %v699 = vunpack.c.l.b16 %v587
        %v700 = vunpack.c.l.b16 %v588
        %v701 = vunpack.c.l.b16 %v589
        %v702 = vunpack.c.l.b16 %v590
        %v703 = vunpack.c.l.b16 %v591
        %v704 = vunpack.c.l.b16 %v592
        %v705 = vunpack.c.l.b16 %v593
        %v706 = vunpack.c.l.b16 %v594
        %v707 = vpack.c.b16 %v671, %v670
        %v708 = vpack.c.b16 %v673, %v672
        %v709 = vpack.c.b16 %v675, %v674
        %v710 = vpack.c.b16 %v677, %v676
        %v711 = vpack.c.b16 %v679, %v678
        %v712 = vpack.c.b16 %v681, %v680
        %v713 = vpack.c.b16 %v683, %v682
        %v714 = vpack.c.b16 %v685, %v684
        %v715 = vpack.c.b16 %v687, %v686
        %v716 = vpack.c.b16 %v689, %v688
        %v717 = vpack.c.b16 %v691, %v690
        %v718 = vpack.c.b16 %v693, %v692
        %v719 = vpack.c.b16 %v695, %v694
        %v720 = vpack.c.b16 %v697, %v696
        %v721 = vpack.c.b16 %v699, %v698
        %v722 = vpack.c.b16 %v701, %v700
        %v723 = vpack.c.b16 %v703, %v702
        %v724 = vpack.c.b16 %v705, %v704
        %v725 = vpack.c.b16 %v706, %v706
        %vm744 = vcmask 269312
        %v746 = vsel %vm744, %v625, 0
        %v749 = vsel %vm744, %v628, 0
        %vm751 = vcmask 1040384
        %v752 = vsel 0, 4294967295, 65535
        %v753 = vsel %vm751, %v752, 0
        %v755 = vand.u32 %v725, %v753
        %757 = vmatprep.subr.bf16.mxu0 0
        %758 = vmatpush1.bf16.msra.mxu0 %v707
        %759 = vmatprep.subr.bf16.mxu0 0
        %760 = vmatpush1.bf16.msra.mxu0 %v708
        %761 = vmatprep.subr.bf16.mxu0 0
        %762 = vmatpush1.bf16.msra.mxu0 %v709
        %763 = vmatprep.subr.bf16.mxu0 0
        %764 = vmatpush1.bf16.msra.mxu0 %v710
        %765 = vmatprep.subr.bf16.mxu0 0
        %766 = vmatpush1.bf16.msra.mxu0 %v711
        %767 = vmatprep.subr.bf16.mxu0 0
        %768 = vmatpush1.bf16.msra.mxu0 %v712
        %769 = vmatprep.subr.bf16.mxu0 0
        %770 = vmatpush1.bf16.msra.mxu0 %v713
        %771 = vmatprep.subr.bf16.mxu0 0
        %772 = vmatpush1.bf16.msra.mxu0 %v714
        %773 = vmatprep.subr.bf16.mxu0 0
        %774 = vmatpush1.bf16.msra.mxu0 %v715
        %775 = vmatprep.subr.bf16.mxu0 0
        %776 = vmatpush1.bf16.msra.mxu0 %v716
        %777 = vmatprep.subr.bf16.mxu0 0
        %778 = vmatpush1.bf16.msra.mxu0 %v717
        %779 = vmatprep.subr.bf16.mxu0 0
        %780 = vmatpush1.bf16.msra.mxu0 %v718
        %781 = vmatprep.subr.bf16.mxu0 0
        %782 = vmatpush1.bf16.msra.mxu0 %v719
        %783 = vmatprep.subr.bf16.mxu0 0
        %784 = vmatpush1.bf16.msra.mxu0 %v720
        %785 = vmatprep.subr.bf16.mxu0 0
        %786 = vmatpush1.bf16.msra.mxu0 %v721
        %787 = vmatprep.subr.bf16.mxu0 0
        %788 = vmatpush1.bf16.msra.mxu0 %v722
        %789 = vmatprep.mubr.bf16.mxu0 %v624
        %790 = vmatmul.mubr.bf16.gmra.mrb[0].mxu0 %v623
        %v791 = vpop.f32.mrb[0].mxu0
        %v792 = vadd.f32 0.0, %v791
        %v793 = vpop.f32.mrb[0].mxu0
        %v794 = vpop.f32.mrb[0].mxu0
        %v795 = vadd.f32 0.0, %v794
        %v796 = vpop.f32.mrb[0].mxu0
        %797 = vmatprep.mubr.bf16.mxu0 %v627
        %798 = vmatmul.mubr.bf16.gmra.mrb[0].mxu0 %v626
        %v799 = vpop.f32.mrb[0].mxu0
        %v800 = vadd.f32 0.0, %v799
        %v801 = vpop.f32.mrb[0].mxu0
        %v802 = vpop.f32.mrb[0].mxu0
        %v803 = vadd.f32 0.0, %v802
        %v804 = vpop.f32.mrb[0].mxu0
        %805 = vdwg.mxu0
        %806 = vmatprep.subr.bf16.mxu0 0
        %807 = vmatpush1.bf16.msra.mxu0 %v723
        %808 = vmatprep.subr.bf16.mxu0 0
        %809 = vmatpush1.bf16.msra.mxu0 %v724
        %810 = vmatprep.subr.bf16.mxu0 0
        %811 = vmatpush1.bf16.msra.mxu0 %v755
        %812 = vmatprep.subr.bf16.mxu0 0
        %813 = vmatpush1.bf16.msra.mxu0 0
        %814 = vmatprep.subr.bf16.mxu0 0
        %815 = vmatpush1.bf16.msra.mxu0 0
        %816 = vmatprep.subr.bf16.mxu0 0
        %817 = vmatpush1.bf16.msra.mxu0 0
        %818 = vmatprep.subr.bf16.mxu0 0
        %819 = vmatpush1.bf16.msra.mxu0 0
        %820 = vmatprep.subr.bf16.mxu0 0
        %821 = vmatpush1.bf16.msra.mxu0 0
        %822 = vmatprep.subr.bf16.mxu0 0
        %823 = vmatpush1.bf16.msra.mxu0 0
        %824 = vmatprep.subr.bf16.mxu0 0
        %825 = vmatpush1.bf16.msra.mxu0 0
        %826 = vmatprep.subr.bf16.mxu0 0
        %827 = vmatpush1.bf16.msra.mxu0 0
        %828 = vmatprep.subr.bf16.mxu0 0
        %829 = vmatpush1.bf16.msra.mxu0 0
        %830 = vmatprep.subr.bf16.mxu0 0
        %831 = vmatpush1.bf16.msra.mxu0 0
        %832 = vmatprep.subr.bf16.mxu0 0
        %833 = vmatpush1.bf16.msra.mxu0 0
        %834 = vmatprep.subr.bf16.mxu0 0
        %835 = vmatpush1.bf16.msra.mxu0 0
        %836 = vmatprep.subr.bf16.mxu0 0
        %837 = vmatpush1.bf16.msra.mxu0 0
        %838 = vmatprep.mubr.bf16.mxu0 0
        %839 = vmatmul.mubr.bf16.gmra.mrb[0].mxu0 %v746
        %v840 = vpop.f32.mrb[0].mxu0
        %v841 = vadd.f32 %v792, %v840
        %v842 = vpop.f32.mrb[0].mxu0
        %v843 = vpop.f32.mrb[0].mxu0
        %v844 = vadd.f32 %v795, %v843
        %v845 = vpop.f32.mrb[0].mxu0
        %846 = vmatprep.mubr.bf16.mxu0 0
        %847 = vmatmul.mubr.bf16.gmra.mrb[0].mxu0 %v749
        %v848 = vpop.f32.mrb[0].mxu0
        %v849 = vadd.f32 %v800, %v848
        %v850 = vpop.f32.mrb[0].mxu0
        %v851 = vpop.f32.mrb[0].mxu0
        %v852 = vadd.f32 %v803, %v851
        %v853 = vpop.f32.mrb[0].mxu0
        %854 = vdwg.mxu0
        %v855 = vpack.c.bf16 %v844, %v841
        %v856 = vpack.c.bf16 %v852, %v849
        %v857 = vld [vmem:[#allocation5] sm:$0x3]
        %vm858 = vcmask 31744
        %v860 = vsel %vm858, %v855, 0
        %v863 = vsel %vm858, %v856, 0
        %vm865 = vcmask 1041408
        %v867 = vsel %vm865, %v857, 0
        %869 = vmatprep.subr.bf16.mxu0 0
        %870 = vmatpush1.bf16.msra.mxu0 %v867
        %871 = vmatprep.subr.bf16.mxu0 0
        %872 = vmatpush1.bf16.msra.mxu0 0
        %873 = vmatprep.subr.bf16.mxu0 0
        %874 = vmatpush1.bf16.msra.mxu0 0
        %875 = vmatprep.subr.bf16.mxu0 0
        %876 = vmatpush1.bf16.msra.mxu0 0
        %877 = vmatprep.subr.bf16.mxu0 0
        %878 = vmatpush1.bf16.msra.mxu0 0
        %879 = vmatprep.subr.bf16.mxu0 0
        %880 = vmatpush1.bf16.msra.mxu0 0
        %881 = vmatprep.subr.bf16.mxu0 0
        %882 = vmatpush1.bf16.msra.mxu0 0
        %883 = vmatprep.subr.bf16.mxu0 0
        %884 = vmatpush1.bf16.msra.mxu0 0
        %885 = vmatprep.subr.bf16.mxu0 0
        %886 = vmatpush1.bf16.msra.mxu0 0
        %887 = vmatprep.subr.bf16.mxu0 0
        %888 = vmatpush1.bf16.msra.mxu0 0
        %889 = vmatprep.subr.bf16.mxu0 0
        %890 = vmatpush1.bf16.msra.mxu0 0
        %891 = vmatprep.subr.bf16.mxu0 0
        %892 = vmatpush1.bf16.msra.mxu0 0
        %893 = vmatprep.subr.bf16.mxu0 0
        %894 = vmatpush1.bf16.msra.mxu0 0
        %895 = vmatprep.subr.bf16.mxu0 0
        %896 = vmatpush1.bf16.msra.mxu0 0
        %897 = vmatprep.subr.bf16.mxu0 0
        %898 = vmatpush1.bf16.msra.mxu0 0
        %899 = vmatprep.subr.bf16.mxu0 0
        %900 = vmatpush1.bf16.msra.mxu0 0
        %901 = vmatprep.mubr.bf16.mxu0 0
        %902 = vmatmul.mubr.bf16.gmra.mrb[0].mxu0 %v860
        %v903 = vpop.f32.mrb[0].mxu0
        %v904 = vadd.f32 0.0, %v903
        %v905 = vpop.f32.mrb[0].mxu0
        %v906 = vpop.f32.mrb[0].mxu0
        %v907 = vadd.f32 0.0, %v906
        %v908 = vpop.f32.mrb[0].mxu0
        %909 = vmatprep.mubr.bf16.mxu0 0
        %910 = vmatmul.mubr.bf16.gmra.mrb[0].mxu0 %v863
        %v911 = vpop.f32.mrb[0].mxu0
        %v912 = vadd.f32 0.0, %v911
        %v913 = vpop.f32.mrb[0].mxu0
        %v914 = vpop.f32.mrb[0].mxu0
        %v915 = vadd.f32 0.0, %v914
        %v916 = vpop.f32.mrb[0].mxu0
        %917 = vdwg.mxu0
        %v918 = vld [vmem:[#allocation7] sm:$0x1]
        %v920 = vlaneseq
        %v921 = vshrl.u32 %v920, 7
        %v922 = vsub.s32 0, %v921
        %v923 = vrot.slane %v918, %v922
        %v925 = vmul.f32 %v904, %v923
        %v926 = vmul.f32 %v907, %v923
        %v927 = vmul.f32 %v912, %v923
        %v928 = vmul.f32 %v915, %v923
        %v929 = vld [vmem:[#allocation8] sm:$0x1]
        %v931 = vlaneseq
        %v932 = vshrl.u32 %v931, 7
        %v933 = vsub.s32 0, %v932
        %v934 = vrot.slane %v929, %v933
        %v936 = vadd.f32 %v925, %v934
        %v937 = vadd.f32 %v926, %v934
        %v938 = vadd.f32 %v927, %v934
        %v939 = vadd.f32 %v928, %v934
        %v940 = vmax.f32 %v936, 0.0
        %v941 = vmax.f32 %v937, 0.0
        %v942 = vmax.f32 %v938, 0.0
        %v943 = vmax.f32 %v939, 0.0
        %v944 = vpack.c.bf16 %v940, %v940
        %v945 = vld [vmem:[#allocation10] sm:$0xff]
        %v946 = vld [vmem:[#allocation10 + $0x8] sm:$0xff]
        %v947 = vld [vmem:[#allocation10 + $0x10] sm:$0xff]
        %v948 = vld [vmem:[#allocation10 + $0x18] sm:$0xff]
        %v949 = vld [vmem:[#allocation10 + $0x20] sm:$0xff]
        %v950 = vld [vmem:[#allocation10 + $0x28] sm:$0xff]
        %v951 = vld [vmem:[#allocation10 + $0x30] sm:$0xff]
        %v952 = vld [vmem:[#allocation10 + $0x38] sm:$0xff]
        %v953 = vld [vmem:[#allocation10 + $0x40] sm:$0xff]
        %v954 = vld [vmem:[#allocation10 + $0x48] sm:$0xff]
        %v955 = vld [vmem:[#allocation10 + $0x50] sm:$0xff]
        %v956 = vld [vmem:[#allocation10 + $0x58] sm:$0xff]
        %v957 = vld [vmem:[#allocation10 + $0x60] sm:$0xff]
        %v958 = vld [vmem:[#allocation10 + $0x68] sm:$0xff]
        %v959 = vld [vmem:[#allocation10 + $0x70] sm:$0xff]
        %v960 = vld [vmem:[#allocation10 + $0x78] sm:$0xff]
        %v961 = vld [vmem:[#allocation10 + $0x80] sm:$0xff]
        %v962 = vld [vmem:[#allocation10 + $0x88] sm:$0xff]
        %v963 = vld [vmem:[#allocation10 + $0x90] sm:$0xff]
        %v964 = vld [vmem:[#allocation10 + $0x98] sm:$0xff]
        %v965 = vld [vmem:[#allocation10 + $0xa0] sm:$0xff]
        %v966 = vld [vmem:[#allocation10 + $0xa8] sm:$0xff]
        %v967 = vld [vmem:[#allocation10 + $0xb0] sm:$0xff]
        %v968 = vld [vmem:[#allocation10 + $0xb8] sm:$0xff]
        %v969 = vld [vmem:[#allocation10 + $0xc0] sm:$0xff]
        %v970 = vld [vmem:[#allocation10 + $0xc8] sm:$0xff]
        %v971 = vld [vmem:[#allocation10 + $0xd0] sm:$0xff]
        %v972 = vld [vmem:[#allocation10 + $0xd8] sm:$0xff]
        %v973 = vld [vmem:[#allocation10 + $0xe0] sm:$0xff]
        %v974 = vld [vmem:[#allocation10 + $0xe8] sm:$0xff]
        %v975 = vld [vmem:[#allocation10 + $0xf0] sm:$0xff]
        %v976 = vld [vmem:[#allocation10 + $0xf8] sm:$0xff]
        %v977 = vld [vmem:[#allocation10 + $0x100] sm:$0xff]
        %v978 = vld [vmem:[#allocation10 + $0x108] sm:$0xff]
        %v979 = vld [vmem:[#allocation10 + $0x110] sm:$0xff]
        %v980 = vld [vmem:[#allocation10 + $0x118] sm:$0xff]
        %v981 = vld [vmem:[#allocation10 + $0x120] sm:$0xff]
        %v982 = vld [vmem:[#allocation10 + $0x128] sm:$0xff]
        %v983 = vld [vmem:[#allocation10 + $0x130] sm:$0xff]
        %v984 = vld [vmem:[#allocation10 + $0x138] sm:$0xff]
        %v985 = vld [vmem:[#allocation10 + $0x140] sm:$0xff]
        %v986 = vld [vmem:[#allocation10 + $0x148] sm:$0xff]
        %v987 = vld [vmem:[#allocation10 + $0x150] sm:$0xff]
        %v988 = vld [vmem:[#allocation10 + $0x158] sm:$0xff]
        %v989 = vld [vmem:[#allocation10 + $0x160] sm:$0xff]
        %v990 = vld [vmem:[#allocation10 + $0x168] sm:$0xff]
        %v991 = vld [vmem:[#allocation10 + $0x170] sm:$0xff]
        %v992 = vld [vmem:[#allocation10 + $0x178] sm:$0xff]
        %s993 = scalar_lea.vmem [#allocation10], 384
        %v994 = vld [vmem:[%s993] sm:$0xff]
        %v995 = vld [vmem:[%s993 + $0x8] sm:$0xff]
        %v996 = vld [vmem:[%s993 + $0x10] sm:$0xff]
        %v997 = vld [vmem:[%s993 + $0x18] sm:$0xff]
        %v998 = vld [vmem:[%s993 + $0x20] sm:$0xff]
        %v999 = vld [vmem:[%s993 + $0x28] sm:$0xff]
        %v1000 = vld [vmem:[%s993 + $0x30] sm:$0xff]
        %v1001 = vld [vmem:[%s993 + $0x38] sm:$0xff]
        %v1002 = vld [vmem:[%s993 + $0x40] sm:$0xff]
        %v1003 = vld [vmem:[%s993 + $0x48] sm:$0xff]
        %v1004 = vld [vmem:[%s993 + $0x50] sm:$0xff]
        %v1005 = vld [vmem:[%s993 + $0x58] sm:$0xff]
        %v1006 = vld [vmem:[%s993 + $0x60] sm:$0xff]
        %v1007 = vld [vmem:[%s993 + $0x68] sm:$0xff]
        %v1008 = vld [vmem:[%s993 + $0x70] sm:$0xff]
        %v1009 = vld [vmem:[%s993 + $0x78] sm:$0xff]
        %v1010 = vld [vmem:[%s993 + $0x80] sm:$0xff]
        %v1011 = vld [vmem:[%s993 + $0x88] sm:$0xff]
        %v1012 = vld [vmem:[%s993 + $0x90] sm:$0xff]
        %v1013 = vld [vmem:[%s993 + $0x98] sm:$0xff]
        %v1014 = vld [vmem:[%s993 + $0xa0] sm:$0xff]
        %v1015 = vld [vmem:[%s993 + $0xa8] sm:$0xff]
        %v1016 = vld [vmem:[%s993 + $0xb0] sm:$0xff]
        %v1017 = vld [vmem:[%s993 + $0xb8] sm:$0xff]
        %v1018 = vld [vmem:[%s993 + $0xc0] sm:$0xff]
        %v1019 = vld [vmem:[%s993 + $0xc8] sm:$0xff]
        %v1020 = vld [vmem:[%s993 + $0xd0] sm:$0xff]
        %v1021 = vld [vmem:[%s993 + $0xd8] sm:$0xff]
        %v1022 = vld [vmem:[%s993 + $0xe0] sm:$0xff]
        %v1023 = vld [vmem:[%s993 + $0xe8] sm:$0xff]
        %v1024 = vld [vmem:[%s993 + $0xf0] sm:$0xff]
        %v1025 = vld [vmem:[%s993 + $0xf8] sm:$0xff]
        %v1026 = vld [vmem:[%s993 + $0x100] sm:$0xff]
        %v1027 = vld [vmem:[%s993 + $0x108] sm:$0xff]
        %v1028 = vld [vmem:[%s993 + $0x110] sm:$0xff]
        %v1029 = vld [vmem:[%s993 + $0x118] sm:$0xff]
        %v1030 = vld [vmem:[%s993 + $0x120] sm:$0xff]
        %v1031 = vld [vmem:[%s993 + $0x128] sm:$0xff]
        %v1032 = vld [vmem:[%s993 + $0x130] sm:$0xff]
        %v1033 = vld [vmem:[%s993 + $0x138] sm:$0xff]
        %v1034 = vld [vmem:[%s993 + $0x140] sm:$0xff]
        %v1035 = vld [vmem:[%s993 + $0x148] sm:$0xff]
        %v1036 = vld [vmem:[%s993 + $0x150] sm:$0xff]
        %v1037 = vld [vmem:[%s993 + $0x158] sm:$0xff]
        %v1038 = vld [vmem:[%s993 + $0x160] sm:$0xff]
        %v1039 = vld [vmem:[%s993 + $0x168] sm:$0xff]
        %v1040 = vld [vmem:[%s993 + $0x170] sm:$0xff]
        %v1041 = vld [vmem:[%s993 + $0x178] sm:$0xff]
        %v1043 = vshrl.u32 %v944, 16
        %v1094 = vunpack.c.l.b16 %v994
        %v1095 = vunpack.c.h.b16 %v994
        %v1096 = vunpack.c.l.b16 %v995
        %v1097 = vunpack.c.h.b16 %v995
        %v1098 = vunpack.c.l.b16 %v996
        %v1099 = vunpack.c.h.b16 %v996
        %v1100 = vunpack.c.l.b16 %v997
        %v1101 = vunpack.c.h.b16 %v997
        %v1102 = vunpack.c.l.b16 %v998
        %v1103 = vunpack.c.h.b16 %v998
        %v1104 = vunpack.c.l.b16 %v999
        %v1105 = vunpack.c.h.b16 %v999
        %v1106 = vunpack.c.l.b16 %v1000
        %v1107 = vunpack.c.h.b16 %v1000
        %v1108 = vunpack.c.l.b16 %v1001
        %v1109 = vunpack.c.h.b16 %v1001
        %v1110 = vunpack.c.l.b16 %v1002
        %v1111 = vunpack.c.h.b16 %v1002
        %v1112 = vunpack.c.l.b16 %v1003
        %v1113 = vunpack.c.h.b16 %v1003
        %v1114 = vunpack.c.l.b16 %v1004
        %v1115 = vunpack.c.h.b16 %v1004
        %v1116 = vunpack.c.l.b16 %v1005
        %v1117 = vunpack.c.h.b16 %v1005
        %v1118 = vunpack.c.l.b16 %v1006
        %v1119 = vunpack.c.h.b16 %v1006
        %v1120 = vunpack.c.l.b16 %v1007
        %v1121 = vunpack.c.h.b16 %v1007
        %v1122 = vunpack.c.l.b16 %v1008
        %v1123 = vunpack.c.h.b16 %v1008
        %v1124 = vunpack.c.l.b16 %v1009
        %v1125 = vunpack.c.h.b16 %v1009
        %v1126 = vunpack.c.l.b16 %v1010
        %v1127 = vunpack.c.h.b16 %v1010
        %v1128 = vunpack.c.l.b16 %v1011
        %v1129 = vunpack.c.h.b16 %v1011
        %v1130 = vunpack.c.l.b16 %v1012
        %v1131 = vunpack.c.h.b16 %v1012
        %v1132 = vunpack.c.l.b16 %v1013
        %v1133 = vunpack.c.h.b16 %v1013
        %v1134 = vunpack.c.l.b16 %v1014
        %v1135 = vunpack.c.h.b16 %v1014
        %v1136 = vunpack.c.l.b16 %v1015
        %v1137 = vunpack.c.h.b16 %v1015
        %v1138 = vunpack.c.l.b16 %v1016
        %v1139 = vunpack.c.h.b16 %v1016
        %v1140 = vunpack.c.l.b16 %v1017
        %v1141 = vunpack.c.h.b16 %v1017
        %v1142 = vunpack.c.l.b16 %v1018
        %v1143 = vunpack.c.h.b16 %v1018
        %v1144 = vunpack.c.l.b16 %v1019
        %v1145 = vunpack.c.h.b16 %v1019
        %v1146 = vunpack.c.l.b16 %v1020
        %v1147 = vunpack.c.h.b16 %v1020
        %v1148 = vunpack.c.l.b16 %v1021
        %v1149 = vunpack.c.h.b16 %v1021
        %v1150 = vunpack.c.l.b16 %v1022
        %v1151 = vunpack.c.h.b16 %v1022
        %v1152 = vunpack.c.l.b16 %v1023
        %v1153 = vunpack.c.h.b16 %v1023
        %v1154 = vunpack.c.l.b16 %v1024
        %v1155 = vunpack.c.h.b16 %v1024
        %v1156 = vunpack.c.l.b16 %v1025
        %v1157 = vunpack.c.h.b16 %v1025
        %v1158 = vunpack.c.l.b16 %v1026
        %v1159 = vunpack.c.h.b16 %v1026
        %v1160 = vunpack.c.l.b16 %v1027
        %v1161 = vunpack.c.h.b16 %v1027
        %v1162 = vunpack.c.l.b16 %v1028
        %v1163 = vunpack.c.h.b16 %v1028
        %v1164 = vunpack.c.l.b16 %v1029
        %v1165 = vunpack.c.h.b16 %v1029
        %v1166 = vunpack.c.l.b16 %v1030
        %v1167 = vunpack.c.h.b16 %v1030
        %v1168 = vunpack.c.l.b16 %v1031
        %v1169 = vunpack.c.h.b16 %v1031
        %v1170 = vunpack.c.l.b16 %v1032
        %v1171 = vunpack.c.h.b16 %v1032
        %v1172 = vunpack.c.l.b16 %v1033
        %v1173 = vunpack.c.h.b16 %v1033
        %v1174 = vunpack.c.l.b16 %v1034
        %v1175 = vunpack.c.h.b16 %v1034
        %v1176 = vunpack.c.l.b16 %v1035
        %v1177 = vunpack.c.h.b16 %v1035
        %v1178 = vunpack.c.l.b16 %v1036
        %v1179 = vunpack.c.h.b16 %v1036
        %v1180 = vunpack.c.l.b16 %v1037
        %v1181 = vunpack.c.h.b16 %v1037
        %v1182 = vunpack.c.l.b16 %v1038
        %v1183 = vunpack.c.h.b16 %v1038
        %v1184 = vunpack.c.l.b16 %v1039
        %v1185 = vunpack.c.h.b16 %v1039
        %v1186 = vunpack.c.l.b16 %v1040
        %v1187 = vunpack.c.h.b16 %v1040
        %v1188 = vunpack.c.l.b16 %v1041
        %v1189 = vunpack.c.h.b16 %v1041
        %v1190 = vpack.c.b16 %v1100, %v1094
        %v1191 = vpack.c.b16 %v1101, %v1095
        %v1192 = vpack.c.b16 %v1102, %v1096
        %v1193 = vpack.c.b16 %v1103, %v1097
        %v1194 = vpack.c.b16 %v1104, %v1098
        %v1195 = vpack.c.b16 %v1105, %v1099
        %v1196 = vpack.c.b16 %v1112, %v1106
        %v1197 = vpack.c.b16 %v1113, %v1107
        %v1198 = vpack.c.b16 %v1114, %v1108
        %v1199 = vpack.c.b16 %v1115, %v1109
        %v1200 = vpack.c.b16 %v1116, %v1110
        %v1201 = vpack.c.b16 %v1117, %v1111
        %v1202 = vpack.c.b16 %v1124, %v1118
        %v1203 = vpack.c.b16 %v1125, %v1119
        %v1204 = vpack.c.b16 %v1126, %v1120
        %v1205 = vpack.c.b16 %v1127, %v1121
        %v1206 = vpack.c.b16 %v1128, %v1122
        %v1207 = vpack.c.b16 %v1129, %v1123
        %v1208 = vpack.c.b16 %v1136, %v1130
        %v1209 = vpack.c.b16 %v1137, %v1131
        %v1210 = vpack.c.b16 %v1138, %v1132
        %v1211 = vpack.c.b16 %v1139, %v1133
        %v1212 = vpack.c.b16 %v1140, %v1134
        %v1213 = vpack.c.b16 %v1141, %v1135
        %v1214 = vpack.c.b16 %v1148, %v1142
        %v1215 = vpack.c.b16 %v1149, %v1143
        %v1216 = vpack.c.b16 %v1150, %v1144
        %v1217 = vpack.c.b16 %v1151, %v1145
        %v1218 = vpack.c.b16 %v1152, %v1146
        %v1219 = vpack.c.b16 %v1153, %v1147
        %v1220 = vpack.c.b16 %v1160, %v1154
        %v1221 = vpack.c.b16 %v1161, %v1155
        %v1222 = vpack.c.b16 %v1162, %v1156
        %v1223 = vpack.c.b16 %v1163, %v1157
        %v1224 = vpack.c.b16 %v1164, %v1158
        %v1225 = vpack.c.b16 %v1165, %v1159
        %v1226 = vpack.c.b16 %v1172, %v1166
        %v1227 = vpack.c.b16 %v1173, %v1167
        %v1228 = vpack.c.b16 %v1174, %v1168
        %v1229 = vpack.c.b16 %v1175, %v1169
        %v1230 = vpack.c.b16 %v1176, %v1170
        %v1231 = vpack.c.b16 %v1177, %v1171
        %v1232 = vpack.c.b16 %v1184, %v1178
        %v1233 = vpack.c.b16 %v1185, %v1179
        %v1234 = vpack.c.b16 %v1186, %v1180
        %v1235 = vpack.c.b16 %v1187, %v1181
        %v1236 = vpack.c.b16 %v1188, %v1182
        %v1237 = vpack.c.b16 %v1189, %v1183
        %1286 = vmatprep.subr.bf16.mxu0 %v1191
        %1287 = vmatpush1.bf16.msra.mxu0 %v1190
        %1288 = vmatprep.subr.bf16.mxu0 %v1197
        %1289 = vmatpush1.bf16.msra.mxu0 %v1196
        %1290 = vmatprep.subr.bf16.mxu0 %v1203
        %1291 = vmatpush1.bf16.msra.mxu0 %v1202
        %1292 = vmatprep.subr.bf16.mxu0 %v1209
        %1293 = vmatpush1.bf16.msra.mxu0 %v1208
        %1294 = vmatprep.subr.bf16.mxu0 %v1215
        %1295 = vmatpush1.bf16.msra.mxu0 %v1214
        %1296 = vmatprep.subr.bf16.mxu0 %v1221
        %1297 = vmatpush1.bf16.msra.mxu0 %v1220
        %1298 = vmatprep.subr.bf16.mxu0 %v1227
        %1299 = vmatpush1.bf16.msra.mxu0 %v1226
        %1300 = vmatprep.subr.bf16.mxu0 %v1233
        %1301 = vmatpush1.bf16.msra.mxu0 %v1232
        %1302 = vmatprep.subr.bf16.mxu0 0
        %1303 = vmatpush1.bf16.msra.mxu0 0
        %1304 = vmatprep.subr.bf16.mxu0 0
        %1305 = vmatpush1.bf16.msra.mxu0 0
        %1306 = vmatprep.subr.bf16.mxu0 0
        %1307 = vmatpush1.bf16.msra.mxu0 0
        %1308 = vmatprep.subr.bf16.mxu0 0
        %1309 = vmatpush1.bf16.msra.mxu0 0
        %1310 = vmatprep.subr.bf16.mxu0 0
        %1311 = vmatpush1.bf16.msra.mxu0 0
        %1312 = vmatprep.subr.bf16.mxu0 0
        %1313 = vmatpush1.bf16.msra.mxu0 0
        %1314 = vmatprep.subr.bf16.mxu0 0
        %1315 = vmatpush1.bf16.msra.mxu0 0
        %1316 = vmatprep.subr.bf16.mxu0 0
        %1317 = vmatpush1.bf16.msra.mxu0 0
        %1318 = vmatprep.mubr.bf16.mxu0 0
        %1319 = vmatmul.mubr.bf16.gmra.mrb[0].mxu0 %v1043
        %v1320 = vpop.f32.mrb[0].mxu0
        %v1321 = vadd.f32 0.0, %v1320
        %v1322 = vpop.f32.mrb[0].mxu0
        %v1323 = vadd.f32 0.0, %v1322
        %v1324 = vpop.f32.mrb[0].mxu0
        %v1325 = vpop.f32.mrb[0].mxu0
        %1326 = vdwg.mxu0
        %1327 = vmatprep.subr.bf16.mxu0 %v1193
        %1328 = vmatpush1.bf16.msra.mxu0 %v1192
        %1329 = vmatprep.subr.bf16.mxu0 %v1199
        %1330 = vmatpush1.bf16.msra.mxu0 %v1198
        %1331 = vmatprep.subr.bf16.mxu0 %v1205
        %1332 = vmatpush1.bf16.msra.mxu0 %v1204
        %1333 = vmatprep.subr.bf16.mxu0 %v1211
        %1334 = vmatpush1.bf16.msra.mxu0 %v1210
        %1335 = vmatprep.subr.bf16.mxu0 %v1217
        %1336 = vmatpush1.bf16.msra.mxu0 %v1216
        %1337 = vmatprep.subr.bf16.mxu0 %v1223
        %1338 = vmatpush1.bf16.msra.mxu0 %v1222
        %1339 = vmatprep.subr.bf16.mxu0 %v1229
        %1340 = vmatpush1.bf16.msra.mxu0 %v1228
        %1341 = vmatprep.subr.bf16.mxu0 %v1235
        %1342 = vmatpush1.bf16.msra.mxu0 %v1234
        %1343 = vmatprep.subr.bf16.mxu0 0
        %1344 = vmatpush1.bf16.msra.mxu0 0
        %1345 = vmatprep.subr.bf16.mxu0 0
        %1346 = vmatpush1.bf16.msra.mxu0 0
        %1347 = vmatprep.subr.bf16.mxu0 0
        %1348 = vmatpush1.bf16.msra.mxu0 0
        %1349 = vmatprep.subr.bf16.mxu0 0
        %1350 = vmatpush1.bf16.msra.mxu0 0
        %1351 = vmatprep.subr.bf16.mxu0 0
        %1352 = vmatpush1.bf16.msra.mxu0 0
        %1353 = vmatprep.subr.bf16.mxu0 0
        %1354 = vmatpush1.bf16.msra.mxu0 0
        %1355 = vmatprep.subr.bf16.mxu0 0
        %1356 = vmatpush1.bf16.msra.mxu0 0
        %1357 = vmatprep.subr.bf16.mxu0 0
        %1358 = vmatpush1.bf16.msra.mxu0 0
        %1359 = vmatprep.mubr.bf16.mxu0 0
        %1360 = vmatmul.mubr.bf16.gmra.mrb[0].mxu0 %v1043
        %v1361 = vpop.f32.mrb[0].mxu0
        %v1362 = vadd.f32 0.0, %v1361
        %v1363 = vpop.f32.mrb[0].mxu0
        %v1364 = vadd.f32 0.0, %v1363
        %v1365 = vpop.f32.mrb[0].mxu0
        %v1366 = vpop.f32.mrb[0].mxu0
        %1367 = vdwg.mxu0
        %1368 = vmatprep.subr.bf16.mxu0 %v1195
        %1369 = vmatpush1.bf16.msra.mxu0 %v1194
        %1370 = vmatprep.subr.bf16.mxu0 %v1201
        %1371 = vmatpush1.bf16.msra.mxu0 %v1200
        %1372 = vmatprep.subr.bf16.mxu0 %v1207
        %1373 = vmatpush1.bf16.msra.mxu0 %v1206
        %1374 = vmatprep.subr.bf16.mxu0 %v1213
        %1375 = vmatpush1.bf16.msra.mxu0 %v1212
        %1376 = vmatprep.subr.bf16.mxu0 %v1219
        %1377 = vmatpush1.bf16.msra.mxu0 %v1218
        %1378 = vmatprep.subr.bf16.mxu0 %v1225
        %1379 = vmatpush1.bf16.msra.mxu0 %v1224
        %1380 = vmatprep.subr.bf16.mxu0 %v1231
        %1381 = vmatpush1.bf16.msra.mxu0 %v1230
        %1382 = vmatprep.subr.bf16.mxu0 %v1237
        %1383 = vmatpush1.bf16.msra.mxu0 %v1236
        %1384 = vmatprep.subr.bf16.mxu0 0
        %1385 = vmatpush1.bf16.msra.mxu0 0
        %1386 = vmatprep.subr.bf16.mxu0 0
        %1387 = vmatpush1.bf16.msra.mxu0 0
        %1388 = vmatprep.subr.bf16.mxu0 0
        %1389 = vmatpush1.bf16.msra.mxu0 0
        %1390 = vmatprep.subr.bf16.mxu0 0
        %1391 = vmatpush1.bf16.msra.mxu0 0
        %1392 = vmatprep.subr.bf16.mxu0 0
        %1393 = vmatpush1.bf16.msra.mxu0 0
        %1394 = vmatprep.subr.bf16.mxu0 0
        %1395 = vmatpush1.bf16.msra.mxu0 0
        %1396 = vmatprep.subr.bf16.mxu0 0
        %1397 = vmatpush1.bf16.msra.mxu0 0
        %1398 = vmatprep.subr.bf16.mxu0 0
        %1399 = vmatpush1.bf16.msra.mxu0 0
        %1400 = vmatprep.mubr.bf16.mxu0 0
        %1401 = vmatmul.mubr.bf16.gmra.mrb[0].mxu0 %v1043
        %v1402 = vpop.f32.mrb[0].mxu0
        %v1403 = vadd.f32 0.0, %v1402
        %v1404 = vpop.f32.mrb[0].mxu0
        %v1405 = vadd.f32 0.0, %v1404
        %v1406 = vpop.f32.mrb[0].mxu0
        %v1407 = vpop.f32.mrb[0].mxu0
        %1408 = vdwg.mxu0
        %v1457 = vunpack.c.l.b16 %v945
        %v1458 = vunpack.c.h.b16 %v945
        %v1459 = vunpack.c.l.b16 %v946
        %v1460 = vunpack.c.h.b16 %v946
        %v1461 = vunpack.c.l.b16 %v947
        %v1462 = vunpack.c.h.b16 %v947
        %v1463 = vunpack.c.l.b16 %v948
        %v1464 = vunpack.c.h.b16 %v948
        %v1465 = vunpack.c.l.b16 %v949
        %v1466 = vunpack.c.h.b16 %v949
        %v1467 = vunpack.c.l.b16 %v950
        %v1468 = vunpack.c.h.b16 %v950
        %v1469 = vunpack.c.l.b16 %v951
        %v1470 = vunpack.c.h.b16 %v951
        %v1471 = vunpack.c.l.b16 %v952
        %v1472 = vunpack.c.h.b16 %v952
        %v1473 = vunpack.c.l.b16 %v953
        %v1474 = vunpack.c.h.b16 %v953
        %v1475 = vunpack.c.l.b16 %v954
        %v1476 = vunpack.c.h.b16 %v954
        %v1477 = vunpack.c.l.b16 %v955
        %v1478 = vunpack.c.h.b16 %v955
        %v1479 = vunpack.c.l.b16 %v956
        %v1480 = vunpack.c.h.b16 %v956
        %v1481 = vunpack.c.l.b16 %v957
        %v1482 = vunpack.c.h.b16 %v957
        %v1483 = vunpack.c.l.b16 %v958
        %v1484 = vunpack.c.h.b16 %v958
        %v1485 = vunpack.c.l.b16 %v959
        %v1486 = vunpack.c.h.b16 %v959
        %v1487 = vunpack.c.l.b16 %v960
        %v1488 = vunpack.c.h.b16 %v960
        %v1489 = vunpack.c.l.b16 %v961
        %v1490 = vunpack.c.h.b16 %v961
        %v1491 = vunpack.c.l.b16 %v962
        %v1492 = vunpack.c.h.b16 %v962
        %v1493 = vunpack.c.l.b16 %v963
        %v1494 = vunpack.c.h.b16 %v963
        %v1495 = vunpack.c.l.b16 %v964
        %v1496 = vunpack.c.h.b16 %v964
        %v1497 = vunpack.c.l.b16 %v965
        %v1498 = vunpack.c.h.b16 %v965
        %v1499 = vunpack.c.l.b16 %v966
        %v1500 = vunpack.c.h.b16 %v966
        %v1501 = vunpack.c.l.b16 %v967
        %v1502 = vunpack.c.h.b16 %v967
        %v1503 = vunpack.c.l.b16 %v968
        %v1504 = vunpack.c.h.b16 %v968
        %v1505 = vunpack.c.l.b16 %v969
        %v1506 = vunpack.c.h.b16 %v969
        %v1507 = vunpack.c.l.b16 %v970
        %v1508 = vunpack.c.h.b16 %v970
        %v1509 = vunpack.c.l.b16 %v971
        %v1510 = vunpack.c.h.b16 %v971
        %v1511 = vunpack.c.l.b16 %v972
        %v1512 = vunpack.c.h.b16 %v972
        %v1513 = vunpack.c.l.b16 %v973
        %v1514 = vunpack.c.h.b16 %v973
        %v1515 = vunpack.c.l.b16 %v974
        %v1516 = vunpack.c.h.b16 %v974
        %v1517 = vunpack.c.l.b16 %v975
        %v1518 = vunpack.c.h.b16 %v975
        %v1519 = vunpack.c.l.b16 %v976
        %v1520 = vunpack.c.h.b16 %v976
        %v1521 = vunpack.c.l.b16 %v977
        %v1522 = vunpack.c.h.b16 %v977
        %v1523 = vunpack.c.l.b16 %v978
        %v1524 = vunpack.c.h.b16 %v978
        %v1525 = vunpack.c.l.b16 %v979
        %v1526 = vunpack.c.h.b16 %v979
        %v1527 = vunpack.c.l.b16 %v980
        %v1528 = vunpack.c.h.b16 %v980
        %v1529 = vunpack.c.l.b16 %v981
        %v1530 = vunpack.c.h.b16 %v981
        %v1531 = vunpack.c.l.b16 %v982
        %v1532 = vunpack.c.h.b16 %v982
        %v1533 = vunpack.c.l.b16 %v983
        %v1534 = vunpack.c.h.b16 %v983
        %v1535 = vunpack.c.l.b16 %v984
        %v1536 = vunpack.c.h.b16 %v984
        %v1537 = vunpack.c.l.b16 %v985
        %v1538 = vunpack.c.h.b16 %v985
        %v1539 = vunpack.c.l.b16 %v986
        %v1540 = vunpack.c.h.b16 %v986
        %v1541 = vunpack.c.l.b16 %v987
        %v1542 = vunpack.c.h.b16 %v987
        %v1543 = vunpack.c.l.b16 %v988
        %v1544 = vunpack.c.h.b16 %v988
        %v1545 = vunpack.c.l.b16 %v989
        %v1546 = vunpack.c.h.b16 %v989
        %v1547 = vunpack.c.l.b16 %v990
        %v1548 = vunpack.c.h.b16 %v990
        %v1549 = vunpack.c.l.b16 %v991
        %v1550 = vunpack.c.h.b16 %v991
        %v1551 = vunpack.c.l.b16 %v992
        %v1552 = vunpack.c.h.b16 %v992
        %v1553 = vpack.c.b16 %v1463, %v1457
        %v1554 = vpack.c.b16 %v1464, %v1458
        %v1555 = vpack.c.b16 %v1465, %v1459
        %v1556 = vpack.c.b16 %v1466, %v1460
        %v1557 = vpack.c.b16 %v1467, %v1461
        %v1558 = vpack.c.b16 %v1468, %v1462
        %v1559 = vpack.c.b16 %v1475, %v1469
        %v1560 = vpack.c.b16 %v1476, %v1470
        %v1561 = vpack.c.b16 %v1477, %v1471
        %v1562 = vpack.c.b16 %v1478, %v1472
        %v1563 = vpack.c.b16 %v1479, %v1473
        %v1564 = vpack.c.b16 %v1480, %v1474
        %v1565 = vpack.c.b16 %v1487, %v1481
        %v1566 = vpack.c.b16 %v1488, %v1482
        %v1567 = vpack.c.b16 %v1489, %v1483
        %v1568 = vpack.c.b16 %v1490, %v1484
        %v1569 = vpack.c.b16 %v1491, %v1485
        %v1570 = vpack.c.b16 %v1492, %v1486
        %v1571 = vpack.c.b16 %v1499, %v1493
        %v1572 = vpack.c.b16 %v1500, %v1494
        %v1573 = vpack.c.b16 %v1501, %v1495
        %v1574 = vpack.c.b16 %v1502, %v1496
        %v1575 = vpack.c.b16 %v1503, %v1497
        %v1576 = vpack.c.b16 %v1504, %v1498
        %v1577 = vpack.c.b16 %v1511, %v1505
        %v1578 = vpack.c.b16 %v1512, %v1506
        %v1579 = vpack.c.b16 %v1513, %v1507
        %v1580 = vpack.c.b16 %v1514, %v1508
        %v1581 = vpack.c.b16 %v1515, %v1509
        %v1582 = vpack.c.b16 %v1516, %v1510
        %v1583 = vpack.c.b16 %v1523, %v1517
        %v1584 = vpack.c.b16 %v1524, %v1518
        %v1585 = vpack.c.b16 %v1525, %v1519
        %v1586 = vpack.c.b16 %v1526, %v1520
        %v1587 = vpack.c.b16 %v1527, %v1521
        %v1588 = vpack.c.b16 %v1528, %v1522
        %v1589 = vpack.c.b16 %v1535, %v1529
        %v1590 = vpack.c.b16 %v1536, %v1530
        %v1591 = vpack.c.b16 %v1537, %v1531
        %v1592 = vpack.c.b16 %v1538, %v1532
        %v1593 = vpack.c.b16 %v1539, %v1533
        %v1594 = vpack.c.b16 %v1540, %v1534
        %v1595 = vpack.c.b16 %v1547, %v1541
        %v1596 = vpack.c.b16 %v1548, %v1542
        %v1597 = vpack.c.b16 %v1549, %v1543
        %v1598 = vpack.c.b16 %v1550, %v1544
        %v1599 = vpack.c.b16 %v1551, %v1545
        %v1600 = vpack.c.b16 %v1552, %v1546
        %1649 = vmatprep.subr.bf16.mxu0 %v1554
        %1650 = vmatpush1.bf16.msra.mxu0 %v1553
        %1651 = vmatprep.subr.bf16.mxu0 %v1560
        %1652 = vmatpush1.bf16.msra.mxu0 %v1559
        %1653 = vmatprep.subr.bf16.mxu0 %v1566
        %1654 = vmatpush1.bf16.msra.mxu0 %v1565
        %1655 = vmatprep.subr.bf16.mxu0 %v1572
        %1656 = vmatpush1.bf16.msra.mxu0 %v1571
        %1657 = vmatprep.subr.bf16.mxu0 %v1578
        %1658 = vmatpush1.bf16.msra.mxu0 %v1577
        %1659 = vmatprep.subr.bf16.mxu0 %v1584
        %1660 = vmatpush1.bf16.msra.mxu0 %v1583
        %1661 = vmatprep.subr.bf16.mxu0 %v1590
        %1662 = vmatpush1.bf16.msra.mxu0 %v1589
        %1663 = vmatprep.subr.bf16.mxu0 %v1596
        %1664 = vmatpush1.bf16.msra.mxu0 %v1595
        %1665 = vmatprep.subr.bf16.mxu0 0
        %1666 = vmatpush1.bf16.msra.mxu0 0
        %1667 = vmatprep.subr.bf16.mxu0 0
        %1668 = vmatpush1.bf16.msra.mxu0 0
        %1669 = vmatprep.subr.bf16.mxu0 0
        %1670 = vmatpush1.bf16.msra.mxu0 0
        %1671 = vmatprep.subr.bf16.mxu0 0
        %1672 = vmatpush1.bf16.msra.mxu0 0
        %1673 = vmatprep.subr.bf16.mxu0 0
        %1674 = vmatpush1.bf16.msra.mxu0 0
        %1675 = vmatprep.subr.bf16.mxu0 0
        %1676 = vmatpush1.bf16.msra.mxu0 0
        %1677 = vmatprep.subr.bf16.mxu0 0
        %1678 = vmatpush1.bf16.msra.mxu0 0
        %1679 = vmatprep.subr.bf16.mxu0 0
        %1680 = vmatpush1.bf16.msra.mxu0 0
        %1681 = vmatprep.mubr.bf16.mxu0 0
        %1682 = vmatmul.mubr.bf16.gmra.mrb[0].mxu0 %v944
        %v1683 = vpop.f32.mrb[0].mxu0
        %v1684 = vadd.f32 %v1321, %v1683
        %v1685 = vpop.f32.mrb[0].mxu0
        %v1686 = vadd.f32 %v1323, %v1685
        %v1687 = vpop.f32.mrb[0].mxu0
        %v1688 = vpop.f32.mrb[0].mxu0
        %1689 = vdwg.mxu0
        %1690 = vmatprep.subr.bf16.mxu0 %v1556
        %1691 = vmatpush1.bf16.msra.mxu0 %v1555
        %1692 = vmatprep.subr.bf16.mxu0 %v1562
        %1693 = vmatpush1.bf16.msra.mxu0 %v1561
        %1694 = vmatprep.subr.bf16.mxu0 %v1568
        %1695 = vmatpush1.bf16.msra.mxu0 %v1567
        %1696 = vmatprep.subr.bf16.mxu0 %v1574
        %1697 = vmatpush1.bf16.msra.mxu0 %v1573
        %1698 = vmatprep.subr.bf16.mxu0 %v1580
        %1699 = vmatpush1.bf16.msra.mxu0 %v1579
        %1700 = vmatprep.subr.bf16.mxu0 %v1586
        %1701 = vmatpush1.bf16.msra.mxu0 %v1585
        %1702 = vmatprep.subr.bf16.mxu0 %v1592
        %1703 = vmatpush1.bf16.msra.mxu0 %v1591
        %1704 = vmatprep.subr.bf16.mxu0 %v1598
        %1705 = vmatpush1.bf16.msra.mxu0 %v1597
        %1706 = vmatprep.subr.bf16.mxu0 0
        %1707 = vmatpush1.bf16.msra.mxu0 0
        %1708 = vmatprep.subr.bf16.mxu0 0
        %1709 = vmatpush1.bf16.msra.mxu0 0
        %1710 = vmatprep.subr.bf16.mxu0 0
        %1711 = vmatpush1.bf16.msra.mxu0 0
        %1712 = vmatprep.subr.bf16.mxu0 0
        %1713 = vmatpush1.bf16.msra.mxu0 0
        %1714 = vmatprep.subr.bf16.mxu0 0
        %1715 = vmatpush1.bf16.msra.mxu0 0
        %1716 = vmatprep.subr.bf16.mxu0 0
        %1717 = vmatpush1.bf16.msra.mxu0 0
        %1718 = vmatprep.subr.bf16.mxu0 0
        %1719 = vmatpush1.bf16.msra.mxu0 0
        %1720 = vmatprep.subr.bf16.mxu0 0
        %1721 = vmatpush1.bf16.msra.mxu0 0
        %1722 = vmatprep.mubr.bf16.mxu0 0
        %1723 = vmatmul.mubr.bf16.gmra.mrb[0].mxu0 %v944
        %v1724 = vpop.f32.mrb[0].mxu0
        %v1725 = vadd.f32 %v1362, %v1724
        %v1726 = vpop.f32.mrb[0].mxu0
        %v1727 = vadd.f32 %v1364, %v1726
        %v1728 = vpop.f32.mrb[0].mxu0
        %v1729 = vpop.f32.mrb[0].mxu0
        %1730 = vdwg.mxu0
        %1731 = vmatprep.subr.bf16.mxu0 %v1558
        %1732 = vmatpush1.bf16.msra.mxu0 %v1557
        %1733 = vmatprep.subr.bf16.mxu0 %v1564
        %1734 = vmatpush1.bf16.msra.mxu0 %v1563
        %1735 = vmatprep.subr.bf16.mxu0 %v1570
        %1736 = vmatpush1.bf16.msra.mxu0 %v1569
        %1737 = vmatprep.subr.bf16.mxu0 %v1576
        %1738 = vmatpush1.bf16.msra.mxu0 %v1575
        %1739 = vmatprep.subr.bf16.mxu0 %v1582
        %1740 = vmatpush1.bf16.msra.mxu0 %v1581
        %1741 = vmatprep.subr.bf16.mxu0 %v1588
        %1742 = vmatpush1.bf16.msra.mxu0 %v1587
        %1743 = vmatprep.subr.bf16.mxu0 %v1594
        %1744 = vmatpush1.bf16.msra.mxu0 %v1593
        %1745 = vmatprep.subr.bf16.mxu0 %v1600
        %1746 = vmatpush1.bf16.msra.mxu0 %v1599
        %1747 = vmatprep.subr.bf16.mxu0 0
        %1748 = vmatpush1.bf16.msra.mxu0 0
        %1749 = vmatprep.subr.bf16.mxu0 0
        %1750 = vmatpush1.bf16.msra.mxu0 0
        %1751 = vmatprep.subr.bf16.mxu0 0
        %1752 = vmatpush1.bf16.msra.mxu0 0
        %1753 = vmatprep.subr.bf16.mxu0 0
        %1754 = vmatpush1.bf16.msra.mxu0 0
        %1755 = vmatprep.subr.bf16.mxu0 0
        %1756 = vmatpush1.bf16.msra.mxu0 0
        %1757 = vmatprep.subr.bf16.mxu0 0
        %1758 = vmatpush1.bf16.msra.mxu0 0
        %1759 = vmatprep.subr.bf16.mxu0 0
        %1760 = vmatpush1.bf16.msra.mxu0 0
        %1761 = vmatprep.subr.bf16.mxu0 0
        %1762 = vmatpush1.bf16.msra.mxu0 0
        %1763 = vmatprep.mubr.bf16.mxu0 0
        %1764 = vmatmul.mubr.bf16.gmra.mrb[0].mxu0 %v944
        %v1765 = vpop.f32.mrb[0].mxu0
        %v1766 = vadd.f32 %v1403, %v1765
        %v1767 = vpop.f32.mrb[0].mxu0
        %v1768 = vadd.f32 %v1405, %v1767
        %v1769 = vpop.f32.mrb[0].mxu0
        %v1770 = vpop.f32.mrb[0].mxu0
        %1771 = vdwg.mxu0
        %s1772 = scalar_lea.vmem [#allocation10], 768
        %v1773 = vld [vmem:[%s1772] sm:$0xff]
        %v1774 = vld [vmem:[%s1772 + $0x8] sm:$0xff]
        %v1775 = vld [vmem:[%s1772 + $0x10] sm:$0xff]
        %v1776 = vld [vmem:[%s1772 + $0x18] sm:$0xff]
        %v1777 = vld [vmem:[%s1772 + $0x20] sm:$0xff]
        %v1778 = vld [vmem:[%s1772 + $0x28] sm:$0xff]
        %v1779 = vld [vmem:[%s1772 + $0x30] sm:$0xff]
        %v1780 = vld [vmem:[%s1772 + $0x38] sm:$0xff]
        %v1781 = vld [vmem:[%s1772 + $0x40] sm:$0xff]
        %v1782 = vld [vmem:[%s1772 + $0x48] sm:$0xff]
        %v1783 = vld [vmem:[%s1772 + $0x50] sm:$0xff]
        %v1784 = vld [vmem:[%s1772 + $0x58] sm:$0xff]
        %v1785 = vld [vmem:[%s1772 + $0x60] sm:$0xff]
        %v1786 = vld [vmem:[%s1772 + $0x68] sm:$0xff]
        %v1787 = vld [vmem:[%s1772 + $0x70] sm:$0xff]
        %v1788 = vld [vmem:[%s1772 + $0x78] sm:$0xff]
        %v1789 = vld [vmem:[%s1772 + $0x80] sm:$0xff]
        %v1790 = vld [vmem:[%s1772 + $0x88] sm:$0xff]
        %v1791 = vld [vmem:[%s1772 + $0x90] sm:$0xff]
        %v1792 = vld [vmem:[%s1772 + $0x98] sm:$0xff]
        %v1793 = vld [vmem:[%s1772 + $0xa0] sm:$0xff]
        %v1794 = vld [vmem:[%s1772 + $0xa8] sm:$0xff]
        %v1795 = vld [vmem:[%s1772 + $0xb0] sm:$0xff]
        %v1796 = vld [vmem:[%s1772 + $0xb8] sm:$0xff]
        %v1797 = vld [vmem:[%s1772 + $0xc0] sm:$0xff]
        %v1798 = vld [vmem:[%s1772 + $0xc8] sm:$0xff]
        %v1799 = vld [vmem:[%s1772 + $0xd0] sm:$0xff]
        %v1800 = vld [vmem:[%s1772 + $0xd8] sm:$0xff]
        %v1801 = vld [vmem:[%s1772 + $0xe0] sm:$0xff]
        %v1802 = vld [vmem:[%s1772 + $0xe8] sm:$0xff]
        %v1803 = vld [vmem:[%s1772 + $0xf0] sm:$0xff]
        %v1804 = vld [vmem:[%s1772 + $0xf8] sm:$0xff]
        %v1805 = vld [vmem:[%s1772 + $0x100] sm:$0xff]
        %v1806 = vld [vmem:[%s1772 + $0x108] sm:$0xff]
        %v1807 = vld [vmem:[%s1772 + $0x110] sm:$0xff]
        %v1808 = vld [vmem:[%s1772 + $0x118] sm:$0xff]
        %v1809 = vld [vmem:[%s1772 + $0x120] sm:$0xff]
        %v1810 = vld [vmem:[%s1772 + $0x128] sm:$0xff]
        %v1811 = vld [vmem:[%s1772 + $0x130] sm:$0xff]
        %v1812 = vld [vmem:[%s1772 + $0x138] sm:$0xff]
        %v1813 = vld [vmem:[%s1772 + $0x140] sm:$0xff]
        %v1814 = vld [vmem:[%s1772 + $0x148] sm:$0xff]
        %v1815 = vld [vmem:[%s1772 + $0x150] sm:$0xff]
        %v1816 = vld [vmem:[%s1772 + $0x158] sm:$0xff]
        %v1817 = vld [vmem:[%s1772 + $0x160] sm:$0xff]
        %v1818 = vld [vmem:[%s1772 + $0x168] sm:$0xff]
        %v1819 = vld [vmem:[%s1772 + $0x170] sm:$0xff]
        %v1820 = vld [vmem:[%s1772 + $0x178] sm:$0xff]
        %v1822 = vrot.slane %v944, 1
        %v1872 = vunpack.c.l.b16 %v1773
        %v1873 = vunpack.c.h.b16 %v1773
        %v1874 = vunpack.c.l.b16 %v1774
        %v1875 = vunpack.c.h.b16 %v1774
        %v1876 = vunpack.c.l.b16 %v1775
        %v1877 = vunpack.c.h.b16 %v1775
        %v1878 = vunpack.c.l.b16 %v1776
        %v1879 = vunpack.c.h.b16 %v1776
        %v1880 = vunpack.c.l.b16 %v1777
        %v1881 = vunpack.c.h.b16 %v1777
        %v1882 = vunpack.c.l.b16 %v1778
        %v1883 = vunpack.c.h.b16 %v1778
        %v1884 = vunpack.c.l.b16 %v1779
        %v1885 = vunpack.c.h.b16 %v1779
        %v1886 = vunpack.c.l.b16 %v1780
        %v1887 = vunpack.c.h.b16 %v1780
        %v1888 = vunpack.c.l.b16 %v1781
        %v1889 = vunpack.c.h.b16 %v1781
        %v1890 = vunpack.c.l.b16 %v1782
        %v1891 = vunpack.c.h.b16 %v1782
        %v1892 = vunpack.c.l.b16 %v1783
        %v1893 = vunpack.c.h.b16 %v1783
        %v1894 = vunpack.c.l.b16 %v1784
        %v1895 = vunpack.c.h.b16 %v1784
        %v1896 = vunpack.c.l.b16 %v1785
        %v1897 = vunpack.c.h.b16 %v1785
        %v1898 = vunpack.c.l.b16 %v1786
        %v1899 = vunpack.c.h.b16 %v1786
        %v1900 = vunpack.c.l.b16 %v1787
        %v1901 = vunpack.c.h.b16 %v1787
        %v1902 = vunpack.c.l.b16 %v1788
        %v1903 = vunpack.c.h.b16 %v1788
        %v1904 = vunpack.c.l.b16 %v1789
        %v1905 = vunpack.c.h.b16 %v1789
        %v1906 = vunpack.c.l.b16 %v1790
        %v1907 = vunpack.c.h.b16 %v1790
        %v1908 = vunpack.c.l.b16 %v1791
        %v1909 = vunpack.c.h.b16 %v1791
        %v1910 = vunpack.c.l.b16 %v1792
        %v1911 = vunpack.c.h.b16 %v1792
        %v1912 = vunpack.c.l.b16 %v1793
        %v1913 = vunpack.c.h.b16 %v1793
        %v1914 = vunpack.c.l.b16 %v1794
        %v1915 = vunpack.c.h.b16 %v1794
        %v1916 = vunpack.c.l.b16 %v1795
        %v1917 = vunpack.c.h.b16 %v1795
        %v1918 = vunpack.c.l.b16 %v1796
        %v1919 = vunpack.c.h.b16 %v1796
        %v1920 = vunpack.c.l.b16 %v1797
        %v1921 = vunpack.c.h.b16 %v1797
        %v1922 = vunpack.c.l.b16 %v1798
        %v1923 = vunpack.c.h.b16 %v1798
        %v1924 = vunpack.c.l.b16 %v1799
        %v1925 = vunpack.c.h.b16 %v1799
        %v1926 = vunpack.c.l.b16 %v1800
        %v1927 = vunpack.c.h.b16 %v1800
        %v1928 = vunpack.c.l.b16 %v1801
        %v1929 = vunpack.c.h.b16 %v1801
        %v1930 = vunpack.c.l.b16 %v1802
        %v1931 = vunpack.c.h.b16 %v1802
        %v1932 = vunpack.c.l.b16 %v1803
        %v1933 = vunpack.c.h.b16 %v1803
        %v1934 = vunpack.c.l.b16 %v1804
        %v1935 = vunpack.c.h.b16 %v1804
        %v1936 = vunpack.c.l.b16 %v1805
        %v1937 = vunpack.c.h.b16 %v1805
        %v1938 = vunpack.c.l.b16 %v1806
        %v1939 = vunpack.c.h.b16 %v1806
        %v1940 = vunpack.c.l.b16 %v1807
        %v1941 = vunpack.c.h.b16 %v1807
        %v1942 = vunpack.c.l.b16 %v1808
        %v1943 = vunpack.c.h.b16 %v1808
        %v1944 = vunpack.c.l.b16 %v1809
        %v1945 = vunpack.c.h.b16 %v1809
        %v1946 = vunpack.c.l.b16 %v1810
        %v1947 = vunpack.c.h.b16 %v1810
        %v1948 = vunpack.c.l.b16 %v1811
        %v1949 = vunpack.c.h.b16 %v1811
        %v1950 = vunpack.c.l.b16 %v1812
        %v1951 = vunpack.c.h.b16 %v1812
        %v1952 = vunpack.c.l.b16 %v1813
        %v1953 = vunpack.c.h.b16 %v1813
        %v1954 = vunpack.c.l.b16 %v1814
        %v1955 = vunpack.c.h.b16 %v1814
        %v1956 = vunpack.c.l.b16 %v1815
        %v1957 = vunpack.c.h.b16 %v1815
        %v1958 = vunpack.c.l.b16 %v1816
        %v1959 = vunpack.c.h.b16 %v1816
        %v1960 = vunpack.c.l.b16 %v1817
        %v1961 = vunpack.c.h.b16 %v1817
        %v1962 = vunpack.c.l.b16 %v1818
        %v1963 = vunpack.c.h.b16 %v1818
        %v1964 = vunpack.c.l.b16 %v1819
        %v1965 = vunpack.c.h.b16 %v1819
        %v1966 = vunpack.c.l.b16 %v1820
        %v1967 = vunpack.c.h.b16 %v1820
        %v1968 = vpack.c.b16 %v1878, %v1872
        %v1969 = vpack.c.b16 %v1879, %v1873
        %v1970 = vpack.c.b16 %v1880, %v1874
        %v1971 = vpack.c.b16 %v1881, %v1875
        %v1972 = vpack.c.b16 %v1882, %v1876
        %v1973 = vpack.c.b16 %v1883, %v1877
        %v1974 = vpack.c.b16 %v1890, %v1884
        %v1975 = vpack.c.b16 %v1891, %v1885
        %v1976 = vpack.c.b16 %v1892, %v1886
        %v1977 = vpack.c.b16 %v1893, %v1887
        %v1978 = vpack.c.b16 %v1894, %v1888
        %v1979 = vpack.c.b16 %v1895, %v1889
        %v1980 = vpack.c.b16 %v1902, %v1896
        %v1981 = vpack.c.b16 %v1903, %v1897
        %v1982 = vpack.c.b16 %v1904, %v1898
        %v1983 = vpack.c.b16 %v1905, %v1899
        %v1984 = vpack.c.b16 %v1906, %v1900
        %v1985 = vpack.c.b16 %v1907, %v1901
        %v1986 = vpack.c.b16 %v1914, %v1908
        %v1987 = vpack.c.b16 %v1915, %v1909
        %v1988 = vpack.c.b16 %v1916, %v1910
        %v1989 = vpack.c.b16 %v1917, %v1911
        %v1990 = vpack.c.b16 %v1918, %v1912
        %v1991 = vpack.c.b16 %v1919, %v1913
        %v1992 = vpack.c.b16 %v1926, %v1920
        %v1993 = vpack.c.b16 %v1927, %v1921
        %v1994 = vpack.c.b16 %v1928, %v1922
        %v1995 = vpack.c.b16 %v1929, %v1923
        %v1996 = vpack.c.b16 %v1930, %v1924
        %v1997 = vpack.c.b16 %v1931, %v1925
        %v1998 = vpack.c.b16 %v1938, %v1932
        %v1999 = vpack.c.b16 %v1939, %v1933
        %v2000 = vpack.c.b16 %v1940, %v1934
        %v2001 = vpack.c.b16 %v1941, %v1935
        %v2002 = vpack.c.b16 %v1942, %v1936
        %v2003 = vpack.c.b16 %v1943, %v1937
        %v2004 = vpack.c.b16 %v1950, %v1944
        %v2005 = vpack.c.b16 %v1951, %v1945
        %v2006 = vpack.c.b16 %v1952, %v1946
        %v2007 = vpack.c.b16 %v1953, %v1947
        %v2008 = vpack.c.b16 %v1954, %v1948
        %v2009 = vpack.c.b16 %v1955, %v1949
        %v2010 = vpack.c.b16 %v1962, %v1956
        %v2011 = vpack.c.b16 %v1963, %v1957
        %v2012 = vpack.c.b16 %v1964, %v1958
        %v2013 = vpack.c.b16 %v1965, %v1959
        %v2014 = vpack.c.b16 %v1966, %v1960
        %v2015 = vpack.c.b16 %v1967, %v1961
        %2064 = vmatprep.subr.bf16.mxu0 %v1969
        %2065 = vmatpush1.bf16.msra.mxu0 %v1968
        %2066 = vmatprep.subr.bf16.mxu0 %v1975
        %2067 = vmatpush1.bf16.msra.mxu0 %v1974
        %2068 = vmatprep.subr.bf16.mxu0 %v1981
        %2069 = vmatpush1.bf16.msra.mxu0 %v1980
        %2070 = vmatprep.subr.bf16.mxu0 %v1987
        %2071 = vmatpush1.bf16.msra.mxu0 %v1986
        %2072 = vmatprep.subr.bf16.mxu0 %v1993
        %2073 = vmatpush1.bf16.msra.mxu0 %v1992
        %2074 = vmatprep.subr.bf16.mxu0 %v1999
        %2075 = vmatpush1.bf16.msra.mxu0 %v1998
        %2076 = vmatprep.subr.bf16.mxu0 %v2005
        %2077 = vmatpush1.bf16.msra.mxu0 %v2004
        %2078 = vmatprep.subr.bf16.mxu0 %v2011
        %2079 = vmatpush1.bf16.msra.mxu0 %v2010
        %2080 = vmatprep.subr.bf16.mxu0 0
        %2081 = vmatpush1.bf16.msra.mxu0 0
        %2082 = vmatprep.subr.bf16.mxu0 0
        %2083 = vmatpush1.bf16.msra.mxu0 0
        %2084 = vmatprep.subr.bf16.mxu0 0
        %2085 = vmatpush1.bf16.msra.mxu0 0
        %2086 = vmatprep.subr.bf16.mxu0 0
        %2087 = vmatpush1.bf16.msra.mxu0 0
        %2088 = vmatprep.subr.bf16.mxu0 0
        %2089 = vmatpush1.bf16.msra.mxu0 0
        %2090 = vmatprep.subr.bf16.mxu0 0
        %2091 = vmatpush1.bf16.msra.mxu0 0
        %2092 = vmatprep.subr.bf16.mxu0 0
        %2093 = vmatpush1.bf16.msra.mxu0 0
        %2094 = vmatprep.subr.bf16.mxu0 0
        %2095 = vmatpush1.bf16.msra.mxu0 0
        %2096 = vmatprep.mubr.bf16.mxu0 0
        %2097 = vmatmul.mubr.bf16.gmra.mrb[0].mxu0 %v1822
        %v2098 = vpop.f32.mrb[0].mxu0
        %v2099 = vadd.f32 0.0, %v2098
        %v2100 = vpop.f32.mrb[0].mxu0
        %v2101 = vadd.f32 0.0, %v2100
        %v2102 = vpop.f32.mrb[0].mxu0
        %v2103 = vpop.f32.mrb[0].mxu0
        %2104 = vdwg.mxu0
        %2105 = vmatprep.subr.bf16.mxu0 %v1971
        %2106 = vmatpush1.bf16.msra.mxu0 %v1970
        %2107 = vmatprep.subr.bf16.mxu0 %v1977
        %2108 = vmatpush1.bf16.msra.mxu0 %v1976
        %2109 = vmatprep.subr.bf16.mxu0 %v1983
        %2110 = vmatpush1.bf16.msra.mxu0 %v1982
        %2111 = vmatprep.subr.bf16.mxu0 %v1989
        %2112 = vmatpush1.bf16.msra.mxu0 %v1988
        %2113 = vmatprep.subr.bf16.mxu0 %v1995
        %2114 = vmatpush1.bf16.msra.mxu0 %v1994
        %2115 = vmatprep.subr.bf16.mxu0 %v2001
        %2116 = vmatpush1.bf16.msra.mxu0 %v2000
        %2117 = vmatprep.subr.bf16.mxu0 %v2007
        %2118 = vmatpush1.bf16.msra.mxu0 %v2006
        %2119 = vmatprep.subr.bf16.mxu0 %v2013
        %2120 = vmatpush1.bf16.msra.mxu0 %v2012
        %2121 = vmatprep.subr.bf16.mxu0 0
        %2122 = vmatpush1.bf16.msra.mxu0 0
        %2123 = vmatprep.subr.bf16.mxu0 0
        %2124 = vmatpush1.bf16.msra.mxu0 0
        %2125 = vmatprep.subr.bf16.mxu0 0
        %2126 = vmatpush1.bf16.msra.mxu0 0
        %2127 = vmatprep.subr.bf16.mxu0 0
        %2128 = vmatpush1.bf16.msra.mxu0 0
        %2129 = vmatprep.subr.bf16.mxu0 0
        %2130 = vmatpush1.bf16.msra.mxu0 0
        %2131 = vmatprep.subr.bf16.mxu0 0
        %2132 = vmatpush1.bf16.msra.mxu0 0
        %2133 = vmatprep.subr.bf16.mxu0 0
        %2134 = vmatpush1.bf16.msra.mxu0 0
        %2135 = vmatprep.subr.bf16.mxu0 0
        %2136 = vmatpush1.bf16.msra.mxu0 0
        %2137 = vmatprep.mubr.bf16.mxu0 0
        %2138 = vmatmul.mubr.bf16.gmra.mrb[0].mxu0 %v1822
        %v2139 = vpop.f32.mrb[0].mxu0
        %v2140 = vadd.f32 0.0, %v2139
        %v2141 = vpop.f32.mrb[0].mxu0
        %v2142 = vadd.f32 0.0, %v2141
        %v2143 = vpop.f32.mrb[0].mxu0
        %v2144 = vpop.f32.mrb[0].mxu0
        %2145 = vdwg.mxu0
        %2146 = vmatprep.subr.bf16.mxu0 %v1973
        %2147 = vmatpush1.bf16.msra.mxu0 %v1972
        %2148 = vmatprep.subr.bf16.mxu0 %v1979
        %2149 = vmatpush1.bf16.msra.mxu0 %v1978
        %2150 = vmatprep.subr.bf16.mxu0 %v1985
        %2151 = vmatpush1.bf16.msra.mxu0 %v1984
        %2152 = vmatprep.subr.bf16.mxu0 %v1991
        %2153 = vmatpush1.bf16.msra.mxu0 %v1990
        %2154 = vmatprep.subr.bf16.mxu0 %v1997
        %2155 = vmatpush1.bf16.msra.mxu0 %v1996
        %2156 = vmatprep.subr.bf16.mxu0 %v2003
        %2157 = vmatpush1.bf16.msra.mxu0 %v2002
        %2158 = vmatprep.subr.bf16.mxu0 %v2009
        %2159 = vmatpush1.bf16.msra.mxu0 %v2008
        %2160 = vmatprep.subr.bf16.mxu0 %v2015
        %2161 = vmatpush1.bf16.msra.mxu0 %v2014
        %2162 = vmatprep.subr.bf16.mxu0 0
        %2163 = vmatpush1.bf16.msra.mxu0 0
        %2164 = vmatprep.subr.bf16.mxu0 0
        %2165 = vmatpush1.bf16.msra.mxu0 0
        %2166 = vmatprep.subr.bf16.mxu0 0
        %2167 = vmatpush1.bf16.msra.mxu0 0
        %2168 = vmatprep.subr.bf16.mxu0 0
        %2169 = vmatpush1.bf16.msra.mxu0 0
        %2170 = vmatprep.subr.bf16.mxu0 0
        %2171 = vmatpush1.bf16.msra.mxu0 0
        %2172 = vmatprep.subr.bf16.mxu0 0
        %2173 = vmatpush1.bf16.msra.mxu0 0
        %2174 = vmatprep.subr.bf16.mxu0 0
        %2175 = vmatpush1.bf16.msra.mxu0 0
        %2176 = vmatprep.subr.bf16.mxu0 0
        %2177 = vmatpush1.bf16.msra.mxu0 0
        %2178 = vmatprep.mubr.bf16.mxu0 0
        %2179 = vmatmul.mubr.bf16.gmra.mrb[0].mxu0 %v1822
        %v2180 = vpop.f32.mrb[0].mxu0
        %v2181 = vadd.f32 0.0, %v2180
        %v2182 = vpop.f32.mrb[0].mxu0
        %v2183 = vadd.f32 0.0, %v2182
        %v2184 = vpop.f32.mrb[0].mxu0
        %v2185 = vpop.f32.mrb[0].mxu0
        %2186 = vdwg.mxu0
        %v2187 = vadd.f32 %v1684, %v2099
        %v2188 = vadd.f32 %v1686, %v2101
        %v2189 = vadd.f32 %v1725, %v2140
        %v2190 = vadd.f32 %v1727, %v2142
        %v2191 = vadd.f32 %v1766, %v2181
        %v2192 = vadd.f32 %v1768, %v2183
        %s2193 = scalar_lea.vmem [#allocation10], 1152
        %v2194 = vld [vmem:[%s2193] sm:$0xff]
        %v2195 = vld [vmem:[%s2193 + $0x8] sm:$0xff]
        %v2196 = vld [vmem:[%s2193 + $0x10] sm:$0xff]
        %v2197 = vld [vmem:[%s2193 + $0x18] sm:$0xff]
        %v2198 = vld [vmem:[%s2193 + $0x20] sm:$0xff]
        %v2199 = vld [vmem:[%s2193 + $0x28] sm:$0xff]
        %v2200 = vld [vmem:[%s2193 + $0x30] sm:$0xff]
        %v2201 = vld [vmem:[%s2193 + $0x38] sm:$0xff]
        %v2202 = vld [vmem:[%s2193 + $0x40] sm:$0xff]
        %v2203 = vld [vmem:[%s2193 + $0x48] sm:$0xff]
        %v2204 = vld [vmem:[%s2193 + $0x50] sm:$0xff]
        %v2205 = vld [vmem:[%s2193 + $0x58] sm:$0xff]
        %v2206 = vld [vmem:[%s2193 + $0x60] sm:$0xff]
        %v2207 = vld [vmem:[%s2193 + $0x68] sm:$0xff]
        %v2208 = vld [vmem:[%s2193 + $0x70] sm:$0xff]
        %v2209 = vld [vmem:[%s2193 + $0x78] sm:$0xff]
        %v2210 = vld [vmem:[%s2193 + $0x80] sm:$0xff]
        %v2211 = vld [vmem:[%s2193 + $0x88] sm:$0xff]
        %v2212 = vld [vmem:[%s2193 + $0x90] sm:$0xff]
        %v2213 = vld [vmem:[%s2193 + $0x98] sm:$0xff]
        %v2214 = vld [vmem:[%s2193 + $0xa0] sm:$0xff]
        %v2215 = vld [vmem:[%s2193 + $0xa8] sm:$0xff]
        %v2216 = vld [vmem:[%s2193 + $0xb0] sm:$0xff]
        %v2217 = vld [vmem:[%s2193 + $0xb8] sm:$0xff]
        %v2218 = vld [vmem:[%s2193 + $0xc0] sm:$0xff]
        %v2219 = vld [vmem:[%s2193 + $0xc8] sm:$0xff]
        %v2220 = vld [vmem:[%s2193 + $0xd0] sm:$0xff]
        %v2221 = vld [vmem:[%s2193 + $0xd8] sm:$0xff]
        %v2222 = vld [vmem:[%s2193 + $0xe0] sm:$0xff]
        %v2223 = vld [vmem:[%s2193 + $0xe8] sm:$0xff]
        %v2224 = vld [vmem:[%s2193 + $0xf0] sm:$0xff]
        %v2225 = vld [vmem:[%s2193 + $0xf8] sm:$0xff]
        %v2226 = vld [vmem:[%s2193 + $0x100] sm:$0xff]
        %v2227 = vld [vmem:[%s2193 + $0x108] sm:$0xff]
        %v2228 = vld [vmem:[%s2193 + $0x110] sm:$0xff]
        %v2229 = vld [vmem:[%s2193 + $0x118] sm:$0xff]
        %v2230 = vld [vmem:[%s2193 + $0x120] sm:$0xff]
        %v2231 = vld [vmem:[%s2193 + $0x128] sm:$0xff]
        %v2232 = vld [vmem:[%s2193 + $0x130] sm:$0xff]
        %v2233 = vld [vmem:[%s2193 + $0x138] sm:$0xff]
        %v2234 = vld [vmem:[%s2193 + $0x140] sm:$0xff]
        %v2235 = vld [vmem:[%s2193 + $0x148] sm:$0xff]
        %v2236 = vld [vmem:[%s2193 + $0x150] sm:$0xff]
        %v2237 = vld [vmem:[%s2193 + $0x158] sm:$0xff]
        %v2238 = vld [vmem:[%s2193 + $0x160] sm:$0xff]
        %v2239 = vld [vmem:[%s2193 + $0x168] sm:$0xff]
        %v2240 = vld [vmem:[%s2193 + $0x170] sm:$0xff]
        %v2241 = vld [vmem:[%s2193 + $0x178] sm:$0xff]
        %v2242 = vrot.slane %v1043, 1
        %v2292 = vunpack.c.l.b16 %v2194
        %v2293 = vunpack.c.h.b16 %v2194
        %v2294 = vunpack.c.l.b16 %v2195
        %v2295 = vunpack.c.h.b16 %v2195
        %v2296 = vunpack.c.l.b16 %v2196
        %v2297 = vunpack.c.h.b16 %v2196
        %v2298 = vunpack.c.l.b16 %v2197
        %v2299 = vunpack.c.h.b16 %v2197
        %v2300 = vunpack.c.l.b16 %v2198
        %v2301 = vunpack.c.h.b16 %v2198
        %v2302 = vunpack.c.l.b16 %v2199
        %v2303 = vunpack.c.h.b16 %v2199
        %v2304 = vunpack.c.l.b16 %v2200
        %v2305 = vunpack.c.h.b16 %v2200
        %v2306 = vunpack.c.l.b16 %v2201
        %v2307 = vunpack.c.h.b16 %v2201
        %v2308 = vunpack.c.l.b16 %v2202
        %v2309 = vunpack.c.h.b16 %v2202
        %v2310 = vunpack.c.l.b16 %v2203
        %v2311 = vunpack.c.h.b16 %v2203
        %v2312 = vunpack.c.l.b16 %v2204
        %v2313 = vunpack.c.h.b16 %v2204
        %v2314 = vunpack.c.l.b16 %v2205
        %v2315 = vunpack.c.h.b16 %v2205
        %v2316 = vunpack.c.l.b16 %v2206
        %v2317 = vunpack.c.h.b16 %v2206
        %v2318 = vunpack.c.l.b16 %v2207
        %v2319 = vunpack.c.h.b16 %v2207
        %v2320 = vunpack.c.l.b16 %v2208
        %v2321 = vunpack.c.h.b16 %v2208
        %v2322 = vunpack.c.l.b16 %v2209
        %v2323 = vunpack.c.h.b16 %v2209
        %v2324 = vunpack.c.l.b16 %v2210
        %v2325 = vunpack.c.h.b16 %v2210
        %v2326 = vunpack.c.l.b16 %v2211
        %v2327 = vunpack.c.h.b16 %v2211
        %v2328 = vunpack.c.l.b16 %v2212
        %v2329 = vunpack.c.h.b16 %v2212
        %v2330 = vunpack.c.l.b16 %v2213
        %v2331 = vunpack.c.h.b16 %v2213
        %v2332 = vunpack.c.l.b16 %v2214
        %v2333 = vunpack.c.h.b16 %v2214
        %v2334 = vunpack.c.l.b16 %v2215
        %v2335 = vunpack.c.h.b16 %v2215
        %v2336 = vunpack.c.l.b16 %v2216
        %v2337 = vunpack.c.h.b16 %v2216
        %v2338 = vunpack.c.l.b16 %v2217
        %v2339 = vunpack.c.h.b16 %v2217
        %v2340 = vunpack.c.l.b16 %v2218
        %v2341 = vunpack.c.h.b16 %v2218
        %v2342 = vunpack.c.l.b16 %v2219
        %v2343 = vunpack.c.h.b16 %v2219
        %v2344 = vunpack.c.l.b16 %v2220
        %v2345 = vunpack.c.h.b16 %v2220
        %v2346 = vunpack.c.l.b16 %v2221
        %v2347 = vunpack.c.h.b16 %v2221
        %v2348 = vunpack.c.l.b16 %v2222
        %v2349 = vunpack.c.h.b16 %v2222
        %v2350 = vunpack.c.l.b16 %v2223
        %v2351 = vunpack.c.h.b16 %v2223
        %v2352 = vunpack.c.l.b16 %v2224
        %v2353 = vunpack.c.h.b16 %v2224
        %v2354 = vunpack.c.l.b16 %v2225
        %v2355 = vunpack.c.h.b16 %v2225
        %v2356 = vunpack.c.l.b16 %v2226
        %v2357 = vunpack.c.h.b16 %v2226
        %v2358 = vunpack.c.l.b16 %v2227
        %v2359 = vunpack.c.h.b16 %v2227
        %v2360 = vunpack.c.l.b16 %v2228
        %v2361 = vunpack.c.h.b16 %v2228
        %v2362 = vunpack.c.l.b16 %v2229
        %v2363 = vunpack.c.h.b16 %v2229
        %v2364 = vunpack.c.l.b16 %v2230
        %v2365 = vunpack.c.h.b16 %v2230
        %v2366 = vunpack.c.l.b16 %v2231
        %v2367 = vunpack.c.h.b16 %v2231
        %v2368 = vunpack.c.l.b16 %v2232
        %v2369 = vunpack.c.h.b16 %v2232
        %v2370 = vunpack.c.l.b16 %v2233
        %v2371 = vunpack.c.h.b16 %v2233
        %v2372 = vunpack.c.l.b16 %v2234
        %v2373 = vunpack.c.h.b16 %v2234
        %v2374 = vunpack.c.l.b16 %v2235
        %v2375 = vunpack.c.h.b16 %v2235
        %v2376 = vunpack.c.l.b16 %v2236
        %v2377 = vunpack.c.h.b16 %v2236
        %v2378 = vunpack.c.l.b16 %v2237
        %v2379 = vunpack.c.h.b16 %v2237
        %v2380 = vunpack.c.l.b16 %v2238
        %v2381 = vunpack.c.h.b16 %v2238
        %v2382 = vunpack.c.l.b16 %v2239
        %v2383 = vunpack.c.h.b16 %v2239
        %v2384 = vunpack.c.l.b16 %v2240
        %v2385 = vunpack.c.h.b16 %v2240
        %v2386 = vunpack.c.l.b16 %v2241
        %v2387 = vunpack.c.h.b16 %v2241
        %v2388 = vpack.c.b16 %v2298, %v2292
        %v2389 = vpack.c.b16 %v2299, %v2293
        %v2390 = vpack.c.b16 %v2300, %v2294
        %v2391 = vpack.c.b16 %v2301, %v2295
        %v2392 = vpack.c.b16 %v2302, %v2296
        %v2393 = vpack.c.b16 %v2303, %v2297
        %v2394 = vpack.c.b16 %v2310, %v2304
        %v2395 = vpack.c.b16 %v2311, %v2305
        %v2396 = vpack.c.b16 %v2312, %v2306
        %v2397 = vpack.c.b16 %v2313, %v2307
        %v2398 = vpack.c.b16 %v2314, %v2308
        %v2399 = vpack.c.b16 %v2315, %v2309
        %v2400 = vpack.c.b16 %v2322, %v2316
        %v2401 = vpack.c.b16 %v2323, %v2317
        %v2402 = vpack.c.b16 %v2324, %v2318
        %v2403 = vpack.c.b16 %v2325, %v2319
        %v2404 = vpack.c.b16 %v2326, %v2320
        %v2405 = vpack.c.b16 %v2327, %v2321
        %v2406 = vpack.c.b16 %v2334, %v2328
        %v2407 = vpack.c.b16 %v2335, %v2329
        %v2408 = vpack.c.b16 %v2336, %v2330
        %v2409 = vpack.c.b16 %v2337, %v2331
        %v2410 = vpack.c.b16 %v2338, %v2332
        %v2411 = vpack.c.b16 %v2339, %v2333
        %v2412 = vpack.c.b16 %v2346, %v2340
        %v2413 = vpack.c.b16 %v2347, %v2341
        %v2414 = vpack.c.b16 %v2348, %v2342
        %v2415 = vpack.c.b16 %v2349, %v2343
        %v2416 = vpack.c.b16 %v2350, %v2344
        %v2417 = vpack.c.b16 %v2351, %v2345
        %v2418 = vpack.c.b16 %v2358, %v2352
        %v2419 = vpack.c.b16 %v2359, %v2353
        %v2420 = vpack.c.b16 %v2360, %v2354
        %v2421 = vpack.c.b16 %v2361, %v2355
        %v2422 = vpack.c.b16 %v2362, %v2356
        %v2423 = vpack.c.b16 %v2363, %v2357
        %v2424 = vpack.c.b16 %v2370, %v2364
        %v2425 = vpack.c.b16 %v2371, %v2365
        %v2426 = vpack.c.b16 %v2372, %v2366
        %v2427 = vpack.c.b16 %v2373, %v2367
        %v2428 = vpack.c.b16 %v2374, %v2368
        %v2429 = vpack.c.b16 %v2375, %v2369
        %v2430 = vpack.c.b16 %v2382, %v2376
        %v2431 = vpack.c.b16 %v2383, %v2377
        %v2432 = vpack.c.b16 %v2384, %v2378
        %v2433 = vpack.c.b16 %v2385, %v2379
        %v2434 = vpack.c.b16 %v2386, %v2380
        %v2435 = vpack.c.b16 %v2387, %v2381
        %2484 = vmatprep.subr.bf16.mxu0 %v2389
        %2485 = vmatpush1.bf16.msra.mxu0 %v2388
        %2486 = vmatprep.subr.bf16.mxu0 %v2395
        %2487 = vmatpush1.bf16.msra.mxu0 %v2394
        %2488 = vmatprep.subr.bf16.mxu0 %v2401
        %2489 = vmatpush1.bf16.msra.mxu0 %v2400
        %2490 = vmatprep.subr.bf16.mxu0 %v2407
        %2491 = vmatpush1.bf16.msra.mxu0 %v2406
        %2492 = vmatprep.subr.bf16.mxu0 %v2413
        %2493 = vmatpush1.bf16.msra.mxu0 %v2412
        %2494 = vmatprep.subr.bf16.mxu0 %v2419
        %2495 = vmatpush1.bf16.msra.mxu0 %v2418
        %2496 = vmatprep.subr.bf16.mxu0 %v2425
        %2497 = vmatpush1.bf16.msra.mxu0 %v2424
        %2498 = vmatprep.subr.bf16.mxu0 %v2431
        %2499 = vmatpush1.bf16.msra.mxu0 %v2430
        %2500 = vmatprep.subr.bf16.mxu0 0
        %2501 = vmatpush1.bf16.msra.mxu0 0
        %2502 = vmatprep.subr.bf16.mxu0 0
        %2503 = vmatpush1.bf16.msra.mxu0 0
        %2504 = vmatprep.subr.bf16.mxu0 0
        %2505 = vmatpush1.bf16.msra.mxu0 0
        %2506 = vmatprep.subr.bf16.mxu0 0
        %2507 = vmatpush1.bf16.msra.mxu0 0
        %2508 = vmatprep.subr.bf16.mxu0 0
        %2509 = vmatpush1.bf16.msra.mxu0 0
        %2510 = vmatprep.subr.bf16.mxu0 0
        %2511 = vmatpush1.bf16.msra.mxu0 0
        %2512 = vmatprep.subr.bf16.mxu0 0
        %2513 = vmatpush1.bf16.msra.mxu0 0
        %2514 = vmatprep.subr.bf16.mxu0 0
        %2515 = vmatpush1.bf16.msra.mxu0 0
        %2516 = vmatprep.mubr.bf16.mxu0 0
        %2517 = vmatmul.mubr.bf16.gmra.mrb[0].mxu0 %v2242
        %v2518 = vpop.f32.mrb[0].mxu0
        %v2519 = vadd.f32 0.0, %v2518
        %v2520 = vpop.f32.mrb[0].mxu0
        %v2521 = vadd.f32 0.0, %v2520
        %v2522 = vpop.f32.mrb[0].mxu0
        %v2523 = vpop.f32.mrb[0].mxu0
        %2524 = vdwg.mxu0
        %2525 = vmatprep.subr.bf16.mxu0 %v2391
        %2526 = vmatpush1.bf16.msra.mxu0 %v2390
        %2527 = vmatprep.subr.bf16.mxu0 %v2397
        %2528 = vmatpush1.bf16.msra.mxu0 %v2396
        %2529 = vmatprep.subr.bf16.mxu0 %v2403
        %2530 = vmatpush1.bf16.msra.mxu0 %v2402
        %2531 = vmatprep.subr.bf16.mxu0 %v2409
        %2532 = vmatpush1.bf16.msra.mxu0 %v2408
        %2533 = vmatprep.subr.bf16.mxu0 %v2415
        %2534 = vmatpush1.bf16.msra.mxu0 %v2414
        %2535 = vmatprep.subr.bf16.mxu0 %v2421
        %2536 = vmatpush1.bf16.msra.mxu0 %v2420
        %2537 = vmatprep.subr.bf16.mxu0 %v2427
        %2538 = vmatpush1.bf16.msra.mxu0 %v2426
        %2539 = vmatprep.subr.bf16.mxu0 %v2433
        %2540 = vmatpush1.bf16.msra.mxu0 %v2432
        %2541 = vmatprep.subr.bf16.mxu0 0
        %2542 = vmatpush1.bf16.msra.mxu0 0
        %2543 = vmatprep.subr.bf16.mxu0 0
        %2544 = vmatpush1.bf16.msra.mxu0 0
        %2545 = vmatprep.subr.bf16.mxu0 0
        %2546 = vmatpush1.bf16.msra.mxu0 0
        %2547 = vmatprep.subr.bf16.mxu0 0
        %2548 = vmatpush1.bf16.msra.mxu0 0
        %2549 = vmatprep.subr.bf16.mxu0 0
        %2550 = vmatpush1.bf16.msra.mxu0 0
        %2551 = vmatprep.subr.bf16.mxu0 0
        %2552 = vmatpush1.bf16.msra.mxu0 0
        %2553 = vmatprep.subr.bf16.mxu0 0
        %2554 = vmatpush1.bf16.msra.mxu0 0
        %2555 = vmatprep.subr.bf16.mxu0 0
        %2556 = vmatpush1.bf16.msra.mxu0 0
        %2557 = vmatprep.mubr.bf16.mxu0 0
        %2558 = vmatmul.mubr.bf16.gmra.mrb[0].mxu0 %v2242
        %v2559 = vpop.f32.mrb[0].mxu0
        %v2560 = vadd.f32 0.0, %v2559
        %v2561 = vpop.f32.mrb[0].mxu0
        %v2562 = vadd.f32 0.0, %v2561
        %v2563 = vpop.f32.mrb[0].mxu0
        %v2564 = vpop.f32.mrb[0].mxu0
        %2565 = vdwg.mxu0
        %2566 = vmatprep.subr.bf16.mxu0 %v2393
        %2567 = vmatpush1.bf16.msra.mxu0 %v2392
        %2568 = vmatprep.subr.bf16.mxu0 %v2399
        %2569 = vmatpush1.bf16.msra.mxu0 %v2398
        %2570 = vmatprep.subr.bf16.mxu0 %v2405
        %2571 = vmatpush1.bf16.msra.mxu0 %v2404
        %2572 = vmatprep.subr.bf16.mxu0 %v2411
        %2573 = vmatpush1.bf16.msra.mxu0 %v2410
        %2574 = vmatprep.subr.bf16.mxu0 %v2417
        %2575 = vmatpush1.bf16.msra.mxu0 %v2416
        %2576 = vmatprep.subr.bf16.mxu0 %v2423
        %2577 = vmatpush1.bf16.msra.mxu0 %v2422
        %2578 = vmatprep.subr.bf16.mxu0 %v2429
        %2579 = vmatpush1.bf16.msra.mxu0 %v2428
        %2580 = vmatprep.subr.bf16.mxu0 %v2435
        %2581 = vmatpush1.bf16.msra.mxu0 %v2434
        %2582 = vmatprep.subr.bf16.mxu0 0
        %2583 = vmatpush1.bf16.msra.mxu0 0
        %2584 = vmatprep.subr.bf16.mxu0 0
        %2585 = vmatpush1.bf16.msra.mxu0 0
        %2586 = vmatprep.subr.bf16.mxu0 0
        %2587 = vmatpush1.bf16.msra.mxu0 0
        %2588 = vmatprep.subr.bf16.mxu0 0
        %2589 = vmatpush1.bf16.msra.mxu0 0
        %2590 = vmatprep.subr.bf16.mxu0 0
        %2591 = vmatpush1.bf16.msra.mxu0 0
        %2592 = vmatprep.subr.bf16.mxu0 0
        %2593 = vmatpush1.bf16.msra.mxu0 0
        %2594 = vmatprep.subr.bf16.mxu0 0
        %2595 = vmatpush1.bf16.msra.mxu0 0
        %2596 = vmatprep.subr.bf16.mxu0 0
        %2597 = vmatpush1.bf16.msra.mxu0 0
        %2598 = vmatprep.mubr.bf16.mxu0 0
        %2599 = vmatmul.mubr.bf16.gmra.mrb[0].mxu0 %v2242
        %v2600 = vpop.f32.mrb[0].mxu0
        %v2601 = vadd.f32 0.0, %v2600
        %v2602 = vpop.f32.mrb[0].mxu0
        %v2603 = vadd.f32 0.0, %v2602
        %v2604 = vpop.f32.mrb[0].mxu0
        %v2605 = vpop.f32.mrb[0].mxu0
        %2606 = vdwg.mxu0
        %v2607 = vadd.f32 %v2187, %v2519
        %v2608 = vadd.f32 %v2188, %v2521
        %v2609 = vadd.f32 %v2189, %v2560
        %v2610 = vadd.f32 %v2190, %v2562
        %v2611 = vadd.f32 %v2191, %v2601
        %v2612 = vadd.f32 %v2192, %v2603
        %s2613 = scalar_lea.vmem [#allocation10], 1536
        %v2614 = vld [vmem:[%s2613] sm:$0xff]
        %v2615 = vld [vmem:[%s2613 + $0x8] sm:$0xff]
        %v2616 = vld [vmem:[%s2613 + $0x10] sm:$0xff]
        %v2617 = vld [vmem:[%s2613 + $0x18] sm:$0xff]
        %v2618 = vld [vmem:[%s2613 + $0x20] sm:$0xff]
        %v2619 = vld [vmem:[%s2613 + $0x28] sm:$0xff]
        %v2620 = vld [vmem:[%s2613 + $0x30] sm:$0xff]
        %v2621 = vld [vmem:[%s2613 + $0x38] sm:$0xff]
        %v2622 = vld [vmem:[%s2613 + $0x40] sm:$0xff]
        %v2623 = vld [vmem:[%s2613 + $0x48] sm:$0xff]
        %v2624 = vld [vmem:[%s2613 + $0x50] sm:$0xff]
        %v2625 = vld [vmem:[%s2613 + $0x58] sm:$0xff]
        %v2626 = vld [vmem:[%s2613 + $0x60] sm:$0xff]
        %v2627 = vld [vmem:[%s2613 + $0x68] sm:$0xff]
        %v2628 = vld [vmem:[%s2613 + $0x70] sm:$0xff]
        %v2629 = vld [vmem:[%s2613 + $0x78] sm:$0xff]
        %v2630 = vld [vmem:[%s2613 + $0x80] sm:$0xff]
        %v2631 = vld [vmem:[%s2613 + $0x88] sm:$0xff]
        %v2632 = vld [vmem:[%s2613 + $0x90] sm:$0xff]
        %v2633 = vld [vmem:[%s2613 + $0x98] sm:$0xff]
        %v2634 = vld [vmem:[%s2613 + $0xa0] sm:$0xff]
        %v2635 = vld [vmem:[%s2613 + $0xa8] sm:$0xff]
        %v2636 = vld [vmem:[%s2613 + $0xb0] sm:$0xff]
        %v2637 = vld [vmem:[%s2613 + $0xb8] sm:$0xff]
        %v2638 = vld [vmem:[%s2613 + $0xc0] sm:$0xff]
        %v2639 = vld [vmem:[%s2613 + $0xc8] sm:$0xff]
        %v2640 = vld [vmem:[%s2613 + $0xd0] sm:$0xff]
        %v2641 = vld [vmem:[%s2613 + $0xd8] sm:$0xff]
        %v2642 = vld [vmem:[%s2613 + $0xe0] sm:$0xff]
        %v2643 = vld [vmem:[%s2613 + $0xe8] sm:$0xff]
        %v2644 = vld [vmem:[%s2613 + $0xf0] sm:$0xff]
        %v2645 = vld [vmem:[%s2613 + $0xf8] sm:$0xff]
        %v2646 = vld [vmem:[%s2613 + $0x100] sm:$0xff]
        %v2647 = vld [vmem:[%s2613 + $0x108] sm:$0xff]
        %v2648 = vld [vmem:[%s2613 + $0x110] sm:$0xff]
        %v2649 = vld [vmem:[%s2613 + $0x118] sm:$0xff]
        %v2650 = vld [vmem:[%s2613 + $0x120] sm:$0xff]
        %v2651 = vld [vmem:[%s2613 + $0x128] sm:$0xff]
        %v2652 = vld [vmem:[%s2613 + $0x130] sm:$0xff]
        %v2653 = vld [vmem:[%s2613 + $0x138] sm:$0xff]
        %v2654 = vld [vmem:[%s2613 + $0x140] sm:$0xff]
        %v2655 = vld [vmem:[%s2613 + $0x148] sm:$0xff]
        %v2656 = vld [vmem:[%s2613 + $0x150] sm:$0xff]
        %v2657 = vld [vmem:[%s2613 + $0x158] sm:$0xff]
        %v2658 = vld [vmem:[%s2613 + $0x160] sm:$0xff]
        %v2659 = vld [vmem:[%s2613 + $0x168] sm:$0xff]
        %v2660 = vld [vmem:[%s2613 + $0x170] sm:$0xff]
        %v2661 = vld [vmem:[%s2613 + $0x178] sm:$0xff]
        %v2662 = vrot.slane %v944, 2
        %v2712 = vunpack.c.l.b16 %v2614
        %v2713 = vunpack.c.h.b16 %v2614
        %v2714 = vunpack.c.l.b16 %v2615
        %v2715 = vunpack.c.h.b16 %v2615
        %v2716 = vunpack.c.l.b16 %v2616
        %v2717 = vunpack.c.h.b16 %v2616
        %v2718 = vunpack.c.l.b16 %v2617
        %v2719 = vunpack.c.h.b16 %v2617
        %v2720 = vunpack.c.l.b16 %v2618
        %v2721 = vunpack.c.h.b16 %v2618
        %v2722 = vunpack.c.l.b16 %v2619
        %v2723 = vunpack.c.h.b16 %v2619
        %v2724 = vunpack.c.l.b16 %v2620
        %v2725 = vunpack.c.h.b16 %v2620
        %v2726 = vunpack.c.l.b16 %v2621
        %v2727 = vunpack.c.h.b16 %v2621
        %v2728 = vunpack.c.l.b16 %v2622
        %v2729 = vunpack.c.h.b16 %v2622
        %v2730 = vunpack.c.l.b16 %v2623
        %v2731 = vunpack.c.h.b16 %v2623
        %v2732 = vunpack.c.l.b16 %v2624
        %v2733 = vunpack.c.h.b16 %v2624
        %v2734 = vunpack.c.l.b16 %v2625
        %v2735 = vunpack.c.h.b16 %v2625
        %v2736 = vunpack.c.l.b16 %v2626
        %v2737 = vunpack.c.h.b16 %v2626
        %v2738 = vunpack.c.l.b16 %v2627
        %v2739 = vunpack.c.h.b16 %v2627
        %v2740 = vunpack.c.l.b16 %v2628
        %v2741 = vunpack.c.h.b16 %v2628
        %v2742 = vunpack.c.l.b16 %v2629
        %v2743 = vunpack.c.h.b16 %v2629
        %v2744 = vunpack.c.l.b16 %v2630
        %v2745 = vunpack.c.h.b16 %v2630
        %v2746 = vunpack.c.l.b16 %v2631
        %v2747 = vunpack.c.h.b16 %v2631
        %v2748 = vunpack.c.l.b16 %v2632
        %v2749 = vunpack.c.h.b16 %v2632
        %v2750 = vunpack.c.l.b16 %v2633
        %v2751 = vunpack.c.h.b16 %v2633
        %v2752 = vunpack.c.l.b16 %v2634
        %v2753 = vunpack.c.h.b16 %v2634
        %v2754 = vunpack.c.l.b16 %v2635
        %v2755 = vunpack.c.h.b16 %v2635
        %v2756 = vunpack.c.l.b16 %v2636
        %v2757 = vunpack.c.h.b16 %v2636
        %v2758 = vunpack.c.l.b16 %v2637
        %v2759 = vunpack.c.h.b16 %v2637
        %v2760 = vunpack.c.l.b16 %v2638
        %v2761 = vunpack.c.h.b16 %v2638
        %v2762 = vunpack.c.l.b16 %v2639
        %v2763 = vunpack.c.h.b16 %v2639
        %v2764 = vunpack.c.l.b16 %v2640
        %v2765 = vunpack.c.h.b16 %v2640
        %v2766 = vunpack.c.l.b16 %v2641
        %v2767 = vunpack.c.h.b16 %v2641
        %v2768 = vunpack.c.l.b16 %v2642
        %v2769 = vunpack.c.h.b16 %v2642
        %v2770 = vunpack.c.l.b16 %v2643
        %v2771 = vunpack.c.h.b16 %v2643
        %v2772 = vunpack.c.l.b16 %v2644
        %v2773 = vunpack.c.h.b16 %v2644
        %v2774 = vunpack.c.l.b16 %v2645
        %v2775 = vunpack.c.h.b16 %v2645
        %v2776 = vunpack.c.l.b16 %v2646
        %v2777 = vunpack.c.h.b16 %v2646
        %v2778 = vunpack.c.l.b16 %v2647
        %v2779 = vunpack.c.h.b16 %v2647
        %v2780 = vunpack.c.l.b16 %v2648
        %v2781 = vunpack.c.h.b16 %v2648
        %v2782 = vunpack.c.l.b16 %v2649
        %v2783 = vunpack.c.h.b16 %v2649
        %v2784 = vunpack.c.l.b16 %v2650
        %v2785 = vunpack.c.h.b16 %v2650
        %v2786 = vunpack.c.l.b16 %v2651
        %v2787 = vunpack.c.h.b16 %v2651
        %v2788 = vunpack.c.l.b16 %v2652
        %v2789 = vunpack.c.h.b16 %v2652
        %v2790 = vunpack.c.l.b16 %v2653
        %v2791 = vunpack.c.h.b16 %v2653
        %v2792 = vunpack.c.l.b16 %v2654
        %v2793 = vunpack.c.h.b16 %v2654
        %v2794 = vunpack.c.l.b16 %v2655
        %v2795 = vunpack.c.h.b16 %v2655
        %v2796 = vunpack.c.l.b16 %v2656
        %v2797 = vunpack.c.h.b16 %v2656
        %v2798 = vunpack.c.l.b16 %v2657
        %v2799 = vunpack.c.h.b16 %v2657
        %v2800 = vunpack.c.l.b16 %v2658
        %v2801 = vunpack.c.h.b16 %v2658
        %v2802 = vunpack.c.l.b16 %v2659
        %v2803 = vunpack.c.h.b16 %v2659
        %v2804 = vunpack.c.l.b16 %v2660
        %v2805 = vunpack.c.h.b16 %v2660
        %v2806 = vunpack.c.l.b16 %v2661
        %v2807 = vunpack.c.h.b16 %v2661
        %v2808 = vpack.c.b16 %v2718, %v2712
        %v2809 = vpack.c.b16 %v2719, %v2713
        %v2810 = vpack.c.b16 %v2720, %v2714
        %v2811 = vpack.c.b16 %v2721, %v2715
        %v2812 = vpack.c.b16 %v2722, %v2716
        %v2813 = vpack.c.b16 %v2723, %v2717
        %v2814 = vpack.c.b16 %v2730, %v2724
        %v2815 = vpack.c.b16 %v2731, %v2725
        %v2816 = vpack.c.b16 %v2732, %v2726
        %v2817 = vpack.c.b16 %v2733, %v2727
        %v2818 = vpack.c.b16 %v2734, %v2728
        %v2819 = vpack.c.b16 %v2735, %v2729
        %v2820 = vpack.c.b16 %v2742, %v2736
        %v2821 = vpack.c.b16 %v2743, %v2737
        %v2822 = vpack.c.b16 %v2744, %v2738
        %v2823 = vpack.c.b16 %v2745, %v2739
        %v2824 = vpack.c.b16 %v2746, %v2740
        %v2825 = vpack.c.b16 %v2747, %v2741
        %v2826 = vpack.c.b16 %v2754, %v2748
        %v2827 = vpack.c.b16 %v2755, %v2749
        %v2828 = vpack.c.b16 %v2756, %v2750
        %v2829 = vpack.c.b16 %v2757, %v2751
        %v2830 = vpack.c.b16 %v2758, %v2752
        %v2831 = vpack.c.b16 %v2759, %v2753
        %v2832 = vpack.c.b16 %v2766, %v2760
        %v2833 = vpack.c.b16 %v2767, %v2761
        %v2834 = vpack.c.b16 %v2768, %v2762
        %v2835 = vpack.c.b16 %v2769, %v2763
        %v2836 = vpack.c.b16 %v2770, %v2764
        %v2837 = vpack.c.b16 %v2771, %v2765
        %v2838 = vpack.c.b16 %v2778, %v2772
        %v2839 = vpack.c.b16 %v2779, %v2773
        %v2840 = vpack.c.b16 %v2780, %v2774
        %v2841 = vpack.c.b16 %v2781, %v2775
        %v2842 = vpack.c.b16 %v2782, %v2776
        %v2843 = vpack.c.b16 %v2783, %v2777
        %v2844 = vpack.c.b16 %v2790, %v2784
        %v2845 = vpack.c.b16 %v2791, %v2785
        %v2846 = vpack.c.b16 %v2792, %v2786
        %v2847 = vpack.c.b16 %v2793, %v2787
        %v2848 = vpack.c.b16 %v2794, %v2788
        %v2849 = vpack.c.b16 %v2795, %v2789
        %v2850 = vpack.c.b16 %v2802, %v2796
        %v2851 = vpack.c.b16 %v2803, %v2797
        %v2852 = vpack.c.b16 %v2804, %v2798
        %v2853 = vpack.c.b16 %v2805, %v2799
        %v2854 = vpack.c.b16 %v2806, %v2800
        %v2855 = vpack.c.b16 %v2807, %v2801
        %2904 = vmatprep.subr.bf16.mxu0 %v2809
        %2905 = vmatpush1.bf16.msra.mxu0 %v2808
        %2906 = vmatprep.subr.bf16.mxu0 %v2815
        %2907 = vmatpush1.bf16.msra.mxu0 %v2814
        %2908 = vmatprep.subr.bf16.mxu0 %v2821
        %2909 = vmatpush1.bf16.msra.mxu0 %v2820
        %2910 = vmatprep.subr.bf16.mxu0 %v2827
        %2911 = vmatpush1.bf16.msra.mxu0 %v2826
        %2912 = vmatprep.subr.bf16.mxu0 %v2833
        %2913 = vmatpush1.bf16.msra.mxu0 %v2832
        %2914 = vmatprep.subr.bf16.mxu0 %v2839
        %2915 = vmatpush1.bf16.msra.mxu0 %v2838
        %2916 = vmatprep.subr.bf16.mxu0 %v2845
        %2917 = vmatpush1.bf16.msra.mxu0 %v2844
        %2918 = vmatprep.subr.bf16.mxu0 %v2851
        %2919 = vmatpush1.bf16.msra.mxu0 %v2850
        %2920 = vmatprep.subr.bf16.mxu0 0
        %2921 = vmatpush1.bf16.msra.mxu0 0
        %2922 = vmatprep.subr.bf16.mxu0 0
        %2923 = vmatpush1.bf16.msra.mxu0 0
        %2924 = vmatprep.subr.bf16.mxu0 0
        %2925 = vmatpush1.bf16.msra.mxu0 0
        %2926 = vmatprep.subr.bf16.mxu0 0
        %2927 = vmatpush1.bf16.msra.mxu0 0
        %2928 = vmatprep.subr.bf16.mxu0 0
        %2929 = vmatpush1.bf16.msra.mxu0 0
        %2930 = vmatprep.subr.bf16.mxu0 0
        %2931 = vmatpush1.bf16.msra.mxu0 0
        %2932 = vmatprep.subr.bf16.mxu0 0
        %2933 = vmatpush1.bf16.msra.mxu0 0
        %2934 = vmatprep.subr.bf16.mxu0 0
        %2935 = vmatpush1.bf16.msra.mxu0 0
        %2936 = vmatprep.mubr.bf16.mxu0 0
        %2937 = vmatmul.mubr.bf16.gmra.mrb[0].mxu0 %v2662
        %v2938 = vpop.f32.mrb[0].mxu0
        %v2939 = vadd.f32 0.0, %v2938
        %v2940 = vpop.f32.mrb[0].mxu0
        %v2941 = vadd.f32 0.0, %v2940
        %v2942 = vpop.f32.mrb[0].mxu0
        %v2943 = vpop.f32.mrb[0].mxu0
        %2944 = vdwg.mxu0
        %2945 = vmatprep.subr.bf16.mxu0 %v2811
        %2946 = vmatpush1.bf16.msra.mxu0 %v2810
        %2947 = vmatprep.subr.bf16.mxu0 %v2817
        %2948 = vmatpush1.bf16.msra.mxu0 %v2816
        %2949 = vmatprep.subr.bf16.mxu0 %v2823
        %2950 = vmatpush1.bf16.msra.mxu0 %v2822
        %2951 = vmatprep.subr.bf16.mxu0 %v2829
        %2952 = vmatpush1.bf16.msra.mxu0 %v2828
        %2953 = vmatprep.subr.bf16.mxu0 %v2835
        %2954 = vmatpush1.bf16.msra.mxu0 %v2834
        %2955 = vmatprep.subr.bf16.mxu0 %v2841
        %2956 = vmatpush1.bf16.msra.mxu0 %v2840
        %2957 = vmatprep.subr.bf16.mxu0 %v2847
        %2958 = vmatpush1.bf16.msra.mxu0 %v2846
        %2959 = vmatprep.subr.bf16.mxu0 %v2853
        %2960 = vmatpush1.bf16.msra.mxu0 %v2852
        %2961 = vmatprep.subr.bf16.mxu0 0
        %2962 = vmatpush1.bf16.msra.mxu0 0
        %2963 = vmatprep.subr.bf16.mxu0 0
        %2964 = vmatpush1.bf16.msra.mxu0 0
        %2965 = vmatprep.subr.bf16.mxu0 0
        %2966 = vmatpush1.bf16.msra.mxu0 0
        %2967 = vmatprep.subr.bf16.mxu0 0
        %2968 = vmatpush1.bf16.msra.mxu0 0
        %2969 = vmatprep.subr.bf16.mxu0 0
        %2970 = vmatpush1.bf16.msra.mxu0 0
        %2971 = vmatprep.subr.bf16.mxu0 0
        %2972 = vmatpush1.bf16.msra.mxu0 0
        %2973 = vmatprep.subr.bf16.mxu0 0
        %2974 = vmatpush1.bf16.msra.mxu0 0
        %2975 = vmatprep.subr.bf16.mxu0 0
        %2976 = vmatpush1.bf16.msra.mxu0 0
        %2977 = vmatprep.mubr.bf16.mxu0 0
        %2978 = vmatmul.mubr.bf16.gmra.mrb[0].mxu0 %v2662
        %v2979 = vpop.f32.mrb[0].mxu0
        %v2980 = vadd.f32 0.0, %v2979
        %v2981 = vpop.f32.mrb[0].mxu0
        %v2982 = vadd.f32 0.0, %v2981
        %v2983 = vpop.f32.mrb[0].mxu0
        %v2984 = vpop.f32.mrb[0].mxu0
        %2985 = vdwg.mxu0
        %2986 = vmatprep.subr.bf16.mxu0 %v2813
        %2987 = vmatpush1.bf16.msra.mxu0 %v2812
        %2988 = vmatprep.subr.bf16.mxu0 %v2819
        %2989 = vmatpush1.bf16.msra.mxu0 %v2818
        %2990 = vmatprep.subr.bf16.mxu0 %v2825
        %2991 = vmatpush1.bf16.msra.mxu0 %v2824
        %2992 = vmatprep.subr.bf16.mxu0 %v2831
        %2993 = vmatpush1.bf16.msra.mxu0 %v2830
        %2994 = vmatprep.subr.bf16.mxu0 %v2837
        %2995 = vmatpush1.bf16.msra.mxu0 %v2836
        %2996 = vmatprep.subr.bf16.mxu0 %v2843
        %2997 = vmatpush1.bf16.msra.mxu0 %v2842
        %2998 = vmatprep.subr.bf16.mxu0 %v2849
        %2999 = vmatpush1.bf16.msra.mxu0 %v2848
        %3000 = vmatprep.subr.bf16.mxu0 %v2855
        %3001 = vmatpush1.bf16.msra.mxu0 %v2854
        %3002 = vmatprep.subr.bf16.mxu0 0
        %3003 = vmatpush1.bf16.msra.mxu0 0
        %3004 = vmatprep.subr.bf16.mxu0 0
        %3005 = vmatpush1.bf16.msra.mxu0 0
        %3006 = vmatprep.subr.bf16.mxu0 0
        %3007 = vmatpush1.bf16.msra.mxu0 0
        %3008 = vmatprep.subr.bf16.mxu0 0
        %3009 = vmatpush1.bf16.msra.mxu0 0
        %3010 = vmatprep.subr.bf16.mxu0 0
        %3011 = vmatpush1.bf16.msra.mxu0 0
        %3012 = vmatprep.subr.bf16.mxu0 0
        %3013 = vmatpush1.bf16.msra.mxu0 0
        %3014 = vmatprep.subr.bf16.mxu0 0
        %3015 = vmatpush1.bf16.msra.mxu0 0
        %3016 = vmatprep.subr.bf16.mxu0 0
        %3017 = vmatpush1.bf16.msra.mxu0 0
        %3018 = vmatprep.mubr.bf16.mxu0 0
        %3019 = vmatmul.mubr.bf16.gmra.mrb[0].mxu0 %v2662
        %v3020 = vpop.f32.mrb[0].mxu0
        %v3021 = vadd.f32 0.0, %v3020
        %v3022 = vpop.f32.mrb[0].mxu0
        %v3023 = vadd.f32 0.0, %v3022
        %v3024 = vpop.f32.mrb[0].mxu0
        %v3025 = vpop.f32.mrb[0].mxu0
        %3026 = vdwg.mxu0
        %v3027 = vadd.f32 %v2607, %v2939
        %v3028 = vadd.f32 %v2608, %v2941
        %v3029 = vadd.f32 %v2609, %v2980
        %v3030 = vadd.f32 %v2610, %v2982
        %v3031 = vadd.f32 %v2611, %v3021
        %v3032 = vadd.f32 %v2612, %v3023
        %s3033 = scalar_lea.vmem [#allocation10], 1920
        %v3034 = vld [vmem:[%s3033] sm:$0xff]
        %v3035 = vld [vmem:[%s3033 + $0x8] sm:$0xff]
        %v3036 = vld [vmem:[%s3033 + $0x10] sm:$0xff]
        %v3037 = vld [vmem:[%s3033 + $0x18] sm:$0xff]
        %v3038 = vld [vmem:[%s3033 + $0x20] sm:$0xff]
        %v3039 = vld [vmem:[%s3033 + $0x28] sm:$0xff]
        %v3040 = vld [vmem:[%s3033 + $0x30] sm:$0xff]
        %v3041 = vld [vmem:[%s3033 + $0x38] sm:$0xff]
        %v3042 = vld [vmem:[%s3033 + $0x40] sm:$0xff]
        %v3043 = vld [vmem:[%s3033 + $0x48] sm:$0xff]
        %v3044 = vld [vmem:[%s3033 + $0x50] sm:$0xff]
        %v3045 = vld [vmem:[%s3033 + $0x58] sm:$0xff]
        %v3046 = vld [vmem:[%s3033 + $0x60] sm:$0xff]
        %v3047 = vld [vmem:[%s3033 + $0x68] sm:$0xff]
        %v3048 = vld [vmem:[%s3033 + $0x70] sm:$0xff]
        %v3049 = vld [vmem:[%s3033 + $0x78] sm:$0xff]
        %v3050 = vld [vmem:[%s3033 + $0x80] sm:$0xff]
        %v3051 = vld [vmem:[%s3033 + $0x88] sm:$0xff]
        %v3052 = vld [vmem:[%s3033 + $0x90] sm:$0xff]
        %v3053 = vld [vmem:[%s3033 + $0x98] sm:$0xff]
        %v3054 = vld [vmem:[%s3033 + $0xa0] sm:$0xff]
        %v3055 = vld [vmem:[%s3033 + $0xa8] sm:$0xff]
        %v3056 = vld [vmem:[%s3033 + $0xb0] sm:$0xff]
        %v3057 = vld [vmem:[%s3033 + $0xb8] sm:$0xff]
        %v3058 = vld [vmem:[%s3033 + $0xc0] sm:$0xff]
        %v3059 = vld [vmem:[%s3033 + $0xc8] sm:$0xff]
        %v3060 = vld [vmem:[%s3033 + $0xd0] sm:$0xff]
        %v3061 = vld [vmem:[%s3033 + $0xd8] sm:$0xff]
        %v3062 = vld [vmem:[%s3033 + $0xe0] sm:$0xff]
        %v3063 = vld [vmem:[%s3033 + $0xe8] sm:$0xff]
        %v3064 = vld [vmem:[%s3033 + $0xf0] sm:$0xff]
        %v3065 = vld [vmem:[%s3033 + $0xf8] sm:$0xff]
        %v3066 = vld [vmem:[%s3033 + $0x100] sm:$0xff]
        %v3067 = vld [vmem:[%s3033 + $0x108] sm:$0xff]
        %v3068 = vld [vmem:[%s3033 + $0x110] sm:$0xff]
        %v3069 = vld [vmem:[%s3033 + $0x118] sm:$0xff]
        %v3070 = vld [vmem:[%s3033 + $0x120] sm:$0xff]
        %v3071 = vld [vmem:[%s3033 + $0x128] sm:$0xff]
        %v3072 = vld [vmem:[%s3033 + $0x130] sm:$0xff]
        %v3073 = vld [vmem:[%s3033 + $0x138] sm:$0xff]
        %v3074 = vld [vmem:[%s3033 + $0x140] sm:$0xff]
        %v3075 = vld [vmem:[%s3033 + $0x148] sm:$0xff]
        %v3076 = vld [vmem:[%s3033 + $0x150] sm:$0xff]
        %v3077 = vld [vmem:[%s3033 + $0x158] sm:$0xff]
        %v3078 = vld [vmem:[%s3033 + $0x160] sm:$0xff]
        %v3079 = vld [vmem:[%s3033 + $0x168] sm:$0xff]
        %v3080 = vld [vmem:[%s3033 + $0x170] sm:$0xff]
        %v3081 = vld [vmem:[%s3033 + $0x178] sm:$0xff]
        %v3082 = vrot.slane %v1043, 2
        %v3132 = vunpack.c.l.b16 %v3034
        %v3133 = vunpack.c.h.b16 %v3034
        %v3134 = vunpack.c.l.b16 %v3035
        %v3135 = vunpack.c.h.b16 %v3035
        %v3136 = vunpack.c.l.b16 %v3036
        %v3137 = vunpack.c.h.b16 %v3036
        %v3138 = vunpack.c.l.b16 %v3037
        %v3139 = vunpack.c.h.b16 %v3037
        %v3140 = vunpack.c.l.b16 %v3038
        %v3141 = vunpack.c.h.b16 %v3038
        %v3142 = vunpack.c.l.b16 %v3039
        %v3143 = vunpack.c.h.b16 %v3039
        %v3144 = vunpack.c.l.b16 %v3040
        %v3145 = vunpack.c.h.b16 %v3040
        %v3146 = vunpack.c.l.b16 %v3041
        %v3147 = vunpack.c.h.b16 %v3041
        %v3148 = vunpack.c.l.b16 %v3042
        %v3149 = vunpack.c.h.b16 %v3042
        %v3150 = vunpack.c.l.b16 %v3043
        %v3151 = vunpack.c.h.b16 %v3043
        %v3152 = vunpack.c.l.b16 %v3044
        %v3153 = vunpack.c.h.b16 %v3044
        %v3154 = vunpack.c.l.b16 %v3045
        %v3155 = vunpack.c.h.b16 %v3045
        %v3156 = vunpack.c.l.b16 %v3046
        %v3157 = vunpack.c.h.b16 %v3046
        %v3158 = vunpack.c.l.b16 %v3047
        %v3159 = vunpack.c.h.b16 %v3047
        %v3160 = vunpack.c.l.b16 %v3048
        %v3161 = vunpack.c.h.b16 %v3048
        %v3162 = vunpack.c.l.b16 %v3049
        %v3163 = vunpack.c.h.b16 %v3049
        %v3164 = vunpack.c.l.b16 %v3050
        %v3165 = vunpack.c.h.b16 %v3050
        %v3166 = vunpack.c.l.b16 %v3051
        %v3167 = vunpack.c.h.b16 %v3051
        %v3168 = vunpack.c.l.b16 %v3052
        %v3169 = vunpack.c.h.b16 %v3052
        %v3170 = vunpack.c.l.b16 %v3053
        %v3171 = vunpack.c.h.b16 %v3053
        %v3172 = vunpack.c.l.b16 %v3054
        %v3173 = vunpack.c.h.b16 %v3054
        %v3174 = vunpack.c.l.b16 %v3055
        %v3175 = vunpack.c.h.b16 %v3055
        %v3176 = vunpack.c.l.b16 %v3056
        %v3177 = vunpack.c.h.b16 %v3056
        %v3178 = vunpack.c.l.b16 %v3057
        %v3179 = vunpack.c.h.b16 %v3057
        %v3180 = vunpack.c.l.b16 %v3058
        %v3181 = vunpack.c.h.b16 %v3058
        %v3182 = vunpack.c.l.b16 %v3059
        %v3183 = vunpack.c.h.b16 %v3059
        %v3184 = vunpack.c.l.b16 %v3060
        %v3185 = vunpack.c.h.b16 %v3060
        %v3186 = vunpack.c.l.b16 %v3061
        %v3187 = vunpack.c.h.b16 %v3061
        %v3188 = vunpack.c.l.b16 %v3062
        %v3189 = vunpack.c.h.b16 %v3062
        %v3190 = vunpack.c.l.b16 %v3063
        %v3191 = vunpack.c.h.b16 %v3063
        %v3192 = vunpack.c.l.b16 %v3064
        %v3193 = vunpack.c.h.b16 %v3064
        %v3194 = vunpack.c.l.b16 %v3065
        %v3195 = vunpack.c.h.b16 %v3065
        %v3196 = vunpack.c.l.b16 %v3066
        %v3197 = vunpack.c.h.b16 %v3066
        %v3198 = vunpack.c.l.b16 %v3067
        %v3199 = vunpack.c.h.b16 %v3067
        %v3200 = vunpack.c.l.b16 %v3068
        %v3201 = vunpack.c.h.b16 %v3068
        %v3202 = vunpack.c.l.b16 %v3069
        %v3203 = vunpack.c.h.b16 %v3069
        %v3204 = vunpack.c.l.b16 %v3070
        %v3205 = vunpack.c.h.b16 %v3070
        %v3206 = vunpack.c.l.b16 %v3071
        %v3207 = vunpack.c.h.b16 %v3071
        %v3208 = vunpack.c.l.b16 %v3072
        %v3209 = vunpack.c.h.b16 %v3072
        %v3210 = vunpack.c.l.b16 %v3073
        %v3211 = vunpack.c.h.b16 %v3073
        %v3212 = vunpack.c.l.b16 %v3074
        %v3213 = vunpack.c.h.b16 %v3074
        %v3214 = vunpack.c.l.b16 %v3075
        %v3215 = vunpack.c.h.b16 %v3075
        %v3216 = vunpack.c.l.b16 %v3076
        %v3217 = vunpack.c.h.b16 %v3076
        %v3218 = vunpack.c.l.b16 %v3077
        %v3219 = vunpack.c.h.b16 %v3077
        %v3220 = vunpack.c.l.b16 %v3078
        %v3221 = vunpack.c.h.b16 %v3078
        %v3222 = vunpack.c.l.b16 %v3079
        %v3223 = vunpack.c.h.b16 %v3079
        %v3224 = vunpack.c.l.b16 %v3080
        %v3225 = vunpack.c.h.b16 %v3080
        %v3226 = vunpack.c.l.b16 %v3081
        %v3227 = vunpack.c.h.b16 %v3081
        %v3228 = vpack.c.b16 %v3138, %v3132
        %v3229 = vpack.c.b16 %v3139, %v3133
        %v3230 = vpack.c.b16 %v3140, %v3134
        %v3231 = vpack.c.b16 %v3141, %v3135
        %v3232 = vpack.c.b16 %v3142, %v3136
        %v3233 = vpack.c.b16 %v3143, %v3137
        %v3234 = vpack.c.b16 %v3150, %v3144
        %v3235 = vpack.c.b16 %v3151, %v3145
        %v3236 = vpack.c.b16 %v3152, %v3146
        %v3237 = vpack.c.b16 %v3153, %v3147
        %v3238 = vpack.c.b16 %v3154, %v3148
        %v3239 = vpack.c.b16 %v3155, %v3149
        %v3240 = vpack.c.b16 %v3162, %v3156
        %v3241 = vpack.c.b16 %v3163, %v3157
        %v3242 = vpack.c.b16 %v3164, %v3158
        %v3243 = vpack.c.b16 %v3165, %v3159
        %v3244 = vpack.c.b16 %v3166, %v3160
        %v3245 = vpack.c.b16 %v3167, %v3161
        %v3246 = vpack.c.b16 %v3174, %v3168
        %v3247 = vpack.c.b16 %v3175, %v3169
        %v3248 = vpack.c.b16 %v3176, %v3170
        %v3249 = vpack.c.b16 %v3177, %v3171
        %v3250 = vpack.c.b16 %v3178, %v3172
        %v3251 = vpack.c.b16 %v3179, %v3173
        %v3252 = vpack.c.b16 %v3186, %v3180
        %v3253 = vpack.c.b16 %v3187, %v3181
        %v3254 = vpack.c.b16 %v3188, %v3182
        %v3255 = vpack.c.b16 %v3189, %v3183
        %v3256 = vpack.c.b16 %v3190, %v3184
        %v3257 = vpack.c.b16 %v3191, %v3185
        %v3258 = vpack.c.b16 %v3198, %v3192
        %v3259 = vpack.c.b16 %v3199, %v3193
        %v3260 = vpack.c.b16 %v3200, %v3194
        %v3261 = vpack.c.b16 %v3201, %v3195
        %v3262 = vpack.c.b16 %v3202, %v3196
        %v3263 = vpack.c.b16 %v3203, %v3197
        %v3264 = vpack.c.b16 %v3210, %v3204
        %v3265 = vpack.c.b16 %v3211, %v3205
        %v3266 = vpack.c.b16 %v3212, %v3206
        %v3267 = vpack.c.b16 %v3213, %v3207
        %v3268 = vpack.c.b16 %v3214, %v3208
        %v3269 = vpack.c.b16 %v3215, %v3209
        %v3270 = vpack.c.b16 %v3222, %v3216
        %v3271 = vpack.c.b16 %v3223, %v3217
        %v3272 = vpack.c.b16 %v3224, %v3218
        %v3273 = vpack.c.b16 %v3225, %v3219
        %v3274 = vpack.c.b16 %v3226, %v3220
        %v3275 = vpack.c.b16 %v3227, %v3221
        %3324 = vmatprep.subr.bf16.mxu0 %v3229
        %3325 = vmatpush1.bf16.msra.mxu0 %v3228
        %3326 = vmatprep.subr.bf16.mxu0 %v3235
        %3327 = vmatpush1.bf16.msra.mxu0 %v3234
        %3328 = vmatprep.subr.bf16.mxu0 %v3241
        %3329 = vmatpush1.bf16.msra.mxu0 %v3240
        %3330 = vmatprep.subr.bf16.mxu0 %v3247
        %3331 = vmatpush1.bf16.msra.mxu0 %v3246
        %3332 = vmatprep.subr.bf16.mxu0 %v3253
        %3333 = vmatpush1.bf16.msra.mxu0 %v3252
        %3334 = vmatprep.subr.bf16.mxu0 %v3259
        %3335 = vmatpush1.bf16.msra.mxu0 %v3258
        %3336 = vmatprep.subr.bf16.mxu0 %v3265
        %3337 = vmatpush1.bf16.msra.mxu0 %v3264
        %3338 = vmatprep.subr.bf16.mxu0 %v3271
        %3339 = vmatpush1.bf16.msra.mxu0 %v3270
        %3340 = vmatprep.subr.bf16.mxu0 0
        %3341 = vmatpush1.bf16.msra.mxu0 0
        %3342 = vmatprep.subr.bf16.mxu0 0
        %3343 = vmatpush1.bf16.msra.mxu0 0
        %3344 = vmatprep.subr.bf16.mxu0 0
        %3345 = vmatpush1.bf16.msra.mxu0 0
        %3346 = vmatprep.subr.bf16.mxu0 0
        %3347 = vmatpush1.bf16.msra.mxu0 0
        %3348 = vmatprep.subr.bf16.mxu0 0
        %3349 = vmatpush1.bf16.msra.mxu0 0
        %3350 = vmatprep.subr.bf16.mxu0 0
        %3351 = vmatpush1.bf16.msra.mxu0 0
        %3352 = vmatprep.subr.bf16.mxu0 0
        %3353 = vmatpush1.bf16.msra.mxu0 0
        %3354 = vmatprep.subr.bf16.mxu0 0
        %3355 = vmatpush1.bf16.msra.mxu0 0
        %3356 = vmatprep.mubr.bf16.mxu0 0
        %3357 = vmatmul.mubr.bf16.gmra.mrb[0].mxu0 %v3082
        %v3358 = vpop.f32.mrb[0].mxu0
        %v3359 = vadd.f32 0.0, %v3358
        %v3360 = vpop.f32.mrb[0].mxu0
        %v3361 = vadd.f32 0.0, %v3360
        %v3362 = vpop.f32.mrb[0].mxu0
        %v3363 = vpop.f32.mrb[0].mxu0
        %3364 = vdwg.mxu0
        %3365 = vmatprep.subr.bf16.mxu0 %v3231
        %3366 = vmatpush1.bf16.msra.mxu0 %v3230
        %3367 = vmatprep.subr.bf16.mxu0 %v3237
        %3368 = vmatpush1.bf16.msra.mxu0 %v3236
        %3369 = vmatprep.subr.bf16.mxu0 %v3243
        %3370 = vmatpush1.bf16.msra.mxu0 %v3242
        %3371 = vmatprep.subr.bf16.mxu0 %v3249
        %3372 = vmatpush1.bf16.msra.mxu0 %v3248
        %3373 = vmatprep.subr.bf16.mxu0 %v3255
        %3374 = vmatpush1.bf16.msra.mxu0 %v3254
        %3375 = vmatprep.subr.bf16.mxu0 %v3261
        %3376 = vmatpush1.bf16.msra.mxu0 %v3260
        %3377 = vmatprep.subr.bf16.mxu0 %v3267
        %3378 = vmatpush1.bf16.msra.mxu0 %v3266
        %3379 = vmatprep.subr.bf16.mxu0 %v3273
        %3380 = vmatpush1.bf16.msra.mxu0 %v3272
        %3381 = vmatprep.subr.bf16.mxu0 0
        %3382 = vmatpush1.bf16.msra.mxu0 0
        %3383 = vmatprep.subr.bf16.mxu0 0
        %3384 = vmatpush1.bf16.msra.mxu0 0
        %3385 = vmatprep.subr.bf16.mxu0 0
        %3386 = vmatpush1.bf16.msra.mxu0 0
        %3387 = vmatprep.subr.bf16.mxu0 0
        %3388 = vmatpush1.bf16.msra.mxu0 0
        %3389 = vmatprep.subr.bf16.mxu0 0
        %3390 = vmatpush1.bf16.msra.mxu0 0
        %3391 = vmatprep.subr.bf16.mxu0 0
        %3392 = vmatpush1.bf16.msra.mxu0 0
        %3393 = vmatprep.subr.bf16.mxu0 0
        %3394 = vmatpush1.bf16.msra.mxu0 0
        %3395 = vmatprep.subr.bf16.mxu0 0
        %3396 = vmatpush1.bf16.msra.mxu0 0
        %3397 = vmatprep.mubr.bf16.mxu0 0
        %3398 = vmatmul.mubr.bf16.gmra.mrb[0].mxu0 %v3082
        %v3399 = vpop.f32.mrb[0].mxu0
        %v3400 = vadd.f32 0.0, %v3399
        %v3401 = vpop.f32.mrb[0].mxu0
        %v3402 = vadd.f32 0.0, %v3401
        %v3403 = vpop.f32.mrb[0].mxu0
        %v3404 = vpop.f32.mrb[0].mxu0
        %3405 = vdwg.mxu0
        %3406 = vmatprep.subr.bf16.mxu0 %v3233
        %3407 = vmatpush1.bf16.msra.mxu0 %v3232
        %3408 = vmatprep.subr.bf16.mxu0 %v3239
        %3409 = vmatpush1.bf16.msra.mxu0 %v3238
        %3410 = vmatprep.subr.bf16.mxu0 %v3245
        %3411 = vmatpush1.bf16.msra.mxu0 %v3244
        %3412 = vmatprep.subr.bf16.mxu0 %v3251
        %3413 = vmatpush1.bf16.msra.mxu0 %v3250
        %3414 = vmatprep.subr.bf16.mxu0 %v3257
        %3415 = vmatpush1.bf16.msra.mxu0 %v3256
        %3416 = vmatprep.subr.bf16.mxu0 %v3263
        %3417 = vmatpush1.bf16.msra.mxu0 %v3262
        %3418 = vmatprep.subr.bf16.mxu0 %v3269
        %3419 = vmatpush1.bf16.msra.mxu0 %v3268
        %3420 = vmatprep.subr.bf16.mxu0 %v3275
        %3421 = vmatpush1.bf16.msra.mxu0 %v3274
        %3422 = vmatprep.subr.bf16.mxu0 0
        %3423 = vmatpush1.bf16.msra.mxu0 0
        %3424 = vmatprep.subr.bf16.mxu0 0
        %3425 = vmatpush1.bf16.msra.mxu0 0
        %3426 = vmatprep.subr.bf16.mxu0 0
        %3427 = vmatpush1.bf16.msra.mxu0 0
        %3428 = vmatprep.subr.bf16.mxu0 0
        %3429 = vmatpush1.bf16.msra.mxu0 0
        %3430 = vmatprep.subr.bf16.mxu0 0
        %3431 = vmatpush1.bf16.msra.mxu0 0
        %3432 = vmatprep.subr.bf16.mxu0 0
        %3433 = vmatpush1.bf16.msra.mxu0 0
        %3434 = vmatprep.subr.bf16.mxu0 0
        %3435 = vmatpush1.bf16.msra.mxu0 0
        %3436 = vmatprep.subr.bf16.mxu0 0
        %3437 = vmatpush1.bf16.msra.mxu0 0
        %3438 = vmatprep.mubr.bf16.mxu0 0
        %3439 = vmatmul.mubr.bf16.gmra.mrb[0].mxu0 %v3082
        %v3440 = vpop.f32.mrb[0].mxu0
        %v3441 = vadd.f32 0.0, %v3440
        %v3442 = vpop.f32.mrb[0].mxu0
        %v3443 = vadd.f32 0.0, %v3442
        %v3444 = vpop.f32.mrb[0].mxu0
        %v3445 = vpop.f32.mrb[0].mxu0
        %3446 = vdwg.mxu0
        %v3447 = vadd.f32 %v3027, %v3359
        %v3448 = vadd.f32 %v3028, %v3361
        %v3449 = vadd.f32 %v3029, %v3400
        %v3450 = vadd.f32 %v3030, %v3402
        %v3451 = vadd.f32 %v3031, %v3441
        %v3452 = vadd.f32 %v3032, %v3443
        %s3453 = scalar_lea.vmem [#allocation10], 2304
        %v3454 = vld [vmem:[%s3453] sm:$0xff]
        %v3455 = vld [vmem:[%s3453 + $0x8] sm:$0xff]
        %v3456 = vld [vmem:[%s3453 + $0x10] sm:$0xff]
        %v3457 = vld [vmem:[%s3453 + $0x18] sm:$0xff]
        %v3458 = vld [vmem:[%s3453 + $0x20] sm:$0xff]
        %v3459 = vld [vmem:[%s3453 + $0x28] sm:$0xff]
        %v3460 = vld [vmem:[%s3453 + $0x30] sm:$0xff]
        %v3461 = vld [vmem:[%s3453 + $0x38] sm:$0xff]
        %v3462 = vld [vmem:[%s3453 + $0x40] sm:$0xff]
        %v3463 = vld [vmem:[%s3453 + $0x48] sm:$0xff]
        %v3464 = vld [vmem:[%s3453 + $0x50] sm:$0xff]
        %v3465 = vld [vmem:[%s3453 + $0x58] sm:$0xff]
        %v3466 = vld [vmem:[%s3453 + $0x60] sm:$0xff]
        %v3467 = vld [vmem:[%s3453 + $0x68] sm:$0xff]
        %v3468 = vld [vmem:[%s3453 + $0x70] sm:$0xff]
        %v3469 = vld [vmem:[%s3453 + $0x78] sm:$0xff]
        %v3470 = vld [vmem:[%s3453 + $0x80] sm:$0xff]
        %v3471 = vld [vmem:[%s3453 + $0x88] sm:$0xff]
        %v3472 = vld [vmem:[%s3453 + $0x90] sm:$0xff]
        %v3473 = vld [vmem:[%s3453 + $0x98] sm:$0xff]
        %v3474 = vld [vmem:[%s3453 + $0xa0] sm:$0xff]
        %v3475 = vld [vmem:[%s3453 + $0xa8] sm:$0xff]
        %v3476 = vld [vmem:[%s3453 + $0xb0] sm:$0xff]
        %v3477 = vld [vmem:[%s3453 + $0xb8] sm:$0xff]
        %v3478 = vld [vmem:[%s3453 + $0xc0] sm:$0xff]
        %v3479 = vld [vmem:[%s3453 + $0xc8] sm:$0xff]
        %v3480 = vld [vmem:[%s3453 + $0xd0] sm:$0xff]
        %v3481 = vld [vmem:[%s3453 + $0xd8] sm:$0xff]
        %v3482 = vld [vmem:[%s3453 + $0xe0] sm:$0xff]
        %v3483 = vld [vmem:[%s3453 + $0xe8] sm:$0xff]
        %v3484 = vld [vmem:[%s3453 + $0xf0] sm:$0xff]
        %v3485 = vld [vmem:[%s3453 + $0xf8] sm:$0xff]
        %v3486 = vld [vmem:[%s3453 + $0x100] sm:$0xff]
        %v3487 = vld [vmem:[%s3453 + $0x108] sm:$0xff]
        %v3488 = vld [vmem:[%s3453 + $0x110] sm:$0xff]
        %v3489 = vld [vmem:[%s3453 + $0x118] sm:$0xff]
        %v3490 = vld [vmem:[%s3453 + $0x120] sm:$0xff]
        %v3491 = vld [vmem:[%s3453 + $0x128] sm:$0xff]
        %v3492 = vld [vmem:[%s3453 + $0x130] sm:$0xff]
        %v3493 = vld [vmem:[%s3453 + $0x138] sm:$0xff]
        %v3494 = vld [vmem:[%s3453 + $0x140] sm:$0xff]
        %v3495 = vld [vmem:[%s3453 + $0x148] sm:$0xff]
        %v3496 = vld [vmem:[%s3453 + $0x150] sm:$0xff]
        %v3497 = vld [vmem:[%s3453 + $0x158] sm:$0xff]
        %v3498 = vld [vmem:[%s3453 + $0x160] sm:$0xff]
        %v3499 = vld [vmem:[%s3453 + $0x168] sm:$0xff]
        %v3500 = vld [vmem:[%s3453 + $0x170] sm:$0xff]
        %v3501 = vld [vmem:[%s3453 + $0x178] sm:$0xff]
        %v3502 = vrot.slane %v944, 3
        %v3552 = vunpack.c.l.b16 %v3454
        %v3553 = vunpack.c.h.b16 %v3454
        %v3554 = vunpack.c.l.b16 %v3455
        %v3555 = vunpack.c.h.b16 %v3455
        %v3556 = vunpack.c.l.b16 %v3456
        %v3557 = vunpack.c.h.b16 %v3456
        %v3558 = vunpack.c.l.b16 %v3457
        %v3559 = vunpack.c.h.b16 %v3457
        %v3560 = vunpack.c.l.b16 %v3458
        %v3561 = vunpack.c.h.b16 %v3458
        %v3562 = vunpack.c.l.b16 %v3459
        %v3563 = vunpack.c.h.b16 %v3459
        %v3564 = vunpack.c.l.b16 %v3460
        %v3565 = vunpack.c.h.b16 %v3460
        %v3566 = vunpack.c.l.b16 %v3461
        %v3567 = vunpack.c.h.b16 %v3461
        %v3568 = vunpack.c.l.b16 %v3462
        %v3569 = vunpack.c.h.b16 %v3462
        %v3570 = vunpack.c.l.b16 %v3463
        %v3571 = vunpack.c.h.b16 %v3463
        %v3572 = vunpack.c.l.b16 %v3464
        %v3573 = vunpack.c.h.b16 %v3464
        %v3574 = vunpack.c.l.b16 %v3465
        %v3575 = vunpack.c.h.b16 %v3465
        %v3576 = vunpack.c.l.b16 %v3466
        %v3577 = vunpack.c.h.b16 %v3466
        %v3578 = vunpack.c.l.b16 %v3467
        %v3579 = vunpack.c.h.b16 %v3467
        %v3580 = vunpack.c.l.b16 %v3468
        %v3581 = vunpack.c.h.b16 %v3468
        %v3582 = vunpack.c.l.b16 %v3469
        %v3583 = vunpack.c.h.b16 %v3469
        %v3584 = vunpack.c.l.b16 %v3470
        %v3585 = vunpack.c.h.b16 %v3470
        %v3586 = vunpack.c.l.b16 %v3471
        %v3587 = vunpack.c.h.b16 %v3471
        %v3588 = vunpack.c.l.b16 %v3472
        %v3589 = vunpack.c.h.b16 %v3472
        %v3590 = vunpack.c.l.b16 %v3473
        %v3591 = vunpack.c.h.b16 %v3473
        %v3592 = vunpack.c.l.b16 %v3474
        %v3593 = vunpack.c.h.b16 %v3474
        %v3594 = vunpack.c.l.b16 %v3475
        %v3595 = vunpack.c.h.b16 %v3475
        %v3596 = vunpack.c.l.b16 %v3476
        %v3597 = vunpack.c.h.b16 %v3476
        %v3598 = vunpack.c.l.b16 %v3477
        %v3599 = vunpack.c.h.b16 %v3477
        %v3600 = vunpack.c.l.b16 %v3478
        %v3601 = vunpack.c.h.b16 %v3478
        %v3602 = vunpack.c.l.b16 %v3479
        %v3603 = vunpack.c.h.b16 %v3479
        %v3604 = vunpack.c.l.b16 %v3480
        %v3605 = vunpack.c.h.b16 %v3480
        %v3606 = vunpack.c.l.b16 %v3481
        %v3607 = vunpack.c.h.b16 %v3481
        %v3608 = vunpack.c.l.b16 %v3482
        %v3609 = vunpack.c.h.b16 %v3482
        %v3610 = vunpack.c.l.b16 %v3483
        %v3611 = vunpack.c.h.b16 %v3483
        %v3612 = vunpack.c.l.b16 %v3484
        %v3613 = vunpack.c.h.b16 %v3484
        %v3614 = vunpack.c.l.b16 %v3485
        %v3615 = vunpack.c.h.b16 %v3485
        %v3616 = vunpack.c.l.b16 %v3486
        %v3617 = vunpack.c.h.b16 %v3486
        %v3618 = vunpack.c.l.b16 %v3487
        %v3619 = vunpack.c.h.b16 %v3487
        %v3620 = vunpack.c.l.b16 %v3488
        %v3621 = vunpack.c.h.b16 %v3488
        %v3622 = vunpack.c.l.b16 %v3489
        %v3623 = vunpack.c.h.b16 %v3489
        %v3624 = vunpack.c.l.b16 %v3490
        %v3625 = vunpack.c.h.b16 %v3490
        %v3626 = vunpack.c.l.b16 %v3491
        %v3627 = vunpack.c.h.b16 %v3491
        %v3628 = vunpack.c.l.b16 %v3492
        %v3629 = vunpack.c.h.b16 %v3492
        %v3630 = vunpack.c.l.b16 %v3493
        %v3631 = vunpack.c.h.b16 %v3493
        %v3632 = vunpack.c.l.b16 %v3494
        %v3633 = vunpack.c.h.b16 %v3494
        %v3634 = vunpack.c.l.b16 %v3495
        %v3635 = vunpack.c.h.b16 %v3495
        %v3636 = vunpack.c.l.b16 %v3496
        %v3637 = vunpack.c.h.b16 %v3496
        %v3638 = vunpack.c.l.b16 %v3497
        %v3639 = vunpack.c.h.b16 %v3497
        %v3640 = vunpack.c.l.b16 %v3498
        %v3641 = vunpack.c.h.b16 %v3498
        %v3642 = vunpack.c.l.b16 %v3499
        %v3643 = vunpack.c.h.b16 %v3499
        %v3644 = vunpack.c.l.b16 %v3500
        %v3645 = vunpack.c.h.b16 %v3500
        %v3646 = vunpack.c.l.b16 %v3501
        %v3647 = vunpack.c.h.b16 %v3501
        %v3648 = vpack.c.b16 %v3558, %v3552
        %v3649 = vpack.c.b16 %v3559, %v3553
        %v3650 = vpack.c.b16 %v3560, %v3554
        %v3651 = vpack.c.b16 %v3561, %v3555
        %v3652 = vpack.c.b16 %v3562, %v3556
        %v3653 = vpack.c.b16 %v3563, %v3557
        %v3654 = vpack.c.b16 %v3570, %v3564
        %v3655 = vpack.c.b16 %v3571, %v3565
        %v3656 = vpack.c.b16 %v3572, %v3566
        %v3657 = vpack.c.b16 %v3573, %v3567
        %v3658 = vpack.c.b16 %v3574, %v3568
        %v3659 = vpack.c.b16 %v3575, %v3569
        %v3660 = vpack.c.b16 %v3582, %v3576
        %v3661 = vpack.c.b16 %v3583, %v3577
        %v3662 = vpack.c.b16 %v3584, %v3578
        %v3663 = vpack.c.b16 %v3585, %v3579
        %v3664 = vpack.c.b16 %v3586, %v3580
        %v3665 = vpack.c.b16 %v3587, %v3581
        %v3666 = vpack.c.b16 %v3594, %v3588
        %v3667 = vpack.c.b16 %v3595, %v3589
        %v3668 = vpack.c.b16 %v3596, %v3590
        %v3669 = vpack.c.b16 %v3597, %v3591
        %v3670 = vpack.c.b16 %v3598, %v3592
        %v3671 = vpack.c.b16 %v3599, %v3593
        %v3672 = vpack.c.b16 %v3606, %v3600
        %v3673 = vpack.c.b16 %v3607, %v3601
        %v3674 = vpack.c.b16 %v3608, %v3602
        %v3675 = vpack.c.b16 %v3609, %v3603
        %v3676 = vpack.c.b16 %v3610, %v3604
        %v3677 = vpack.c.b16 %v3611, %v3605
        %v3678 = vpack.c.b16 %v3618, %v3612
        %v3679 = vpack.c.b16 %v3619, %v3613
        %v3680 = vpack.c.b16 %v3620, %v3614
        %v3681 = vpack.c.b16 %v3621, %v3615
        %v3682 = vpack.c.b16 %v3622, %v3616
        %v3683 = vpack.c.b16 %v3623, %v3617
        %v3684 = vpack.c.b16 %v3630, %v3624
        %v3685 = vpack.c.b16 %v3631, %v3625
        %v3686 = vpack.c.b16 %v3632, %v3626
        %v3687 = vpack.c.b16 %v3633, %v3627
        %v3688 = vpack.c.b16 %v3634, %v3628
        %v3689 = vpack.c.b16 %v3635, %v3629
        %v3690 = vpack.c.b16 %v3642, %v3636
        %v3691 = vpack.c.b16 %v3643, %v3637
        %v3692 = vpack.c.b16 %v3644, %v3638
        %v3693 = vpack.c.b16 %v3645, %v3639
        %v3694 = vpack.c.b16 %v3646, %v3640
        %v3695 = vpack.c.b16 %v3647, %v3641
        %3744 = vmatprep.subr.bf16.mxu0 %v3649
        %3745 = vmatpush1.bf16.msra.mxu0 %v3648
        %3746 = vmatprep.subr.bf16.mxu0 %v3655
        %3747 = vmatpush1.bf16.msra.mxu0 %v3654
        %3748 = vmatprep.subr.bf16.mxu0 %v3661
        %3749 = vmatpush1.bf16.msra.mxu0 %v3660
        %3750 = vmatprep.subr.bf16.mxu0 %v3667
        %3751 = vmatpush1.bf16.msra.mxu0 %v3666
        %3752 = vmatprep.subr.bf16.mxu0 %v3673
        %3753 = vmatpush1.bf16.msra.mxu0 %v3672
        %3754 = vmatprep.subr.bf16.mxu0 %v3679
        %3755 = vmatpush1.bf16.msra.mxu0 %v3678
        %3756 = vmatprep.subr.bf16.mxu0 %v3685
        %3757 = vmatpush1.bf16.msra.mxu0 %v3684
        %3758 = vmatprep.subr.bf16.mxu0 %v3691
        %3759 = vmatpush1.bf16.msra.mxu0 %v3690
        %3760 = vmatprep.subr.bf16.mxu0 0
        %3761 = vmatpush1.bf16.msra.mxu0 0
        %3762 = vmatprep.subr.bf16.mxu0 0
        %3763 = vmatpush1.bf16.msra.mxu0 0
        %3764 = vmatprep.subr.bf16.mxu0 0
        %3765 = vmatpush1.bf16.msra.mxu0 0
        %3766 = vmatprep.subr.bf16.mxu0 0
        %3767 = vmatpush1.bf16.msra.mxu0 0
        %3768 = vmatprep.subr.bf16.mxu0 0
        %3769 = vmatpush1.bf16.msra.mxu0 0
        %3770 = vmatprep.subr.bf16.mxu0 0
        %3771 = vmatpush1.bf16.msra.mxu0 0
        %3772 = vmatprep.subr.bf16.mxu0 0
        %3773 = vmatpush1.bf16.msra.mxu0 0
        %3774 = vmatprep.subr.bf16.mxu0 0
        %3775 = vmatpush1.bf16.msra.mxu0 0
        %3776 = vmatprep.mubr.bf16.mxu0 0
        %3777 = vmatmul.mubr.bf16.gmra.mrb[0].mxu0 %v3502
        %v3778 = vpop.f32.mrb[0].mxu0
        %v3779 = vadd.f32 0.0, %v3778
        %v3780 = vpop.f32.mrb[0].mxu0
        %v3781 = vadd.f32 0.0, %v3780
        %v3782 = vpop.f32.mrb[0].mxu0
        %v3783 = vpop.f32.mrb[0].mxu0
        %3784 = vdwg.mxu0
        %3785 = vmatprep.subr.bf16.mxu0 %v3651
        %3786 = vmatpush1.bf16.msra.mxu0 %v3650
        %3787 = vmatprep.subr.bf16.mxu0 %v3657
        %3788 = vmatpush1.bf16.msra.mxu0 %v3656
        %3789 = vmatprep.subr.bf16.mxu0 %v3663
        %3790 = vmatpush1.bf16.msra.mxu0 %v3662
        %3791 = vmatprep.subr.bf16.mxu0 %v3669
        %3792 = vmatpush1.bf16.msra.mxu0 %v3668
        %3793 = vmatprep.subr.bf16.mxu0 %v3675
        %3794 = vmatpush1.bf16.msra.mxu0 %v3674
        %3795 = vmatprep.subr.bf16.mxu0 %v3681
        %3796 = vmatpush1.bf16.msra.mxu0 %v3680
        %3797 = vmatprep.subr.bf16.mxu0 %v3687
        %3798 = vmatpush1.bf16.msra.mxu0 %v3686
        %3799 = vmatprep.subr.bf16.mxu0 %v3693
        %3800 = vmatpush1.bf16.msra.mxu0 %v3692
        %3801 = vmatprep.subr.bf16.mxu0 0
        %3802 = vmatpush1.bf16.msra.mxu0 0
        %3803 = vmatprep.subr.bf16.mxu0 0
        %3804 = vmatpush1.bf16.msra.mxu0 0
        %3805 = vmatprep.subr.bf16.mxu0 0
        %3806 = vmatpush1.bf16.msra.mxu0 0
        %3807 = vmatprep.subr.bf16.mxu0 0
        %3808 = vmatpush1.bf16.msra.mxu0 0
        %3809 = vmatprep.subr.bf16.mxu0 0
        %3810 = vmatpush1.bf16.msra.mxu0 0
        %3811 = vmatprep.subr.bf16.mxu0 0
        %3812 = vmatpush1.bf16.msra.mxu0 0
        %3813 = vmatprep.subr.bf16.mxu0 0
        %3814 = vmatpush1.bf16.msra.mxu0 0
        %3815 = vmatprep.subr.bf16.mxu0 0
        %3816 = vmatpush1.bf16.msra.mxu0 0
        %3817 = vmatprep.mubr.bf16.mxu0 0
        %3818 = vmatmul.mubr.bf16.gmra.mrb[0].mxu0 %v3502
        %v3819 = vpop.f32.mrb[0].mxu0
        %v3820 = vadd.f32 0.0, %v3819
        %v3821 = vpop.f32.mrb[0].mxu0
        %v3822 = vadd.f32 0.0, %v3821
        %v3823 = vpop.f32.mrb[0].mxu0
        %v3824 = vpop.f32.mrb[0].mxu0
        %3825 = vdwg.mxu0
        %3826 = vmatprep.subr.bf16.mxu0 %v3653
        %3827 = vmatpush1.bf16.msra.mxu0 %v3652
        %3828 = vmatprep.subr.bf16.mxu0 %v3659
        %3829 = vmatpush1.bf16.msra.mxu0 %v3658
        %3830 = vmatprep.subr.bf16.mxu0 %v3665
        %3831 = vmatpush1.bf16.msra.mxu0 %v3664
        %3832 = vmatprep.subr.bf16.mxu0 %v3671
        %3833 = vmatpush1.bf16.msra.mxu0 %v3670
        %3834 = vmatprep.subr.bf16.mxu0 %v3677
        %3835 = vmatpush1.bf16.msra.mxu0 %v3676
        %3836 = vmatprep.subr.bf16.mxu0 %v3683
        %3837 = vmatpush1.bf16.msra.mxu0 %v3682
        %3838 = vmatprep.subr.bf16.mxu0 %v3689
        %3839 = vmatpush1.bf16.msra.mxu0 %v3688
        %3840 = vmatprep.subr.bf16.mxu0 %v3695
        %3841 = vmatpush1.bf16.msra.mxu0 %v3694
        %3842 = vmatprep.subr.bf16.mxu0 0
        %3843 = vmatpush1.bf16.msra.mxu0 0
        %3844 = vmatprep.subr.bf16.mxu0 0
        %3845 = vmatpush1.bf16.msra.mxu0 0
        %3846 = vmatprep.subr.bf16.mxu0 0
        %3847 = vmatpush1.bf16.msra.mxu0 0
        %3848 = vmatprep.subr.bf16.mxu0 0
        %3849 = vmatpush1.bf16.msra.mxu0 0
        %3850 = vmatprep.subr.bf16.mxu0 0
        %3851 = vmatpush1.bf16.msra.mxu0 0
        %3852 = vmatprep.subr.bf16.mxu0 0
        %3853 = vmatpush1.bf16.msra.mxu0 0
        %3854 = vmatprep.subr.bf16.mxu0 0
        %3855 = vmatpush1.bf16.msra.mxu0 0
        %3856 = vmatprep.subr.bf16.mxu0 0
        %3857 = vmatpush1.bf16.msra.mxu0 0
        %3858 = vmatprep.mubr.bf16.mxu0 0
        %3859 = vmatmul.mubr.bf16.gmra.mrb[0].mxu0 %v3502
        %v3860 = vpop.f32.mrb[0].mxu0
        %v3861 = vadd.f32 0.0, %v3860
        %v3862 = vpop.f32.mrb[0].mxu0
        %v3863 = vadd.f32 0.0, %v3862
        %v3864 = vpop.f32.mrb[0].mxu0
        %v3865 = vpop.f32.mrb[0].mxu0
        %3866 = vdwg.mxu0
        %v3867 = vadd.f32 %v3447, %v3779
        %v3868 = vadd.f32 %v3448, %v3781
        %v3869 = vadd.f32 %v3449, %v3820
        %v3870 = vadd.f32 %v3450, %v3822
        %v3871 = vadd.f32 %v3451, %v3861
        %v3872 = vadd.f32 %v3452, %v3863
        %s3873 = scalar_lea.vmem [#allocation10], 2688
        %v3874 = vld [vmem:[%s3873] sm:$0xff]
        %v3875 = vld [vmem:[%s3873 + $0x8] sm:$0xff]
        %v3876 = vld [vmem:[%s3873 + $0x10] sm:$0xff]
        %v3877 = vld [vmem:[%s3873 + $0x18] sm:$0xff]
        %v3878 = vld [vmem:[%s3873 + $0x20] sm:$0xff]
        %v3879 = vld [vmem:[%s3873 + $0x28] sm:$0xff]
        %v3880 = vld [vmem:[%s3873 + $0x30] sm:$0xff]
        %v3881 = vld [vmem:[%s3873 + $0x38] sm:$0xff]
        %v3882 = vld [vmem:[%s3873 + $0x40] sm:$0xff]
        %v3883 = vld [vmem:[%s3873 + $0x48] sm:$0xff]
        %v3884 = vld [vmem:[%s3873 + $0x50] sm:$0xff]
        %v3885 = vld [vmem:[%s3873 + $0x58] sm:$0xff]
        %v3886 = vld [vmem:[%s3873 + $0x60] sm:$0xff]
        %v3887 = vld [vmem:[%s3873 + $0x68] sm:$0xff]
        %v3888 = vld [vmem:[%s3873 + $0x70] sm:$0xff]
        %v3889 = vld [vmem:[%s3873 + $0x78] sm:$0xff]
        %v3890 = vld [vmem:[%s3873 + $0x80] sm:$0xff]
        %v3891 = vld [vmem:[%s3873 + $0x88] sm:$0xff]
        %v3892 = vld [vmem:[%s3873 + $0x90] sm:$0xff]
        %v3893 = vld [vmem:[%s3873 + $0x98] sm:$0xff]
        %v3894 = vld [vmem:[%s3873 + $0xa0] sm:$0xff]
        %v3895 = vld [vmem:[%s3873 + $0xa8] sm:$0xff]
        %v3896 = vld [vmem:[%s3873 + $0xb0] sm:$0xff]
        %v3897 = vld [vmem:[%s3873 + $0xb8] sm:$0xff]
        %v3898 = vld [vmem:[%s3873 + $0xc0] sm:$0xff]
        %v3899 = vld [vmem:[%s3873 + $0xc8] sm:$0xff]
        %v3900 = vld [vmem:[%s3873 + $0xd0] sm:$0xff]
        %v3901 = vld [vmem:[%s3873 + $0xd8] sm:$0xff]
        %v3902 = vld [vmem:[%s3873 + $0xe0] sm:$0xff]
        %v3903 = vld [vmem:[%s3873 + $0xe8] sm:$0xff]
        %v3904 = vld [vmem:[%s3873 + $0xf0] sm:$0xff]
        %v3905 = vld [vmem:[%s3873 + $0xf8] sm:$0xff]
        %v3906 = vld [vmem:[%s3873 + $0x100] sm:$0xff]
        %v3907 = vld [vmem:[%s3873 + $0x108] sm:$0xff]
        %v3908 = vld [vmem:[%s3873 + $0x110] sm:$0xff]
        %v3909 = vld [vmem:[%s3873 + $0x118] sm:$0xff]
        %v3910 = vld [vmem:[%s3873 + $0x120] sm:$0xff]
        %v3911 = vld [vmem:[%s3873 + $0x128] sm:$0xff]
        %v3912 = vld [vmem:[%s3873 + $0x130] sm:$0xff]
        %v3913 = vld [vmem:[%s3873 + $0x138] sm:$0xff]
        %v3914 = vld [vmem:[%s3873 + $0x140] sm:$0xff]
        %v3915 = vld [vmem:[%s3873 + $0x148] sm:$0xff]
        %v3916 = vld [vmem:[%s3873 + $0x150] sm:$0xff]
        %v3917 = vld [vmem:[%s3873 + $0x158] sm:$0xff]
        %v3918 = vld [vmem:[%s3873 + $0x160] sm:$0xff]
        %v3919 = vld [vmem:[%s3873 + $0x168] sm:$0xff]
        %v3920 = vld [vmem:[%s3873 + $0x170] sm:$0xff]
        %v3921 = vld [vmem:[%s3873 + $0x178] sm:$0xff]
        %v3922 = vrot.slane %v1043, 3
        %v3972 = vunpack.c.l.b16 %v3874
        %v3973 = vunpack.c.h.b16 %v3874
        %v3974 = vunpack.c.l.b16 %v3875
        %v3975 = vunpack.c.h.b16 %v3875
        %v3976 = vunpack.c.l.b16 %v3876
        %v3977 = vunpack.c.h.b16 %v3876
        %v3978 = vunpack.c.l.b16 %v3877
        %v3979 = vunpack.c.h.b16 %v3877
        %v3980 = vunpack.c.l.b16 %v3878
        %v3981 = vunpack.c.h.b16 %v3878
        %v3982 = vunpack.c.l.b16 %v3879
        %v3983 = vunpack.c.h.b16 %v3879
        %v3984 = vunpack.c.l.b16 %v3880
        %v3985 = vunpack.c.h.b16 %v3880
        %v3986 = vunpack.c.l.b16 %v3881
        %v3987 = vunpack.c.h.b16 %v3881
        %v3988 = vunpack.c.l.b16 %v3882
        %v3989 = vunpack.c.h.b16 %v3882
        %v3990 = vunpack.c.l.b16 %v3883
        %v3991 = vunpack.c.h.b16 %v3883
        %v3992 = vunpack.c.l.b16 %v3884
        %v3993 = vunpack.c.h.b16 %v3884
        %v3994 = vunpack.c.l.b16 %v3885
        %v3995 = vunpack.c.h.b16 %v3885
        %v3996 = vunpack.c.l.b16 %v3886
        %v3997 = vunpack.c.h.b16 %v3886
        %v3998 = vunpack.c.l.b16 %v3887
        %v3999 = vunpack.c.h.b16 %v3887
        %v4000 = vunpack.c.l.b16 %v3888
        %v4001 = vunpack.c.h.b16 %v3888
        %v4002 = vunpack.c.l.b16 %v3889
        %v4003 = vunpack.c.h.b16 %v3889
        %v4004 = vunpack.c.l.b16 %v3890
        %v4005 = vunpack.c.h.b16 %v3890
        %v4006 = vunpack.c.l.b16 %v3891
        %v4007 = vunpack.c.h.b16 %v3891
        %v4008 = vunpack.c.l.b16 %v3892
        %v4009 = vunpack.c.h.b16 %v3892
        %v4010 = vunpack.c.l.b16 %v3893
        %v4011 = vunpack.c.h.b16 %v3893
        %v4012 = vunpack.c.l.b16 %v3894
        %v4013 = vunpack.c.h.b16 %v3894
        %v4014 = vunpack.c.l.b16 %v3895
        %v4015 = vunpack.c.h.b16 %v3895
        %v4016 = vunpack.c.l.b16 %v3896
        %v4017 = vunpack.c.h.b16 %v3896
        %v4018 = vunpack.c.l.b16 %v3897
        %v4019 = vunpack.c.h.b16 %v3897
        %v4020 = vunpack.c.l.b16 %v3898
        %v4021 = vunpack.c.h.b16 %v3898
        %v4022 = vunpack.c.l.b16 %v3899
        %v4023 = vunpack.c.h.b16 %v3899
        %v4024 = vunpack.c.l.b16 %v3900
        %v4025 = vunpack.c.h.b16 %v3900
        %v4026 = vunpack.c.l.b16 %v3901
        %v4027 = vunpack.c.h.b16 %v3901
        %v4028 = vunpack.c.l.b16 %v3902
        %v4029 = vunpack.c.h.b16 %v3902
        %v4030 = vunpack.c.l.b16 %v3903
        %v4031 = vunpack.c.h.b16 %v3903
        %v4032 = vunpack.c.l.b16 %v3904
        %v4033 = vunpack.c.h.b16 %v3904
        %v4034 = vunpack.c.l.b16 %v3905
        %v4035 = vunpack.c.h.b16 %v3905
        %v4036 = vunpack.c.l.b16 %v3906
        %v4037 = vunpack.c.h.b16 %v3906
        %v4038 = vunpack.c.l.b16 %v3907
        %v4039 = vunpack.c.h.b16 %v3907
        %v4040 = vunpack.c.l.b16 %v3908
        %v4041 = vunpack.c.h.b16 %v3908
        %v4042 = vunpack.c.l.b16 %v3909
        %v4043 = vunpack.c.h.b16 %v3909
        %v4044 = vunpack.c.l.b16 %v3910
        %v4045 = vunpack.c.h.b16 %v3910
        %v4046 = vunpack.c.l.b16 %v3911
        %v4047 = vunpack.c.h.b16 %v3911
        %v4048 = vunpack.c.l.b16 %v3912
        %v4049 = vunpack.c.h.b16 %v3912
        %v4050 = vunpack.c.l.b16 %v3913
        %v4051 = vunpack.c.h.b16 %v3913
        %v4052 = vunpack.c.l.b16 %v3914
        %v4053 = vunpack.c.h.b16 %v3914
        %v4054 = vunpack.c.l.b16 %v3915
        %v4055 = vunpack.c.h.b16 %v3915
        %v4056 = vunpack.c.l.b16 %v3916
        %v4057 = vunpack.c.h.b16 %v3916
        %v4058 = vunpack.c.l.b16 %v3917
        %v4059 = vunpack.c.h.b16 %v3917
        %v4060 = vunpack.c.l.b16 %v3918
        %v4061 = vunpack.c.h.b16 %v3918
        %v4062 = vunpack.c.l.b16 %v3919
        %v4063 = vunpack.c.h.b16 %v3919
        %v4064 = vunpack.c.l.b16 %v3920
        %v4065 = vunpack.c.h.b16 %v3920
        %v4066 = vunpack.c.l.b16 %v3921
        %v4067 = vunpack.c.h.b16 %v3921
        %v4068 = vpack.c.b16 %v3978, %v3972
        %v4069 = vpack.c.b16 %v3979, %v3973
        %v4070 = vpack.c.b16 %v3980, %v3974
        %v4071 = vpack.c.b16 %v3981, %v3975
        %v4072 = vpack.c.b16 %v3982, %v3976
        %v4073 = vpack.c.b16 %v3983, %v3977
        %v4074 = vpack.c.b16 %v3990, %v3984
        %v4075 = vpack.c.b16 %v3991, %v3985
        %v4076 = vpack.c.b16 %v3992, %v3986
        %v4077 = vpack.c.b16 %v3993, %v3987
        %v4078 = vpack.c.b16 %v3994, %v3988
        %v4079 = vpack.c.b16 %v3995, %v3989
        %v4080 = vpack.c.b16 %v4002, %v3996
        %v4081 = vpack.c.b16 %v4003, %v3997
        %v4082 = vpack.c.b16 %v4004, %v3998
        %v4083 = vpack.c.b16 %v4005, %v3999
        %v4084 = vpack.c.b16 %v4006, %v4000
        %v4085 = vpack.c.b16 %v4007, %v4001
        %v4086 = vpack.c.b16 %v4014, %v4008
        %v4087 = vpack.c.b16 %v4015, %v4009
        %v4088 = vpack.c.b16 %v4016, %v4010
        %v4089 = vpack.c.b16 %v4017, %v4011
        %v4090 = vpack.c.b16 %v4018, %v4012
        %v4091 = vpack.c.b16 %v4019, %v4013
        %v4092 = vpack.c.b16 %v4026, %v4020
        %v4093 = vpack.c.b16 %v4027, %v4021
        %v4094 = vpack.c.b16 %v4028, %v4022
        %v4095 = vpack.c.b16 %v4029, %v4023
        %v4096 = vpack.c.b16 %v4030, %v4024
        %v4097 = vpack.c.b16 %v4031, %v4025
        %v4098 = vpack.c.b16 %v4038, %v4032
        %v4099 = vpack.c.b16 %v4039, %v4033
        %v4100 = vpack.c.b16 %v4040, %v4034
        %v4101 = vpack.c.b16 %v4041, %v4035
        %v4102 = vpack.c.b16 %v4042, %v4036
        %v4103 = vpack.c.b16 %v4043, %v4037
        %v4104 = vpack.c.b16 %v4050, %v4044
        %v4105 = vpack.c.b16 %v4051, %v4045
        %v4106 = vpack.c.b16 %v4052, %v4046
        %v4107 = vpack.c.b16 %v4053, %v4047
        %v4108 = vpack.c.b16 %v4054, %v4048
        %v4109 = vpack.c.b16 %v4055, %v4049
        %v4110 = vpack.c.b16 %v4062, %v4056
        %v4111 = vpack.c.b16 %v4063, %v4057
        %v4112 = vpack.c.b16 %v4064, %v4058
        %v4113 = vpack.c.b16 %v4065, %v4059
        %v4114 = vpack.c.b16 %v4066, %v4060
        %v4115 = vpack.c.b16 %v4067, %v4061
        %4164 = vmatprep.subr.bf16.mxu0 %v4069
        %4165 = vmatpush1.bf16.msra.mxu0 %v4068
        %4166 = vmatprep.subr.bf16.mxu0 %v4075
        %4167 = vmatpush1.bf16.msra.mxu0 %v4074
        %4168 = vmatprep.subr.bf16.mxu0 %v4081
        %4169 = vmatpush1.bf16.msra.mxu0 %v4080
        %4170 = vmatprep.subr.bf16.mxu0 %v4087
        %4171 = vmatpush1.bf16.msra.mxu0 %v4086
        %4172 = vmatprep.subr.bf16.mxu0 %v4093
        %4173 = vmatpush1.bf16.msra.mxu0 %v4092
        %4174 = vmatprep.subr.bf16.mxu0 %v4099
        %4175 = vmatpush1.bf16.msra.mxu0 %v4098
        %4176 = vmatprep.subr.bf16.mxu0 %v4105
        %4177 = vmatpush1.bf16.msra.mxu0 %v4104
        %4178 = vmatprep.subr.bf16.mxu0 %v4111
        %4179 = vmatpush1.bf16.msra.mxu0 %v4110
        %4180 = vmatprep.subr.bf16.mxu0 0
        %4181 = vmatpush1.bf16.msra.mxu0 0
        %4182 = vmatprep.subr.bf16.mxu0 0
        %4183 = vmatpush1.bf16.msra.mxu0 0
        %4184 = vmatprep.subr.bf16.mxu0 0
        %4185 = vmatpush1.bf16.msra.mxu0 0
        %4186 = vmatprep.subr.bf16.mxu0 0
        %4187 = vmatpush1.bf16.msra.mxu0 0
        %4188 = vmatprep.subr.bf16.mxu0 0
        %4189 = vmatpush1.bf16.msra.mxu0 0
        %4190 = vmatprep.subr.bf16.mxu0 0
        %4191 = vmatpush1.bf16.msra.mxu0 0
        %4192 = vmatprep.subr.bf16.mxu0 0
        %4193 = vmatpush1.bf16.msra.mxu0 0
        %4194 = vmatprep.subr.bf16.mxu0 0
        %4195 = vmatpush1.bf16.msra.mxu0 0
        %4196 = vmatprep.mubr.bf16.mxu0 0
        %4197 = vmatmul.mubr.bf16.gmra.mrb[0].mxu0 %v3922
        %v4198 = vpop.f32.mrb[0].mxu0
        %v4199 = vadd.f32 0.0, %v4198
        %v4200 = vpop.f32.mrb[0].mxu0
        %v4201 = vadd.f32 0.0, %v4200
        %v4202 = vpop.f32.mrb[0].mxu0
        %v4203 = vpop.f32.mrb[0].mxu0
        %4204 = vdwg.mxu0
        %4205 = vmatprep.subr.bf16.mxu0 %v4071
        %4206 = vmatpush1.bf16.msra.mxu0 %v4070
        %4207 = vmatprep.subr.bf16.mxu0 %v4077
        %4208 = vmatpush1.bf16.msra.mxu0 %v4076
        %4209 = vmatprep.subr.bf16.mxu0 %v4083
        %4210 = vmatpush1.bf16.msra.mxu0 %v4082
        %4211 = vmatprep.subr.bf16.mxu0 %v4089
        %4212 = vmatpush1.bf16.msra.mxu0 %v4088
        %4213 = vmatprep.subr.bf16.mxu0 %v4095
        %4214 = vmatpush1.bf16.msra.mxu0 %v4094
        %4215 = vmatprep.subr.bf16.mxu0 %v4101
        %4216 = vmatpush1.bf16.msra.mxu0 %v4100
        %4217 = vmatprep.subr.bf16.mxu0 %v4107
        %4218 = vmatpush1.bf16.msra.mxu0 %v4106
        %4219 = vmatprep.subr.bf16.mxu0 %v4113
        %4220 = vmatpush1.bf16.msra.mxu0 %v4112
        %4221 = vmatprep.subr.bf16.mxu0 0
        %4222 = vmatpush1.bf16.msra.mxu0 0
        %4223 = vmatprep.subr.bf16.mxu0 0
        %4224 = vmatpush1.bf16.msra.mxu0 0
        %4225 = vmatprep.subr.bf16.mxu0 0
        %4226 = vmatpush1.bf16.msra.mxu0 0
        %4227 = vmatprep.subr.bf16.mxu0 0
        %4228 = vmatpush1.bf16.msra.mxu0 0
        %4229 = vmatprep.subr.bf16.mxu0 0
        %4230 = vmatpush1.bf16.msra.mxu0 0
        %4231 = vmatprep.subr.bf16.mxu0 0
        %4232 = vmatpush1.bf16.msra.mxu0 0
        %4233 = vmatprep.subr.bf16.mxu0 0
        %4234 = vmatpush1.bf16.msra.mxu0 0
        %4235 = vmatprep.subr.bf16.mxu0 0
        %4236 = vmatpush1.bf16.msra.mxu0 0
        %4237 = vmatprep.mubr.bf16.mxu0 0
        %4238 = vmatmul.mubr.bf16.gmra.mrb[0].mxu0 %v3922
        %v4239 = vpop.f32.mrb[0].mxu0
        %v4240 = vadd.f32 0.0, %v4239
        %v4241 = vpop.f32.mrb[0].mxu0
        %v4242 = vadd.f32 0.0, %v4241
        %v4243 = vpop.f32.mrb[0].mxu0
        %v4244 = vpop.f32.mrb[0].mxu0
        %4245 = vdwg.mxu0
        %4246 = vmatprep.subr.bf16.mxu0 %v4073
        %4247 = vmatpush1.bf16.msra.mxu0 %v4072
        %4248 = vmatprep.subr.bf16.mxu0 %v4079
        %4249 = vmatpush1.bf16.msra.mxu0 %v4078
        %4250 = vmatprep.subr.bf16.mxu0 %v4085
        %4251 = vmatpush1.bf16.msra.mxu0 %v4084
        %4252 = vmatprep.subr.bf16.mxu0 %v4091
        %4253 = vmatpush1.bf16.msra.mxu0 %v4090
        %4254 = vmatprep.subr.bf16.mxu0 %v4097
        %4255 = vmatpush1.bf16.msra.mxu0 %v4096
        %4256 = vmatprep.subr.bf16.mxu0 %v4103
        %4257 = vmatpush1.bf16.msra.mxu0 %v4102
        %4258 = vmatprep.subr.bf16.mxu0 %v4109
        %4259 = vmatpush1.bf16.msra.mxu0 %v4108
        %4260 = vmatprep.subr.bf16.mxu0 %v4115
        %4261 = vmatpush1.bf16.msra.mxu0 %v4114
        %4262 = vmatprep.subr.bf16.mxu0 0
        %4263 = vmatpush1.bf16.msra.mxu0 0
        %4264 = vmatprep.subr.bf16.mxu0 0
        %4265 = vmatpush1.bf16.msra.mxu0 0
        %4266 = vmatprep.subr.bf16.mxu0 0
        %4267 = vmatpush1.bf16.msra.mxu0 0
        %4268 = vmatprep.subr.bf16.mxu0 0
        %4269 = vmatpush1.bf16.msra.mxu0 0
        %4270 = vmatprep.subr.bf16.mxu0 0
        %4271 = vmatpush1.bf16.msra.mxu0 0
        %4272 = vmatprep.subr.bf16.mxu0 0
        %4273 = vmatpush1.bf16.msra.mxu0 0
        %4274 = vmatprep.subr.bf16.mxu0 0
        %4275 = vmatpush1.bf16.msra.mxu0 0
        %4276 = vmatprep.subr.bf16.mxu0 0
        %4277 = vmatpush1.bf16.msra.mxu0 0
        %4278 = vmatprep.mubr.bf16.mxu0 0
        %4279 = vmatmul.mubr.bf16.gmra.mrb[0].mxu0 %v3922
        %v4280 = vpop.f32.mrb[0].mxu0
        %v4281 = vadd.f32 0.0, %v4280
        %v4282 = vpop.f32.mrb[0].mxu0
        %v4283 = vadd.f32 0.0, %v4282
        %v4284 = vpop.f32.mrb[0].mxu0
        %v4285 = vpop.f32.mrb[0].mxu0
        %4286 = vdwg.mxu0
        %v4287 = vadd.f32 %v3867, %v4199
        %v4288 = vadd.f32 %v3868, %v4201
        %v4289 = vadd.f32 %v3869, %v4240
        %v4290 = vadd.f32 %v3870, %v4242
        %v4291 = vadd.f32 %v3871, %v4281
        %v4292 = vadd.f32 %v3872, %v4283
        %v4293 = vpack.c.bf16 %v941, %v941
        %s4294 = scalar_lea.vmem [#allocation10], 3072
        %v4295 = vld [vmem:[%s4294] sm:$0xff]
        %v4296 = vld [vmem:[%s4294 + $0x8] sm:$0xff]
        %v4297 = vld [vmem:[%s4294 + $0x10] sm:$0xff]
        %v4298 = vld [vmem:[%s4294 + $0x18] sm:$0xff]
        %v4299 = vld [vmem:[%s4294 + $0x20] sm:$0xff]
        %v4300 = vld [vmem:[%s4294 + $0x28] sm:$0xff]
        %v4301 = vld [vmem:[%s4294 + $0x30] sm:$0xff]
        %v4302 = vld [vmem:[%s4294 + $0x38] sm:$0xff]
        %v4303 = vld [vmem:[%s4294 + $0x40] sm:$0xff]
        %v4304 = vld [vmem:[%s4294 + $0x48] sm:$0xff]
        %v4305 = vld [vmem:[%s4294 + $0x50] sm:$0xff]
        %v4306 = vld [vmem:[%s4294 + $0x58] sm:$0xff]
        %v4307 = vld [vmem:[%s4294 + $0x60] sm:$0xff]
        %v4308 = vld [vmem:[%s4294 + $0x68] sm:$0xff]
        %v4309 = vld [vmem:[%s4294 + $0x70] sm:$0xff]
        %v4310 = vld [vmem:[%s4294 + $0x78] sm:$0xff]
        %v4311 = vld [vmem:[%s4294 + $0x80] sm:$0xff]
        %v4312 = vld [vmem:[%s4294 + $0x88] sm:$0xff]
        %v4313 = vld [vmem:[%s4294 + $0x90] sm:$0xff]
        %v4314 = vld [vmem:[%s4294 + $0x98] sm:$0xff]
        %v4315 = vld [vmem:[%s4294 + $0xa0] sm:$0xff]
        %v4316 = vld [vmem:[%s4294 + $0xa8] sm:$0xff]
        %v4317 = vld [vmem:[%s4294 + $0xb0] sm:$0xff]
        %v4318 = vld [vmem:[%s4294 + $0xb8] sm:$0xff]
        %v4319 = vld [vmem:[%s4294 + $0xc0] sm:$0xff]
        %v4320 = vld [vmem:[%s4294 + $0xc8] sm:$0xff]
        %v4321 = vld [vmem:[%s4294 + $0xd0] sm:$0xff]
        %v4322 = vld [vmem:[%s4294 + $0xd8] sm:$0xff]
        %v4323 = vld [vmem:[%s4294 + $0xe0] sm:$0xff]
        %v4324 = vld [vmem:[%s4294 + $0xe8] sm:$0xff]
        %v4325 = vld [vmem:[%s4294 + $0xf0] sm:$0xff]
        %v4326 = vld [vmem:[%s4294 + $0xf8] sm:$0xff]
        %v4327 = vld [vmem:[%s4294 + $0x100] sm:$0xff]
        %v4328 = vld [vmem:[%s4294 + $0x108] sm:$0xff]
        %v4329 = vld [vmem:[%s4294 + $0x110] sm:$0xff]
        %v4330 = vld [vmem:[%s4294 + $0x118] sm:$0xff]
        %v4331 = vld [vmem:[%s4294 + $0x120] sm:$0xff]
        %v4332 = vld [vmem:[%s4294 + $0x128] sm:$0xff]
        %v4333 = vld [vmem:[%s4294 + $0x130] sm:$0xff]
        %v4334 = vld [vmem:[%s4294 + $0x138] sm:$0xff]
        %v4335 = vld [vmem:[%s4294 + $0x140] sm:$0xff]
        %v4336 = vld [vmem:[%s4294 + $0x148] sm:$0xff]
        %v4337 = vld [vmem:[%s4294 + $0x150] sm:$0xff]
        %v4338 = vld [vmem:[%s4294 + $0x158] sm:$0xff]
        %v4339 = vld [vmem:[%s4294 + $0x160] sm:$0xff]
        %v4340 = vld [vmem:[%s4294 + $0x168] sm:$0xff]
        %v4341 = vld [vmem:[%s4294 + $0x170] sm:$0xff]
        %v4342 = vld [vmem:[%s4294 + $0x178] sm:$0xff]
        %v4391 = vunpack.c.l.b16 %v4295
        %v4392 = vunpack.c.h.b16 %v4295
        %v4393 = vunpack.c.l.b16 %v4296
        %v4394 = vunpack.c.h.b16 %v4296
        %v4395 = vunpack.c.l.b16 %v4297
        %v4396 = vunpack.c.h.b16 %v4297
        %v4397 = vunpack.c.l.b16 %v4298
        %v4398 = vunpack.c.h.b16 %v4298
        %v4399 = vunpack.c.l.b16 %v4299
        %v4400 = vunpack.c.h.b16 %v4299
        %v4401 = vunpack.c.l.b16 %v4300
        %v4402 = vunpack.c.h.b16 %v4300
        %v4403 = vunpack.c.l.b16 %v4301
        %v4404 = vunpack.c.h.b16 %v4301
        %v4405 = vunpack.c.l.b16 %v4302
        %v4406 = vunpack.c.h.b16 %v4302
        %v4407 = vunpack.c.l.b16 %v4303
        %v4408 = vunpack.c.h.b16 %v4303
        %v4409 = vunpack.c.l.b16 %v4304
        %v4410 = vunpack.c.h.b16 %v4304
        %v4411 = vunpack.c.l.b16 %v4305
        %v4412 = vunpack.c.h.b16 %v4305
        %v4413 = vunpack.c.l.b16 %v4306
        %v4414 = vunpack.c.h.b16 %v4306
        %v4415 = vunpack.c.l.b16 %v4307
        %v4416 = vunpack.c.h.b16 %v4307
        %v4417 = vunpack.c.l.b16 %v4308
        %v4418 = vunpack.c.h.b16 %v4308
        %v4419 = vunpack.c.l.b16 %v4309
        %v4420 = vunpack.c.h.b16 %v4309
        %v4421 = vunpack.c.l.b16 %v4310
        %v4422 = vunpack.c.h.b16 %v4310
        %v4423 = vunpack.c.l.b16 %v4311
        %v4424 = vunpack.c.h.b16 %v4311
        %v4425 = vunpack.c.l.b16 %v4312
        %v4426 = vunpack.c.h.b16 %v4312
        %v4427 = vunpack.c.l.b16 %v4313
        %v4428 = vunpack.c.h.b16 %v4313
        %v4429 = vunpack.c.l.b16 %v4314
        %v4430 = vunpack.c.h.b16 %v4314
        %v4431 = vunpack.c.l.b16 %v4315
        %v4432 = vunpack.c.h.b16 %v4315
        %v4433 = vunpack.c.l.b16 %v4316
        %v4434 = vunpack.c.h.b16 %v4316
        %v4435 = vunpack.c.l.b16 %v4317
        %v4436 = vunpack.c.h.b16 %v4317
        %v4437 = vunpack.c.l.b16 %v4318
        %v4438 = vunpack.c.h.b16 %v4318
        %v4439 = vunpack.c.l.b16 %v4319
        %v4440 = vunpack.c.h.b16 %v4319
        %v4441 = vunpack.c.l.b16 %v4320
        %v4442 = vunpack.c.h.b16 %v4320
        %v4443 = vunpack.c.l.b16 %v4321
        %v4444 = vunpack.c.h.b16 %v4321
        %v4445 = vunpack.c.l.b16 %v4322
        %v4446 = vunpack.c.h.b16 %v4322
        %v4447 = vunpack.c.l.b16 %v4323
        %v4448 = vunpack.c.h.b16 %v4323
        %v4449 = vunpack.c.l.b16 %v4324
        %v4450 = vunpack.c.h.b16 %v4324
        %v4451 = vunpack.c.l.b16 %v4325
        %v4452 = vunpack.c.h.b16 %v4325
        %v4453 = vunpack.c.l.b16 %v4326
        %v4454 = vunpack.c.h.b16 %v4326
        %v4455 = vunpack.c.l.b16 %v4327
        %v4456 = vunpack.c.h.b16 %v4327
        %v4457 = vunpack.c.l.b16 %v4328
        %v4458 = vunpack.c.h.b16 %v4328
        %v4459 = vunpack.c.l.b16 %v4329
        %v4460 = vunpack.c.h.b16 %v4329
        %v4461 = vunpack.c.l.b16 %v4330
        %v4462 = vunpack.c.h.b16 %v4330
        %v4463 = vunpack.c.l.b16 %v4331
        %v4464 = vunpack.c.h.b16 %v4331
        %v4465 = vunpack.c.l.b16 %v4332
        %v4466 = vunpack.c.h.b16 %v4332
        %v4467 = vunpack.c.l.b16 %v4333
        %v4468 = vunpack.c.h.b16 %v4333
        %v4469 = vunpack.c.l.b16 %v4334
        %v4470 = vunpack.c.h.b16 %v4334
        %v4471 = vunpack.c.l.b16 %v4335
        %v4472 = vunpack.c.h.b16 %v4335
        %v4473 = vunpack.c.l.b16 %v4336
        %v4474 = vunpack.c.h.b16 %v4336
        %v4475 = vunpack.c.l.b16 %v4337
        %v4476 = vunpack.c.h.b16 %v4337
        %v4477 = vunpack.c.l.b16 %v4338
        %v4478 = vunpack.c.h.b16 %v4338
        %v4479 = vunpack.c.l.b16 %v4339
        %v4480 = vunpack.c.h.b16 %v4339
        %v4481 = vunpack.c.l.b16 %v4340
        %v4482 = vunpack.c.h.b16 %v4340
        %v4483 = vunpack.c.l.b16 %v4341
        %v4484 = vunpack.c.h.b16 %v4341
        %v4485 = vunpack.c.l.b16 %v4342
        %v4486 = vunpack.c.h.b16 %v4342
        %v4487 = vpack.c.b16 %v4397, %v4391
        %v4488 = vpack.c.b16 %v4398, %v4392
        %v4489 = vpack.c.b16 %v4399, %v4393
        %v4490 = vpack.c.b16 %v4400, %v4394
        %v4491 = vpack.c.b16 %v4401, %v4395
        %v4492 = vpack.c.b16 %v4402, %v4396
        %v4493 = vpack.c.b16 %v4409, %v4403
        %v4494 = vpack.c.b16 %v4410, %v4404
        %v4495 = vpack.c.b16 %v4411, %v4405
        %v4496 = vpack.c.b16 %v4412, %v4406
        %v4497 = vpack.c.b16 %v4413, %v4407
        %v4498 = vpack.c.b16 %v4414, %v4408
        %v4499 = vpack.c.b16 %v4421, %v4415
        %v4500 = vpack.c.b16 %v4422, %v4416
        %v4501 = vpack.c.b16 %v4423, %v4417
        %v4502 = vpack.c.b16 %v4424, %v4418
        %v4503 = vpack.c.b16 %v4425, %v4419
        %v4504 = vpack.c.b16 %v4426, %v4420
        %v4505 = vpack.c.b16 %v4433, %v4427
        %v4506 = vpack.c.b16 %v4434, %v4428
        %v4507 = vpack.c.b16 %v4435, %v4429
        %v4508 = vpack.c.b16 %v4436, %v4430
        %v4509 = vpack.c.b16 %v4437, %v4431
        %v4510 = vpack.c.b16 %v4438, %v4432
        %v4511 = vpack.c.b16 %v4445, %v4439
        %v4512 = vpack.c.b16 %v4446, %v4440
        %v4513 = vpack.c.b16 %v4447, %v4441
        %v4514 = vpack.c.b16 %v4448, %v4442
        %v4515 = vpack.c.b16 %v4449, %v4443
        %v4516 = vpack.c.b16 %v4450, %v4444
        %v4517 = vpack.c.b16 %v4457, %v4451
        %v4518 = vpack.c.b16 %v4458, %v4452
        %v4519 = vpack.c.b16 %v4459, %v4453
        %v4520 = vpack.c.b16 %v4460, %v4454
        %v4521 = vpack.c.b16 %v4461, %v4455
        %v4522 = vpack.c.b16 %v4462, %v4456
        %v4523 = vpack.c.b16 %v4469, %v4463
        %v4524 = vpack.c.b16 %v4470, %v4464
        %v4525 = vpack.c.b16 %v4471, %v4465
        %v4526 = vpack.c.b16 %v4472, %v4466
        %v4527 = vpack.c.b16 %v4473, %v4467
        %v4528 = vpack.c.b16 %v4474, %v4468
        %v4529 = vpack.c.b16 %v4481, %v4475
        %v4530 = vpack.c.b16 %v4482, %v4476
        %v4531 = vpack.c.b16 %v4483, %v4477
        %v4532 = vpack.c.b16 %v4484, %v4478
        %v4533 = vpack.c.b16 %v4485, %v4479
        %v4534 = vpack.c.b16 %v4486, %v4480
        %4583 = vmatprep.subr.bf16.mxu0 %v4488
        %4584 = vmatpush1.bf16.msra.mxu0 %v4487
        %4585 = vmatprep.subr.bf16.mxu0 %v4494
        %4586 = vmatpush1.bf16.msra.mxu0 %v4493
        %4587 = vmatprep.subr.bf16.mxu0 %v4500
        %4588 = vmatpush1.bf16.msra.mxu0 %v4499
        %4589 = vmatprep.subr.bf16.mxu0 %v4506
        %4590 = vmatpush1.bf16.msra.mxu0 %v4505
        %4591 = vmatprep.subr.bf16.mxu0 %v4512
        %4592 = vmatpush1.bf16.msra.mxu0 %v4511
        %4593 = vmatprep.subr.bf16.mxu0 %v4518
        %4594 = vmatpush1.bf16.msra.mxu0 %v4517
        %4595 = vmatprep.subr.bf16.mxu0 %v4524
        %4596 = vmatpush1.bf16.msra.mxu0 %v4523
        %4597 = vmatprep.subr.bf16.mxu0 %v4530
        %4598 = vmatpush1.bf16.msra.mxu0 %v4529
        %4599 = vmatprep.subr.bf16.mxu0 0
        %4600 = vmatpush1.bf16.msra.mxu0 0
        %4601 = vmatprep.subr.bf16.mxu0 0
        %4602 = vmatpush1.bf16.msra.mxu0 0
        %4603 = vmatprep.subr.bf16.mxu0 0
        %4604 = vmatpush1.bf16.msra.mxu0 0
        %4605 = vmatprep.subr.bf16.mxu0 0
        %4606 = vmatpush1.bf16.msra.mxu0 0
        %4607 = vmatprep.subr.bf16.mxu0 0
        %4608 = vmatpush1.bf16.msra.mxu0 0
        %4609 = vmatprep.subr.bf16.mxu0 0
        %4610 = vmatpush1.bf16.msra.mxu0 0
        %4611 = vmatprep.subr.bf16.mxu0 0
        %4612 = vmatpush1.bf16.msra.mxu0 0
        %4613 = vmatprep.subr.bf16.mxu0 0
        %4614 = vmatpush1.bf16.msra.mxu0 0
        %4615 = vmatprep.mubr.bf16.mxu0 0
        %4616 = vmatmul.mubr.bf16.gmra.mrb[0].mxu0 %v4293
        %v4617 = vpop.f32.mrb[0].mxu0
        %v4618 = vadd.f32 0.0, %v4617
        %v4619 = vpop.f32.mrb[0].mxu0
        %v4620 = vadd.f32 0.0, %v4619
        %v4621 = vpop.f32.mrb[0].mxu0
        %v4622 = vpop.f32.mrb[0].mxu0
        %4623 = vdwg.mxu0
        %4624 = vmatprep.subr.bf16.mxu0 %v4490
        %4625 = vmatpush1.bf16.msra.mxu0 %v4489
        %4626 = vmatprep.subr.bf16.mxu0 %v4496
        %4627 = vmatpush1.bf16.msra.mxu0 %v4495
        %4628 = vmatprep.subr.bf16.mxu0 %v4502
        %4629 = vmatpush1.bf16.msra.mxu0 %v4501
        %4630 = vmatprep.subr.bf16.mxu0 %v4508
        %4631 = vmatpush1.bf16.msra.mxu0 %v4507
        %4632 = vmatprep.subr.bf16.mxu0 %v4514
        %4633 = vmatpush1.bf16.msra.mxu0 %v4513
        %4634 = vmatprep.subr.bf16.mxu0 %v4520
        %4635 = vmatpush1.bf16.msra.mxu0 %v4519
        %4636 = vmatprep.subr.bf16.mxu0 %v4526
        %4637 = vmatpush1.bf16.msra.mxu0 %v4525
        %4638 = vmatprep.subr.bf16.mxu0 %v4532
        %4639 = vmatpush1.bf16.msra.mxu0 %v4531
        %4640 = vmatprep.subr.bf16.mxu0 0
        %4641 = vmatpush1.bf16.msra.mxu0 0
        %4642 = vmatprep.subr.bf16.mxu0 0
        %4643 = vmatpush1.bf16.msra.mxu0 0
        %4644 = vmatprep.subr.bf16.mxu0 0
        %4645 = vmatpush1.bf16.msra.mxu0 0
        %4646 = vmatprep.subr.bf16.mxu0 0
        %4647 = vmatpush1.bf16.msra.mxu0 0
        %4648 = vmatprep.subr.bf16.mxu0 0
        %4649 = vmatpush1.bf16.msra.mxu0 0
        %4650 = vmatprep.subr.bf16.mxu0 0
        %4651 = vmatpush1.bf16.msra.mxu0 0
        %4652 = vmatprep.subr.bf16.mxu0 0
        %4653 = vmatpush1.bf16.msra.mxu0 0
        %4654 = vmatprep.subr.bf16.mxu0 0
        %4655 = vmatpush1.bf16.msra.mxu0 0
        %4656 = vmatprep.mubr.bf16.mxu0 0
        %4657 = vmatmul.mubr.bf16.gmra.mrb[0].mxu0 %v4293
        %v4658 = vpop.f32.mrb[0].mxu0
        %v4659 = vadd.f32 0.0, %v4658
        %v4660 = vpop.f32.mrb[0].mxu0
        %v4661 = vadd.f32 0.0, %v4660
        %v4662 = vpop.f32.mrb[0].mxu0
        %v4663 = vpop.f32.mrb[0].mxu0
        %4664 = vdwg.mxu0
        %4665 = vmatprep.subr.bf16.mxu0 %v4492
        %4666 = vmatpush1.bf16.msra.mxu0 %v4491
        %4667 = vmatprep.subr.bf16.mxu0 %v4498
        %4668 = vmatpush1.bf16.msra.mxu0 %v4497
        %4669 = vmatprep.subr.bf16.mxu0 %v4504
        %4670 = vmatpush1.bf16.msra.mxu0 %v4503
        %4671 = vmatprep.subr.bf16.mxu0 %v4510
        %4672 = vmatpush1.bf16.msra.mxu0 %v4509
        %4673 = vmatprep.subr.bf16.mxu0 %v4516
        %4674 = vmatpush1.bf16.msra.mxu0 %v4515
        %4675 = vmatprep.subr.bf16.mxu0 %v4522
        %4676 = vmatpush1.bf16.msra.mxu0 %v4521
        %4677 = vmatprep.subr.bf16.mxu0 %v4528
        %4678 = vmatpush1.bf16.msra.mxu0 %v4527
        %4679 = vmatprep.subr.bf16.mxu0 %v4534
        %4680 = vmatpush1.bf16.msra.mxu0 %v4533
        %4681 = vmatprep.subr.bf16.mxu0 0
        %4682 = vmatpush1.bf16.msra.mxu0 0
        %4683 = vmatprep.subr.bf16.mxu0 0
        %4684 = vmatpush1.bf16.msra.mxu0 0
        %4685 = vmatprep.subr.bf16.mxu0 0
        %4686 = vmatpush1.bf16.msra.mxu0 0
        %4687 = vmatprep.subr.bf16.mxu0 0
        %4688 = vmatpush1.bf16.msra.mxu0 0
        %4689 = vmatprep.subr.bf16.mxu0 0
        %4690 = vmatpush1.bf16.msra.mxu0 0
        %4691 = vmatprep.subr.bf16.mxu0 0
        %4692 = vmatpush1.bf16.msra.mxu0 0
        %4693 = vmatprep.subr.bf16.mxu0 0
        %4694 = vmatpush1.bf16.msra.mxu0 0
        %4695 = vmatprep.subr.bf16.mxu0 0
        %4696 = vmatpush1.bf16.msra.mxu0 0
        %4697 = vmatprep.mubr.bf16.mxu0 0
        %4698 = vmatmul.mubr.bf16.gmra.mrb[0].mxu0 %v4293
        %v4699 = vpop.f32.mrb[0].mxu0
        %v4700 = vadd.f32 0.0, %v4699
        %v4701 = vpop.f32.mrb[0].mxu0
        %v4702 = vadd.f32 0.0, %v4701
        %v4703 = vpop.f32.mrb[0].mxu0
        %v4704 = vpop.f32.mrb[0].mxu0
        %4705 = vdwg.mxu0
        %v4706 = vadd.f32 %v4287, %v4618
        %v4707 = vadd.f32 %v4288, %v4620
        %v4708 = vadd.f32 %v4289, %v4659
        %v4709 = vadd.f32 %v4290, %v4661
        %v4710 = vadd.f32 %v4291, %v4700
        %v4711 = vadd.f32 %v4292, %v4702
        %s4712 = scalar_lea.vmem [#allocation10], 3456
        %v4713 = vld [vmem:[%s4712] sm:$0xff]
        %v4714 = vld [vmem:[%s4712 + $0x8] sm:$0xff]
        %v4715 = vld [vmem:[%s4712 + $0x10] sm:$0xff]
        %v4716 = vld [vmem:[%s4712 + $0x18] sm:$0xff]
        %v4717 = vld [vmem:[%s4712 + $0x20] sm:$0xff]
        %v4718 = vld [vmem:[%s4712 + $0x28] sm:$0xff]
        %v4719 = vld [vmem:[%s4712 + $0x30] sm:$0xff]
        %v4720 = vld [vmem:[%s4712 + $0x38] sm:$0xff]
        %v4721 = vld [vmem:[%s4712 + $0x40] sm:$0xff]
        %v4722 = vld [vmem:[%s4712 + $0x48] sm:$0xff]
        %v4723 = vld [vmem:[%s4712 + $0x50] sm:$0xff]
        %v4724 = vld [vmem:[%s4712 + $0x58] sm:$0xff]
        %v4725 = vld [vmem:[%s4712 + $0x60] sm:$0xff]
        %v4726 = vld [vmem:[%s4712 + $0x68] sm:$0xff]
        %v4727 = vld [vmem:[%s4712 + $0x70] sm:$0xff]
        %v4728 = vld [vmem:[%s4712 + $0x78] sm:$0xff]
        %v4729 = vld [vmem:[%s4712 + $0x80] sm:$0xff]
        %v4730 = vld [vmem:[%s4712 + $0x88] sm:$0xff]
        %v4731 = vld [vmem:[%s4712 + $0x90] sm:$0xff]
        %v4732 = vld [vmem:[%s4712 + $0x98] sm:$0xff]
        %v4733 = vld [vmem:[%s4712 + $0xa0] sm:$0xff]
        %v4734 = vld [vmem:[%s4712 + $0xa8] sm:$0xff]
        %v4735 = vld [vmem:[%s4712 + $0xb0] sm:$0xff]
        %v4736 = vld [vmem:[%s4712 + $0xb8] sm:$0xff]
        %v4737 = vld [vmem:[%s4712 + $0xc0] sm:$0xff]
        %v4738 = vld [vmem:[%s4712 + $0xc8] sm:$0xff]
        %v4739 = vld [vmem:[%s4712 + $0xd0] sm:$0xff]
        %v4740 = vld [vmem:[%s4712 + $0xd8] sm:$0xff]
        %v4741 = vld [vmem:[%s4712 + $0xe0] sm:$0xff]
        %v4742 = vld [vmem:[%s4712 + $0xe8] sm:$0xff]
        %v4743 = vld [vmem:[%s4712 + $0xf0] sm:$0xff]
        %v4744 = vld [vmem:[%s4712 + $0xf8] sm:$0xff]
        %v4745 = vld [vmem:[%s4712 + $0x100] sm:$0xff]
        %v4746 = vld [vmem:[%s4712 + $0x108] sm:$0xff]
        %v4747 = vld [vmem:[%s4712 + $0x110] sm:$0xff]
        %v4748 = vld [vmem:[%s4712 + $0x118] sm:$0xff]
        %v4749 = vld [vmem:[%s4712 + $0x120] sm:$0xff]
        %v4750 = vld [vmem:[%s4712 + $0x128] sm:$0xff]
        %v4751 = vld [vmem:[%s4712 + $0x130] sm:$0xff]
        %v4752 = vld [vmem:[%s4712 + $0x138] sm:$0xff]
        %v4753 = vld [vmem:[%s4712 + $0x140] sm:$0xff]
        %v4754 = vld [vmem:[%s4712 + $0x148] sm:$0xff]
        %v4755 = vld [vmem:[%s4712 + $0x150] sm:$0xff]
        %v4756 = vld [vmem:[%s4712 + $0x158] sm:$0xff]
        %v4757 = vld [vmem:[%s4712 + $0x160] sm:$0xff]
        %v4758 = vld [vmem:[%s4712 + $0x168] sm:$0xff]
        %v4759 = vld [vmem:[%s4712 + $0x170] sm:$0xff]
        %v4760 = vld [vmem:[%s4712 + $0x178] sm:$0xff]
        %v4762 = vshrl.u32 %v4293, 16
        %v4813 = vunpack.c.l.b16 %v4713
        %v4814 = vunpack.c.h.b16 %v4713
        %v4815 = vunpack.c.l.b16 %v4714
        %v4816 = vunpack.c.h.b16 %v4714
        %v4817 = vunpack.c.l.b16 %v4715
        %v4818 = vunpack.c.h.b16 %v4715
        %v4819 = vunpack.c.l.b16 %v4716
        %v4820 = vunpack.c.h.b16 %v4716
        %v4821 = vunpack.c.l.b16 %v4717
        %v4822 = vunpack.c.h.b16 %v4717
        %v4823 = vunpack.c.l.b16 %v4718
        %v4824 = vunpack.c.h.b16 %v4718
        %v4825 = vunpack.c.l.b16 %v4719
        %v4826 = vunpack.c.h.b16 %v4719
        %v4827 = vunpack.c.l.b16 %v4720
        %v4828 = vunpack.c.h.b16 %v4720
        %v4829 = vunpack.c.l.b16 %v4721
        %v4830 = vunpack.c.h.b16 %v4721
        %v4831 = vunpack.c.l.b16 %v4722
        %v4832 = vunpack.c.h.b16 %v4722
        %v4833 = vunpack.c.l.b16 %v4723
        %v4834 = vunpack.c.h.b16 %v4723
        %v4835 = vunpack.c.l.b16 %v4724
        %v4836 = vunpack.c.h.b16 %v4724
        %v4837 = vunpack.c.l.b16 %v4725
        %v4838 = vunpack.c.h.b16 %v4725
        %v4839 = vunpack.c.l.b16 %v4726
        %v4840 = vunpack.c.h.b16 %v4726
        %v4841 = vunpack.c.l.b16 %v4727
        %v4842 = vunpack.c.h.b16 %v4727
        %v4843 = vunpack.c.l.b16 %v4728
        %v4844 = vunpack.c.h.b16 %v4728
        %v4845 = vunpack.c.l.b16 %v4729
        %v4846 = vunpack.c.h.b16 %v4729
        %v4847 = vunpack.c.l.b16 %v4730
        %v4848 = vunpack.c.h.b16 %v4730
        %v4849 = vunpack.c.l.b16 %v4731
        %v4850 = vunpack.c.h.b16 %v4731
        %v4851 = vunpack.c.l.b16 %v4732
        %v4852 = vunpack.c.h.b16 %v4732
        %v4853 = vunpack.c.l.b16 %v4733
        %v4854 = vunpack.c.h.b16 %v4733
        %v4855 = vunpack.c.l.b16 %v4734
        %v4856 = vunpack.c.h.b16 %v4734
        %v4857 = vunpack.c.l.b16 %v4735
        %v4858 = vunpack.c.h.b16 %v4735
        %v4859 = vunpack.c.l.b16 %v4736
        %v4860 = vunpack.c.h.b16 %v4736
        %v4861 = vunpack.c.l.b16 %v4737
        %v4862 = vunpack.c.h.b16 %v4737
        %v4863 = vunpack.c.l.b16 %v4738
        %v4864 = vunpack.c.h.b16 %v4738
        %v4865 = vunpack.c.l.b16 %v4739
        %v4866 = vunpack.c.h.b16 %v4739
        %v4867 = vunpack.c.l.b16 %v4740
        %v4868 = vunpack.c.h.b16 %v4740
        %v4869 = vunpack.c.l.b16 %v4741
        %v4870 = vunpack.c.h.b16 %v4741
        %v4871 = vunpack.c.l.b16 %v4742
        %v4872 = vunpack.c.h.b16 %v4742
        %v4873 = vunpack.c.l.b16 %v4743
        %v4874 = vunpack.c.h.b16 %v4743
        %v4875 = vunpack.c.l.b16 %v4744
        %v4876 = vunpack.c.h.b16 %v4744
        %v4877 = vunpack.c.l.b16 %v4745
        %v4878 = vunpack.c.h.b16 %v4745
        %v4879 = vunpack.c.l.b16 %v4746
        %v4880 = vunpack.c.h.b16 %v4746
        %v4881 = vunpack.c.l.b16 %v4747
        %v4882 = vunpack.c.h.b16 %v4747
        %v4883 = vunpack.c.l.b16 %v4748
        %v4884 = vunpack.c.h.b16 %v4748
        %v4885 = vunpack.c.l.b16 %v4749
        %v4886 = vunpack.c.h.b16 %v4749
        %v4887 = vunpack.c.l.b16 %v4750
        %v4888 = vunpack.c.h.b16 %v4750
        %v4889 = vunpack.c.l.b16 %v4751
        %v4890 = vunpack.c.h.b16 %v4751
        %v4891 = vunpack.c.l.b16 %v4752
        %v4892 = vunpack.c.h.b16 %v4752
        %v4893 = vunpack.c.l.b16 %v4753
        %v4894 = vunpack.c.h.b16 %v4753
        %v4895 = vunpack.c.l.b16 %v4754
        %v4896 = vunpack.c.h.b16 %v4754
        %v4897 = vunpack.c.l.b16 %v4755
        %v4898 = vunpack.c.h.b16 %v4755
        %v4899 = vunpack.c.l.b16 %v4756
        %v4900 = vunpack.c.h.b16 %v4756
        %v4901 = vunpack.c.l.b16 %v4757
        %v4902 = vunpack.c.h.b16 %v4757
        %v4903 = vunpack.c.l.b16 %v4758
        %v4904 = vunpack.c.h.b16 %v4758
        %v4905 = vunpack.c.l.b16 %v4759
        %v4906 = vunpack.c.h.b16 %v4759
        %v4907 = vunpack.c.l.b16 %v4760
        %v4908 = vunpack.c.h.b16 %v4760
        %v4909 = vpack.c.b16 %v4819, %v4813
        %v4910 = vpack.c.b16 %v4820, %v4814
        %v4911 = vpack.c.b16 %v4821, %v4815
        %v4912 = vpack.c.b16 %v4822, %v4816
        %v4913 = vpack.c.b16 %v4823, %v4817
        %v4914 = vpack.c.b16 %v4824, %v4818
        %v4915 = vpack.c.b16 %v4831, %v4825
        %v4916 = vpack.c.b16 %v4832, %v4826
        %v4917 = vpack.c.b16 %v4833, %v4827
        %v4918 = vpack.c.b16 %v4834, %v4828
        %v4919 = vpack.c.b16 %v4835, %v4829
        %v4920 = vpack.c.b16 %v4836, %v4830
        %v4921 = vpack.c.b16 %v4843, %v4837
        %v4922 = vpack.c.b16 %v4844, %v4838
        %v4923 = vpack.c.b16 %v4845, %v4839
        %v4924 = vpack.c.b16 %v4846, %v4840
        %v4925 = vpack.c.b16 %v4847, %v4841
        %v4926 = vpack.c.b16 %v4848, %v4842
        %v4927 = vpack.c.b16 %v4855, %v4849
        %v4928 = vpack.c.b16 %v4856, %v4850
        %v4929 = vpack.c.b16 %v4857, %v4851
        %v4930 = vpack.c.b16 %v4858, %v4852
        %v4931 = vpack.c.b16 %v4859, %v4853
        %v4932 = vpack.c.b16 %v4860, %v4854
        %v4933 = vpack.c.b16 %v4867, %v4861
        %v4934 = vpack.c.b16 %v4868, %v4862
        %v4935 = vpack.c.b16 %v4869, %v4863
        %v4936 = vpack.c.b16 %v4870, %v4864
        %v4937 = vpack.c.b16 %v4871, %v4865
        %v4938 = vpack.c.b16 %v4872, %v4866
        %v4939 = vpack.c.b16 %v4879, %v4873
        %v4940 = vpack.c.b16 %v4880, %v4874
        %v4941 = vpack.c.b16 %v4881, %v4875
        %v4942 = vpack.c.b16 %v4882, %v4876
        %v4943 = vpack.c.b16 %v4883, %v4877
        %v4944 = vpack.c.b16 %v4884, %v4878
        %v4945 = vpack.c.b16 %v4891, %v4885
        %v4946 = vpack.c.b16 %v4892, %v4886
        %v4947 = vpack.c.b16 %v4893, %v4887
        %v4948 = vpack.c.b16 %v4894, %v4888
        %v4949 = vpack.c.b16 %v4895, %v4889
        %v4950 = vpack.c.b16 %v4896, %v4890
        %v4951 = vpack.c.b16 %v4903, %v4897
        %v4952 = vpack.c.b16 %v4904, %v4898
        %v4953 = vpack.c.b16 %v4905, %v4899
        %v4954 = vpack.c.b16 %v4906, %v4900
        %v4955 = vpack.c.b16 %v4907, %v4901
        %v4956 = vpack.c.b16 %v4908, %v4902
        %5005 = vmatprep.subr.bf16.mxu0 %v4910
        %5006 = vmatpush1.bf16.msra.mxu0 %v4909
        %5007 = vmatprep.subr.bf16.mxu0 %v4916
        %5008 = vmatpush1.bf16.msra.mxu0 %v4915
        %5009 = vmatprep.subr.bf16.mxu0 %v4922
        %5010 = vmatpush1.bf16.msra.mxu0 %v4921
        %5011 = vmatprep.subr.bf16.mxu0 %v4928
        %5012 = vmatpush1.bf16.msra.mxu0 %v4927
        %5013 = vmatprep.subr.bf16.mxu0 %v4934
        %5014 = vmatpush1.bf16.msra.mxu0 %v4933
        %5015 = vmatprep.subr.bf16.mxu0 %v4940
        %5016 = vmatpush1.bf16.msra.mxu0 %v4939
        %5017 = vmatprep.subr.bf16.mxu0 %v4946
        %5018 = vmatpush1.bf16.msra.mxu0 %v4945
        %5019 = vmatprep.subr.bf16.mxu0 %v4952
        %5020 = vmatpush1.bf16.msra.mxu0 %v4951
        %5021 = vmatprep.subr.bf16.mxu0 0
        %5022 = vmatpush1.bf16.msra.mxu0 0
        %5023 = vmatprep.subr.bf16.mxu0 0
        %5024 = vmatpush1.bf16.msra.mxu0 0
        %5025 = vmatprep.subr.bf16.mxu0 0
        %5026 = vmatpush1.bf16.msra.mxu0 0
        %5027 = vmatprep.subr.bf16.mxu0 0
        %5028 = vmatpush1.bf16.msra.mxu0 0
        %5029 = vmatprep.subr.bf16.mxu0 0
        %5030 = vmatpush1.bf16.msra.mxu0 0
        %5031 = vmatprep.subr.bf16.mxu0 0
        %5032 = vmatpush1.bf16.msra.mxu0 0
        %5033 = vmatprep.subr.bf16.mxu0 0
        %5034 = vmatpush1.bf16.msra.mxu0 0
        %5035 = vmatprep.subr.bf16.mxu0 0
        %5036 = vmatpush1.bf16.msra.mxu0 0
        %5037 = vmatprep.mubr.bf16.mxu0 0
        %5038 = vmatmul.mubr.bf16.gmra.mrb[0].mxu0 %v4762
        %v5039 = vpop.f32.mrb[0].mxu0
        %v5040 = vadd.f32 0.0, %v5039
        %v5041 = vpop.f32.mrb[0].mxu0
        %v5042 = vadd.f32 0.0, %v5041
        %v5043 = vpop.f32.mrb[0].mxu0
        %v5044 = vpop.f32.mrb[0].mxu0
        %5045 = vdwg.mxu0
        %5046 = vmatprep.subr.bf16.mxu0 %v4912
        %5047 = vmatpush1.bf16.msra.mxu0 %v4911
        %5048 = vmatprep.subr.bf16.mxu0 %v4918
        %5049 = vmatpush1.bf16.msra.mxu0 %v4917
        %5050 = vmatprep.subr.bf16.mxu0 %v4924
        %5051 = vmatpush1.bf16.msra.mxu0 %v4923
        %5052 = vmatprep.subr.bf16.mxu0 %v4930
        %5053 = vmatpush1.bf16.msra.mxu0 %v4929
        %5054 = vmatprep.subr.bf16.mxu0 %v4936
        %5055 = vmatpush1.bf16.msra.mxu0 %v4935
        %5056 = vmatprep.subr.bf16.mxu0 %v4942
        %5057 = vmatpush1.bf16.msra.mxu0 %v4941
        %5058 = vmatprep.subr.bf16.mxu0 %v4948
        %5059 = vmatpush1.bf16.msra.mxu0 %v4947
        %5060 = vmatprep.subr.bf16.mxu0 %v4954
        %5061 = vmatpush1.bf16.msra.mxu0 %v4953
        %5062 = vmatprep.subr.bf16.mxu0 0
        %5063 = vmatpush1.bf16.msra.mxu0 0
        %5064 = vmatprep.subr.bf16.mxu0 0
        %5065 = vmatpush1.bf16.msra.mxu0 0
        %5066 = vmatprep.subr.bf16.mxu0 0
        %5067 = vmatpush1.bf16.msra.mxu0 0
        %5068 = vmatprep.subr.bf16.mxu0 0
        %5069 = vmatpush1.bf16.msra.mxu0 0
        %5070 = vmatprep.subr.bf16.mxu0 0
        %5071 = vmatpush1.bf16.msra.mxu0 0
        %5072 = vmatprep.subr.bf16.mxu0 0
        %5073 = vmatpush1.bf16.msra.mxu0 0
        %5074 = vmatprep.subr.bf16.mxu0 0
        %5075 = vmatpush1.bf16.msra.mxu0 0
        %5076 = vmatprep.subr.bf16.mxu0 0
        %5077 = vmatpush1.bf16.msra.mxu0 0
        %5078 = vmatprep.mubr.bf16.mxu0 0
        %5079 = vmatmul.mubr.bf16.gmra.mrb[0].mxu0 %v4762
        %v5080 = vpop.f32.mrb[0].mxu0
        %v5081 = vadd.f32 0.0, %v5080
        %v5082 = vpop.f32.mrb[0].mxu0
        %v5083 = vadd.f32 0.0, %v5082
        %v5084 = vpop.f32.mrb[0].mxu0
        %v5085 = vpop.f32.mrb[0].mxu0
        %5086 = vdwg.mxu0
        %5087 = vmatprep.subr.bf16.mxu0 %v4914
        %5088 = vmatpush1.bf16.msra.mxu0 %v4913
        %5089 = vmatprep.subr.bf16.mxu0 %v4920
        %5090 = vmatpush1.bf16.msra.mxu0 %v4919
        %5091 = vmatprep.subr.bf16.mxu0 %v4926
        %5092 = vmatpush1.bf16.msra.mxu0 %v4925
        %5093 = vmatprep.subr.bf16.mxu0 %v4932
        %5094 = vmatpush1.bf16.msra.mxu0 %v4931
        %5095 = vmatprep.subr.bf16.mxu0 %v4938
        %5096 = vmatpush1.bf16.msra.mxu0 %v4937
        %5097 = vmatprep.subr.bf16.mxu0 %v4944
        %5098 = vmatpush1.bf16.msra.mxu0 %v4943
        %5099 = vmatprep.subr.bf16.mxu0 %v4950
        %5100 = vmatpush1.bf16.msra.mxu0 %v4949
        %5101 = vmatprep.subr.bf16.mxu0 %v4956
        %5102 = vmatpush1.bf16.msra.mxu0 %v4955
        %5103 = vmatprep.subr.bf16.mxu0 0
        %5104 = vmatpush1.bf16.msra.mxu0 0
        %5105 = vmatprep.subr.bf16.mxu0 0
        %5106 = vmatpush1.bf16.msra.mxu0 0
        %5107 = vmatprep.subr.bf16.mxu0 0
        %5108 = vmatpush1.bf16.msra.mxu0 0
        %5109 = vmatprep.subr.bf16.mxu0 0
        %5110 = vmatpush1.bf16.msra.mxu0 0
        %5111 = vmatprep.subr.bf16.mxu0 0
        %5112 = vmatpush1.bf16.msra.mxu0 0
        %5113 = vmatprep.subr.bf16.mxu0 0
        %5114 = vmatpush1.bf16.msra.mxu0 0
        %5115 = vmatprep.subr.bf16.mxu0 0
        %5116 = vmatpush1.bf16.msra.mxu0 0
        %5117 = vmatprep.subr.bf16.mxu0 0
        %5118 = vmatpush1.bf16.msra.mxu0 0
        %5119 = vmatprep.mubr.bf16.mxu0 0
        %5120 = vmatmul.mubr.bf16.gmra.mrb[0].mxu0 %v4762
        %v5121 = vpop.f32.mrb[0].mxu0
        %v5122 = vadd.f32 0.0, %v5121
        %v5123 = vpop.f32.mrb[0].mxu0
        %v5124 = vadd.f32 0.0, %v5123
        %v5125 = vpop.f32.mrb[0].mxu0
        %v5126 = vpop.f32.mrb[0].mxu0
        %5127 = vdwg.mxu0
        %v5128 = vadd.f32 %v4706, %v5040
        %v5129 = vadd.f32 %v4707, %v5042
        %v5130 = vadd.f32 %v4708, %v5081
        %v5131 = vadd.f32 %v4709, %v5083
        %v5132 = vadd.f32 %v4710, %v5122
        %v5133 = vadd.f32 %v4711, %v5124
        %s5134 = scalar_lea.vmem [#allocation10], 3840
        %v5135 = vld [vmem:[%s5134] sm:$0xff]
        %v5136 = vld [vmem:[%s5134 + $0x8] sm:$0xff]
        %v5137 = vld [vmem:[%s5134 + $0x10] sm:$0xff]
        %v5138 = vld [vmem:[%s5134 + $0x18] sm:$0xff]
        %v5139 = vld [vmem:[%s5134 + $0x20] sm:$0xff]
        %v5140 = vld [vmem:[%s5134 + $0x28] sm:$0xff]
        %v5141 = vld [vmem:[%s5134 + $0x30] sm:$0xff]
        %v5142 = vld [vmem:[%s5134 + $0x38] sm:$0xff]
        %v5143 = vld [vmem:[%s5134 + $0x40] sm:$0xff]
        %v5144 = vld [vmem:[%s5134 + $0x48] sm:$0xff]
        %v5145 = vld [vmem:[%s5134 + $0x50] sm:$0xff]
        %v5146 = vld [vmem:[%s5134 + $0x58] sm:$0xff]
        %v5147 = vld [vmem:[%s5134 + $0x60] sm:$0xff]
        %v5148 = vld [vmem:[%s5134 + $0x68] sm:$0xff]
        %v5149 = vld [vmem:[%s5134 + $0x70] sm:$0xff]
        %v5150 = vld [vmem:[%s5134 + $0x78] sm:$0xff]
        %v5151 = vld [vmem:[%s5134 + $0x80] sm:$0xff]
        %v5152 = vld [vmem:[%s5134 + $0x88] sm:$0xff]
        %v5153 = vld [vmem:[%s5134 + $0x90] sm:$0xff]
        %v5154 = vld [vmem:[%s5134 + $0x98] sm:$0xff]
        %v5155 = vld [vmem:[%s5134 + $0xa0] sm:$0xff]
        %v5156 = vld [vmem:[%s5134 + $0xa8] sm:$0xff]
        %v5157 = vld [vmem:[%s5134 + $0xb0] sm:$0xff]
        %v5158 = vld [vmem:[%s5134 + $0xb8] sm:$0xff]
        %v5159 = vld [vmem:[%s5134 + $0xc0] sm:$0xff]
        %v5160 = vld [vmem:[%s5134 + $0xc8] sm:$0xff]
        %v5161 = vld [vmem:[%s5134 + $0xd0] sm:$0xff]
        %v5162 = vld [vmem:[%s5134 + $0xd8] sm:$0xff]
        %v5163 = vld [vmem:[%s5134 + $0xe0] sm:$0xff]
        %v5164 = vld [vmem:[%s5134 + $0xe8] sm:$0xff]
        %v5165 = vld [vmem:[%s5134 + $0xf0] sm:$0xff]
        %v5166 = vld [vmem:[%s5134 + $0xf8] sm:$0xff]
        %v5167 = vld [vmem:[%s5134 + $0x100] sm:$0xff]
        %v5168 = vld [vmem:[%s5134 + $0x108] sm:$0xff]
        %v5169 = vld [vmem:[%s5134 + $0x110] sm:$0xff]
        %v5170 = vld [vmem:[%s5134 + $0x118] sm:$0xff]
        %v5171 = vld [vmem:[%s5134 + $0x120] sm:$0xff]
        %v5172 = vld [vmem:[%s5134 + $0x128] sm:$0xff]
        %v5173 = vld [vmem:[%s5134 + $0x130] sm:$0xff]
        %v5174 = vld [vmem:[%s5134 + $0x138] sm:$0xff]
        %v5175 = vld [vmem:[%s5134 + $0x140] sm:$0xff]
        %v5176 = vld [vmem:[%s5134 + $0x148] sm:$0xff]
        %v5177 = vld [vmem:[%s5134 + $0x150] sm:$0xff]
        %v5178 = vld [vmem:[%s5134 + $0x158] sm:$0xff]
        %v5179 = vld [vmem:[%s5134 + $0x160] sm:$0xff]
        %v5180 = vld [vmem:[%s5134 + $0x168] sm:$0xff]
        %v5181 = vld [vmem:[%s5134 + $0x170] sm:$0xff]
        %v5182 = vld [vmem:[%s5134 + $0x178] sm:$0xff]
        %v5184 = vrot.slane %v4293, 1
        %v5234 = vunpack.c.l.b16 %v5135
        %v5235 = vunpack.c.h.b16 %v5135
        %v5236 = vunpack.c.l.b16 %v5136
        %v5237 = vunpack.c.h.b16 %v5136
        %v5238 = vunpack.c.l.b16 %v5137
        %v5239 = vunpack.c.h.b16 %v5137
        %v5240 = vunpack.c.l.b16 %v5138
        %v5241 = vunpack.c.h.b16 %v5138
        %v5242 = vunpack.c.l.b16 %v5139
        %v5243 = vunpack.c.h.b16 %v5139
        %v5244 = vunpack.c.l.b16 %v5140
        %v5245 = vunpack.c.h.b16 %v5140
        %v5246 = vunpack.c.l.b16 %v5141
        %v5247 = vunpack.c.h.b16 %v5141
        %v5248 = vunpack.c.l.b16 %v5142
        %v5249 = vunpack.c.h.b16 %v5142
        %v5250 = vunpack.c.l.b16 %v5143
        %v5251 = vunpack.c.h.b16 %v5143
        %v5252 = vunpack.c.l.b16 %v5144
        %v5253 = vunpack.c.h.b16 %v5144
        %v5254 = vunpack.c.l.b16 %v5145
        %v5255 = vunpack.c.h.b16 %v5145
        %v5256 = vunpack.c.l.b16 %v5146
        %v5257 = vunpack.c.h.b16 %v5146
        %v5258 = vunpack.c.l.b16 %v5147
        %v5259 = vunpack.c.h.b16 %v5147
        %v5260 = vunpack.c.l.b16 %v5148
        %v5261 = vunpack.c.h.b16 %v5148
        %v5262 = vunpack.c.l.b16 %v5149
        %v5263 = vunpack.c.h.b16 %v5149
        %v5264 = vunpack.c.l.b16 %v5150
        %v5265 = vunpack.c.h.b16 %v5150
        %v5266 = vunpack.c.l.b16 %v5151
        %v5267 = vunpack.c.h.b16 %v5151
        %v5268 = vunpack.c.l.b16 %v5152
        %v5269 = vunpack.c.h.b16 %v5152
        %v5270 = vunpack.c.l.b16 %v5153
        %v5271 = vunpack.c.h.b16 %v5153
        %v5272 = vunpack.c.l.b16 %v5154
        %v5273 = vunpack.c.h.b16 %v5154
        %v5274 = vunpack.c.l.b16 %v5155
        %v5275 = vunpack.c.h.b16 %v5155
        %v5276 = vunpack.c.l.b16 %v5156
        %v5277 = vunpack.c.h.b16 %v5156
        %v5278 = vunpack.c.l.b16 %v5157
        %v5279 = vunpack.c.h.b16 %v5157
        %v5280 = vunpack.c.l.b16 %v5158
        %v5281 = vunpack.c.h.b16 %v5158
        %v5282 = vunpack.c.l.b16 %v5159
        %v5283 = vunpack.c.h.b16 %v5159
        %v5284 = vunpack.c.l.b16 %v5160
        %v5285 = vunpack.c.h.b16 %v5160
        %v5286 = vunpack.c.l.b16 %v5161
        %v5287 = vunpack.c.h.b16 %v5161
        %v5288 = vunpack.c.l.b16 %v5162
        %v5289 = vunpack.c.h.b16 %v5162
        %v5290 = vunpack.c.l.b16 %v5163
        %v5291 = vunpack.c.h.b16 %v5163
        %v5292 = vunpack.c.l.b16 %v5164
        %v5293 = vunpack.c.h.b16 %v5164
        %v5294 = vunpack.c.l.b16 %v5165
        %v5295 = vunpack.c.h.b16 %v5165
        %v5296 = vunpack.c.l.b16 %v5166
        %v5297 = vunpack.c.h.b16 %v5166
        %v5298 = vunpack.c.l.b16 %v5167
        %v5299 = vunpack.c.h.b16 %v5167
        %v5300 = vunpack.c.l.b16 %v5168
        %v5301 = vunpack.c.h.b16 %v5168
        %v5302 = vunpack.c.l.b16 %v5169
        %v5303 = vunpack.c.h.b16 %v5169
        %v5304 = vunpack.c.l.b16 %v5170
        %v5305 = vunpack.c.h.b16 %v5170
        %v5306 = vunpack.c.l.b16 %v5171
        %v5307 = vunpack.c.h.b16 %v5171
        %v5308 = vunpack.c.l.b16 %v5172
        %v5309 = vunpack.c.h.b16 %v5172
        %v5310 = vunpack.c.l.b16 %v5173
        %v5311 = vunpack.c.h.b16 %v5173
        %v5312 = vunpack.c.l.b16 %v5174
        %v5313 = vunpack.c.h.b16 %v5174
        %v5314 = vunpack.c.l.b16 %v5175
        %v5315 = vunpack.c.h.b16 %v5175
        %v5316 = vunpack.c.l.b16 %v5176
        %v5317 = vunpack.c.h.b16 %v5176
        %v5318 = vunpack.c.l.b16 %v5177
        %v5319 = vunpack.c.h.b16 %v5177
        %v5320 = vunpack.c.l.b16 %v5178
        %v5321 = vunpack.c.h.b16 %v5178
        %v5322 = vunpack.c.l.b16 %v5179
        %v5323 = vunpack.c.h.b16 %v5179
        %v5324 = vunpack.c.l.b16 %v5180
        %v5325 = vunpack.c.h.b16 %v5180
        %v5326 = vunpack.c.l.b16 %v5181
        %v5327 = vunpack.c.h.b16 %v5181
        %v5328 = vunpack.c.l.b16 %v5182
        %v5329 = vunpack.c.h.b16 %v5182
        %v5330 = vpack.c.b16 %v5240, %v5234
        %v5331 = vpack.c.b16 %v5241, %v5235
        %v5332 = vpack.c.b16 %v5242, %v5236
        %v5333 = vpack.c.b16 %v5243, %v5237
        %v5334 = vpack.c.b16 %v5244, %v5238
        %v5335 = vpack.c.b16 %v5245, %v5239
        %v5336 = vpack.c.b16 %v5252, %v5246
        %v5337 = vpack.c.b16 %v5253, %v5247
        %v5338 = vpack.c.b16 %v5254, %v5248
        %v5339 = vpack.c.b16 %v5255, %v5249
        %v5340 = vpack.c.b16 %v5256, %v5250
        %v5341 = vpack.c.b16 %v5257, %v5251
        %v5342 = vpack.c.b16 %v5264, %v5258
        %v5343 = vpack.c.b16 %v5265, %v5259
        %v5344 = vpack.c.b16 %v5266, %v5260
        %v5345 = vpack.c.b16 %v5267, %v5261
        %v5346 = vpack.c.b16 %v5268, %v5262
        %v5347 = vpack.c.b16 %v5269, %v5263
        %v5348 = vpack.c.b16 %v5276, %v5270
        %v5349 = vpack.c.b16 %v5277, %v5271
        %v5350 = vpack.c.b16 %v5278, %v5272
        %v5351 = vpack.c.b16 %v5279, %v5273
        %v5352 = vpack.c.b16 %v5280, %v5274
        %v5353 = vpack.c.b16 %v5281, %v5275
        %v5354 = vpack.c.b16 %v5288, %v5282
        %v5355 = vpack.c.b16 %v5289, %v5283
        %v5356 = vpack.c.b16 %v5290, %v5284
        %v5357 = vpack.c.b16 %v5291, %v5285
        %v5358 = vpack.c.b16 %v5292, %v5286
        %v5359 = vpack.c.b16 %v5293, %v5287
        %v5360 = vpack.c.b16 %v5300, %v5294
        %v5361 = vpack.c.b16 %v5301, %v5295
        %v5362 = vpack.c.b16 %v5302, %v5296
        %v5363 = vpack.c.b16 %v5303, %v5297
        %v5364 = vpack.c.b16 %v5304, %v5298
        %v5365 = vpack.c.b16 %v5305, %v5299
        %v5366 = vpack.c.b16 %v5312, %v5306
        %v5367 = vpack.c.b16 %v5313, %v5307
        %v5368 = vpack.c.b16 %v5314, %v5308
        %v5369 = vpack.c.b16 %v5315, %v5309
        %v5370 = vpack.c.b16 %v5316, %v5310
        %v5371 = vpack.c.b16 %v5317, %v5311
        %v5372 = vpack.c.b16 %v5324, %v5318
        %v5373 = vpack.c.b16 %v5325, %v5319
        %v5374 = vpack.c.b16 %v5326, %v5320
        %v5375 = vpack.c.b16 %v5327, %v5321
        %v5376 = vpack.c.b16 %v5328, %v5322
        %v5377 = vpack.c.b16 %v5329, %v5323
        %5426 = vmatprep.subr.bf16.mxu0 %v5331
        %5427 = vmatpush1.bf16.msra.mxu0 %v5330
        %5428 = vmatprep.subr.bf16.mxu0 %v5337
        %5429 = vmatpush1.bf16.msra.mxu0 %v5336
        %5430 = vmatprep.subr.bf16.mxu0 %v5343
        %5431 = vmatpush1.bf16.msra.mxu0 %v5342
        %5432 = vmatprep.subr.bf16.mxu0 %v5349
        %5433 = vmatpush1.bf16.msra.mxu0 %v5348
        %5434 = vmatprep.subr.bf16.mxu0 %v5355
        %5435 = vmatpush1.bf16.msra.mxu0 %v5354
        %5436 = vmatprep.subr.bf16.mxu0 %v5361
        %5437 = vmatpush1.bf16.msra.mxu0 %v5360
        %5438 = vmatprep.subr.bf16.mxu0 %v5367
        %5439 = vmatpush1.bf16.msra.mxu0 %v5366
        %5440 = vmatprep.subr.bf16.mxu0 %v5373
        %5441 = vmatpush1.bf16.msra.mxu0 %v5372
        %5442 = vmatprep.subr.bf16.mxu0 0
        %5443 = vmatpush1.bf16.msra.mxu0 0
        %5444 = vmatprep.subr.bf16.mxu0 0
        %5445 = vmatpush1.bf16.msra.mxu0 0
        %5446 = vmatprep.subr.bf16.mxu0 0
        %5447 = vmatpush1.bf16.msra.mxu0 0
        %5448 = vmatprep.subr.bf16.mxu0 0
        %5449 = vmatpush1.bf16.msra.mxu0 0
        %5450 = vmatprep.subr.bf16.mxu0 0
        %5451 = vmatpush1.bf16.msra.mxu0 0
        %5452 = vmatprep.subr.bf16.mxu0 0
        %5453 = vmatpush1.bf16.msra.mxu0 0
        %5454 = vmatprep.subr.bf16.mxu0 0
        %5455 = vmatpush1.bf16.msra.mxu0 0
        %5456 = vmatprep.subr.bf16.mxu0 0
        %5457 = vmatpush1.bf16.msra.mxu0 0
        %5458 = vmatprep.mubr.bf16.mxu0 0
        %5459 = vmatmul.mubr.bf16.gmra.mrb[0].mxu0 %v5184
        %v5460 = vpop.f32.mrb[0].mxu0
        %v5461 = vadd.f32 0.0, %v5460
        %v5462 = vpop.f32.mrb[0].mxu0
        %v5463 = vadd.f32 0.0, %v5462
        %v5464 = vpop.f32.mrb[0].mxu0
        %v5465 = vpop.f32.mrb[0].mxu0
        %5466 = vdwg.mxu0
        %5467 = vmatprep.subr.bf16.mxu0 %v5333
        %5468 = vmatpush1.bf16.msra.mxu0 %v5332
        %5469 = vmatprep.subr.bf16.mxu0 %v5339
        %5470 = vmatpush1.bf16.msra.mxu0 %v5338
        %5471 = vmatprep.subr.bf16.mxu0 %v5345
        %5472 = vmatpush1.bf16.msra.mxu0 %v5344
        %5473 = vmatprep.subr.bf16.mxu0 %v5351
        %5474 = vmatpush1.bf16.msra.mxu0 %v5350
        %5475 = vmatprep.subr.bf16.mxu0 %v5357
        %5476 = vmatpush1.bf16.msra.mxu0 %v5356
        %5477 = vmatprep.subr.bf16.mxu0 %v5363
        %5478 = vmatpush1.bf16.msra.mxu0 %v5362
        %5479 = vmatprep.subr.bf16.mxu0 %v5369
        %5480 = vmatpush1.bf16.msra.mxu0 %v5368
        %5481 = vmatprep.subr.bf16.mxu0 %v5375
        %5482 = vmatpush1.bf16.msra.mxu0 %v5374
        %5483 = vmatprep.subr.bf16.mxu0 0
        %5484 = vmatpush1.bf16.msra.mxu0 0
        %5485 = vmatprep.subr.bf16.mxu0 0
        %5486 = vmatpush1.bf16.msra.mxu0 0
        %5487 = vmatprep.subr.bf16.mxu0 0
        %5488 = vmatpush1.bf16.msra.mxu0 0
        %5489 = vmatprep.subr.bf16.mxu0 0
        %5490 = vmatpush1.bf16.msra.mxu0 0
        %5491 = vmatprep.subr.bf16.mxu0 0
        %5492 = vmatpush1.bf16.msra.mxu0 0
        %5493 = vmatprep.subr.bf16.mxu0 0
        %5494 = vmatpush1.bf16.msra.mxu0 0
        %5495 = vmatprep.subr.bf16.mxu0 0
        %5496 = vmatpush1.bf16.msra.mxu0 0
        %5497 = vmatprep.subr.bf16.mxu0 0
        %5498 = vmatpush1.bf16.msra.mxu0 0
        %5499 = vmatprep.mubr.bf16.mxu0 0
        %5500 = vmatmul.mubr.bf16.gmra.mrb[0].mxu0 %v5184
        %v5501 = vpop.f32.mrb[0].mxu0
        %v5502 = vadd.f32 0.0, %v5501
        %v5503 = vpop.f32.mrb[0].mxu0
        %v5504 = vadd.f32 0.0, %v5503
        %v5505 = vpop.f32.mrb[0].mxu0
        %v5506 = vpop.f32.mrb[0].mxu0
        %5507 = vdwg.mxu0
        %5508 = vmatprep.subr.bf16.mxu0 %v5335
        %5509 = vmatpush1.bf16.msra.mxu0 %v5334
        %5510 = vmatprep.subr.bf16.mxu0 %v5341
        %5511 = vmatpush1.bf16.msra.mxu0 %v5340
        %5512 = vmatprep.subr.bf16.mxu0 %v5347
        %5513 = vmatpush1.bf16.msra.mxu0 %v5346
        %5514 = vmatprep.subr.bf16.mxu0 %v5353
        %5515 = vmatpush1.bf16.msra.mxu0 %v5352
        %5516 = vmatprep.subr.bf16.mxu0 %v5359
        %5517 = vmatpush1.bf16.msra.mxu0 %v5358
        %5518 = vmatprep.subr.bf16.mxu0 %v5365
        %5519 = vmatpush1.bf16.msra.mxu0 %v5364
        %5520 = vmatprep.subr.bf16.mxu0 %v5371
        %5521 = vmatpush1.bf16.msra.mxu0 %v5370
        %5522 = vmatprep.subr.bf16.mxu0 %v5377
        %5523 = vmatpush1.bf16.msra.mxu0 %v5376
        %5524 = vmatprep.subr.bf16.mxu0 0
        %5525 = vmatpush1.bf16.msra.mxu0 0
        %5526 = vmatprep.subr.bf16.mxu0 0
        %5527 = vmatpush1.bf16.msra.mxu0 0
        %5528 = vmatprep.subr.bf16.mxu0 0
        %5529 = vmatpush1.bf16.msra.mxu0 0
        %5530 = vmatprep.subr.bf16.mxu0 0
        %5531 = vmatpush1.bf16.msra.mxu0 0
        %5532 = vmatprep.subr.bf16.mxu0 0
        %5533 = vmatpush1.bf16.msra.mxu0 0
        %5534 = vmatprep.subr.bf16.mxu0 0
        %5535 = vmatpush1.bf16.msra.mxu0 0
        %5536 = vmatprep.subr.bf16.mxu0 0
        %5537 = vmatpush1.bf16.msra.mxu0 0
        %5538 = vmatprep.subr.bf16.mxu0 0
        %5539 = vmatpush1.bf16.msra.mxu0 0
        %5540 = vmatprep.mubr.bf16.mxu0 0
        %5541 = vmatmul.mubr.bf16.gmra.mrb[0].mxu0 %v5184
        %v5542 = vpop.f32.mrb[0].mxu0
        %v5543 = vadd.f32 0.0, %v5542
        %v5544 = vpop.f32.mrb[0].mxu0
        %v5545 = vadd.f32 0.0, %v5544
        %v5546 = vpop.f32.mrb[0].mxu0
        %v5547 = vpop.f32.mrb[0].mxu0
        %5548 = vdwg.mxu0
        %v5549 = vadd.f32 %v5128, %v5461
        %v5550 = vadd.f32 %v5129, %v5463
        %v5551 = vadd.f32 %v5130, %v5502
        %v5552 = vadd.f32 %v5131, %v5504
        %v5553 = vadd.f32 %v5132, %v5543
        %v5554 = vadd.f32 %v5133, %v5545
        %s5555 = scalar_lea.vmem [#allocation10], 4224
        %v5556 = vld [vmem:[%s5555] sm:$0xff]
        %v5557 = vld [vmem:[%s5555 + $0x8] sm:$0xff]
        %v5558 = vld [vmem:[%s5555 + $0x10] sm:$0xff]
        %v5559 = vld [vmem:[%s5555 + $0x18] sm:$0xff]
        %v5560 = vld [vmem:[%s5555 + $0x20] sm:$0xff]
        %v5561 = vld [vmem:[%s5555 + $0x28] sm:$0xff]
        %v5562 = vld [vmem:[%s5555 + $0x30] sm:$0xff]
        %v5563 = vld [vmem:[%s5555 + $0x38] sm:$0xff]
        %v5564 = vld [vmem:[%s5555 + $0x40] sm:$0xff]
        %v5565 = vld [vmem:[%s5555 + $0x48] sm:$0xff]
        %v5566 = vld [vmem:[%s5555 + $0x50] sm:$0xff]
        %v5567 = vld [vmem:[%s5555 + $0x58] sm:$0xff]
        %v5568 = vld [vmem:[%s5555 + $0x60] sm:$0xff]
        %v5569 = vld [vmem:[%s5555 + $0x68] sm:$0xff]
        %v5570 = vld [vmem:[%s5555 + $0x70] sm:$0xff]
        %v5571 = vld [vmem:[%s5555 + $0x78] sm:$0xff]
        %v5572 = vld [vmem:[%s5555 + $0x80] sm:$0xff]
        %v5573 = vld [vmem:[%s5555 + $0x88] sm:$0xff]
        %v5574 = vld [vmem:[%s5555 + $0x90] sm:$0xff]
        %v5575 = vld [vmem:[%s5555 + $0x98] sm:$0xff]
        %v5576 = vld [vmem:[%s5555 + $0xa0] sm:$0xff]
        %v5577 = vld [vmem:[%s5555 + $0xa8] sm:$0xff]
        %v5578 = vld [vmem:[%s5555 + $0xb0] sm:$0xff]
        %v5579 = vld [vmem:[%s5555 + $0xb8] sm:$0xff]
        %v5580 = vld [vmem:[%s5555 + $0xc0] sm:$0xff]
        %v5581 = vld [vmem:[%s5555 + $0xc8] sm:$0xff]
        %v5582 = vld [vmem:[%s5555 + $0xd0] sm:$0xff]
        %v5583 = vld [vmem:[%s5555 + $0xd8] sm:$0xff]
        %v5584 = vld [vmem:[%s5555 + $0xe0] sm:$0xff]
        %v5585 = vld [vmem:[%s5555 + $0xe8] sm:$0xff]
        %v5586 = vld [vmem:[%s5555 + $0xf0] sm:$0xff]
        %v5587 = vld [vmem:[%s5555 + $0xf8] sm:$0xff]
        %v5588 = vld [vmem:[%s5555 + $0x100] sm:$0xff]
        %v5589 = vld [vmem:[%s5555 + $0x108] sm:$0xff]
        %v5590 = vld [vmem:[%s5555 + $0x110] sm:$0xff]
        %v5591 = vld [vmem:[%s5555 + $0x118] sm:$0xff]
        %v5592 = vld [vmem:[%s5555 + $0x120] sm:$0xff]
        %v5593 = vld [vmem:[%s5555 + $0x128] sm:$0xff]
        %v5594 = vld [vmem:[%s5555 + $0x130] sm:$0xff]
        %v5595 = vld [vmem:[%s5555 + $0x138] sm:$0xff]
        %v5596 = vld [vmem:[%s5555 + $0x140] sm:$0xff]
        %v5597 = vld [vmem:[%s5555 + $0x148] sm:$0xff]
        %v5598 = vld [vmem:[%s5555 + $0x150] sm:$0xff]
        %v5599 = vld [vmem:[%s5555 + $0x158] sm:$0xff]
        %v5600 = vld [vmem:[%s5555 + $0x160] sm:$0xff]
        %v5601 = vld [vmem:[%s5555 + $0x168] sm:$0xff]
        %v5602 = vld [vmem:[%s5555 + $0x170] sm:$0xff]
        %v5603 = vld [vmem:[%s5555 + $0x178] sm:$0xff]
        %v5604 = vrot.slane %v4762, 1
        %v5654 = vunpack.c.l.b16 %v5556
        %v5655 = vunpack.c.h.b16 %v5556
        %v5656 = vunpack.c.l.b16 %v5557
        %v5657 = vunpack.c.h.b16 %v5557
        %v5658 = vunpack.c.l.b16 %v5558
        %v5659 = vunpack.c.h.b16 %v5558
        %v5660 = vunpack.c.l.b16 %v5559
        %v5661 = vunpack.c.h.b16 %v5559
        %v5662 = vunpack.c.l.b16 %v5560
        %v5663 = vunpack.c.h.b16 %v5560
        %v5664 = vunpack.c.l.b16 %v5561
        %v5665 = vunpack.c.h.b16 %v5561
        %v5666 = vunpack.c.l.b16 %v5562
        %v5667 = vunpack.c.h.b16 %v5562
        %v5668 = vunpack.c.l.b16 %v5563
        %v5669 = vunpack.c.h.b16 %v5563
        %v5670 = vunpack.c.l.b16 %v5564
        %v5671 = vunpack.c.h.b16 %v5564
        %v5672 = vunpack.c.l.b16 %v5565
        %v5673 = vunpack.c.h.b16 %v5565
        %v5674 = vunpack.c.l.b16 %v5566
        %v5675 = vunpack.c.h.b16 %v5566
        %v5676 = vunpack.c.l.b16 %v5567
        %v5677 = vunpack.c.h.b16 %v5567
        %v5678 = vunpack.c.l.b16 %v5568
        %v5679 = vunpack.c.h.b16 %v5568
        %v5680 = vunpack.c.l.b16 %v5569
        %v5681 = vunpack.c.h.b16 %v5569
        %v5682 = vunpack.c.l.b16 %v5570
        %v5683 = vunpack.c.h.b16 %v5570
        %v5684 = vunpack.c.l.b16 %v5571
        %v5685 = vunpack.c.h.b16 %v5571
        %v5686 = vunpack.c.l.b16 %v5572
        %v5687 = vunpack.c.h.b16 %v5572
        %v5688 = vunpack.c.l.b16 %v5573
        %v5689 = vunpack.c.h.b16 %v5573
        %v5690 = vunpack.c.l.b16 %v5574
        %v5691 = vunpack.c.h.b16 %v5574
        %v5692 = vunpack.c.l.b16 %v5575
        %v5693 = vunpack.c.h.b16 %v5575
        %v5694 = vunpack.c.l.b16 %v5576
        %v5695 = vunpack.c.h.b16 %v5576
        %v5696 = vunpack.c.l.b16 %v5577
        %v5697 = vunpack.c.h.b16 %v5577
        %v5698 = vunpack.c.l.b16 %v5578
        %v5699 = vunpack.c.h.b16 %v5578
        %v5700 = vunpack.c.l.b16 %v5579
        %v5701 = vunpack.c.h.b16 %v5579
        %v5702 = vunpack.c.l.b16 %v5580
        %v5703 = vunpack.c.h.b16 %v5580
        %v5704 = vunpack.c.l.b16 %v5581
        %v5705 = vunpack.c.h.b16 %v5581
        %v5706 = vunpack.c.l.b16 %v5582
        %v5707 = vunpack.c.h.b16 %v5582
        %v5708 = vunpack.c.l.b16 %v5583
        %v5709 = vunpack.c.h.b16 %v5583
        %v5710 = vunpack.c.l.b16 %v5584
        %v5711 = vunpack.c.h.b16 %v5584
        %v5712 = vunpack.c.l.b16 %v5585
        %v5713 = vunpack.c.h.b16 %v5585
        %v5714 = vunpack.c.l.b16 %v5586
        %v5715 = vunpack.c.h.b16 %v5586
        %v5716 = vunpack.c.l.b16 %v5587
        %v5717 = vunpack.c.h.b16 %v5587
        %v5718 = vunpack.c.l.b16 %v5588
        %v5719 = vunpack.c.h.b16 %v5588
        %v5720 = vunpack.c.l.b16 %v5589
        %v5721 = vunpack.c.h.b16 %v5589
        %v5722 = vunpack.c.l.b16 %v5590
        %v5723 = vunpack.c.h.b16 %v5590
        %v5724 = vunpack.c.l.b16 %v5591
        %v5725 = vunpack.c.h.b16 %v5591
        %v5726 = vunpack.c.l.b16 %v5592
        %v5727 = vunpack.c.h.b16 %v5592
        %v5728 = vunpack.c.l.b16 %v5593
        %v5729 = vunpack.c.h.b16 %v5593
        %v5730 = vunpack.c.l.b16 %v5594
        %v5731 = vunpack.c.h.b16 %v5594
        %v5732 = vunpack.c.l.b16 %v5595
        %v5733 = vunpack.c.h.b16 %v5595
        %v5734 = vunpack.c.l.b16 %v5596
        %v5735 = vunpack.c.h.b16 %v5596
        %v5736 = vunpack.c.l.b16 %v5597
        %v5737 = vunpack.c.h.b16 %v5597
        %v5738 = vunpack.c.l.b16 %v5598
        %v5739 = vunpack.c.h.b16 %v5598
        %v5740 = vunpack.c.l.b16 %v5599
        %v5741 = vunpack.c.h.b16 %v5599
        %v5742 = vunpack.c.l.b16 %v5600
        %v5743 = vunpack.c.h.b16 %v5600
        %v5744 = vunpack.c.l.b16 %v5601
        %v5745 = vunpack.c.h.b16 %v5601
        %v5746 = vunpack.c.l.b16 %v5602
        %v5747 = vunpack.c.h.b16 %v5602
        %v5748 = vunpack.c.l.b16 %v5603
        %v5749 = vunpack.c.h.b16 %v5603
        %v5750 = vpack.c.b16 %v5660, %v5654
        %v5751 = vpack.c.b16 %v5661, %v5655
        %v5752 = vpack.c.b16 %v5662, %v5656
        %v5753 = vpack.c.b16 %v5663, %v5657
        %v5754 = vpack.c.b16 %v5664, %v5658
        %v5755 = vpack.c.b16 %v5665, %v5659
        %v5756 = vpack.c.b16 %v5672, %v5666
        %v5757 = vpack.c.b16 %v5673, %v5667
        %v5758 = vpack.c.b16 %v5674, %v5668
        %v5759 = vpack.c.b16 %v5675, %v5669
        %v5760 = vpack.c.b16 %v5676, %v5670
        %v5761 = vpack.c.b16 %v5677, %v5671
        %v5762 = vpack.c.b16 %v5684, %v5678
        %v5763 = vpack.c.b16 %v5685, %v5679
        %v5764 = vpack.c.b16 %v5686, %v5680
        %v5765 = vpack.c.b16 %v5687, %v5681
        %v5766 = vpack.c.b16 %v5688, %v5682
        %v5767 = vpack.c.b16 %v5689, %v5683
        %v5768 = vpack.c.b16 %v5696, %v5690
        %v5769 = vpack.c.b16 %v5697, %v5691
        %v5770 = vpack.c.b16 %v5698, %v5692
        %v5771 = vpack.c.b16 %v5699, %v5693
        %v5772 = vpack.c.b16 %v5700, %v5694
        %v5773 = vpack.c.b16 %v5701, %v5695
        %v5774 = vpack.c.b16 %v5708, %v5702
        %v5775 = vpack.c.b16 %v5709, %v5703
        %v5776 = vpack.c.b16 %v5710, %v5704
        %v5777 = vpack.c.b16 %v5711, %v5705
        %v5778 = vpack.c.b16 %v5712, %v5706
        %v5779 = vpack.c.b16 %v5713, %v5707
        %v5780 = vpack.c.b16 %v5720, %v5714
        %v5781 = vpack.c.b16 %v5721, %v5715
        %v5782 = vpack.c.b16 %v5722, %v5716
        %v5783 = vpack.c.b16 %v5723, %v5717
        %v5784 = vpack.c.b16 %v5724, %v5718
        %v5785 = vpack.c.b16 %v5725, %v5719
        %v5786 = vpack.c.b16 %v5732, %v5726
        %v5787 = vpack.c.b16 %v5733, %v5727
        %v5788 = vpack.c.b16 %v5734, %v5728
        %v5789 = vpack.c.b16 %v5735, %v5729
        %v5790 = vpack.c.b16 %v5736, %v5730
        %v5791 = vpack.c.b16 %v5737, %v5731
        %v5792 = vpack.c.b16 %v5744, %v5738
        %v5793 = vpack.c.b16 %v5745, %v5739
        %v5794 = vpack.c.b16 %v5746, %v5740
        %v5795 = vpack.c.b16 %v5747, %v5741
        %v5796 = vpack.c.b16 %v5748, %v5742
        %v5797 = vpack.c.b16 %v5749, %v5743
        %5846 = vmatprep.subr.bf16.mxu0 %v5751
        %5847 = vmatpush1.bf16.msra.mxu0 %v5750
        %5848 = vmatprep.subr.bf16.mxu0 %v5757
        %5849 = vmatpush1.bf16.msra.mxu0 %v5756
        %5850 = vmatprep.subr.bf16.mxu0 %v5763
        %5851 = vmatpush1.bf16.msra.mxu0 %v5762
        %5852 = vmatprep.subr.bf16.mxu0 %v5769
        %5853 = vmatpush1.bf16.msra.mxu0 %v5768
        %5854 = vmatprep.subr.bf16.mxu0 %v5775
        %5855 = vmatpush1.bf16.msra.mxu0 %v5774
        %5856 = vmatprep.subr.bf16.mxu0 %v5781
        %5857 = vmatpush1.bf16.msra.mxu0 %v5780
        %5858 = vmatprep.subr.bf16.mxu0 %v5787
        %5859 = vmatpush1.bf16.msra.mxu0 %v5786
        %5860 = vmatprep.subr.bf16.mxu0 %v5793
        %5861 = vmatpush1.bf16.msra.mxu0 %v5792
        %5862 = vmatprep.subr.bf16.mxu0 0
        %5863 = vmatpush1.bf16.msra.mxu0 0
        %5864 = vmatprep.subr.bf16.mxu0 0
        %5865 = vmatpush1.bf16.msra.mxu0 0
        %5866 = vmatprep.subr.bf16.mxu0 0
        %5867 = vmatpush1.bf16.msra.mxu0 0
        %5868 = vmatprep.subr.bf16.mxu0 0
        %5869 = vmatpush1.bf16.msra.mxu0 0
        %5870 = vmatprep.subr.bf16.mxu0 0
        %5871 = vmatpush1.bf16.msra.mxu0 0
        %5872 = vmatprep.subr.bf16.mxu0 0
        %5873 = vmatpush1.bf16.msra.mxu0 0
        %5874 = vmatprep.subr.bf16.mxu0 0
        %5875 = vmatpush1.bf16.msra.mxu0 0
        %5876 = vmatprep.subr.bf16.mxu0 0
        %5877 = vmatpush1.bf16.msra.mxu0 0
        %5878 = vmatprep.mubr.bf16.mxu0 0
        %5879 = vmatmul.mubr.bf16.gmra.mrb[0].mxu0 %v5604
        %v5880 = vpop.f32.mrb[0].mxu0
        %v5881 = vadd.f32 0.0, %v5880
        %v5882 = vpop.f32.mrb[0].mxu0
        %v5883 = vadd.f32 0.0, %v5882
        %v5884 = vpop.f32.mrb[0].mxu0
        %v5885 = vpop.f32.mrb[0].mxu0
        %5886 = vdwg.mxu0
        %5887 = vmatprep.subr.bf16.mxu0 %v5753
        %5888 = vmatpush1.bf16.msra.mxu0 %v5752
        %5889 = vmatprep.subr.bf16.mxu0 %v5759
        %5890 = vmatpush1.bf16.msra.mxu0 %v5758
        %5891 = vmatprep.subr.bf16.mxu0 %v5765
        %5892 = vmatpush1.bf16.msra.mxu0 %v5764
        %5893 = vmatprep.subr.bf16.mxu0 %v5771
        %5894 = vmatpush1.bf16.msra.mxu0 %v5770
        %5895 = vmatprep.subr.bf16.mxu0 %v5777
        %5896 = vmatpush1.bf16.msra.mxu0 %v5776
        %5897 = vmatprep.subr.bf16.mxu0 %v5783
        %5898 = vmatpush1.bf16.msra.mxu0 %v5782
        %5899 = vmatprep.subr.bf16.mxu0 %v5789
        %5900 = vmatpush1.bf16.msra.mxu0 %v5788
        %5901 = vmatprep.subr.bf16.mxu0 %v5795
        %5902 = vmatpush1.bf16.msra.mxu0 %v5794
        %5903 = vmatprep.subr.bf16.mxu0 0
        %5904 = vmatpush1.bf16.msra.mxu0 0
        %5905 = vmatprep.subr.bf16.mxu0 0
        %5906 = vmatpush1.bf16.msra.mxu0 0
        %5907 = vmatprep.subr.bf16.mxu0 0
        %5908 = vmatpush1.bf16.msra.mxu0 0
        %5909 = vmatprep.subr.bf16.mxu0 0
        %5910 = vmatpush1.bf16.msra.mxu0 0
        %5911 = vmatprep.subr.bf16.mxu0 0
        %5912 = vmatpush1.bf16.msra.mxu0 0
        %5913 = vmatprep.subr.bf16.mxu0 0
        %5914 = vmatpush1.bf16.msra.mxu0 0
        %5915 = vmatprep.subr.bf16.mxu0 0
        %5916 = vmatpush1.bf16.msra.mxu0 0
        %5917 = vmatprep.subr.bf16.mxu0 0
        %5918 = vmatpush1.bf16.msra.mxu0 0
        %5919 = vmatprep.mubr.bf16.mxu0 0
        %5920 = vmatmul.mubr.bf16.gmra.mrb[0].mxu0 %v5604
        %v5921 = vpop.f32.mrb[0].mxu0
        %v5922 = vadd.f32 0.0, %v5921
        %v5923 = vpop.f32.mrb[0].mxu0
        %v5924 = vadd.f32 0.0, %v5923
        %v5925 = vpop.f32.mrb[0].mxu0
        %v5926 = vpop.f32.mrb[0].mxu0
        %5927 = vdwg.mxu0
        %5928 = vmatprep.subr.bf16.mxu0 %v5755
        %5929 = vmatpush1.bf16.msra.mxu0 %v5754
        %5930 = vmatprep.subr.bf16.mxu0 %v5761
        %5931 = vmatpush1.bf16.msra.mxu0 %v5760
        %5932 = vmatprep.subr.bf16.mxu0 %v5767
        %5933 = vmatpush1.bf16.msra.mxu0 %v5766
        %5934 = vmatprep.subr.bf16.mxu0 %v5773
        %5935 = vmatpush1.bf16.msra.mxu0 %v5772
        %5936 = vmatprep.subr.bf16.mxu0 %v5779
        %5937 = vmatpush1.bf16.msra.mxu0 %v5778
        %5938 = vmatprep.subr.bf16.mxu0 %v5785
        %5939 = vmatpush1.bf16.msra.mxu0 %v5784
        %5940 = vmatprep.subr.bf16.mxu0 %v5791
        %5941 = vmatpush1.bf16.msra.mxu0 %v5790
        %5942 = vmatprep.subr.bf16.mxu0 %v5797
        %5943 = vmatpush1.bf16.msra.mxu0 %v5796
        %5944 = vmatprep.subr.bf16.mxu0 0
        %5945 = vmatpush1.bf16.msra.mxu0 0
        %5946 = vmatprep.subr.bf16.mxu0 0
        %5947 = vmatpush1.bf16.msra.mxu0 0
        %5948 = vmatprep.subr.bf16.mxu0 0
        %5949 = vmatpush1.bf16.msra.mxu0 0
        %5950 = vmatprep.subr.bf16.mxu0 0
        %5951 = vmatpush1.bf16.msra.mxu0 0
        %5952 = vmatprep.subr.bf16.mxu0 0
        %5953 = vmatpush1.bf16.msra.mxu0 0
        %5954 = vmatprep.subr.bf16.mxu0 0
        %5955 = vmatpush1.bf16.msra.mxu0 0
        %5956 = vmatprep.subr.bf16.mxu0 0
        %5957 = vmatpush1.bf16.msra.mxu0 0
        %5958 = vmatprep.subr.bf16.mxu0 0
        %5959 = vmatpush1.bf16.msra.mxu0 0
        %5960 = vmatprep.mubr.bf16.mxu0 0
        %5961 = vmatmul.mubr.bf16.gmra.mrb[0].mxu0 %v5604
        %v5962 = vpop.f32.mrb[0].mxu0
        %v5963 = vadd.f32 0.0, %v5962
        %v5964 = vpop.f32.mrb[0].mxu0
        %v5965 = vadd.f32 0.0, %v5964
        %v5966 = vpop.f32.mrb[0].mxu0
        %v5967 = vpop.f32.mrb[0].mxu0
        %5968 = vdwg.mxu0
        %v5969 = vadd.f32 %v5549, %v5881
        %v5970 = vadd.f32 %v5550, %v5883
        %v5971 = vadd.f32 %v5551, %v5922
        %v5972 = vadd.f32 %v5552, %v5924
        %v5973 = vadd.f32 %v5553, %v5963
        %v5974 = vadd.f32 %v5554, %v5965
        %s5975 = scalar_lea.vmem [#allocation10], 4608
        %v5976 = vld [vmem:[%s5975] sm:$0xff]
        %v5977 = vld [vmem:[%s5975 + $0x8] sm:$0xff]
        %v5978 = vld [vmem:[%s5975 + $0x10] sm:$0xff]
        %v5979 = vld [vmem:[%s5975 + $0x18] sm:$0xff]
        %v5980 = vld [vmem:[%s5975 + $0x20] sm:$0xff]
        %v5981 = vld [vmem:[%s5975 + $0x28] sm:$0xff]
        %v5982 = vld [vmem:[%s5975 + $0x30] sm:$0xff]
        %v5983 = vld [vmem:[%s5975 + $0x38] sm:$0xff]
        %v5984 = vld [vmem:[%s5975 + $0x40] sm:$0xff]
        %v5985 = vld [vmem:[%s5975 + $0x48] sm:$0xff]
        %v5986 = vld [vmem:[%s5975 + $0x50] sm:$0xff]
        %v5987 = vld [vmem:[%s5975 + $0x58] sm:$0xff]
        %v5988 = vld [vmem:[%s5975 + $0x60] sm:$0xff]
        %v5989 = vld [vmem:[%s5975 + $0x68] sm:$0xff]
        %v5990 = vld [vmem:[%s5975 + $0x70] sm:$0xff]
        %v5991 = vld [vmem:[%s5975 + $0x78] sm:$0xff]
        %v5992 = vld [vmem:[%s5975 + $0x80] sm:$0xff]
        %v5993 = vld [vmem:[%s5975 + $0x88] sm:$0xff]
        %v5994 = vld [vmem:[%s5975 + $0x90] sm:$0xff]
        %v5995 = vld [vmem:[%s5975 + $0x98] sm:$0xff]
        %v5996 = vld [vmem:[%s5975 + $0xa0] sm:$0xff]
        %v5997 = vld [vmem:[%s5975 + $0xa8] sm:$0xff]
        %v5998 = vld [vmem:[%s5975 + $0xb0] sm:$0xff]
        %v5999 = vld [vmem:[%s5975 + $0xb8] sm:$0xff]
        %v6000 = vld [vmem:[%s5975 + $0xc0] sm:$0xff]
        %v6001 = vld [vmem:[%s5975 + $0xc8] sm:$0xff]
        %v6002 = vld [vmem:[%s5975 + $0xd0] sm:$0xff]
        %v6003 = vld [vmem:[%s5975 + $0xd8] sm:$0xff]
        %v6004 = vld [vmem:[%s5975 + $0xe0] sm:$0xff]
        %v6005 = vld [vmem:[%s5975 + $0xe8] sm:$0xff]
        %v6006 = vld [vmem:[%s5975 + $0xf0] sm:$0xff]
        %v6007 = vld [vmem:[%s5975 + $0xf8] sm:$0xff]
        %v6008 = vld [vmem:[%s5975 + $0x100] sm:$0xff]
        %v6009 = vld [vmem:[%s5975 + $0x108] sm:$0xff]
        %v6010 = vld [vmem:[%s5975 + $0x110] sm:$0xff]
        %v6011 = vld [vmem:[%s5975 + $0x118] sm:$0xff]
        %v6012 = vld [vmem:[%s5975 + $0x120] sm:$0xff]
        %v6013 = vld [vmem:[%s5975 + $0x128] sm:$0xff]
        %v6014 = vld [vmem:[%s5975 + $0x130] sm:$0xff]
        %v6015 = vld [vmem:[%s5975 + $0x138] sm:$0xff]
        %v6016 = vld [vmem:[%s5975 + $0x140] sm:$0xff]
        %v6017 = vld [vmem:[%s5975 + $0x148] sm:$0xff]
        %v6018 = vld [vmem:[%s5975 + $0x150] sm:$0xff]
        %v6019 = vld [vmem:[%s5975 + $0x158] sm:$0xff]
        %v6020 = vld [vmem:[%s5975 + $0x160] sm:$0xff]
        %v6021 = vld [vmem:[%s5975 + $0x168] sm:$0xff]
        %v6022 = vld [vmem:[%s5975 + $0x170] sm:$0xff]
        %v6023 = vld [vmem:[%s5975 + $0x178] sm:$0xff]
        %v6024 = vrot.slane %v4293, 2
        %v6074 = vunpack.c.l.b16 %v5976
        %v6075 = vunpack.c.h.b16 %v5976
        %v6076 = vunpack.c.l.b16 %v5977
        %v6077 = vunpack.c.h.b16 %v5977
        %v6078 = vunpack.c.l.b16 %v5978
        %v6079 = vunpack.c.h.b16 %v5978
        %v6080 = vunpack.c.l.b16 %v5979
        %v6081 = vunpack.c.h.b16 %v5979
        %v6082 = vunpack.c.l.b16 %v5980
        %v6083 = vunpack.c.h.b16 %v5980
        %v6084 = vunpack.c.l.b16 %v5981
        %v6085 = vunpack.c.h.b16 %v5981
        %v6086 = vunpack.c.l.b16 %v5982
        %v6087 = vunpack.c.h.b16 %v5982
        %v6088 = vunpack.c.l.b16 %v5983
        %v6089 = vunpack.c.h.b16 %v5983
        %v6090 = vunpack.c.l.b16 %v5984
        %v6091 = vunpack.c.h.b16 %v5984
        %v6092 = vunpack.c.l.b16 %v5985
        %v6093 = vunpack.c.h.b16 %v5985
        %v6094 = vunpack.c.l.b16 %v5986
        %v6095 = vunpack.c.h.b16 %v5986
        %v6096 = vunpack.c.l.b16 %v5987
        %v6097 = vunpack.c.h.b16 %v5987
        %v6098 = vunpack.c.l.b16 %v5988
        %v6099 = vunpack.c.h.b16 %v5988
        %v6100 = vunpack.c.l.b16 %v5989
        %v6101 = vunpack.c.h.b16 %v5989
        %v6102 = vunpack.c.l.b16 %v5990
        %v6103 = vunpack.c.h.b16 %v5990
        %v6104 = vunpack.c.l.b16 %v5991
        %v6105 = vunpack.c.h.b16 %v5991
        %v6106 = vunpack.c.l.b16 %v5992
        %v6107 = vunpack.c.h.b16 %v5992
        %v6108 = vunpack.c.l.b16 %v5993
        %v6109 = vunpack.c.h.b16 %v5993
        %v6110 = vunpack.c.l.b16 %v5994
        %v6111 = vunpack.c.h.b16 %v5994
        %v6112 = vunpack.c.l.b16 %v5995
        %v6113 = vunpack.c.h.b16 %v5995
        %v6114 = vunpack.c.l.b16 %v5996
        %v6115 = vunpack.c.h.b16 %v5996
        %v6116 = vunpack.c.l.b16 %v5997
        %v6117 = vunpack.c.h.b16 %v5997
        %v6118 = vunpack.c.l.b16 %v5998
        %v6119 = vunpack.c.h.b16 %v5998
        %v6120 = vunpack.c.l.b16 %v5999
        %v6121 = vunpack.c.h.b16 %v5999
        %v6122 = vunpack.c.l.b16 %v6000
        %v6123 = vunpack.c.h.b16 %v6000
        %v6124 = vunpack.c.l.b16 %v6001
        %v6125 = vunpack.c.h.b16 %v6001
        %v6126 = vunpack.c.l.b16 %v6002
        %v6127 = vunpack.c.h.b16 %v6002
        %v6128 = vunpack.c.l.b16 %v6003
        %v6129 = vunpack.c.h.b16 %v6003
        %v6130 = vunpack.c.l.b16 %v6004
        %v6131 = vunpack.c.h.b16 %v6004
        %v6132 = vunpack.c.l.b16 %v6005
        %v6133 = vunpack.c.h.b16 %v6005
        %v6134 = vunpack.c.l.b16 %v6006
        %v6135 = vunpack.c.h.b16 %v6006
        %v6136 = vunpack.c.l.b16 %v6007
        %v6137 = vunpack.c.h.b16 %v6007
        %v6138 = vunpack.c.l.b16 %v6008
        %v6139 = vunpack.c.h.b16 %v6008
        %v6140 = vunpack.c.l.b16 %v6009
        %v6141 = vunpack.c.h.b16 %v6009
        %v6142 = vunpack.c.l.b16 %v6010
        %v6143 = vunpack.c.h.b16 %v6010
        %v6144 = vunpack.c.l.b16 %v6011
        %v6145 = vunpack.c.h.b16 %v6011
        %v6146 = vunpack.c.l.b16 %v6012
        %v6147 = vunpack.c.h.b16 %v6012
        %v6148 = vunpack.c.l.b16 %v6013
        %v6149 = vunpack.c.h.b16 %v6013
        %v6150 = vunpack.c.l.b16 %v6014
        %v6151 = vunpack.c.h.b16 %v6014
        %v6152 = vunpack.c.l.b16 %v6015
        %v6153 = vunpack.c.h.b16 %v6015
        %v6154 = vunpack.c.l.b16 %v6016
        %v6155 = vunpack.c.h.b16 %v6016
        %v6156 = vunpack.c.l.b16 %v6017
        %v6157 = vunpack.c.h.b16 %v6017
        %v6158 = vunpack.c.l.b16 %v6018
        %v6159 = vunpack.c.h.b16 %v6018
        %v6160 = vunpack.c.l.b16 %v6019
        %v6161 = vunpack.c.h.b16 %v6019
        %v6162 = vunpack.c.l.b16 %v6020
        %v6163 = vunpack.c.h.b16 %v6020
        %v6164 = vunpack.c.l.b16 %v6021
        %v6165 = vunpack.c.h.b16 %v6021
        %v6166 = vunpack.c.l.b16 %v6022
        %v6167 = vunpack.c.h.b16 %v6022
        %v6168 = vunpack.c.l.b16 %v6023
        %v6169 = vunpack.c.h.b16 %v6023
        %v6170 = vpack.c.b16 %v6080, %v6074
        %v6171 = vpack.c.b16 %v6081, %v6075
        %v6172 = vpack.c.b16 %v6082, %v6076
        %v6173 = vpack.c.b16 %v6083, %v6077
        %v6174 = vpack.c.b16 %v6084, %v6078
        %v6175 = vpack.c.b16 %v6085, %v6079
        %v6176 = vpack.c.b16 %v6092, %v6086
        %v6177 = vpack.c.b16 %v6093, %v6087
        %v6178 = vpack.c.b16 %v6094, %v6088
        %v6179 = vpack.c.b16 %v6095, %v6089
        %v6180 = vpack.c.b16 %v6096, %v6090
        %v6181 = vpack.c.b16 %v6097, %v6091
        %v6182 = vpack.c.b16 %v6104, %v6098
        %v6183 = vpack.c.b16 %v6105, %v6099
        %v6184 = vpack.c.b16 %v6106, %v6100
        %v6185 = vpack.c.b16 %v6107, %v6101
        %v6186 = vpack.c.b16 %v6108, %v6102
        %v6187 = vpack.c.b16 %v6109, %v6103
        %v6188 = vpack.c.b16 %v6116, %v6110
        %v6189 = vpack.c.b16 %v6117, %v6111
        %v6190 = vpack.c.b16 %v6118, %v6112
        %v6191 = vpack.c.b16 %v6119, %v6113
        %v6192 = vpack.c.b16 %v6120, %v6114
        %v6193 = vpack.c.b16 %v6121, %v6115
        %v6194 = vpack.c.b16 %v6128, %v6122
        %v6195 = vpack.c.b16 %v6129, %v6123
        %v6196 = vpack.c.b16 %v6130, %v6124
        %v6197 = vpack.c.b16 %v6131, %v6125
        %v6198 = vpack.c.b16 %v6132, %v6126
        %v6199 = vpack.c.b16 %v6133, %v6127
        %v6200 = vpack.c.b16 %v6140, %v6134
        %v6201 = vpack.c.b16 %v6141, %v6135
        %v6202 = vpack.c.b16 %v6142, %v6136
        %v6203 = vpack.c.b16 %v6143, %v6137
        %v6204 = vpack.c.b16 %v6144, %v6138
        %v6205 = vpack.c.b16 %v6145, %v6139
        %v6206 = vpack.c.b16 %v6152, %v6146
        %v6207 = vpack.c.b16 %v6153, %v6147
        %v6208 = vpack.c.b16 %v6154, %v6148
        %v6209 = vpack.c.b16 %v6155, %v6149
        %v6210 = vpack.c.b16 %v6156, %v6150
        %v6211 = vpack.c.b16 %v6157, %v6151
        %v6212 = vpack.c.b16 %v6164, %v6158
        %v6213 = vpack.c.b16 %v6165, %v6159
        %v6214 = vpack.c.b16 %v6166, %v6160
        %v6215 = vpack.c.b16 %v6167, %v6161
        %v6216 = vpack.c.b16 %v6168, %v6162
        %v6217 = vpack.c.b16 %v6169, %v6163
        %6266 = vmatprep.subr.bf16.mxu0 %v6171
        %6267 = vmatpush1.bf16.msra.mxu0 %v6170
        %6268 = vmatprep.subr.bf16.mxu0 %v6177
        %6269 = vmatpush1.bf16.msra.mxu0 %v6176
        %6270 = vmatprep.subr.bf16.mxu0 %v6183
        %6271 = vmatpush1.bf16.msra.mxu0 %v6182
        %6272 = vmatprep.subr.bf16.mxu0 %v6189
        %6273 = vmatpush1.bf16.msra.mxu0 %v6188
        %6274 = vmatprep.subr.bf16.mxu0 %v6195
        %6275 = vmatpush1.bf16.msra.mxu0 %v6194
        %6276 = vmatprep.subr.bf16.mxu0 %v6201
        %6277 = vmatpush1.bf16.msra.mxu0 %v6200
        %6278 = vmatprep.subr.bf16.mxu0 %v6207
        %6279 = vmatpush1.bf16.msra.mxu0 %v6206
        %6280 = vmatprep.subr.bf16.mxu0 %v6213
        %6281 = vmatpush1.bf16.msra.mxu0 %v6212
        %6282 = vmatprep.subr.bf16.mxu0 0
        %6283 = vmatpush1.bf16.msra.mxu0 0
        %6284 = vmatprep.subr.bf16.mxu0 0
        %6285 = vmatpush1.bf16.msra.mxu0 0
        %6286 = vmatprep.subr.bf16.mxu0 0
        %6287 = vmatpush1.bf16.msra.mxu0 0
        %6288 = vmatprep.subr.bf16.mxu0 0
        %6289 = vmatpush1.bf16.msra.mxu0 0
        %6290 = vmatprep.subr.bf16.mxu0 0
        %6291 = vmatpush1.bf16.msra.mxu0 0
        %6292 = vmatprep.subr.bf16.mxu0 0
        %6293 = vmatpush1.bf16.msra.mxu0 0
        %6294 = vmatprep.subr.bf16.mxu0 0
        %6295 = vmatpush1.bf16.msra.mxu0 0
        %6296 = vmatprep.subr.bf16.mxu0 0
        %6297 = vmatpush1.bf16.msra.mxu0 0
        %6298 = vmatprep.mubr.bf16.mxu0 0
        %6299 = vmatmul.mubr.bf16.gmra.mrb[0].mxu0 %v6024
        %v6300 = vpop.f32.mrb[0].mxu0
        %v6301 = vadd.f32 0.0, %v6300
        %v6302 = vpop.f32.mrb[0].mxu0
        %v6303 = vadd.f32 0.0, %v6302
        %v6304 = vpop.f32.mrb[0].mxu0
        %v6305 = vpop.f32.mrb[0].mxu0
        %6306 = vdwg.mxu0
        %6307 = vmatprep.subr.bf16.mxu0 %v6173
        %6308 = vmatpush1.bf16.msra.mxu0 %v6172
        %6309 = vmatprep.subr.bf16.mxu0 %v6179
        %6310 = vmatpush1.bf16.msra.mxu0 %v6178
        %6311 = vmatprep.subr.bf16.mxu0 %v6185
        %6312 = vmatpush1.bf16.msra.mxu0 %v6184
        %6313 = vmatprep.subr.bf16.mxu0 %v6191
        %6314 = vmatpush1.bf16.msra.mxu0 %v6190
        %6315 = vmatprep.subr.bf16.mxu0 %v6197
        %6316 = vmatpush1.bf16.msra.mxu0 %v6196
        %6317 = vmatprep.subr.bf16.mxu0 %v6203
        %6318 = vmatpush1.bf16.msra.mxu0 %v6202
        %6319 = vmatprep.subr.bf16.mxu0 %v6209
        %6320 = vmatpush1.bf16.msra.mxu0 %v6208
        %6321 = vmatprep.subr.bf16.mxu0 %v6215
        %6322 = vmatpush1.bf16.msra.mxu0 %v6214
        %6323 = vmatprep.subr.bf16.mxu0 0
        %6324 = vmatpush1.bf16.msra.mxu0 0
        %6325 = vmatprep.subr.bf16.mxu0 0
        %6326 = vmatpush1.bf16.msra.mxu0 0
        %6327 = vmatprep.subr.bf16.mxu0 0
        %6328 = vmatpush1.bf16.msra.mxu0 0
        %6329 = vmatprep.subr.bf16.mxu0 0
        %6330 = vmatpush1.bf16.msra.mxu0 0
        %6331 = vmatprep.subr.bf16.mxu0 0
        %6332 = vmatpush1.bf16.msra.mxu0 0
        %6333 = vmatprep.subr.bf16.mxu0 0
        %6334 = vmatpush1.bf16.msra.mxu0 0
        %6335 = vmatprep.subr.bf16.mxu0 0
        %6336 = vmatpush1.bf16.msra.mxu0 0
        %6337 = vmatprep.subr.bf16.mxu0 0
        %6338 = vmatpush1.bf16.msra.mxu0 0
        %6339 = vmatprep.mubr.bf16.mxu0 0
        %6340 = vmatmul.mubr.bf16.gmra.mrb[0].mxu0 %v6024
        %v6341 = vpop.f32.mrb[0].mxu0
        %v6342 = vadd.f32 0.0, %v6341
        %v6343 = vpop.f32.mrb[0].mxu0
        %v6344 = vadd.f32 0.0, %v6343
        %v6345 = vpop.f32.mrb[0].mxu0
        %v6346 = vpop.f32.mrb[0].mxu0
        %6347 = vdwg.mxu0
        %6348 = vmatprep.subr.bf16.mxu0 %v6175
        %6349 = vmatpush1.bf16.msra.mxu0 %v6174
        %6350 = vmatprep.subr.bf16.mxu0 %v6181
        %6351 = vmatpush1.bf16.msra.mxu0 %v6180
        %6352 = vmatprep.subr.bf16.mxu0 %v6187
        %6353 = vmatpush1.bf16.msra.mxu0 %v6186
        %6354 = vmatprep.subr.bf16.mxu0 %v6193
        %6355 = vmatpush1.bf16.msra.mxu0 %v6192
        %6356 = vmatprep.subr.bf16.mxu0 %v6199
        %6357 = vmatpush1.bf16.msra.mxu0 %v6198
        %6358 = vmatprep.subr.bf16.mxu0 %v6205
        %6359 = vmatpush1.bf16.msra.mxu0 %v6204
        %6360 = vmatprep.subr.bf16.mxu0 %v6211
        %6361 = vmatpush1.bf16.msra.mxu0 %v6210
        %6362 = vmatprep.subr.bf16.mxu0 %v6217
        %6363 = vmatpush1.bf16.msra.mxu0 %v6216
        %6364 = vmatprep.subr.bf16.mxu0 0
        %6365 = vmatpush1.bf16.msra.mxu0 0
        %6366 = vmatprep.subr.bf16.mxu0 0
        %6367 = vmatpush1.bf16.msra.mxu0 0
        %6368 = vmatprep.subr.bf16.mxu0 0
        %6369 = vmatpush1.bf16.msra.mxu0 0
        %6370 = vmatprep.subr.bf16.mxu0 0
        %6371 = vmatpush1.bf16.msra.mxu0 0
        %6372 = vmatprep.subr.bf16.mxu0 0
        %6373 = vmatpush1.bf16.msra.mxu0 0
        %6374 = vmatprep.subr.bf16.mxu0 0
        %6375 = vmatpush1.bf16.msra.mxu0 0
        %6376 = vmatprep.subr.bf16.mxu0 0
        %6377 = vmatpush1.bf16.msra.mxu0 0
        %6378 = vmatprep.subr.bf16.mxu0 0
        %6379 = vmatpush1.bf16.msra.mxu0 0
        %6380 = vmatprep.mubr.bf16.mxu0 0
        %6381 = vmatmul.mubr.bf16.gmra.mrb[0].mxu0 %v6024
        %v6382 = vpop.f32.mrb[0].mxu0
        %v6383 = vadd.f32 0.0, %v6382
        %v6384 = vpop.f32.mrb[0].mxu0
        %v6385 = vadd.f32 0.0, %v6384
        %v6386 = vpop.f32.mrb[0].mxu0
        %v6387 = vpop.f32.mrb[0].mxu0
        %6388 = vdwg.mxu0
        %v6389 = vadd.f32 %v5969, %v6301
        %v6390 = vadd.f32 %v5970, %v6303
        %v6391 = vadd.f32 %v5971, %v6342
        %v6392 = vadd.f32 %v5972, %v6344
        %v6393 = vadd.f32 %v5973, %v6383
        %v6394 = vadd.f32 %v5974, %v6385
        %s6395 = scalar_lea.vmem [#allocation10], 4992
        %v6396 = vld [vmem:[%s6395] sm:$0xff]
        %v6397 = vld [vmem:[%s6395 + $0x8] sm:$0xff]
        %v6398 = vld [vmem:[%s6395 + $0x10] sm:$0xff]
        %v6399 = vld [vmem:[%s6395 + $0x18] sm:$0xff]
        %v6400 = vld [vmem:[%s6395 + $0x20] sm:$0xff]
        %v6401 = vld [vmem:[%s6395 + $0x28] sm:$0xff]
        %v6402 = vld [vmem:[%s6395 + $0x30] sm:$0xff]
        %v6403 = vld [vmem:[%s6395 + $0x38] sm:$0xff]
        %v6404 = vld [vmem:[%s6395 + $0x40] sm:$0xff]
        %v6405 = vld [vmem:[%s6395 + $0x48] sm:$0xff]
        %v6406 = vld [vmem:[%s6395 + $0x50] sm:$0xff]
        %v6407 = vld [vmem:[%s6395 + $0x58] sm:$0xff]
        %v6408 = vld [vmem:[%s6395 + $0x60] sm:$0xff]
        %v6409 = vld [vmem:[%s6395 + $0x68] sm:$0xff]
        %v6410 = vld [vmem:[%s6395 + $0x70] sm:$0xff]
        %v6411 = vld [vmem:[%s6395 + $0x78] sm:$0xff]
        %v6412 = vld [vmem:[%s6395 + $0x80] sm:$0xff]
        %v6413 = vld [vmem:[%s6395 + $0x88] sm:$0xff]
        %v6414 = vld [vmem:[%s6395 + $0x90] sm:$0xff]
        %v6415 = vld [vmem:[%s6395 + $0x98] sm:$0xff]
        %v6416 = vld [vmem:[%s6395 + $0xa0] sm:$0xff]
        %v6417 = vld [vmem:[%s6395 + $0xa8] sm:$0xff]
        %v6418 = vld [vmem:[%s6395 + $0xb0] sm:$0xff]
        %v6419 = vld [vmem:[%s6395 + $0xb8] sm:$0xff]
        %v6420 = vld [vmem:[%s6395 + $0xc0] sm:$0xff]
        %v6421 = vld [vmem:[%s6395 + $0xc8] sm:$0xff]
        %v6422 = vld [vmem:[%s6395 + $0xd0] sm:$0xff]
        %v6423 = vld [vmem:[%s6395 + $0xd8] sm:$0xff]
        %v6424 = vld [vmem:[%s6395 + $0xe0] sm:$0xff]
        %v6425 = vld [vmem:[%s6395 + $0xe8] sm:$0xff]
        %v6426 = vld [vmem:[%s6395 + $0xf0] sm:$0xff]
        %v6427 = vld [vmem:[%s6395 + $0xf8] sm:$0xff]
        %v6428 = vld [vmem:[%s6395 + $0x100] sm:$0xff]
        %v6429 = vld [vmem:[%s6395 + $0x108] sm:$0xff]
        %v6430 = vld [vmem:[%s6395 + $0x110] sm:$0xff]
        %v6431 = vld [vmem:[%s6395 + $0x118] sm:$0xff]
        %v6432 = vld [vmem:[%s6395 + $0x120] sm:$0xff]
        %v6433 = vld [vmem:[%s6395 + $0x128] sm:$0xff]
        %v6434 = vld [vmem:[%s6395 + $0x130] sm:$0xff]
        %v6435 = vld [vmem:[%s6395 + $0x138] sm:$0xff]
        %v6436 = vld [vmem:[%s6395 + $0x140] sm:$0xff]
        %v6437 = vld [vmem:[%s6395 + $0x148] sm:$0xff]
        %v6438 = vld [vmem:[%s6395 + $0x150] sm:$0xff]
        %v6439 = vld [vmem:[%s6395 + $0x158] sm:$0xff]
        %v6440 = vld [vmem:[%s6395 + $0x160] sm:$0xff]
        %v6441 = vld [vmem:[%s6395 + $0x168] sm:$0xff]
        %v6442 = vld [vmem:[%s6395 + $0x170] sm:$0xff]
        %v6443 = vld [vmem:[%s6395 + $0x178] sm:$0xff]
        %v6444 = vrot.slane %v4762, 2
        %v6494 = vunpack.c.l.b16 %v6396
        %v6495 = vunpack.c.h.b16 %v6396
        %v6496 = vunpack.c.l.b16 %v6397
        %v6497 = vunpack.c.h.b16 %v6397
        %v6498 = vunpack.c.l.b16 %v6398
        %v6499 = vunpack.c.h.b16 %v6398
        %v6500 = vunpack.c.l.b16 %v6399
        %v6501 = vunpack.c.h.b16 %v6399
        %v6502 = vunpack.c.l.b16 %v6400
        %v6503 = vunpack.c.h.b16 %v6400
        %v6504 = vunpack.c.l.b16 %v6401
        %v6505 = vunpack.c.h.b16 %v6401
        %v6506 = vunpack.c.l.b16 %v6402
        %v6507 = vunpack.c.h.b16 %v6402
        %v6508 = vunpack.c.l.b16 %v6403
        %v6509 = vunpack.c.h.b16 %v6403
        %v6510 = vunpack.c.l.b16 %v6404
        %v6511 = vunpack.c.h.b16 %v6404
        %v6512 = vunpack.c.l.b16 %v6405
        %v6513 = vunpack.c.h.b16 %v6405
        %v6514 = vunpack.c.l.b16 %v6406
        %v6515 = vunpack.c.h.b16 %v6406
        %v6516 = vunpack.c.l.b16 %v6407
        %v6517 = vunpack.c.h.b16 %v6407
        %v6518 = vunpack.c.l.b16 %v6408
        %v6519 = vunpack.c.h.b16 %v6408
        %v6520 = vunpack.c.l.b16 %v6409
        %v6521 = vunpack.c.h.b16 %v6409
        %v6522 = vunpack.c.l.b16 %v6410
        %v6523 = vunpack.c.h.b16 %v6410
        %v6524 = vunpack.c.l.b16 %v6411
        %v6525 = vunpack.c.h.b16 %v6411
        %v6526 = vunpack.c.l.b16 %v6412
        %v6527 = vunpack.c.h.b16 %v6412
        %v6528 = vunpack.c.l.b16 %v6413
        %v6529 = vunpack.c.h.b16 %v6413
        %v6530 = vunpack.c.l.b16 %v6414
        %v6531 = vunpack.c.h.b16 %v6414
        %v6532 = vunpack.c.l.b16 %v6415
        %v6533 = vunpack.c.h.b16 %v6415
        %v6534 = vunpack.c.l.b16 %v6416
        %v6535 = vunpack.c.h.b16 %v6416
        %v6536 = vunpack.c.l.b16 %v6417
        %v6537 = vunpack.c.h.b16 %v6417
        %v6538 = vunpack.c.l.b16 %v6418
        %v6539 = vunpack.c.h.b16 %v6418
        %v6540 = vunpack.c.l.b16 %v6419
        %v6541 = vunpack.c.h.b16 %v6419
        %v6542 = vunpack.c.l.b16 %v6420
        %v6543 = vunpack.c.h.b16 %v6420
        %v6544 = vunpack.c.l.b16 %v6421
        %v6545 = vunpack.c.h.b16 %v6421
        %v6546 = vunpack.c.l.b16 %v6422
        %v6547 = vunpack.c.h.b16 %v6422
        %v6548 = vunpack.c.l.b16 %v6423
        %v6549 = vunpack.c.h.b16 %v6423
        %v6550 = vunpack.c.l.b16 %v6424
        %v6551 = vunpack.c.h.b16 %v6424
        %v6552 = vunpack.c.l.b16 %v6425
        %v6553 = vunpack.c.h.b16 %v6425
        %v6554 = vunpack.c.l.b16 %v6426
        %v6555 = vunpack.c.h.b16 %v6426
        %v6556 = vunpack.c.l.b16 %v6427
        %v6557 = vunpack.c.h.b16 %v6427
        %v6558 = vunpack.c.l.b16 %v6428
        %v6559 = vunpack.c.h.b16 %v6428
        %v6560 = vunpack.c.l.b16 %v6429
        %v6561 = vunpack.c.h.b16 %v6429
        %v6562 = vunpack.c.l.b16 %v6430
        %v6563 = vunpack.c.h.b16 %v6430
        %v6564 = vunpack.c.l.b16 %v6431
        %v6565 = vunpack.c.h.b16 %v6431
        %v6566 = vunpack.c.l.b16 %v6432
        %v6567 = vunpack.c.h.b16 %v6432
        %v6568 = vunpack.c.l.b16 %v6433
        %v6569 = vunpack.c.h.b16 %v6433
        %v6570 = vunpack.c.l.b16 %v6434
        %v6571 = vunpack.c.h.b16 %v6434
        %v6572 = vunpack.c.l.b16 %v6435
        %v6573 = vunpack.c.h.b16 %v6435
        %v6574 = vunpack.c.l.b16 %v6436
        %v6575 = vunpack.c.h.b16 %v6436
        %v6576 = vunpack.c.l.b16 %v6437
        %v6577 = vunpack.c.h.b16 %v6437
        %v6578 = vunpack.c.l.b16 %v6438
        %v6579 = vunpack.c.h.b16 %v6438
        %v6580 = vunpack.c.l.b16 %v6439
        %v6581 = vunpack.c.h.b16 %v6439
        %v6582 = vunpack.c.l.b16 %v6440
        %v6583 = vunpack.c.h.b16 %v6440
        %v6584 = vunpack.c.l.b16 %v6441
        %v6585 = vunpack.c.h.b16 %v6441
        %v6586 = vunpack.c.l.b16 %v6442
        %v6587 = vunpack.c.h.b16 %v6442
        %v6588 = vunpack.c.l.b16 %v6443
        %v6589 = vunpack.c.h.b16 %v6443
        %v6590 = vpack.c.b16 %v6500, %v6494
        %v6591 = vpack.c.b16 %v6501, %v6495
        %v6592 = vpack.c.b16 %v6502, %v6496
        %v6593 = vpack.c.b16 %v6503, %v6497
        %v6594 = vpack.c.b16 %v6504, %v6498
        %v6595 = vpack.c.b16 %v6505, %v6499
        %v6596 = vpack.c.b16 %v6512, %v6506
        %v6597 = vpack.c.b16 %v6513, %v6507
        %v6598 = vpack.c.b16 %v6514, %v6508
        %v6599 = vpack.c.b16 %v6515, %v6509
        %v6600 = vpack.c.b16 %v6516, %v6510
        %v6601 = vpack.c.b16 %v6517, %v6511
        %v6602 = vpack.c.b16 %v6524, %v6518
        %v6603 = vpack.c.b16 %v6525, %v6519
        %v6604 = vpack.c.b16 %v6526, %v6520
        %v6605 = vpack.c.b16 %v6527, %v6521
        %v6606 = vpack.c.b16 %v6528, %v6522
        %v6607 = vpack.c.b16 %v6529, %v6523
        %v6608 = vpack.c.b16 %v6536, %v6530
        %v6609 = vpack.c.b16 %v6537, %v6531
        %v6610 = vpack.c.b16 %v6538, %v6532
        %v6611 = vpack.c.b16 %v6539, %v6533
        %v6612 = vpack.c.b16 %v6540, %v6534
        %v6613 = vpack.c.b16 %v6541, %v6535
        %v6614 = vpack.c.b16 %v6548, %v6542
        %v6615 = vpack.c.b16 %v6549, %v6543
        %v6616 = vpack.c.b16 %v6550, %v6544
        %v6617 = vpack.c.b16 %v6551, %v6545
        %v6618 = vpack.c.b16 %v6552, %v6546
        %v6619 = vpack.c.b16 %v6553, %v6547
        %v6620 = vpack.c.b16 %v6560, %v6554
        %v6621 = vpack.c.b16 %v6561, %v6555
        %v6622 = vpack.c.b16 %v6562, %v6556
        %v6623 = vpack.c.b16 %v6563, %v6557
        %v6624 = vpack.c.b16 %v6564, %v6558
        %v6625 = vpack.c.b16 %v6565, %v6559
        %v6626 = vpack.c.b16 %v6572, %v6566
        %v6627 = vpack.c.b16 %v6573, %v6567
        %v6628 = vpack.c.b16 %v6574, %v6568
        %v6629 = vpack.c.b16 %v6575, %v6569
        %v6630 = vpack.c.b16 %v6576, %v6570
        %v6631 = vpack.c.b16 %v6577, %v6571
        %v6632 = vpack.c.b16 %v6584, %v6578
        %v6633 = vpack.c.b16 %v6585, %v6579
        %v6634 = vpack.c.b16 %v6586, %v6580
        %v6635 = vpack.c.b16 %v6587, %v6581
        %v6636 = vpack.c.b16 %v6588, %v6582
        %v6637 = vpack.c.b16 %v6589, %v6583
        %6686 = vmatprep.subr.bf16.mxu0 %v6591
        %6687 = vmatpush1.bf16.msra.mxu0 %v6590
        %6688 = vmatprep.subr.bf16.mxu0 %v6597
        %6689 = vmatpush1.bf16.msra.mxu0 %v6596
        %6690 = vmatprep.subr.bf16.mxu0 %v6603
        %6691 = vmatpush1.bf16.msra.mxu0 %v6602
        %6692 = vmatprep.subr.bf16.mxu0 %v6609
        %6693 = vmatpush1.bf16.msra.mxu0 %v6608
        %6694 = vmatprep.subr.bf16.mxu0 %v6615
        %6695 = vmatpush1.bf16.msra.mxu0 %v6614
        %6696 = vmatprep.subr.bf16.mxu0 %v6621
        %6697 = vmatpush1.bf16.msra.mxu0 %v6620
        %6698 = vmatprep.subr.bf16.mxu0 %v6627
        %6699 = vmatpush1.bf16.msra.mxu0 %v6626
        %6700 = vmatprep.subr.bf16.mxu0 %v6633
        %6701 = vmatpush1.bf16.msra.mxu0 %v6632
        %6702 = vmatprep.subr.bf16.mxu0 0
        %6703 = vmatpush1.bf16.msra.mxu0 0
        %6704 = vmatprep.subr.bf16.mxu0 0
        %6705 = vmatpush1.bf16.msra.mxu0 0
        %6706 = vmatprep.subr.bf16.mxu0 0
        %6707 = vmatpush1.bf16.msra.mxu0 0
        %6708 = vmatprep.subr.bf16.mxu0 0
        %6709 = vmatpush1.bf16.msra.mxu0 0
        %6710 = vmatprep.subr.bf16.mxu0 0
        %6711 = vmatpush1.bf16.msra.mxu0 0
        %6712 = vmatprep.subr.bf16.mxu0 0
        %6713 = vmatpush1.bf16.msra.mxu0 0
        %6714 = vmatprep.subr.bf16.mxu0 0
        %6715 = vmatpush1.bf16.msra.mxu0 0
        %6716 = vmatprep.subr.bf16.mxu0 0
        %6717 = vmatpush1.bf16.msra.mxu0 0
        %6718 = vmatprep.mubr.bf16.mxu0 0
        %6719 = vmatmul.mubr.bf16.gmra.mrb[0].mxu0 %v6444
        %v6720 = vpop.f32.mrb[0].mxu0
        %v6721 = vadd.f32 0.0, %v6720
        %v6722 = vpop.f32.mrb[0].mxu0
        %v6723 = vadd.f32 0.0, %v6722
        %v6724 = vpop.f32.mrb[0].mxu0
        %v6725 = vpop.f32.mrb[0].mxu0
        %6726 = vdwg.mxu0
        %6727 = vmatprep.subr.bf16.mxu0 %v6593
        %6728 = vmatpush1.bf16.msra.mxu0 %v6592
        %6729 = vmatprep.subr.bf16.mxu0 %v6599
        %6730 = vmatpush1.bf16.msra.mxu0 %v6598
        %6731 = vmatprep.subr.bf16.mxu0 %v6605
        %6732 = vmatpush1.bf16.msra.mxu0 %v6604
        %6733 = vmatprep.subr.bf16.mxu0 %v6611
        %6734 = vmatpush1.bf16.msra.mxu0 %v6610
        %6735 = vmatprep.subr.bf16.mxu0 %v6617
        %6736 = vmatpush1.bf16.msra.mxu0 %v6616
        %6737 = vmatprep.subr.bf16.mxu0 %v6623
        %6738 = vmatpush1.bf16.msra.mxu0 %v6622
        %6739 = vmatprep.subr.bf16.mxu0 %v6629
        %6740 = vmatpush1.bf16.msra.mxu0 %v6628
        %6741 = vmatprep.subr.bf16.mxu0 %v6635
        %6742 = vmatpush1.bf16.msra.mxu0 %v6634
        %6743 = vmatprep.subr.bf16.mxu0 0
        %6744 = vmatpush1.bf16.msra.mxu0 0
        %6745 = vmatprep.subr.bf16.mxu0 0
        %6746 = vmatpush1.bf16.msra.mxu0 0
        %6747 = vmatprep.subr.bf16.mxu0 0
        %6748 = vmatpush1.bf16.msra.mxu0 0
        %6749 = vmatprep.subr.bf16.mxu0 0
        %6750 = vmatpush1.bf16.msra.mxu0 0
        %6751 = vmatprep.subr.bf16.mxu0 0
        %6752 = vmatpush1.bf16.msra.mxu0 0
        %6753 = vmatprep.subr.bf16.mxu0 0
        %6754 = vmatpush1.bf16.msra.mxu0 0
        %6755 = vmatprep.subr.bf16.mxu0 0
        %6756 = vmatpush1.bf16.msra.mxu0 0
        %6757 = vmatprep.subr.bf16.mxu0 0
        %6758 = vmatpush1.bf16.msra.mxu0 0
        %6759 = vmatprep.mubr.bf16.mxu0 0
        %6760 = vmatmul.mubr.bf16.gmra.mrb[0].mxu0 %v6444
        %v6761 = vpop.f32.mrb[0].mxu0
        %v6762 = vadd.f32 0.0, %v6761
        %v6763 = vpop.f32.mrb[0].mxu0
        %v6764 = vadd.f32 0.0, %v6763
        %v6765 = vpop.f32.mrb[0].mxu0
        %v6766 = vpop.f32.mrb[0].mxu0
        %6767 = vdwg.mxu0
        %6768 = vmatprep.subr.bf16.mxu0 %v6595
        %6769 = vmatpush1.bf16.msra.mxu0 %v6594
        %6770 = vmatprep.subr.bf16.mxu0 %v6601
        %6771 = vmatpush1.bf16.msra.mxu0 %v6600
        %6772 = vmatprep.subr.bf16.mxu0 %v6607
        %6773 = vmatpush1.bf16.msra.mxu0 %v6606
        %6774 = vmatprep.subr.bf16.mxu0 %v6613
        %6775 = vmatpush1.bf16.msra.mxu0 %v6612
        %6776 = vmatprep.subr.bf16.mxu0 %v6619
        %6777 = vmatpush1.bf16.msra.mxu0 %v6618
        %6778 = vmatprep.subr.bf16.mxu0 %v6625
        %6779 = vmatpush1.bf16.msra.mxu0 %v6624
        %6780 = vmatprep.subr.bf16.mxu0 %v6631
        %6781 = vmatpush1.bf16.msra.mxu0 %v6630
        %6782 = vmatprep.subr.bf16.mxu0 %v6637
        %6783 = vmatpush1.bf16.msra.mxu0 %v6636
        %6784 = vmatprep.subr.bf16.mxu0 0
        %6785 = vmatpush1.bf16.msra.mxu0 0
        %6786 = vmatprep.subr.bf16.mxu0 0
        %6787 = vmatpush1.bf16.msra.mxu0 0
        %6788 = vmatprep.subr.bf16.mxu0 0
        %6789 = vmatpush1.bf16.msra.mxu0 0
        %6790 = vmatprep.subr.bf16.mxu0 0
        %6791 = vmatpush1.bf16.msra.mxu0 0
        %6792 = vmatprep.subr.bf16.mxu0 0
        %6793 = vmatpush1.bf16.msra.mxu0 0
        %6794 = vmatprep.subr.bf16.mxu0 0
        %6795 = vmatpush1.bf16.msra.mxu0 0
        %6796 = vmatprep.subr.bf16.mxu0 0
        %6797 = vmatpush1.bf16.msra.mxu0 0
        %6798 = vmatprep.subr.bf16.mxu0 0
        %6799 = vmatpush1.bf16.msra.mxu0 0
        %6800 = vmatprep.mubr.bf16.mxu0 0
        %6801 = vmatmul.mubr.bf16.gmra.mrb[0].mxu0 %v6444
        %v6802 = vpop.f32.mrb[0].mxu0
        %v6803 = vadd.f32 0.0, %v6802
        %v6804 = vpop.f32.mrb[0].mxu0
        %v6805 = vadd.f32 0.0, %v6804
        %v6806 = vpop.f32.mrb[0].mxu0
        %v6807 = vpop.f32.mrb[0].mxu0
        %6808 = vdwg.mxu0
        %v6809 = vadd.f32 %v6389, %v6721
        %v6810 = vadd.f32 %v6390, %v6723
        %v6811 = vadd.f32 %v6391, %v6762
        %v6812 = vadd.f32 %v6392, %v6764
        %v6813 = vadd.f32 %v6393, %v6803
        %v6814 = vadd.f32 %v6394, %v6805
        %s6815 = scalar_lea.vmem [#allocation10], 5376
        %v6816 = vld [vmem:[%s6815] sm:$0xff]
        %v6817 = vld [vmem:[%s6815 + $0x8] sm:$0xff]
        %v6818 = vld [vmem:[%s6815 + $0x10] sm:$0xff]
        %v6819 = vld [vmem:[%s6815 + $0x18] sm:$0xff]
        %v6820 = vld [vmem:[%s6815 + $0x20] sm:$0xff]
        %v6821 = vld [vmem:[%s6815 + $0x28] sm:$0xff]
        %v6822 = vld [vmem:[%s6815 + $0x30] sm:$0xff]
        %v6823 = vld [vmem:[%s6815 + $0x38] sm:$0xff]
        %v6824 = vld [vmem:[%s6815 + $0x40] sm:$0xff]
        %v6825 = vld [vmem:[%s6815 + $0x48] sm:$0xff]
        %v6826 = vld [vmem:[%s6815 + $0x50] sm:$0xff]
        %v6827 = vld [vmem:[%s6815 + $0x58] sm:$0xff]
        %v6828 = vld [vmem:[%s6815 + $0x60] sm:$0xff]
        %v6829 = vld [vmem:[%s6815 + $0x68] sm:$0xff]
        %v6830 = vld [vmem:[%s6815 + $0x70] sm:$0xff]
        %v6831 = vld [vmem:[%s6815 + $0x78] sm:$0xff]
        %v6832 = vld [vmem:[%s6815 + $0x80] sm:$0xff]
        %v6833 = vld [vmem:[%s6815 + $0x88] sm:$0xff]
        %v6834 = vld [vmem:[%s6815 + $0x90] sm:$0xff]
        %v6835 = vld [vmem:[%s6815 + $0x98] sm:$0xff]
        %v6836 = vld [vmem:[%s6815 + $0xa0] sm:$0xff]
        %v6837 = vld [vmem:[%s6815 + $0xa8] sm:$0xff]
        %v6838 = vld [vmem:[%s6815 + $0xb0] sm:$0xff]
        %v6839 = vld [vmem:[%s6815 + $0xb8] sm:$0xff]
        %v6840 = vld [vmem:[%s6815 + $0xc0] sm:$0xff]
        %v6841 = vld [vmem:[%s6815 + $0xc8] sm:$0xff]
        %v6842 = vld [vmem:[%s6815 + $0xd0] sm:$0xff]
        %v6843 = vld [vmem:[%s6815 + $0xd8] sm:$0xff]
        %v6844 = vld [vmem:[%s6815 + $0xe0] sm:$0xff]
        %v6845 = vld [vmem:[%s6815 + $0xe8] sm:$0xff]
        %v6846 = vld [vmem:[%s6815 + $0xf0] sm:$0xff]
        %v6847 = vld [vmem:[%s6815 + $0xf8] sm:$0xff]
        %v6848 = vld [vmem:[%s6815 + $0x100] sm:$0xff]
        %v6849 = vld [vmem:[%s6815 + $0x108] sm:$0xff]
        %v6850 = vld [vmem:[%s6815 + $0x110] sm:$0xff]
        %v6851 = vld [vmem:[%s6815 + $0x118] sm:$0xff]
        %v6852 = vld [vmem:[%s6815 + $0x120] sm:$0xff]
        %v6853 = vld [vmem:[%s6815 + $0x128] sm:$0xff]
        %v6854 = vld [vmem:[%s6815 + $0x130] sm:$0xff]
        %v6855 = vld [vmem:[%s6815 + $0x138] sm:$0xff]
        %v6856 = vld [vmem:[%s6815 + $0x140] sm:$0xff]
        %v6857 = vld [vmem:[%s6815 + $0x148] sm:$0xff]
        %v6858 = vld [vmem:[%s6815 + $0x150] sm:$0xff]
        %v6859 = vld [vmem:[%s6815 + $0x158] sm:$0xff]
        %v6860 = vld [vmem:[%s6815 + $0x160] sm:$0xff]
        %v6861 = vld [vmem:[%s6815 + $0x168] sm:$0xff]
        %v6862 = vld [vmem:[%s6815 + $0x170] sm:$0xff]
        %v6863 = vld [vmem:[%s6815 + $0x178] sm:$0xff]
        %v6864 = vrot.slane %v4293, 3
        %v6914 = vunpack.c.l.b16 %v6816
        %v6915 = vunpack.c.h.b16 %v6816
        %v6916 = vunpack.c.l.b16 %v6817
        %v6917 = vunpack.c.h.b16 %v6817
        %v6918 = vunpack.c.l.b16 %v6818
        %v6919 = vunpack.c.h.b16 %v6818
        %v6920 = vunpack.c.l.b16 %v6819
        %v6921 = vunpack.c.h.b16 %v6819
        %v6922 = vunpack.c.l.b16 %v6820
        %v6923 = vunpack.c.h.b16 %v6820
        %v6924 = vunpack.c.l.b16 %v6821
        %v6925 = vunpack.c.h.b16 %v6821
        %v6926 = vunpack.c.l.b16 %v6822
        %v6927 = vunpack.c.h.b16 %v6822
        %v6928 = vunpack.c.l.b16 %v6823
        %v6929 = vunpack.c.h.b16 %v6823
        %v6930 = vunpack.c.l.b16 %v6824
        %v6931 = vunpack.c.h.b16 %v6824
        %v6932 = vunpack.c.l.b16 %v6825
        %v6933 = vunpack.c.h.b16 %v6825
        %v6934 = vunpack.c.l.b16 %v6826
        %v6935 = vunpack.c.h.b16 %v6826
        %v6936 = vunpack.c.l.b16 %v6827
        %v6937 = vunpack.c.h.b16 %v6827
        %v6938 = vunpack.c.l.b16 %v6828
        %v6939 = vunpack.c.h.b16 %v6828
        %v6940 = vunpack.c.l.b16 %v6829
        %v6941 = vunpack.c.h.b16 %v6829
        %v6942 = vunpack.c.l.b16 %v6830
        %v6943 = vunpack.c.h.b16 %v6830
        %v6944 = vunpack.c.l.b16 %v6831
        %v6945 = vunpack.c.h.b16 %v6831
        %v6946 = vunpack.c.l.b16 %v6832
        %v6947 = vunpack.c.h.b16 %v6832
        %v6948 = vunpack.c.l.b16 %v6833
        %v6949 = vunpack.c.h.b16 %v6833
        %v6950 = vunpack.c.l.b16 %v6834
        %v6951 = vunpack.c.h.b16 %v6834
        %v6952 = vunpack.c.l.b16 %v6835
        %v6953 = vunpack.c.h.b16 %v6835
        %v6954 = vunpack.c.l.b16 %v6836
        %v6955 = vunpack.c.h.b16 %v6836
        %v6956 = vunpack.c.l.b16 %v6837
        %v6957 = vunpack.c.h.b16 %v6837
        %v6958 = vunpack.c.l.b16 %v6838
        %v6959 = vunpack.c.h.b16 %v6838
        %v6960 = vunpack.c.l.b16 %v6839
        %v6961 = vunpack.c.h.b16 %v6839
        %v6962 = vunpack.c.l.b16 %v6840
        %v6963 = vunpack.c.h.b16 %v6840
        %v6964 = vunpack.c.l.b16 %v6841
        %v6965 = vunpack.c.h.b16 %v6841
        %v6966 = vunpack.c.l.b16 %v6842
        %v6967 = vunpack.c.h.b16 %v6842
        %v6968 = vunpack.c.l.b16 %v6843
        %v6969 = vunpack.c.h.b16 %v6843
        %v6970 = vunpack.c.l.b16 %v6844
        %v6971 = vunpack.c.h.b16 %v6844
        %v6972 = vunpack.c.l.b16 %v6845
        %v6973 = vunpack.c.h.b16 %v6845
        %v6974 = vunpack.c.l.b16 %v6846
        %v6975 = vunpack.c.h.b16 %v6846
        %v6976 = vunpack.c.l.b16 %v6847
        %v6977 = vunpack.c.h.b16 %v6847
        %v6978 = vunpack.c.l.b16 %v6848
        %v6979 = vunpack.c.h.b16 %v6848
        %v6980 = vunpack.c.l.b16 %v6849
        %v6981 = vunpack.c.h.b16 %v6849
        %v6982 = vunpack.c.l.b16 %v6850
        %v6983 = vunpack.c.h.b16 %v6850
        %v6984 = vunpack.c.l.b16 %v6851
        %v6985 = vunpack.c.h.b16 %v6851
        %v6986 = vunpack.c.l.b16 %v6852
        %v6987 = vunpack.c.h.b16 %v6852
        %v6988 = vunpack.c.l.b16 %v6853
        %v6989 = vunpack.c.h.b16 %v6853
        %v6990 = vunpack.c.l.b16 %v6854
        %v6991 = vunpack.c.h.b16 %v6854
        %v6992 = vunpack.c.l.b16 %v6855
        %v6993 = vunpack.c.h.b16 %v6855
        %v6994 = vunpack.c.l.b16 %v6856
        %v6995 = vunpack.c.h.b16 %v6856
        %v6996 = vunpack.c.l.b16 %v6857
        %v6997 = vunpack.c.h.b16 %v6857
        %v6998 = vunpack.c.l.b16 %v6858
        %v6999 = vunpack.c.h.b16 %v6858
        %v7000 = vunpack.c.l.b16 %v6859
        %v7001 = vunpack.c.h.b16 %v6859
        %v7002 = vunpack.c.l.b16 %v6860
        %v7003 = vunpack.c.h.b16 %v6860
        %v7004 = vunpack.c.l.b16 %v6861
        %v7005 = vunpack.c.h.b16 %v6861
        %v7006 = vunpack.c.l.b16 %v6862
        %v7007 = vunpack.c.h.b16 %v6862
        %v7008 = vunpack.c.l.b16 %v6863
        %v7009 = vunpack.c.h.b16 %v6863
        %v7010 = vpack.c.b16 %v6920, %v6914
        %v7011 = vpack.c.b16 %v6921, %v6915
        %v7012 = vpack.c.b16 %v6922, %v6916
        %v7013 = vpack.c.b16 %v6923, %v6917
        %v7014 = vpack.c.b16 %v6924, %v6918
        %v7015 = vpack.c.b16 %v6925, %v6919
        %v7016 = vpack.c.b16 %v6932, %v6926
        %v7017 = vpack.c.b16 %v6933, %v6927
        %v7018 = vpack.c.b16 %v6934, %v6928
        %v7019 = vpack.c.b16 %v6935, %v6929
        %v7020 = vpack.c.b16 %v6936, %v6930
        %v7021 = vpack.c.b16 %v6937, %v6931
        %v7022 = vpack.c.b16 %v6944, %v6938
        %v7023 = vpack.c.b16 %v6945, %v6939
        %v7024 = vpack.c.b16 %v6946, %v6940
        %v7025 = vpack.c.b16 %v6947, %v6941
        %v7026 = vpack.c.b16 %v6948, %v6942
        %v7027 = vpack.c.b16 %v6949, %v6943
        %v7028 = vpack.c.b16 %v6956, %v6950
        %v7029 = vpack.c.b16 %v6957, %v6951
        %v7030 = vpack.c.b16 %v6958, %v6952
        %v7031 = vpack.c.b16 %v6959, %v6953
        %v7032 = vpack.c.b16 %v6960, %v6954
        %v7033 = vpack.c.b16 %v6961, %v6955
        %v7034 = vpack.c.b16 %v6968, %v6962
        %v7035 = vpack.c.b16 %v6969, %v6963
        %v7036 = vpack.c.b16 %v6970, %v6964
        %v7037 = vpack.c.b16 %v6971, %v6965
        %v7038 = vpack.c.b16 %v6972, %v6966
        %v7039 = vpack.c.b16 %v6973, %v6967
        %v7040 = vpack.c.b16 %v6980, %v6974
        %v7041 = vpack.c.b16 %v6981, %v6975
        %v7042 = vpack.c.b16 %v6982, %v6976
        %v7043 = vpack.c.b16 %v6983, %v6977
        %v7044 = vpack.c.b16 %v6984, %v6978
        %v7045 = vpack.c.b16 %v6985, %v6979
        %v7046 = vpack.c.b16 %v6992, %v6986
        %v7047 = vpack.c.b16 %v6993, %v6987
        %v7048 = vpack.c.b16 %v6994, %v6988
        %v7049 = vpack.c.b16 %v6995, %v6989
        %v7050 = vpack.c.b16 %v6996, %v6990
        %v7051 = vpack.c.b16 %v6997, %v6991
        %v7052 = vpack.c.b16 %v7004, %v6998
        %v7053 = vpack.c.b16 %v7005, %v6999
        %v7054 = vpack.c.b16 %v7006, %v7000
        %v7055 = vpack.c.b16 %v7007, %v7001
        %v7056 = vpack.c.b16 %v7008, %v7002
        %v7057 = vpack.c.b16 %v7009, %v7003
        %7106 = vmatprep.subr.bf16.mxu0 %v7011
        %7107 = vmatpush1.bf16.msra.mxu0 %v7010
        %7108 = vmatprep.subr.bf16.mxu0 %v7017
        %7109 = vmatpush1.bf16.msra.mxu0 %v7016
        %7110 = vmatprep.subr.bf16.mxu0 %v7023
        %7111 = vmatpush1.bf16.msra.mxu0 %v7022
        %7112 = vmatprep.subr.bf16.mxu0 %v7029
        %7113 = vmatpush1.bf16.msra.mxu0 %v7028
        %7114 = vmatprep.subr.bf16.mxu0 %v7035
        %7115 = vmatpush1.bf16.msra.mxu0 %v7034
        %7116 = vmatprep.subr.bf16.mxu0 %v7041
        %7117 = vmatpush1.bf16.msra.mxu0 %v7040
        %7118 = vmatprep.subr.bf16.mxu0 %v7047
        %7119 = vmatpush1.bf16.msra.mxu0 %v7046
        %7120 = vmatprep.subr.bf16.mxu0 %v7053
        %7121 = vmatpush1.bf16.msra.mxu0 %v7052
        %7122 = vmatprep.subr.bf16.mxu0 0
        %7123 = vmatpush1.bf16.msra.mxu0 0
        %7124 = vmatprep.subr.bf16.mxu0 0
        %7125 = vmatpush1.bf16.msra.mxu0 0
        %7126 = vmatprep.subr.bf16.mxu0 0
        %7127 = vmatpush1.bf16.msra.mxu0 0
        %7128 = vmatprep.subr.bf16.mxu0 0
        %7129 = vmatpush1.bf16.msra.mxu0 0
        %7130 = vmatprep.subr.bf16.mxu0 0
        %7131 = vmatpush1.bf16.msra.mxu0 0
        %7132 = vmatprep.subr.bf16.mxu0 0
        %7133 = vmatpush1.bf16.msra.mxu0 0
        %7134 = vmatprep.subr.bf16.mxu0 0
        %7135 = vmatpush1.bf16.msra.mxu0 0
        %7136 = vmatprep.subr.bf16.mxu0 0
        %7137 = vmatpush1.bf16.msra.mxu0 0
        %7138 = vmatprep.mubr.bf16.mxu0 0
        %7139 = vmatmul.mubr.bf16.gmra.mrb[0].mxu0 %v6864
        %v7140 = vpop.f32.mrb[0].mxu0
        %v7141 = vadd.f32 0.0, %v7140
        %v7142 = vpop.f32.mrb[0].mxu0
        %v7143 = vadd.f32 0.0, %v7142
        %v7144 = vpop.f32.mrb[0].mxu0
        %v7145 = vpop.f32.mrb[0].mxu0
        %7146 = vdwg.mxu0
        %7147 = vmatprep.subr.bf16.mxu0 %v7013
        %7148 = vmatpush1.bf16.msra.mxu0 %v7012
        %7149 = vmatprep.subr.bf16.mxu0 %v7019
        %7150 = vmatpush1.bf16.msra.mxu0 %v7018
        %7151 = vmatprep.subr.bf16.mxu0 %v7025
        %7152 = vmatpush1.bf16.msra.mxu0 %v7024
        %7153 = vmatprep.subr.bf16.mxu0 %v7031
        %7154 = vmatpush1.bf16.msra.mxu0 %v7030
        %7155 = vmatprep.subr.bf16.mxu0 %v7037
        %7156 = vmatpush1.bf16.msra.mxu0 %v7036
        %7157 = vmatprep.subr.bf16.mxu0 %v7043
        %7158 = vmatpush1.bf16.msra.mxu0 %v7042
        %7159 = vmatprep.subr.bf16.mxu0 %v7049
        %7160 = vmatpush1.bf16.msra.mxu0 %v7048
        %7161 = vmatprep.subr.bf16.mxu0 %v7055
        %7162 = vmatpush1.bf16.msra.mxu0 %v7054
        %7163 = vmatprep.subr.bf16.mxu0 0
        %7164 = vmatpush1.bf16.msra.mxu0 0
        %7165 = vmatprep.subr.bf16.mxu0 0
        %7166 = vmatpush1.bf16.msra.mxu0 0
        %7167 = vmatprep.subr.bf16.mxu0 0
        %7168 = vmatpush1.bf16.msra.mxu0 0
        %7169 = vmatprep.subr.bf16.mxu0 0
        %7170 = vmatpush1.bf16.msra.mxu0 0
        %7171 = vmatprep.subr.bf16.mxu0 0
        %7172 = vmatpush1.bf16.msra.mxu0 0
        %7173 = vmatprep.subr.bf16.mxu0 0
        %7174 = vmatpush1.bf16.msra.mxu0 0
        %7175 = vmatprep.subr.bf16.mxu0 0
        %7176 = vmatpush1.bf16.msra.mxu0 0
        %7177 = vmatprep.subr.bf16.mxu0 0
        %7178 = vmatpush1.bf16.msra.mxu0 0
        %7179 = vmatprep.mubr.bf16.mxu0 0
        %7180 = vmatmul.mubr.bf16.gmra.mrb[0].mxu0 %v6864
        %v7181 = vpop.f32.mrb[0].mxu0
        %v7182 = vadd.f32 0.0, %v7181
        %v7183 = vpop.f32.mrb[0].mxu0
        %v7184 = vadd.f32 0.0, %v7183
        %v7185 = vpop.f32.mrb[0].mxu0
        %v7186 = vpop.f32.mrb[0].mxu0
        %7187 = vdwg.mxu0
        %7188 = vmatprep.subr.bf16.mxu0 %v7015
        %7189 = vmatpush1.bf16.msra.mxu0 %v7014
        %7190 = vmatprep.subr.bf16.mxu0 %v7021
        %7191 = vmatpush1.bf16.msra.mxu0 %v7020
        %7192 = vmatprep.subr.bf16.mxu0 %v7027
        %7193 = vmatpush1.bf16.msra.mxu0 %v7026
        %7194 = vmatprep.subr.bf16.mxu0 %v7033
        %7195 = vmatpush1.bf16.msra.mxu0 %v7032
        %7196 = vmatprep.subr.bf16.mxu0 %v7039
        %7197 = vmatpush1.bf16.msra.mxu0 %v7038
        %7198 = vmatprep.subr.bf16.mxu0 %v7045
        %7199 = vmatpush1.bf16.msra.mxu0 %v7044
        %7200 = vmatprep.subr.bf16.mxu0 %v7051
        %7201 = vmatpush1.bf16.msra.mxu0 %v7050
        %7202 = vmatprep.subr.bf16.mxu0 %v7057
        %7203 = vmatpush1.bf16.msra.mxu0 %v7056
        %7204 = vmatprep.subr.bf16.mxu0 0
        %7205 = vmatpush1.bf16.msra.mxu0 0
        %7206 = vmatprep.subr.bf16.mxu0 0
        %7207 = vmatpush1.bf16.msra.mxu0 0
        %7208 = vmatprep.subr.bf16.mxu0 0
        %7209 = vmatpush1.bf16.msra.mxu0 0
        %7210 = vmatprep.subr.bf16.mxu0 0
        %7211 = vmatpush1.bf16.msra.mxu0 0
        %7212 = vmatprep.subr.bf16.mxu0 0
        %7213 = vmatpush1.bf16.msra.mxu0 0
        %7214 = vmatprep.subr.bf16.mxu0 0
        %7215 = vmatpush1.bf16.msra.mxu0 0
        %7216 = vmatprep.subr.bf16.mxu0 0
        %7217 = vmatpush1.bf16.msra.mxu0 0
        %7218 = vmatprep.subr.bf16.mxu0 0
        %7219 = vmatpush1.bf16.msra.mxu0 0
        %7220 = vmatprep.mubr.bf16.mxu0 0
        %7221 = vmatmul.mubr.bf16.gmra.mrb[0].mxu0 %v6864
        %v7222 = vpop.f32.mrb[0].mxu0
        %v7223 = vadd.f32 0.0, %v7222
        %v7224 = vpop.f32.mrb[0].mxu0
        %v7225 = vadd.f32 0.0, %v7224
        %v7226 = vpop.f32.mrb[0].mxu0
        %v7227 = vpop.f32.mrb[0].mxu0
        %7228 = vdwg.mxu0
        %v7229 = vadd.f32 %v6809, %v7141
        %v7230 = vadd.f32 %v6810, %v7143
        %v7231 = vadd.f32 %v6811, %v7182
        %v7232 = vadd.f32 %v6812, %v7184
        %v7233 = vadd.f32 %v6813, %v7223
        %v7234 = vadd.f32 %v6814, %v7225
        %s7235 = scalar_lea.vmem [#allocation10], 5760
        %v7236 = vld [vmem:[%s7235] sm:$0xff]
        %v7237 = vld [vmem:[%s7235 + $0x8] sm:$0xff]
        %v7238 = vld [vmem:[%s7235 + $0x10] sm:$0xff]
        %v7239 = vld [vmem:[%s7235 + $0x18] sm:$0xff]
        %v7240 = vld [vmem:[%s7235 + $0x20] sm:$0xff]
        %v7241 = vld [vmem:[%s7235 + $0x28] sm:$0xff]
        %v7242 = vld [vmem:[%s7235 + $0x30] sm:$0xff]
        %v7243 = vld [vmem:[%s7235 + $0x38] sm:$0xff]
        %v7244 = vld [vmem:[%s7235 + $0x40] sm:$0xff]
        %v7245 = vld [vmem:[%s7235 + $0x48] sm:$0xff]
        %v7246 = vld [vmem:[%s7235 + $0x50] sm:$0xff]
        %v7247 = vld [vmem:[%s7235 + $0x58] sm:$0xff]
        %v7248 = vld [vmem:[%s7235 + $0x60] sm:$0xff]
        %v7249 = vld [vmem:[%s7235 + $0x68] sm:$0xff]
        %v7250 = vld [vmem:[%s7235 + $0x70] sm:$0xff]
        %v7251 = vld [vmem:[%s7235 + $0x78] sm:$0xff]
        %v7252 = vld [vmem:[%s7235 + $0x80] sm:$0xff]
        %v7253 = vld [vmem:[%s7235 + $0x88] sm:$0xff]
        %v7254 = vld [vmem:[%s7235 + $0x90] sm:$0xff]
        %v7255 = vld [vmem:[%s7235 + $0x98] sm:$0xff]
        %v7256 = vld [vmem:[%s7235 + $0xa0] sm:$0xff]
        %v7257 = vld [vmem:[%s7235 + $0xa8] sm:$0xff]
        %v7258 = vld [vmem:[%s7235 + $0xb0] sm:$0xff]
        %v7259 = vld [vmem:[%s7235 + $0xb8] sm:$0xff]
        %v7260 = vld [vmem:[%s7235 + $0xc0] sm:$0xff]
        %v7261 = vld [vmem:[%s7235 + $0xc8] sm:$0xff]
        %v7262 = vld [vmem:[%s7235 + $0xd0] sm:$0xff]
        %v7263 = vld [vmem:[%s7235 + $0xd8] sm:$0xff]
        %v7264 = vld [vmem:[%s7235 + $0xe0] sm:$0xff]
        %v7265 = vld [vmem:[%s7235 + $0xe8] sm:$0xff]
        %v7266 = vld [vmem:[%s7235 + $0xf0] sm:$0xff]
        %v7267 = vld [vmem:[%s7235 + $0xf8] sm:$0xff]
        %v7268 = vld [vmem:[%s7235 + $0x100] sm:$0xff]
        %v7269 = vld [vmem:[%s7235 + $0x108] sm:$0xff]
        %v7270 = vld [vmem:[%s7235 + $0x110] sm:$0xff]
        %v7271 = vld [vmem:[%s7235 + $0x118] sm:$0xff]
        %v7272 = vld [vmem:[%s7235 + $0x120] sm:$0xff]
        %v7273 = vld [vmem:[%s7235 + $0x128] sm:$0xff]
        %v7274 = vld [vmem:[%s7235 + $0x130] sm:$0xff]
        %v7275 = vld [vmem:[%s7235 + $0x138] sm:$0xff]
        %v7276 = vld [vmem:[%s7235 + $0x140] sm:$0xff]
        %v7277 = vld [vmem:[%s7235 + $0x148] sm:$0xff]
        %v7278 = vld [vmem:[%s7235 + $0x150] sm:$0xff]
        %v7279 = vld [vmem:[%s7235 + $0x158] sm:$0xff]
        %v7280 = vld [vmem:[%s7235 + $0x160] sm:$0xff]
        %v7281 = vld [vmem:[%s7235 + $0x168] sm:$0xff]
        %v7282 = vld [vmem:[%s7235 + $0x170] sm:$0xff]
        %v7283 = vld [vmem:[%s7235 + $0x178] sm:$0xff]
        %v7284 = vrot.slane %v4762, 3
        %v7334 = vunpack.c.l.b16 %v7236
        %v7335 = vunpack.c.h.b16 %v7236
        %v7336 = vunpack.c.l.b16 %v7237
        %v7337 = vunpack.c.h.b16 %v7237
        %v7338 = vunpack.c.l.b16 %v7238
        %v7339 = vunpack.c.h.b16 %v7238
        %v7340 = vunpack.c.l.b16 %v7239
        %v7341 = vunpack.c.h.b16 %v7239
        %v7342 = vunpack.c.l.b16 %v7240
        %v7343 = vunpack.c.h.b16 %v7240
        %v7344 = vunpack.c.l.b16 %v7241
        %v7345 = vunpack.c.h.b16 %v7241
        %v7346 = vunpack.c.l.b16 %v7242
        %v7347 = vunpack.c.h.b16 %v7242
        %v7348 = vunpack.c.l.b16 %v7243
        %v7349 = vunpack.c.h.b16 %v7243
        %v7350 = vunpack.c.l.b16 %v7244
        %v7351 = vunpack.c.h.b16 %v7244
        %v7352 = vunpack.c.l.b16 %v7245
        %v7353 = vunpack.c.h.b16 %v7245
        %v7354 = vunpack.c.l.b16 %v7246
        %v7355 = vunpack.c.h.b16 %v7246
        %v7356 = vunpack.c.l.b16 %v7247
        %v7357 = vunpack.c.h.b16 %v7247
        %v7358 = vunpack.c.l.b16 %v7248
        %v7359 = vunpack.c.h.b16 %v7248
        %v7360 = vunpack.c.l.b16 %v7249
        %v7361 = vunpack.c.h.b16 %v7249
        %v7362 = vunpack.c.l.b16 %v7250
        %v7363 = vunpack.c.h.b16 %v7250
        %v7364 = vunpack.c.l.b16 %v7251
        %v7365 = vunpack.c.h.b16 %v7251
        %v7366 = vunpack.c.l.b16 %v7252
        %v7367 = vunpack.c.h.b16 %v7252
        %v7368 = vunpack.c.l.b16 %v7253
        %v7369 = vunpack.c.h.b16 %v7253
        %v7370 = vunpack.c.l.b16 %v7254
        %v7371 = vunpack.c.h.b16 %v7254
        %v7372 = vunpack.c.l.b16 %v7255
        %v7373 = vunpack.c.h.b16 %v7255
        %v7374 = vunpack.c.l.b16 %v7256
        %v7375 = vunpack.c.h.b16 %v7256
        %v7376 = vunpack.c.l.b16 %v7257
        %v7377 = vunpack.c.h.b16 %v7257
        %v7378 = vunpack.c.l.b16 %v7258
        %v7379 = vunpack.c.h.b16 %v7258
        %v7380 = vunpack.c.l.b16 %v7259
        %v7381 = vunpack.c.h.b16 %v7259
        %v7382 = vunpack.c.l.b16 %v7260
        %v7383 = vunpack.c.h.b16 %v7260
        %v7384 = vunpack.c.l.b16 %v7261
        %v7385 = vunpack.c.h.b16 %v7261
        %v7386 = vunpack.c.l.b16 %v7262
        %v7387 = vunpack.c.h.b16 %v7262
        %v7388 = vunpack.c.l.b16 %v7263
        %v7389 = vunpack.c.h.b16 %v7263
        %v7390 = vunpack.c.l.b16 %v7264
        %v7391 = vunpack.c.h.b16 %v7264
        %v7392 = vunpack.c.l.b16 %v7265
        %v7393 = vunpack.c.h.b16 %v7265
        %v7394 = vunpack.c.l.b16 %v7266
        %v7395 = vunpack.c.h.b16 %v7266
        %v7396 = vunpack.c.l.b16 %v7267
        %v7397 = vunpack.c.h.b16 %v7267
        %v7398 = vunpack.c.l.b16 %v7268
        %v7399 = vunpack.c.h.b16 %v7268
        %v7400 = vunpack.c.l.b16 %v7269
        %v7401 = vunpack.c.h.b16 %v7269
        %v7402 = vunpack.c.l.b16 %v7270
        %v7403 = vunpack.c.h.b16 %v7270
        %v7404 = vunpack.c.l.b16 %v7271
        %v7405 = vunpack.c.h.b16 %v7271
        %v7406 = vunpack.c.l.b16 %v7272
        %v7407 = vunpack.c.h.b16 %v7272
        %v7408 = vunpack.c.l.b16 %v7273
        %v7409 = vunpack.c.h.b16 %v7273
        %v7410 = vunpack.c.l.b16 %v7274
        %v7411 = vunpack.c.h.b16 %v7274
        %v7412 = vunpack.c.l.b16 %v7275
        %v7413 = vunpack.c.h.b16 %v7275
        %v7414 = vunpack.c.l.b16 %v7276
        %v7415 = vunpack.c.h.b16 %v7276
        %v7416 = vunpack.c.l.b16 %v7277
        %v7417 = vunpack.c.h.b16 %v7277
        %v7418 = vunpack.c.l.b16 %v7278
        %v7419 = vunpack.c.h.b16 %v7278
        %v7420 = vunpack.c.l.b16 %v7279
        %v7421 = vunpack.c.h.b16 %v7279
        %v7422 = vunpack.c.l.b16 %v7280
        %v7423 = vunpack.c.h.b16 %v7280
        %v7424 = vunpack.c.l.b16 %v7281
        %v7425 = vunpack.c.h.b16 %v7281
        %v7426 = vunpack.c.l.b16 %v7282
        %v7427 = vunpack.c.h.b16 %v7282
        %v7428 = vunpack.c.l.b16 %v7283
        %v7429 = vunpack.c.h.b16 %v7283
        %v7430 = vpack.c.b16 %v7340, %v7334
        %v7431 = vpack.c.b16 %v7341, %v7335
        %v7432 = vpack.c.b16 %v7342, %v7336
        %v7433 = vpack.c.b16 %v7343, %v7337
        %v7434 = vpack.c.b16 %v7344, %v7338
        %v7435 = vpack.c.b16 %v7345, %v7339
        %v7436 = vpack.c.b16 %v7352, %v7346
        %v7437 = vpack.c.b16 %v7353, %v7347
        %v7438 = vpack.c.b16 %v7354, %v7348
        %v7439 = vpack.c.b16 %v7355, %v7349
        %v7440 = vpack.c.b16 %v7356, %v7350
        %v7441 = vpack.c.b16 %v7357, %v7351
        %v7442 = vpack.c.b16 %v7364, %v7358
        %v7443 = vpack.c.b16 %v7365, %v7359
        %v7444 = vpack.c.b16 %v7366, %v7360
        %v7445 = vpack.c.b16 %v7367, %v7361
        %v7446 = vpack.c.b16 %v7368, %v7362
        %v7447 = vpack.c.b16 %v7369, %v7363
        %v7448 = vpack.c.b16 %v7376, %v7370
        %v7449 = vpack.c.b16 %v7377, %v7371
        %v7450 = vpack.c.b16 %v7378, %v7372
        %v7451 = vpack.c.b16 %v7379, %v7373
        %v7452 = vpack.c.b16 %v7380, %v7374
        %v7453 = vpack.c.b16 %v7381, %v7375
        %v7454 = vpack.c.b16 %v7388, %v7382
        %v7455 = vpack.c.b16 %v7389, %v7383
        %v7456 = vpack.c.b16 %v7390, %v7384
        %v7457 = vpack.c.b16 %v7391, %v7385
        %v7458 = vpack.c.b16 %v7392, %v7386
        %v7459 = vpack.c.b16 %v7393, %v7387
        %v7460 = vpack.c.b16 %v7400, %v7394
        %v7461 = vpack.c.b16 %v7401, %v7395
        %v7462 = vpack.c.b16 %v7402, %v7396
        %v7463 = vpack.c.b16 %v7403, %v7397
        %v7464 = vpack.c.b16 %v7404, %v7398
        %v7465 = vpack.c.b16 %v7405, %v7399
        %v7466 = vpack.c.b16 %v7412, %v7406
        %v7467 = vpack.c.b16 %v7413, %v7407
        %v7468 = vpack.c.b16 %v7414, %v7408
        %v7469 = vpack.c.b16 %v7415, %v7409
        %v7470 = vpack.c.b16 %v7416, %v7410
        %v7471 = vpack.c.b16 %v7417, %v7411
        %v7472 = vpack.c.b16 %v7424, %v7418
        %v7473 = vpack.c.b16 %v7425, %v7419
        %v7474 = vpack.c.b16 %v7426, %v7420
        %v7475 = vpack.c.b16 %v7427, %v7421
        %v7476 = vpack.c.b16 %v7428, %v7422
        %v7477 = vpack.c.b16 %v7429, %v7423
        %7526 = vmatprep.subr.bf16.mxu0 %v7431
        %7527 = vmatpush1.bf16.msra.mxu0 %v7430
        %7528 = vmatprep.subr.bf16.mxu0 %v7437
        %7529 = vmatpush1.bf16.msra.mxu0 %v7436
        %7530 = vmatprep.subr.bf16.mxu0 %v7443
        %7531 = vmatpush1.bf16.msra.mxu0 %v7442
        %7532 = vmatprep.subr.bf16.mxu0 %v7449
        %7533 = vmatpush1.bf16.msra.mxu0 %v7448
        %7534 = vmatprep.subr.bf16.mxu0 %v7455
        %7535 = vmatpush1.bf16.msra.mxu0 %v7454
        %7536 = vmatprep.subr.bf16.mxu0 %v7461
        %7537 = vmatpush1.bf16.msra.mxu0 %v7460
        %7538 = vmatprep.subr.bf16.mxu0 %v7467
        %7539 = vmatpush1.bf16.msra.mxu0 %v7466
        %7540 = vmatprep.subr.bf16.mxu0 %v7473
        %7541 = vmatpush1.bf16.msra.mxu0 %v7472
        %7542 = vmatprep.subr.bf16.mxu0 0
        %7543 = vmatpush1.bf16.msra.mxu0 0
        %7544 = vmatprep.subr.bf16.mxu0 0
        %7545 = vmatpush1.bf16.msra.mxu0 0
        %7546 = vmatprep.subr.bf16.mxu0 0
        %7547 = vmatpush1.bf16.msra.mxu0 0
        %7548 = vmatprep.subr.bf16.mxu0 0
        %7549 = vmatpush1.bf16.msra.mxu0 0
        %7550 = vmatprep.subr.bf16.mxu0 0
        %7551 = vmatpush1.bf16.msra.mxu0 0
        %7552 = vmatprep.subr.bf16.mxu0 0
        %7553 = vmatpush1.bf16.msra.mxu0 0
        %7554 = vmatprep.subr.bf16.mxu0 0
        %7555 = vmatpush1.bf16.msra.mxu0 0
        %7556 = vmatprep.subr.bf16.mxu0 0
        %7557 = vmatpush1.bf16.msra.mxu0 0
        %7558 = vmatprep.mubr.bf16.mxu0 0
        %7559 = vmatmul.mubr.bf16.gmra.mrb[0].mxu0 %v7284
        %v7560 = vpop.f32.mrb[0].mxu0
        %v7561 = vadd.f32 0.0, %v7560
        %v7562 = vpop.f32.mrb[0].mxu0
        %v7563 = vadd.f32 0.0, %v7562
        %v7564 = vpop.f32.mrb[0].mxu0
        %v7565 = vpop.f32.mrb[0].mxu0
        %7566 = vdwg.mxu0
        %7567 = vmatprep.subr.bf16.mxu0 %v7433
        %7568 = vmatpush1.bf16.msra.mxu0 %v7432
        %7569 = vmatprep.subr.bf16.mxu0 %v7439
        %7570 = vmatpush1.bf16.msra.mxu0 %v7438
        %7571 = vmatprep.subr.bf16.mxu0 %v7445
        %7572 = vmatpush1.bf16.msra.mxu0 %v7444
        %7573 = vmatprep.subr.bf16.mxu0 %v7451
        %7574 = vmatpush1.bf16.msra.mxu0 %v7450
        %7575 = vmatprep.subr.bf16.mxu0 %v7457
        %7576 = vmatpush1.bf16.msra.mxu0 %v7456
        %7577 = vmatprep.subr.bf16.mxu0 %v7463
        %7578 = vmatpush1.bf16.msra.mxu0 %v7462
        %7579 = vmatprep.subr.bf16.mxu0 %v7469
        %7580 = vmatpush1.bf16.msra.mxu0 %v7468
        %7581 = vmatprep.subr.bf16.mxu0 %v7475
        %7582 = vmatpush1.bf16.msra.mxu0 %v7474
        %7583 = vmatprep.subr.bf16.mxu0 0
        %7584 = vmatpush1.bf16.msra.mxu0 0
        %7585 = vmatprep.subr.bf16.mxu0 0
        %7586 = vmatpush1.bf16.msra.mxu0 0
        %7587 = vmatprep.subr.bf16.mxu0 0
        %7588 = vmatpush1.bf16.msra.mxu0 0
        %7589 = vmatprep.subr.bf16.mxu0 0
        %7590 = vmatpush1.bf16.msra.mxu0 0
        %7591 = vmatprep.subr.bf16.mxu0 0
        %7592 = vmatpush1.bf16.msra.mxu0 0
        %7593 = vmatprep.subr.bf16.mxu0 0
        %7594 = vmatpush1.bf16.msra.mxu0 0
        %7595 = vmatprep.subr.bf16.mxu0 0
        %7596 = vmatpush1.bf16.msra.mxu0 0
        %7597 = vmatprep.subr.bf16.mxu0 0
        %7598 = vmatpush1.bf16.msra.mxu0 0
        %7599 = vmatprep.mubr.bf16.mxu0 0
        %7600 = vmatmul.mubr.bf16.gmra.mrb[0].mxu0 %v7284
        %v7601 = vpop.f32.mrb[0].mxu0
        %v7602 = vadd.f32 0.0, %v7601
        %v7603 = vpop.f32.mrb[0].mxu0
        %v7604 = vadd.f32 0.0, %v7603
        %v7605 = vpop.f32.mrb[0].mxu0
        %v7606 = vpop.f32.mrb[0].mxu0
        %7607 = vdwg.mxu0
        %7608 = vmatprep.subr.bf16.mxu0 %v7435
        %7609 = vmatpush1.bf16.msra.mxu0 %v7434
        %7610 = vmatprep.subr.bf16.mxu0 %v7441
        %7611 = vmatpush1.bf16.msra.mxu0 %v7440
        %7612 = vmatprep.subr.bf16.mxu0 %v7447
        %7613 = vmatpush1.bf16.msra.mxu0 %v7446
        %7614 = vmatprep.subr.bf16.mxu0 %v7453
        %7615 = vmatpush1.bf16.msra.mxu0 %v7452
        %7616 = vmatprep.subr.bf16.mxu0 %v7459
        %7617 = vmatpush1.bf16.msra.mxu0 %v7458
        %7618 = vmatprep.subr.bf16.mxu0 %v7465
        %7619 = vmatpush1.bf16.msra.mxu0 %v7464
        %7620 = vmatprep.subr.bf16.mxu0 %v7471
        %7621 = vmatpush1.bf16.msra.mxu0 %v7470
        %7622 = vmatprep.subr.bf16.mxu0 %v7477
        %7623 = vmatpush1.bf16.msra.mxu0 %v7476
        %7624 = vmatprep.subr.bf16.mxu0 0
        %7625 = vmatpush1.bf16.msra.mxu0 0
        %7626 = vmatprep.subr.bf16.mxu0 0
        %7627 = vmatpush1.bf16.msra.mxu0 0
        %7628 = vmatprep.subr.bf16.mxu0 0
        %7629 = vmatpush1.bf16.msra.mxu0 0
        %7630 = vmatprep.subr.bf16.mxu0 0
        %7631 = vmatpush1.bf16.msra.mxu0 0
        %7632 = vmatprep.subr.bf16.mxu0 0
        %7633 = vmatpush1.bf16.msra.mxu0 0
        %7634 = vmatprep.subr.bf16.mxu0 0
        %7635 = vmatpush1.bf16.msra.mxu0 0
        %7636 = vmatprep.subr.bf16.mxu0 0
        %7637 = vmatpush1.bf16.msra.mxu0 0
        %7638 = vmatprep.subr.bf16.mxu0 0
        %7639 = vmatpush1.bf16.msra.mxu0 0
        %7640 = vmatprep.mubr.bf16.mxu0 0
        %7641 = vmatmul.mubr.bf16.gmra.mrb[0].mxu0 %v7284
        %v7642 = vpop.f32.mrb[0].mxu0
        %v7643 = vadd.f32 0.0, %v7642
        %v7644 = vpop.f32.mrb[0].mxu0
        %v7645 = vadd.f32 0.0, %v7644
        %v7646 = vpop.f32.mrb[0].mxu0
        %v7647 = vpop.f32.mrb[0].mxu0
        %7648 = vdwg.mxu0
        %v7649 = vadd.f32 %v7229, %v7561
        %v7650 = vadd.f32 %v7230, %v7563
        %v7651 = vadd.f32 %v7231, %v7602
        %v7652 = vadd.f32 %v7232, %v7604
        %v7653 = vadd.f32 %v7233, %v7643
        %v7654 = vadd.f32 %v7234, %v7645
        %v7655 = vpack.c.bf16 %v942, %v942
        %s7656 = scalar_lea.vmem [#allocation10], 6144
        %v7657 = vld [vmem:[%s7656] sm:$0xff]
        %v7658 = vld [vmem:[%s7656 + $0x8] sm:$0xff]
        %v7659 = vld [vmem:[%s7656 + $0x10] sm:$0xff]
        %v7660 = vld [vmem:[%s7656 + $0x18] sm:$0xff]
        %v7661 = vld [vmem:[%s7656 + $0x20] sm:$0xff]
        %v7662 = vld [vmem:[%s7656 + $0x28] sm:$0xff]
        %v7663 = vld [vmem:[%s7656 + $0x30] sm:$0xff]
        %v7664 = vld [vmem:[%s7656 + $0x38] sm:$0xff]
        %v7665 = vld [vmem:[%s7656 + $0x40] sm:$0xff]
        %v7666 = vld [vmem:[%s7656 + $0x48] sm:$0xff]
        %v7667 = vld [vmem:[%s7656 + $0x50] sm:$0xff]
        %v7668 = vld [vmem:[%s7656 + $0x58] sm:$0xff]
        %v7669 = vld [vmem:[%s7656 + $0x60] sm:$0xff]
        %v7670 = vld [vmem:[%s7656 + $0x68] sm:$0xff]
        %v7671 = vld [vmem:[%s7656 + $0x70] sm:$0xff]
        %v7672 = vld [vmem:[%s7656 + $0x78] sm:$0xff]
        %v7673 = vld [vmem:[%s7656 + $0x80] sm:$0xff]
        %v7674 = vld [vmem:[%s7656 + $0x88] sm:$0xff]
        %v7675 = vld [vmem:[%s7656 + $0x90] sm:$0xff]
        %v7676 = vld [vmem:[%s7656 + $0x98] sm:$0xff]
        %v7677 = vld [vmem:[%s7656 + $0xa0] sm:$0xff]
        %v7678 = vld [vmem:[%s7656 + $0xa8] sm:$0xff]
        %v7679 = vld [vmem:[%s7656 + $0xb0] sm:$0xff]
        %v7680 = vld [vmem:[%s7656 + $0xb8] sm:$0xff]
        %v7681 = vld [vmem:[%s7656 + $0xc0] sm:$0xff]
        %v7682 = vld [vmem:[%s7656 + $0xc8] sm:$0xff]
        %v7683 = vld [vmem:[%s7656 + $0xd0] sm:$0xff]
        %v7684 = vld [vmem:[%s7656 + $0xd8] sm:$0xff]
        %v7685 = vld [vmem:[%s7656 + $0xe0] sm:$0xff]
        %v7686 = vld [vmem:[%s7656 + $0xe8] sm:$0xff]
        %v7687 = vld [vmem:[%s7656 + $0xf0] sm:$0xff]
        %v7688 = vld [vmem:[%s7656 + $0xf8] sm:$0xff]
        %v7689 = vld [vmem:[%s7656 + $0x100] sm:$0xff]
        %v7690 = vld [vmem:[%s7656 + $0x108] sm:$0xff]
        %v7691 = vld [vmem:[%s7656 + $0x110] sm:$0xff]
        %v7692 = vld [vmem:[%s7656 + $0x118] sm:$0xff]
        %v7693 = vld [vmem:[%s7656 + $0x120] sm:$0xff]
        %v7694 = vld [vmem:[%s7656 + $0x128] sm:$0xff]
        %v7695 = vld [vmem:[%s7656 + $0x130] sm:$0xff]
        %v7696 = vld [vmem:[%s7656 + $0x138] sm:$0xff]
        %v7697 = vld [vmem:[%s7656 + $0x140] sm:$0xff]
        %v7698 = vld [vmem:[%s7656 + $0x148] sm:$0xff]
        %v7699 = vld [vmem:[%s7656 + $0x150] sm:$0xff]
        %v7700 = vld [vmem:[%s7656 + $0x158] sm:$0xff]
        %v7701 = vld [vmem:[%s7656 + $0x160] sm:$0xff]
        %v7702 = vld [vmem:[%s7656 + $0x168] sm:$0xff]
        %v7703 = vld [vmem:[%s7656 + $0x170] sm:$0xff]
        %v7704 = vld [vmem:[%s7656 + $0x178] sm:$0xff]
        %v7753 = vunpack.c.l.b16 %v7657
        %v7754 = vunpack.c.h.b16 %v7657
        %v7755 = vunpack.c.l.b16 %v7658
        %v7756 = vunpack.c.h.b16 %v7658
        %v7757 = vunpack.c.l.b16 %v7659
        %v7758 = vunpack.c.h.b16 %v7659
        %v7759 = vunpack.c.l.b16 %v7660
        %v7760 = vunpack.c.h.b16 %v7660
        %v7761 = vunpack.c.l.b16 %v7661
        %v7762 = vunpack.c.h.b16 %v7661
        %v7763 = vunpack.c.l.b16 %v7662
        %v7764 = vunpack.c.h.b16 %v7662
        %v7765 = vunpack.c.l.b16 %v7663
        %v7766 = vunpack.c.h.b16 %v7663
        %v7767 = vunpack.c.l.b16 %v7664
        %v7768 = vunpack.c.h.b16 %v7664
        %v7769 = vunpack.c.l.b16 %v7665
        %v7770 = vunpack.c.h.b16 %v7665
        %v7771 = vunpack.c.l.b16 %v7666
        %v7772 = vunpack.c.h.b16 %v7666
        %v7773 = vunpack.c.l.b16 %v7667
        %v7774 = vunpack.c.h.b16 %v7667
        %v7775 = vunpack.c.l.b16 %v7668
        %v7776 = vunpack.c.h.b16 %v7668
        %v7777 = vunpack.c.l.b16 %v7669
        %v7778 = vunpack.c.h.b16 %v7669
        %v7779 = vunpack.c.l.b16 %v7670
        %v7780 = vunpack.c.h.b16 %v7670
        %v7781 = vunpack.c.l.b16 %v7671
        %v7782 = vunpack.c.h.b16 %v7671
        %v7783 = vunpack.c.l.b16 %v7672
        %v7784 = vunpack.c.h.b16 %v7672
        %v7785 = vunpack.c.l.b16 %v7673
        %v7786 = vunpack.c.h.b16 %v7673
        %v7787 = vunpack.c.l.b16 %v7674
        %v7788 = vunpack.c.h.b16 %v7674
        %v7789 = vunpack.c.l.b16 %v7675
        %v7790 = vunpack.c.h.b16 %v7675
        %v7791 = vunpack.c.l.b16 %v7676
        %v7792 = vunpack.c.h.b16 %v7676
        %v7793 = vunpack.c.l.b16 %v7677
        %v7794 = vunpack.c.h.b16 %v7677
        %v7795 = vunpack.c.l.b16 %v7678
        %v7796 = vunpack.c.h.b16 %v7678
        %v7797 = vunpack.c.l.b16 %v7679
        %v7798 = vunpack.c.h.b16 %v7679
        %v7799 = vunpack.c.l.b16 %v7680
        %v7800 = vunpack.c.h.b16 %v7680
        %v7801 = vunpack.c.l.b16 %v7681
        %v7802 = vunpack.c.h.b16 %v7681
        %v7803 = vunpack.c.l.b16 %v7682
        %v7804 = vunpack.c.h.b16 %v7682
        %v7805 = vunpack.c.l.b16 %v7683
        %v7806 = vunpack.c.h.b16 %v7683
        %v7807 = vunpack.c.l.b16 %v7684
        %v7808 = vunpack.c.h.b16 %v7684
        %v7809 = vunpack.c.l.b16 %v7685
        %v7810 = vunpack.c.h.b16 %v7685
        %v7811 = vunpack.c.l.b16 %v7686
        %v7812 = vunpack.c.h.b16 %v7686
        %v7813 = vunpack.c.l.b16 %v7687
        %v7814 = vunpack.c.h.b16 %v7687
        %v7815 = vunpack.c.l.b16 %v7688
        %v7816 = vunpack.c.h.b16 %v7688
        %v7817 = vunpack.c.l.b16 %v7689
        %v7818 = vunpack.c.h.b16 %v7689
        %v7819 = vunpack.c.l.b16 %v7690
        %v7820 = vunpack.c.h.b16 %v7690
        %v7821 = vunpack.c.l.b16 %v7691
        %v7822 = vunpack.c.h.b16 %v7691
        %v7823 = vunpack.c.l.b16 %v7692
        %v7824 = vunpack.c.h.b16 %v7692
        %v7825 = vunpack.c.l.b16 %v7693
        %v7826 = vunpack.c.h.b16 %v7693
        %v7827 = vunpack.c.l.b16 %v7694
        %v7828 = vunpack.c.h.b16 %v7694
        %v7829 = vunpack.c.l.b16 %v7695
        %v7830 = vunpack.c.h.b16 %v7695
        %v7831 = vunpack.c.l.b16 %v7696
        %v7832 = vunpack.c.h.b16 %v7696
        %v7833 = vunpack.c.l.b16 %v7697
        %v7834 = vunpack.c.h.b16 %v7697
        %v7835 = vunpack.c.l.b16 %v7698
        %v7836 = vunpack.c.h.b16 %v7698
        %v7837 = vunpack.c.l.b16 %v7699
        %v7838 = vunpack.c.h.b16 %v7699
        %v7839 = vunpack.c.l.b16 %v7700
        %v7840 = vunpack.c.h.b16 %v7700
        %v7841 = vunpack.c.l.b16 %v7701
        %v7842 = vunpack.c.h.b16 %v7701
        %v7843 = vunpack.c.l.b16 %v7702
        %v7844 = vunpack.c.h.b16 %v7702
        %v7845 = vunpack.c.l.b16 %v7703
        %v7846 = vunpack.c.h.b16 %v7703
        %v7847 = vunpack.c.l.b16 %v7704
        %v7848 = vunpack.c.h.b16 %v7704
        %v7849 = vpack.c.b16 %v7759, %v7753
        %v7850 = vpack.c.b16 %v7760, %v7754
        %v7851 = vpack.c.b16 %v7761, %v7755
        %v7852 = vpack.c.b16 %v7762, %v7756
        %v7853 = vpack.c.b16 %v7763, %v7757
        %v7854 = vpack.c.b16 %v7764, %v7758
        %v7855 = vpack.c.b16 %v7771, %v7765
        %v7856 = vpack.c.b16 %v7772, %v7766
        %v7857 = vpack.c.b16 %v7773, %v7767
        %v7858 = vpack.c.b16 %v7774, %v7768
        %v7859 = vpack.c.b16 %v7775, %v7769
        %v7860 = vpack.c.b16 %v7776, %v7770
        %v7861 = vpack.c.b16 %v7783, %v7777
        %v7862 = vpack.c.b16 %v7784, %v7778
        %v7863 = vpack.c.b16 %v7785, %v7779
        %v7864 = vpack.c.b16 %v7786, %v7780
        %v7865 = vpack.c.b16 %v7787, %v7781
        %v7866 = vpack.c.b16 %v7788, %v7782
        %v7867 = vpack.c.b16 %v7795, %v7789
        %v7868 = vpack.c.b16 %v7796, %v7790
        %v7869 = vpack.c.b16 %v7797, %v7791
        %v7870 = vpack.c.b16 %v7798, %v7792
        %v7871 = vpack.c.b16 %v7799, %v7793
        %v7872 = vpack.c.b16 %v7800, %v7794
        %v7873 = vpack.c.b16 %v7807, %v7801
        %v7874 = vpack.c.b16 %v7808, %v7802
        %v7875 = vpack.c.b16 %v7809, %v7803
        %v7876 = vpack.c.b16 %v7810, %v7804
        %v7877 = vpack.c.b16 %v7811, %v7805
        %v7878 = vpack.c.b16 %v7812, %v7806
        %v7879 = vpack.c.b16 %v7819, %v7813
        %v7880 = vpack.c.b16 %v7820, %v7814
        %v7881 = vpack.c.b16 %v7821, %v7815
        %v7882 = vpack.c.b16 %v7822, %v7816
        %v7883 = vpack.c.b16 %v7823, %v7817
        %v7884 = vpack.c.b16 %v7824, %v7818
        %v7885 = vpack.c.b16 %v7831, %v7825
        %v7886 = vpack.c.b16 %v7832, %v7826
        %v7887 = vpack.c.b16 %v7833, %v7827
        %v7888 = vpack.c.b16 %v7834, %v7828
        %v7889 = vpack.c.b16 %v7835, %v7829
        %v7890 = vpack.c.b16 %v7836, %v7830
        %v7891 = vpack.c.b16 %v7843, %v7837
        %v7892 = vpack.c.b16 %v7844, %v7838
        %v7893 = vpack.c.b16 %v7845, %v7839
        %v7894 = vpack.c.b16 %v7846, %v7840
        %v7895 = vpack.c.b16 %v7847, %v7841
        %v7896 = vpack.c.b16 %v7848, %v7842
        %7945 = vmatprep.subr.bf16.mxu0 %v7850
        %7946 = vmatpush1.bf16.msra.mxu0 %v7849
        %7947 = vmatprep.subr.bf16.mxu0 %v7856
        %7948 = vmatpush1.bf16.msra.mxu0 %v7855
        %7949 = vmatprep.subr.bf16.mxu0 %v7862
        %7950 = vmatpush1.bf16.msra.mxu0 %v7861
        %7951 = vmatprep.subr.bf16.mxu0 %v7868
        %7952 = vmatpush1.bf16.msra.mxu0 %v7867
        %7953 = vmatprep.subr.bf16.mxu0 %v7874
        %7954 = vmatpush1.bf16.msra.mxu0 %v7873
        %7955 = vmatprep.subr.bf16.mxu0 %v7880
        %7956 = vmatpush1.bf16.msra.mxu0 %v7879
        %7957 = vmatprep.subr.bf16.mxu0 %v7886
        %7958 = vmatpush1.bf16.msra.mxu0 %v7885
        %7959 = vmatprep.subr.bf16.mxu0 %v7892
        %7960 = vmatpush1.bf16.msra.mxu0 %v7891
        %7961 = vmatprep.subr.bf16.mxu0 0
        %7962 = vmatpush1.bf16.msra.mxu0 0
        %7963 = vmatprep.subr.bf16.mxu0 0
        %7964 = vmatpush1.bf16.msra.mxu0 0
        %7965 = vmatprep.subr.bf16.mxu0 0
        %7966 = vmatpush1.bf16.msra.mxu0 0
        %7967 = vmatprep.subr.bf16.mxu0 0
        %7968 = vmatpush1.bf16.msra.mxu0 0
        %7969 = vmatprep.subr.bf16.mxu0 0
        %7970 = vmatpush1.bf16.msra.mxu0 0
        %7971 = vmatprep.subr.bf16.mxu0 0
        %7972 = vmatpush1.bf16.msra.mxu0 0
        %7973 = vmatprep.subr.bf16.mxu0 0
        %7974 = vmatpush1.bf16.msra.mxu0 0
        %7975 = vmatprep.subr.bf16.mxu0 0
        %7976 = vmatpush1.bf16.msra.mxu0 0
        %7977 = vmatprep.mubr.bf16.mxu0 0
        %7978 = vmatmul.mubr.bf16.gmra.mrb[0].mxu0 %v7655
        %v7979 = vpop.f32.mrb[0].mxu0
        %v7980 = vadd.f32 0.0, %v7979
        %v7981 = vpop.f32.mrb[0].mxu0
        %v7982 = vadd.f32 0.0, %v7981
        %v7983 = vpop.f32.mrb[0].mxu0
        %v7984 = vpop.f32.mrb[0].mxu0
        %7985 = vdwg.mxu0
        %7986 = vmatprep.subr.bf16.mxu0 %v7852
        %7987 = vmatpush1.bf16.msra.mxu0 %v7851
        %7988 = vmatprep.subr.bf16.mxu0 %v7858
        %7989 = vmatpush1.bf16.msra.mxu0 %v7857
        %7990 = vmatprep.subr.bf16.mxu0 %v7864
        %7991 = vmatpush1.bf16.msra.mxu0 %v7863
        %7992 = vmatprep.subr.bf16.mxu0 %v7870
        %7993 = vmatpush1.bf16.msra.mxu0 %v7869
        %7994 = vmatprep.subr.bf16.mxu0 %v7876
        %7995 = vmatpush1.bf16.msra.mxu0 %v7875
        %7996 = vmatprep.subr.bf16.mxu0 %v7882
        %7997 = vmatpush1.bf16.msra.mxu0 %v7881
        %7998 = vmatprep.subr.bf16.mxu0 %v7888
        %7999 = vmatpush1.bf16.msra.mxu0 %v7887
        %8000 = vmatprep.subr.bf16.mxu0 %v7894
        %8001 = vmatpush1.bf16.msra.mxu0 %v7893
        %8002 = vmatprep.subr.bf16.mxu0 0
        %8003 = vmatpush1.bf16.msra.mxu0 0
        %8004 = vmatprep.subr.bf16.mxu0 0
        %8005 = vmatpush1.bf16.msra.mxu0 0
        %8006 = vmatprep.subr.bf16.mxu0 0
        %8007 = vmatpush1.bf16.msra.mxu0 0
        %8008 = vmatprep.subr.bf16.mxu0 0
        %8009 = vmatpush1.bf16.msra.mxu0 0
        %8010 = vmatprep.subr.bf16.mxu0 0
        %8011 = vmatpush1.bf16.msra.mxu0 0
        %8012 = vmatprep.subr.bf16.mxu0 0
        %8013 = vmatpush1.bf16.msra.mxu0 0
        %8014 = vmatprep.subr.bf16.mxu0 0
        %8015 = vmatpush1.bf16.msra.mxu0 0
        %8016 = vmatprep.subr.bf16.mxu0 0
        %8017 = vmatpush1.bf16.msra.mxu0 0
        %8018 = vmatprep.mubr.bf16.mxu0 0
        %8019 = vmatmul.mubr.bf16.gmra.mrb[0].mxu0 %v7655
        %v8020 = vpop.f32.mrb[0].mxu0
        %v8021 = vadd.f32 0.0, %v8020
        %v8022 = vpop.f32.mrb[0].mxu0
        %v8023 = vadd.f32 0.0, %v8022
        %v8024 = vpop.f32.mrb[0].mxu0
        %v8025 = vpop.f32.mrb[0].mxu0
        %8026 = vdwg.mxu0
        %8027 = vmatprep.subr.bf16.mxu0 %v7854
        %8028 = vmatpush1.bf16.msra.mxu0 %v7853
        %8029 = vmatprep.subr.bf16.mxu0 %v7860
        %8030 = vmatpush1.bf16.msra.mxu0 %v7859
        %8031 = vmatprep.subr.bf16.mxu0 %v7866
        %8032 = vmatpush1.bf16.msra.mxu0 %v7865
        %8033 = vmatprep.subr.bf16.mxu0 %v7872
        %8034 = vmatpush1.bf16.msra.mxu0 %v7871
        %8035 = vmatprep.subr.bf16.mxu0 %v7878
        %8036 = vmatpush1.bf16.msra.mxu0 %v7877
        %8037 = vmatprep.subr.bf16.mxu0 %v7884
        %8038 = vmatpush1.bf16.msra.mxu0 %v7883
        %8039 = vmatprep.subr.bf16.mxu0 %v7890
        %8040 = vmatpush1.bf16.msra.mxu0 %v7889
        %8041 = vmatprep.subr.bf16.mxu0 %v7896
        %8042 = vmatpush1.bf16.msra.mxu0 %v7895
        %8043 = vmatprep.subr.bf16.mxu0 0
        %8044 = vmatpush1.bf16.msra.mxu0 0
        %8045 = vmatprep.subr.bf16.mxu0 0
        %8046 = vmatpush1.bf16.msra.mxu0 0
        %8047 = vmatprep.subr.bf16.mxu0 0
        %8048 = vmatpush1.bf16.msra.mxu0 0
        %8049 = vmatprep.subr.bf16.mxu0 0
        %8050 = vmatpush1.bf16.msra.mxu0 0
        %8051 = vmatprep.subr.bf16.mxu0 0
        %8052 = vmatpush1.bf16.msra.mxu0 0
        %8053 = vmatprep.subr.bf16.mxu0 0
        %8054 = vmatpush1.bf16.msra.mxu0 0
        %8055 = vmatprep.subr.bf16.mxu0 0
        %8056 = vmatpush1.bf16.msra.mxu0 0
        %8057 = vmatprep.subr.bf16.mxu0 0
        %8058 = vmatpush1.bf16.msra.mxu0 0
        %8059 = vmatprep.mubr.bf16.mxu0 0
        %8060 = vmatmul.mubr.bf16.gmra.mrb[0].mxu0 %v7655
        %v8061 = vpop.f32.mrb[0].mxu0
        %v8062 = vadd.f32 0.0, %v8061
        %v8063 = vpop.f32.mrb[0].mxu0
        %v8064 = vadd.f32 0.0, %v8063
        %v8065 = vpop.f32.mrb[0].mxu0
        %v8066 = vpop.f32.mrb[0].mxu0
        %8067 = vdwg.mxu0
        %v8068 = vadd.f32 %v7649, %v7980
        %v8069 = vadd.f32 %v7650, %v7982
        %v8070 = vadd.f32 %v7651, %v8021
        %v8071 = vadd.f32 %v7652, %v8023
        %v8072 = vadd.f32 %v7653, %v8062
        %v8073 = vadd.f32 %v7654, %v8064
        %s8074 = scalar_lea.vmem [#allocation10], 6528
        %v8075 = vld [vmem:[%s8074] sm:$0xff]
        %v8076 = vld [vmem:[%s8074 + $0x8] sm:$0xff]
        %v8077 = vld [vmem:[%s8074 + $0x10] sm:$0xff]
        %v8078 = vld [vmem:[%s8074 + $0x18] sm:$0xff]
        %v8079 = vld [vmem:[%s8074 + $0x20] sm:$0xff]
        %v8080 = vld [vmem:[%s8074 + $0x28] sm:$0xff]
        %v8081 = vld [vmem:[%s8074 + $0x30] sm:$0xff]
        %v8082 = vld [vmem:[%s8074 + $0x38] sm:$0xff]
        %v8083 = vld [vmem:[%s8074 + $0x40] sm:$0xff]
        %v8084 = vld [vmem:[%s8074 + $0x48] sm:$0xff]
        %v8085 = vld [vmem:[%s8074 + $0x50] sm:$0xff]
        %v8086 = vld [vmem:[%s8074 + $0x58] sm:$0xff]
        %v8087 = vld [vmem:[%s8074 + $0x60] sm:$0xff]
        %v8088 = vld [vmem:[%s8074 + $0x68] sm:$0xff]
        %v8089 = vld [vmem:[%s8074 + $0x70] sm:$0xff]
        %v8090 = vld [vmem:[%s8074 + $0x78] sm:$0xff]
        %v8091 = vld [vmem:[%s8074 + $0x80] sm:$0xff]
        %v8092 = vld [vmem:[%s8074 + $0x88] sm:$0xff]
        %v8093 = vld [vmem:[%s8074 + $0x90] sm:$0xff]
        %v8094 = vld [vmem:[%s8074 + $0x98] sm:$0xff]
        %v8095 = vld [vmem:[%s8074 + $0xa0] sm:$0xff]
        %v8096 = vld [vmem:[%s8074 + $0xa8] sm:$0xff]
        %v8097 = vld [vmem:[%s8074 + $0xb0] sm:$0xff]
        %v8098 = vld [vmem:[%s8074 + $0xb8] sm:$0xff]
        %v8099 = vld [vmem:[%s8074 + $0xc0] sm:$0xff]
        %v8100 = vld [vmem:[%s8074 + $0xc8] sm:$0xff]
        %v8101 = vld [vmem:[%s8074 + $0xd0] sm:$0xff]
        %v8102 = vld [vmem:[%s8074 + $0xd8] sm:$0xff]
        %v8103 = vld [vmem:[%s8074 + $0xe0] sm:$0xff]
        %v8104 = vld [vmem:[%s8074 + $0xe8] sm:$0xff]
        %v8105 = vld [vmem:[%s8074 + $0xf0] sm:$0xff]
        %v8106 = vld [vmem:[%s8074 + $0xf8] sm:$0xff]
        %v8107 = vld [vmem:[%s8074 + $0x100] sm:$0xff]
        %v8108 = vld [vmem:[%s8074 + $0x108] sm:$0xff]
        %v8109 = vld [vmem:[%s8074 + $0x110] sm:$0xff]
        %v8110 = vld [vmem:[%s8074 + $0x118] sm:$0xff]
        %v8111 = vld [vmem:[%s8074 + $0x120] sm:$0xff]
        %v8112 = vld [vmem:[%s8074 + $0x128] sm:$0xff]
        %v8113 = vld [vmem:[%s8074 + $0x130] sm:$0xff]
        %v8114 = vld [vmem:[%s8074 + $0x138] sm:$0xff]
        %v8115 = vld [vmem:[%s8074 + $0x140] sm:$0xff]
        %v8116 = vld [vmem:[%s8074 + $0x148] sm:$0xff]
        %v8117 = vld [vmem:[%s8074 + $0x150] sm:$0xff]
        %v8118 = vld [vmem:[%s8074 + $0x158] sm:$0xff]
        %v8119 = vld [vmem:[%s8074 + $0x160] sm:$0xff]
        %v8120 = vld [vmem:[%s8074 + $0x168] sm:$0xff]
        %v8121 = vld [vmem:[%s8074 + $0x170] sm:$0xff]
        %v8122 = vld [vmem:[%s8074 + $0x178] sm:$0xff]
        %v8124 = vshrl.u32 %v7655, 16
        %v8175 = vunpack.c.l.b16 %v8075
        %v8176 = vunpack.c.h.b16 %v8075
        %v8177 = vunpack.c.l.b16 %v8076
        %v8178 = vunpack.c.h.b16 %v8076
        %v8179 = vunpack.c.l.b16 %v8077
        %v8180 = vunpack.c.h.b16 %v8077
        %v8181 = vunpack.c.l.b16 %v8078
        %v8182 = vunpack.c.h.b16 %v8078
        %v8183 = vunpack.c.l.b16 %v8079
        %v8184 = vunpack.c.h.b16 %v8079
        %v8185 = vunpack.c.l.b16 %v8080
        %v8186 = vunpack.c.h.b16 %v8080
        %v8187 = vunpack.c.l.b16 %v8081
        %v8188 = vunpack.c.h.b16 %v8081
        %v8189 = vunpack.c.l.b16 %v8082
        %v8190 = vunpack.c.h.b16 %v8082
        %v8191 = vunpack.c.l.b16 %v8083
        %v8192 = vunpack.c.h.b16 %v8083
        %v8193 = vunpack.c.l.b16 %v8084
        %v8194 = vunpack.c.h.b16 %v8084
        %v8195 = vunpack.c.l.b16 %v8085
        %v8196 = vunpack.c.h.b16 %v8085
        %v8197 = vunpack.c.l.b16 %v8086
        %v8198 = vunpack.c.h.b16 %v8086
        %v8199 = vunpack.c.l.b16 %v8087
        %v8200 = vunpack.c.h.b16 %v8087
        %v8201 = vunpack.c.l.b16 %v8088
        %v8202 = vunpack.c.h.b16 %v8088
        %v8203 = vunpack.c.l.b16 %v8089
        %v8204 = vunpack.c.h.b16 %v8089
        %v8205 = vunpack.c.l.b16 %v8090
        %v8206 = vunpack.c.h.b16 %v8090
        %v8207 = vunpack.c.l.b16 %v8091
        %v8208 = vunpack.c.h.b16 %v8091
        %v8209 = vunpack.c.l.b16 %v8092
        %v8210 = vunpack.c.h.b16 %v8092
        %v8211 = vunpack.c.l.b16 %v8093
        %v8212 = vunpack.c.h.b16 %v8093
        %v8213 = vunpack.c.l.b16 %v8094
        %v8214 = vunpack.c.h.b16 %v8094
        %v8215 = vunpack.c.l.b16 %v8095
        %v8216 = vunpack.c.h.b16 %v8095
        %v8217 = vunpack.c.l.b16 %v8096
        %v8218 = vunpack.c.h.b16 %v8096
        %v8219 = vunpack.c.l.b16 %v8097
        %v8220 = vunpack.c.h.b16 %v8097
        %v8221 = vunpack.c.l.b16 %v8098
        %v8222 = vunpack.c.h.b16 %v8098
        %v8223 = vunpack.c.l.b16 %v8099
        %v8224 = vunpack.c.h.b16 %v8099
        %v8225 = vunpack.c.l.b16 %v8100
        %v8226 = vunpack.c.h.b16 %v8100
        %v8227 = vunpack.c.l.b16 %v8101
        %v8228 = vunpack.c.h.b16 %v8101
        %v8229 = vunpack.c.l.b16 %v8102
        %v8230 = vunpack.c.h.b16 %v8102
        %v8231 = vunpack.c.l.b16 %v8103
        %v8232 = vunpack.c.h.b16 %v8103
        %v8233 = vunpack.c.l.b16 %v8104
        %v8234 = vunpack.c.h.b16 %v8104
        %v8235 = vunpack.c.l.b16 %v8105
        %v8236 = vunpack.c.h.b16 %v8105
        %v8237 = vunpack.c.l.b16 %v8106
        %v8238 = vunpack.c.h.b16 %v8106
        %v8239 = vunpack.c.l.b16 %v8107
        %v8240 = vunpack.c.h.b16 %v8107
        %v8241 = vunpack.c.l.b16 %v8108
        %v8242 = vunpack.c.h.b16 %v8108
        %v8243 = vunpack.c.l.b16 %v8109
        %v8244 = vunpack.c.h.b16 %v8109
        %v8245 = vunpack.c.l.b16 %v8110
        %v8246 = vunpack.c.h.b16 %v8110
        %v8247 = vunpack.c.l.b16 %v8111
        %v8248 = vunpack.c.h.b16 %v8111
        %v8249 = vunpack.c.l.b16 %v8112
        %v8250 = vunpack.c.h.b16 %v8112
        %v8251 = vunpack.c.l.b16 %v8113
        %v8252 = vunpack.c.h.b16 %v8113
        %v8253 = vunpack.c.l.b16 %v8114
        %v8254 = vunpack.c.h.b16 %v8114
        %v8255 = vunpack.c.l.b16 %v8115
        %v8256 = vunpack.c.h.b16 %v8115
        %v8257 = vunpack.c.l.b16 %v8116
        %v8258 = vunpack.c.h.b16 %v8116
        %v8259 = vunpack.c.l.b16 %v8117
        %v8260 = vunpack.c.h.b16 %v8117
        %v8261 = vunpack.c.l.b16 %v8118
        %v8262 = vunpack.c.h.b16 %v8118
        %v8263 = vunpack.c.l.b16 %v8119
        %v8264 = vunpack.c.h.b16 %v8119
        %v8265 = vunpack.c.l.b16 %v8120
        %v8266 = vunpack.c.h.b16 %v8120
        %v8267 = vunpack.c.l.b16 %v8121
        %v8268 = vunpack.c.h.b16 %v8121
        %v8269 = vunpack.c.l.b16 %v8122
        %v8270 = vunpack.c.h.b16 %v8122
        %v8271 = vpack.c.b16 %v8181, %v8175
        %v8272 = vpack.c.b16 %v8182, %v8176
        %v8273 = vpack.c.b16 %v8183, %v8177
        %v8274 = vpack.c.b16 %v8184, %v8178
        %v8275 = vpack.c.b16 %v8185, %v8179
        %v8276 = vpack.c.b16 %v8186, %v8180
        %v8277 = vpack.c.b16 %v8193, %v8187
        %v8278 = vpack.c.b16 %v8194, %v8188
        %v8279 = vpack.c.b16 %v8195, %v8189
        %v8280 = vpack.c.b16 %v8196, %v8190
        %v8281 = vpack.c.b16 %v8197, %v8191
        %v8282 = vpack.c.b16 %v8198, %v8192
        %v8283 = vpack.c.b16 %v8205, %v8199
        %v8284 = vpack.c.b16 %v8206, %v8200
        %v8285 = vpack.c.b16 %v8207, %v8201
        %v8286 = vpack.c.b16 %v8208, %v8202
        %v8287 = vpack.c.b16 %v8209, %v8203
        %v8288 = vpack.c.b16 %v8210, %v8204
        %v8289 = vpack.c.b16 %v8217, %v8211
        %v8290 = vpack.c.b16 %v8218, %v8212
        %v8291 = vpack.c.b16 %v8219, %v8213
        %v8292 = vpack.c.b16 %v8220, %v8214
        %v8293 = vpack.c.b16 %v8221, %v8215
        %v8294 = vpack.c.b16 %v8222, %v8216
        %v8295 = vpack.c.b16 %v8229, %v8223
        %v8296 = vpack.c.b16 %v8230, %v8224
        %v8297 = vpack.c.b16 %v8231, %v8225
        %v8298 = vpack.c.b16 %v8232, %v8226
        %v8299 = vpack.c.b16 %v8233, %v8227
        %v8300 = vpack.c.b16 %v8234, %v8228
        %v8301 = vpack.c.b16 %v8241, %v8235
        %v8302 = vpack.c.b16 %v8242, %v8236
        %v8303 = vpack.c.b16 %v8243, %v8237
        %v8304 = vpack.c.b16 %v8244, %v8238
        %v8305 = vpack.c.b16 %v8245, %v8239
        %v8306 = vpack.c.b16 %v8246, %v8240
        %v8307 = vpack.c.b16 %v8253, %v8247
        %v8308 = vpack.c.b16 %v8254, %v8248
        %v8309 = vpack.c.b16 %v8255, %v8249
        %v8310 = vpack.c.b16 %v8256, %v8250
        %v8311 = vpack.c.b16 %v8257, %v8251
        %v8312 = vpack.c.b16 %v8258, %v8252
        %v8313 = vpack.c.b16 %v8265, %v8259
        %v8314 = vpack.c.b16 %v8266, %v8260
        %v8315 = vpack.c.b16 %v8267, %v8261
        %v8316 = vpack.c.b16 %v8268, %v8262
        %v8317 = vpack.c.b16 %v8269, %v8263
        %v8318 = vpack.c.b16 %v8270, %v8264
        %8367 = vmatprep.subr.bf16.mxu0 %v8272
        %8368 = vmatpush1.bf16.msra.mxu0 %v8271
        %8369 = vmatprep.subr.bf16.mxu0 %v8278
        %8370 = vmatpush1.bf16.msra.mxu0 %v8277
        %8371 = vmatprep.subr.bf16.mxu0 %v8284
        %8372 = vmatpush1.bf16.msra.mxu0 %v8283
        %8373 = vmatprep.subr.bf16.mxu0 %v8290
        %8374 = vmatpush1.bf16.msra.mxu0 %v8289
        %8375 = vmatprep.subr.bf16.mxu0 %v8296
        %8376 = vmatpush1.bf16.msra.mxu0 %v8295
        %8377 = vmatprep.subr.bf16.mxu0 %v8302
        %8378 = vmatpush1.bf16.msra.mxu0 %v8301
        %8379 = vmatprep.subr.bf16.mxu0 %v8308
        %8380 = vmatpush1.bf16.msra.mxu0 %v8307
        %8381 = vmatprep.subr.bf16.mxu0 %v8314
        %8382 = vmatpush1.bf16.msra.mxu0 %v8313
        %8383 = vmatprep.subr.bf16.mxu0 0
        %8384 = vmatpush1.bf16.msra.mxu0 0
        %8385 = vmatprep.subr.bf16.mxu0 0
        %8386 = vmatpush1.bf16.msra.mxu0 0
        %8387 = vmatprep.subr.bf16.mxu0 0
        %8388 = vmatpush1.bf16.msra.mxu0 0
        %8389 = vmatprep.subr.bf16.mxu0 0
        %8390 = vmatpush1.bf16.msra.mxu0 0
        %8391 = vmatprep.subr.bf16.mxu0 0
        %8392 = vmatpush1.bf16.msra.mxu0 0
        %8393 = vmatprep.subr.bf16.mxu0 0
        %8394 = vmatpush1.bf16.msra.mxu0 0
        %8395 = vmatprep.subr.bf16.mxu0 0
        %8396 = vmatpush1.bf16.msra.mxu0 0
        %8397 = vmatprep.subr.bf16.mxu0 0
        %8398 = vmatpush1.bf16.msra.mxu0 0
        %8399 = vmatprep.mubr.bf16.mxu0 0
        %8400 = vmatmul.mubr.bf16.gmra.mrb[0].mxu0 %v8124
        %v8401 = vpop.f32.mrb[0].mxu0
        %v8402 = vadd.f32 0.0, %v8401
        %v8403 = vpop.f32.mrb[0].mxu0
        %v8404 = vadd.f32 0.0, %v8403
        %v8405 = vpop.f32.mrb[0].mxu0
        %v8406 = vpop.f32.mrb[0].mxu0
        %8407 = vdwg.mxu0
        %8408 = vmatprep.subr.bf16.mxu0 %v8274
        %8409 = vmatpush1.bf16.msra.mxu0 %v8273
        %8410 = vmatprep.subr.bf16.mxu0 %v8280
        %8411 = vmatpush1.bf16.msra.mxu0 %v8279
        %8412 = vmatprep.subr.bf16.mxu0 %v8286
        %8413 = vmatpush1.bf16.msra.mxu0 %v8285
        %8414 = vmatprep.subr.bf16.mxu0 %v8292
        %8415 = vmatpush1.bf16.msra.mxu0 %v8291
        %8416 = vmatprep.subr.bf16.mxu0 %v8298
        %8417 = vmatpush1.bf16.msra.mxu0 %v8297
        %8418 = vmatprep.subr.bf16.mxu0 %v8304
        %8419 = vmatpush1.bf16.msra.mxu0 %v8303
        %8420 = vmatprep.subr.bf16.mxu0 %v8310
        %8421 = vmatpush1.bf16.msra.mxu0 %v8309
        %8422 = vmatprep.subr.bf16.mxu0 %v8316
        %8423 = vmatpush1.bf16.msra.mxu0 %v8315
        %8424 = vmatprep.subr.bf16.mxu0 0
        %8425 = vmatpush1.bf16.msra.mxu0 0
        %8426 = vmatprep.subr.bf16.mxu0 0
        %8427 = vmatpush1.bf16.msra.mxu0 0
        %8428 = vmatprep.subr.bf16.mxu0 0
        %8429 = vmatpush1.bf16.msra.mxu0 0
        %8430 = vmatprep.subr.bf16.mxu0 0
        %8431 = vmatpush1.bf16.msra.mxu0 0
        %8432 = vmatprep.subr.bf16.mxu0 0
        %8433 = vmatpush1.bf16.msra.mxu0 0
        %8434 = vmatprep.subr.bf16.mxu0 0
        %8435 = vmatpush1.bf16.msra.mxu0 0
        %8436 = vmatprep.subr.bf16.mxu0 0
        %8437 = vmatpush1.bf16.msra.mxu0 0
        %8438 = vmatprep.subr.bf16.mxu0 0
        %8439 = vmatpush1.bf16.msra.mxu0 0
        %8440 = vmatprep.mubr.bf16.mxu0 0
        %8441 = vmatmul.mubr.bf16.gmra.mrb[0].mxu0 %v8124
        %v8442 = vpop.f32.mrb[0].mxu0
        %v8443 = vadd.f32 0.0, %v8442
        %v8444 = vpop.f32.mrb[0].mxu0
        %v8445 = vadd.f32 0.0, %v8444
        %v8446 = vpop.f32.mrb[0].mxu0
        %v8447 = vpop.f32.mrb[0].mxu0
        %8448 = vdwg.mxu0
        %8449 = vmatprep.subr.bf16.mxu0 %v8276
        %8450 = vmatpush1.bf16.msra.mxu0 %v8275
        %8451 = vmatprep.subr.bf16.mxu0 %v8282
        %8452 = vmatpush1.bf16.msra.mxu0 %v8281
        %8453 = vmatprep.subr.bf16.mxu0 %v8288
        %8454 = vmatpush1.bf16.msra.mxu0 %v8287
        %8455 = vmatprep.subr.bf16.mxu0 %v8294
        %8456 = vmatpush1.bf16.msra.mxu0 %v8293
        %8457 = vmatprep.subr.bf16.mxu0 %v8300
        %8458 = vmatpush1.bf16.msra.mxu0 %v8299
        %8459 = vmatprep.subr.bf16.mxu0 %v8306
        %8460 = vmatpush1.bf16.msra.mxu0 %v8305
        %8461 = vmatprep.subr.bf16.mxu0 %v8312
        %8462 = vmatpush1.bf16.msra.mxu0 %v8311
        %8463 = vmatprep.subr.bf16.mxu0 %v8318
        %8464 = vmatpush1.bf16.msra.mxu0 %v8317
        %8465 = vmatprep.subr.bf16.mxu0 0
        %8466 = vmatpush1.bf16.msra.mxu0 0
        %8467 = vmatprep.subr.bf16.mxu0 0
        %8468 = vmatpush1.bf16.msra.mxu0 0
        %8469 = vmatprep.subr.bf16.mxu0 0
        %8470 = vmatpush1.bf16.msra.mxu0 0
        %8471 = vmatprep.subr.bf16.mxu0 0
        %8472 = vmatpush1.bf16.msra.mxu0 0
        %8473 = vmatprep.subr.bf16.mxu0 0
        %8474 = vmatpush1.bf16.msra.mxu0 0
        %8475 = vmatprep.subr.bf16.mxu0 0
        %8476 = vmatpush1.bf16.msra.mxu0 0
        %8477 = vmatprep.subr.bf16.mxu0 0
        %8478 = vmatpush1.bf16.msra.mxu0 0
        %8479 = vmatprep.subr.bf16.mxu0 0
        %8480 = vmatpush1.bf16.msra.mxu0 0
        %8481 = vmatprep.mubr.bf16.mxu0 0
        %8482 = vmatmul.mubr.bf16.gmra.mrb[0].mxu0 %v8124
        %v8483 = vpop.f32.mrb[0].mxu0
        %v8484 = vadd.f32 0.0, %v8483
        %v8485 = vpop.f32.mrb[0].mxu0
        %v8486 = vadd.f32 0.0, %v8485
        %v8487 = vpop.f32.mrb[0].mxu0
        %v8488 = vpop.f32.mrb[0].mxu0
        %8489 = vdwg.mxu0
        %v8490 = vadd.f32 %v8068, %v8402
        %v8491 = vadd.f32 %v8069, %v8404
        %v8492 = vadd.f32 %v8070, %v8443
        %v8493 = vadd.f32 %v8071, %v8445
        %v8494 = vadd.f32 %v8072, %v8484
        %v8495 = vadd.f32 %v8073, %v8486
        %s8496 = scalar_lea.vmem [#allocation10], 6912
        %v8497 = vld [vmem:[%s8496] sm:$0xff]
        %v8498 = vld [vmem:[%s8496 + $0x8] sm:$0xff]
        %v8499 = vld [vmem:[%s8496 + $0x10] sm:$0xff]
        %v8500 = vld [vmem:[%s8496 + $0x18] sm:$0xff]
        %v8501 = vld [vmem:[%s8496 + $0x20] sm:$0xff]
        %v8502 = vld [vmem:[%s8496 + $0x28] sm:$0xff]
        %v8503 = vld [vmem:[%s8496 + $0x30] sm:$0xff]
        %v8504 = vld [vmem:[%s8496 + $0x38] sm:$0xff]
        %v8505 = vld [vmem:[%s8496 + $0x40] sm:$0xff]
        %v8506 = vld [vmem:[%s8496 + $0x48] sm:$0xff]
        %v8507 = vld [vmem:[%s8496 + $0x50] sm:$0xff]
        %v8508 = vld [vmem:[%s8496 + $0x58] sm:$0xff]
        %v8509 = vld [vmem:[%s8496 + $0x60] sm:$0xff]
        %v8510 = vld [vmem:[%s8496 + $0x68] sm:$0xff]
        %v8511 = vld [vmem:[%s8496 + $0x70] sm:$0xff]
        %v8512 = vld [vmem:[%s8496 + $0x78] sm:$0xff]
        %v8513 = vld [vmem:[%s8496 + $0x80] sm:$0xff]
        %v8514 = vld [vmem:[%s8496 + $0x88] sm:$0xff]
        %v8515 = vld [vmem:[%s8496 + $0x90] sm:$0xff]
        %v8516 = vld [vmem:[%s8496 + $0x98] sm:$0xff]
        %v8517 = vld [vmem:[%s8496 + $0xa0] sm:$0xff]
        %v8518 = vld [vmem:[%s8496 + $0xa8] sm:$0xff]
        %v8519 = vld [vmem:[%s8496 + $0xb0] sm:$0xff]
        %v8520 = vld [vmem:[%s8496 + $0xb8] sm:$0xff]
        %v8521 = vld [vmem:[%s8496 + $0xc0] sm:$0xff]
        %v8522 = vld [vmem:[%s8496 + $0xc8] sm:$0xff]
        %v8523 = vld [vmem:[%s8496 + $0xd0] sm:$0xff]
        %v8524 = vld [vmem:[%s8496 + $0xd8] sm:$0xff]
        %v8525 = vld [vmem:[%s8496 + $0xe0] sm:$0xff]
        %v8526 = vld [vmem:[%s8496 + $0xe8] sm:$0xff]
        %v8527 = vld [vmem:[%s8496 + $0xf0] sm:$0xff]
        %v8528 = vld [vmem:[%s8496 + $0xf8] sm:$0xff]
        %v8529 = vld [vmem:[%s8496 + $0x100] sm:$0xff]
        %v8530 = vld [vmem:[%s8496 + $0x108] sm:$0xff]
        %v8531 = vld [vmem:[%s8496 + $0x110] sm:$0xff]
        %v8532 = vld [vmem:[%s8496 + $0x118] sm:$0xff]
        %v8533 = vld [vmem:[%s8496 + $0x120] sm:$0xff]
        %v8534 = vld [vmem:[%s8496 + $0x128] sm:$0xff]
        %v8535 = vld [vmem:[%s8496 + $0x130] sm:$0xff]
        %v8536 = vld [vmem:[%s8496 + $0x138] sm:$0xff]
        %v8537 = vld [vmem:[%s8496 + $0x140] sm:$0xff]
        %v8538 = vld [vmem:[%s8496 + $0x148] sm:$0xff]
        %v8539 = vld [vmem:[%s8496 + $0x150] sm:$0xff]
        %v8540 = vld [vmem:[%s8496 + $0x158] sm:$0xff]
        %v8541 = vld [vmem:[%s8496 + $0x160] sm:$0xff]
        %v8542 = vld [vmem:[%s8496 + $0x168] sm:$0xff]
        %v8543 = vld [vmem:[%s8496 + $0x170] sm:$0xff]
        %v8544 = vld [vmem:[%s8496 + $0x178] sm:$0xff]
        %v8546 = vrot.slane %v7655, 1
        %v8596 = vunpack.c.l.b16 %v8497
        %v8597 = vunpack.c.h.b16 %v8497
        %v8598 = vunpack.c.l.b16 %v8498
        %v8599 = vunpack.c.h.b16 %v8498
        %v8600 = vunpack.c.l.b16 %v8499
        %v8601 = vunpack.c.h.b16 %v8499
        %v8602 = vunpack.c.l.b16 %v8500
        %v8603 = vunpack.c.h.b16 %v8500
        %v8604 = vunpack.c.l.b16 %v8501
        %v8605 = vunpack.c.h.b16 %v8501
        %v8606 = vunpack.c.l.b16 %v8502
        %v8607 = vunpack.c.h.b16 %v8502
        %v8608 = vunpack.c.l.b16 %v8503
        %v8609 = vunpack.c.h.b16 %v8503
        %v8610 = vunpack.c.l.b16 %v8504
        %v8611 = vunpack.c.h.b16 %v8504
        %v8612 = vunpack.c.l.b16 %v8505
        %v8613 = vunpack.c.h.b16 %v8505
        %v8614 = vunpack.c.l.b16 %v8506
        %v8615 = vunpack.c.h.b16 %v8506
        %v8616 = vunpack.c.l.b16 %v8507
        %v8617 = vunpack.c.h.b16 %v8507
        %v8618 = vunpack.c.l.b16 %v8508
        %v8619 = vunpack.c.h.b16 %v8508
        %v8620 = vunpack.c.l.b16 %v8509
        %v8621 = vunpack.c.h.b16 %v8509
        %v8622 = vunpack.c.l.b16 %v8510
        %v8623 = vunpack.c.h.b16 %v8510
        %v8624 = vunpack.c.l.b16 %v8511
        %v8625 = vunpack.c.h.b16 %v8511
        %v8626 = vunpack.c.l.b16 %v8512
        %v8627 = vunpack.c.h.b16 %v8512
        %v8628 = vunpack.c.l.b16 %v8513
        %v8629 = vunpack.c.h.b16 %v8513
        %v8630 = vunpack.c.l.b16 %v8514
        %v8631 = vunpack.c.h.b16 %v8514
        %v8632 = vunpack.c.l.b16 %v8515
        %v8633 = vunpack.c.h.b16 %v8515
        %v8634 = vunpack.c.l.b16 %v8516
        %v8635 = vunpack.c.h.b16 %v8516
        %v8636 = vunpack.c.l.b16 %v8517
        %v8637 = vunpack.c.h.b16 %v8517
        %v8638 = vunpack.c.l.b16 %v8518
        %v8639 = vunpack.c.h.b16 %v8518
        %v8640 = vunpack.c.l.b16 %v8519
        %v8641 = vunpack.c.h.b16 %v8519
        %v8642 = vunpack.c.l.b16 %v8520
        %v8643 = vunpack.c.h.b16 %v8520
        %v8644 = vunpack.c.l.b16 %v8521
        %v8645 = vunpack.c.h.b16 %v8521
        %v8646 = vunpack.c.l.b16 %v8522
        %v8647 = vunpack.c.h.b16 %v8522
        %v8648 = vunpack.c.l.b16 %v8523
        %v8649 = vunpack.c.h.b16 %v8523
        %v8650 = vunpack.c.l.b16 %v8524
        %v8651 = vunpack.c.h.b16 %v8524
        %v8652 = vunpack.c.l.b16 %v8525
        %v8653 = vunpack.c.h.b16 %v8525
        %v8654 = vunpack.c.l.b16 %v8526
        %v8655 = vunpack.c.h.b16 %v8526
        %v8656 = vunpack.c.l.b16 %v8527
        %v8657 = vunpack.c.h.b16 %v8527
        %v8658 = vunpack.c.l.b16 %v8528
        %v8659 = vunpack.c.h.b16 %v8528
        %v8660 = vunpack.c.l.b16 %v8529
        %v8661 = vunpack.c.h.b16 %v8529
        %v8662 = vunpack.c.l.b16 %v8530
        %v8663 = vunpack.c.h.b16 %v8530
        %v8664 = vunpack.c.l.b16 %v8531
        %v8665 = vunpack.c.h.b16 %v8531
        %v8666 = vunpack.c.l.b16 %v8532
        %v8667 = vunpack.c.h.b16 %v8532
        %v8668 = vunpack.c.l.b16 %v8533
        %v8669 = vunpack.c.h.b16 %v8533
        %v8670 = vunpack.c.l.b16 %v8534
        %v8671 = vunpack.c.h.b16 %v8534
        %v8672 = vunpack.c.l.b16 %v8535
        %v8673 = vunpack.c.h.b16 %v8535
        %v8674 = vunpack.c.l.b16 %v8536
        %v8675 = vunpack.c.h.b16 %v8536
        %v8676 = vunpack.c.l.b16 %v8537
        %v8677 = vunpack.c.h.b16 %v8537
        %v8678 = vunpack.c.l.b16 %v8538
        %v8679 = vunpack.c.h.b16 %v8538
        %v8680 = vunpack.c.l.b16 %v8539
        %v8681 = vunpack.c.h.b16 %v8539
        %v8682 = vunpack.c.l.b16 %v8540
        %v8683 = vunpack.c.h.b16 %v8540
        %v8684 = vunpack.c.l.b16 %v8541
        %v8685 = vunpack.c.h.b16 %v8541
        %v8686 = vunpack.c.l.b16 %v8542
        %v8687 = vunpack.c.h.b16 %v8542
        %v8688 = vunpack.c.l.b16 %v8543
        %v8689 = vunpack.c.h.b16 %v8543
        %v8690 = vunpack.c.l.b16 %v8544
        %v8691 = vunpack.c.h.b16 %v8544
        %v8692 = vpack.c.b16 %v8602, %v8596
        %v8693 = vpack.c.b16 %v8603, %v8597
        %v8694 = vpack.c.b16 %v8604, %v8598
        %v8695 = vpack.c.b16 %v8605, %v8599
        %v8696 = vpack.c.b16 %v8606, %v8600
        %v8697 = vpack.c.b16 %v8607, %v8601
        %v8698 = vpack.c.b16 %v8614, %v8608
        %v8699 = vpack.c.b16 %v8615, %v8609
        %v8700 = vpack.c.b16 %v8616, %v8610
        %v8701 = vpack.c.b16 %v8617, %v8611
        %v8702 = vpack.c.b16 %v8618, %v8612
        %v8703 = vpack.c.b16 %v8619, %v8613
        %v8704 = vpack.c.b16 %v8626, %v8620
        %v8705 = vpack.c.b16 %v8627, %v8621
        %v8706 = vpack.c.b16 %v8628, %v8622
        %v8707 = vpack.c.b16 %v8629, %v8623
        %v8708 = vpack.c.b16 %v8630, %v8624
        %v8709 = vpack.c.b16 %v8631, %v8625
        %v8710 = vpack.c.b16 %v8638, %v8632
        %v8711 = vpack.c.b16 %v8639, %v8633
        %v8712 = vpack.c.b16 %v8640, %v8634
        %v8713 = vpack.c.b16 %v8641, %v8635
        %v8714 = vpack.c.b16 %v8642, %v8636
        %v8715 = vpack.c.b16 %v8643, %v8637
        %v8716 = vpack.c.b16 %v8650, %v8644
        %v8717 = vpack.c.b16 %v8651, %v8645
        %v8718 = vpack.c.b16 %v8652, %v8646
        %v8719 = vpack.c.b16 %v8653, %v8647
        %v8720 = vpack.c.b16 %v8654, %v8648
        %v8721 = vpack.c.b16 %v8655, %v8649
        %v8722 = vpack.c.b16 %v8662, %v8656
        %v8723 = vpack.c.b16 %v8663, %v8657
        %v8724 = vpack.c.b16 %v8664, %v8658
        %v8725 = vpack.c.b16 %v8665, %v8659
        %v8726 = vpack.c.b16 %v8666, %v8660
        %v8727 = vpack.c.b16 %v8667, %v8661
        %v8728 = vpack.c.b16 %v8674, %v8668
        %v8729 = vpack.c.b16 %v8675, %v8669
        %v8730 = vpack.c.b16 %v8676, %v8670
        %v8731 = vpack.c.b16 %v8677, %v8671
        %v8732 = vpack.c.b16 %v8678, %v8672
        %v8733 = vpack.c.b16 %v8679, %v8673
        %v8734 = vpack.c.b16 %v8686, %v8680
        %v8735 = vpack.c.b16 %v8687, %v8681
        %v8736 = vpack.c.b16 %v8688, %v8682
        %v8737 = vpack.c.b16 %v8689, %v8683
        %v8738 = vpack.c.b16 %v8690, %v8684
        %v8739 = vpack.c.b16 %v8691, %v8685
        %8788 = vmatprep.subr.bf16.mxu0 %v8693
        %8789 = vmatpush1.bf16.msra.mxu0 %v8692
        %8790 = vmatprep.subr.bf16.mxu0 %v8699
        %8791 = vmatpush1.bf16.msra.mxu0 %v8698
        %8792 = vmatprep.subr.bf16.mxu0 %v8705
        %8793 = vmatpush1.bf16.msra.mxu0 %v8704
        %8794 = vmatprep.subr.bf16.mxu0 %v8711
        %8795 = vmatpush1.bf16.msra.mxu0 %v8710
        %8796 = vmatprep.subr.bf16.mxu0 %v8717
        %8797 = vmatpush1.bf16.msra.mxu0 %v8716
        %8798 = vmatprep.subr.bf16.mxu0 %v8723
        %8799 = vmatpush1.bf16.msra.mxu0 %v8722
        %8800 = vmatprep.subr.bf16.mxu0 %v8729
        %8801 = vmatpush1.bf16.msra.mxu0 %v8728
        %8802 = vmatprep.subr.bf16.mxu0 %v8735
        %8803 = vmatpush1.bf16.msra.mxu0 %v8734
        %8804 = vmatprep.subr.bf16.mxu0 0
        %8805 = vmatpush1.bf16.msra.mxu0 0
        %8806 = vmatprep.subr.bf16.mxu0 0
        %8807 = vmatpush1.bf16.msra.mxu0 0
        %8808 = vmatprep.subr.bf16.mxu0 0
        %8809 = vmatpush1.bf16.msra.mxu0 0
        %8810 = vmatprep.subr.bf16.mxu0 0
        %8811 = vmatpush1.bf16.msra.mxu0 0
        %8812 = vmatprep.subr.bf16.mxu0 0
        %8813 = vmatpush1.bf16.msra.mxu0 0
        %8814 = vmatprep.subr.bf16.mxu0 0
        %8815 = vmatpush1.bf16.msra.mxu0 0
        %8816 = vmatprep.subr.bf16.mxu0 0
        %8817 = vmatpush1.bf16.msra.mxu0 0
        %8818 = vmatprep.subr.bf16.mxu0 0
        %8819 = vmatpush1.bf16.msra.mxu0 0
        %8820 = vmatprep.mubr.bf16.mxu0 0
        %8821 = vmatmul.mubr.bf16.gmra.mrb[0].mxu0 %v8546
        %v8822 = vpop.f32.mrb[0].mxu0
        %v8823 = vadd.f32 0.0, %v8822
        %v8824 = vpop.f32.mrb[0].mxu0
        %v8825 = vadd.f32 0.0, %v8824
        %v8826 = vpop.f32.mrb[0].mxu0
        %v8827 = vpop.f32.mrb[0].mxu0
        %8828 = vdwg.mxu0
        %8829 = vmatprep.subr.bf16.mxu0 %v8695
        %8830 = vmatpush1.bf16.msra.mxu0 %v8694
        %8831 = vmatprep.subr.bf16.mxu0 %v8701
        %8832 = vmatpush1.bf16.msra.mxu0 %v8700
        %8833 = vmatprep.subr.bf16.mxu0 %v8707
        %8834 = vmatpush1.bf16.msra.mxu0 %v8706
        %8835 = vmatprep.subr.bf16.mxu0 %v8713
        %8836 = vmatpush1.bf16.msra.mxu0 %v8712
        %8837 = vmatprep.subr.bf16.mxu0 %v8719
        %8838 = vmatpush1.bf16.msra.mxu0 %v8718
        %8839 = vmatprep.subr.bf16.mxu0 %v8725
        %8840 = vmatpush1.bf16.msra.mxu0 %v8724
        %8841 = vmatprep.subr.bf16.mxu0 %v8731
        %8842 = vmatpush1.bf16.msra.mxu0 %v8730
        %8843 = vmatprep.subr.bf16.mxu0 %v8737
        %8844 = vmatpush1.bf16.msra.mxu0 %v8736
        %8845 = vmatprep.subr.bf16.mxu0 0
        %8846 = vmatpush1.bf16.msra.mxu0 0
        %8847 = vmatprep.subr.bf16.mxu0 0
        %8848 = vmatpush1.bf16.msra.mxu0 0
        %8849 = vmatprep.subr.bf16.mxu0 0
        %8850 = vmatpush1.bf16.msra.mxu0 0
        %8851 = vmatprep.subr.bf16.mxu0 0
        %8852 = vmatpush1.bf16.msra.mxu0 0
        %8853 = vmatprep.subr.bf16.mxu0 0
        %8854 = vmatpush1.bf16.msra.mxu0 0
        %8855 = vmatprep.subr.bf16.mxu0 0
        %8856 = vmatpush1.bf16.msra.mxu0 0
        %8857 = vmatprep.subr.bf16.mxu0 0
        %8858 = vmatpush1.bf16.msra.mxu0 0
        %8859 = vmatprep.subr.bf16.mxu0 0
        %8860 = vmatpush1.bf16.msra.mxu0 0
        %8861 = vmatprep.mubr.bf16.mxu0 0
        %8862 = vmatmul.mubr.bf16.gmra.mrb[0].mxu0 %v8546
        %v8863 = vpop.f32.mrb[0].mxu0
        %v8864 = vadd.f32 0.0, %v8863
        %v8865 = vpop.f32.mrb[0].mxu0
        %v8866 = vadd.f32 0.0, %v8865
        %v8867 = vpop.f32.mrb[0].mxu0
        %v8868 = vpop.f32.mrb[0].mxu0
        %8869 = vdwg.mxu0
        %8870 = vmatprep.subr.bf16.mxu0 %v8697
        %8871 = vmatpush1.bf16.msra.mxu0 %v8696
        %8872 = vmatprep.subr.bf16.mxu0 %v8703
        %8873 = vmatpush1.bf16.msra.mxu0 %v8702
        %8874 = vmatprep.subr.bf16.mxu0 %v8709
        %8875 = vmatpush1.bf16.msra.mxu0 %v8708
        %8876 = vmatprep.subr.bf16.mxu0 %v8715
        %8877 = vmatpush1.bf16.msra.mxu0 %v8714
        %8878 = vmatprep.subr.bf16.mxu0 %v8721
        %8879 = vmatpush1.bf16.msra.mxu0 %v8720
        %8880 = vmatprep.subr.bf16.mxu0 %v8727
        %8881 = vmatpush1.bf16.msra.mxu0 %v8726
        %8882 = vmatprep.subr.bf16.mxu0 %v8733
        %8883 = vmatpush1.bf16.msra.mxu0 %v8732
        %8884 = vmatprep.subr.bf16.mxu0 %v8739
        %8885 = vmatpush1.bf16.msra.mxu0 %v8738
        %8886 = vmatprep.subr.bf16.mxu0 0
        %8887 = vmatpush1.bf16.msra.mxu0 0
        %8888 = vmatprep.subr.bf16.mxu0 0
        %8889 = vmatpush1.bf16.msra.mxu0 0
        %8890 = vmatprep.subr.bf16.mxu0 0
        %8891 = vmatpush1.bf16.msra.mxu0 0
        %8892 = vmatprep.subr.bf16.mxu0 0
        %8893 = vmatpush1.bf16.msra.mxu0 0
        %8894 = vmatprep.subr.bf16.mxu0 0
        %8895 = vmatpush1.bf16.msra.mxu0 0
        %8896 = vmatprep.subr.bf16.mxu0 0
        %8897 = vmatpush1.bf16.msra.mxu0 0
        %8898 = vmatprep.subr.bf16.mxu0 0
        %8899 = vmatpush1.bf16.msra.mxu0 0
        %8900 = vmatprep.subr.bf16.mxu0 0
        %8901 = vmatpush1.bf16.msra.mxu0 0
        %8902 = vmatprep.mubr.bf16.mxu0 0
        %8903 = vmatmul.mubr.bf16.gmra.mrb[0].mxu0 %v8546
        %v8904 = vpop.f32.mrb[0].mxu0
        %v8905 = vadd.f32 0.0, %v8904
        %v8906 = vpop.f32.mrb[0].mxu0
        %v8907 = vadd.f32 0.0, %v8906
        %v8908 = vpop.f32.mrb[0].mxu0
        %v8909 = vpop.f32.mrb[0].mxu0
        %8910 = vdwg.mxu0
        %v8911 = vadd.f32 %v8490, %v8823
        %v8912 = vadd.f32 %v8491, %v8825
        %v8913 = vadd.f32 %v8492, %v8864
        %v8914 = vadd.f32 %v8493, %v8866
        %v8915 = vadd.f32 %v8494, %v8905
        %v8916 = vadd.f32 %v8495, %v8907
        %s8917 = scalar_lea.vmem [#allocation10], 7296
        %v8918 = vld [vmem:[%s8917] sm:$0xff]
        %v8919 = vld [vmem:[%s8917 + $0x8] sm:$0xff]
        %v8920 = vld [vmem:[%s8917 + $0x10] sm:$0xff]
        %v8921 = vld [vmem:[%s8917 + $0x18] sm:$0xff]
        %v8922 = vld [vmem:[%s8917 + $0x20] sm:$0xff]
        %v8923 = vld [vmem:[%s8917 + $0x28] sm:$0xff]
        %v8924 = vld [vmem:[%s8917 + $0x30] sm:$0xff]
        %v8925 = vld [vmem:[%s8917 + $0x38] sm:$0xff]
        %v8926 = vld [vmem:[%s8917 + $0x40] sm:$0xff]
        %v8927 = vld [vmem:[%s8917 + $0x48] sm:$0xff]
        %v8928 = vld [vmem:[%s8917 + $0x50] sm:$0xff]
        %v8929 = vld [vmem:[%s8917 + $0x58] sm:$0xff]
        %v8930 = vld [vmem:[%s8917 + $0x60] sm:$0xff]
        %v8931 = vld [vmem:[%s8917 + $0x68] sm:$0xff]
        %v8932 = vld [vmem:[%s8917 + $0x70] sm:$0xff]
        %v8933 = vld [vmem:[%s8917 + $0x78] sm:$0xff]
        %v8934 = vld [vmem:[%s8917 + $0x80] sm:$0xff]
        %v8935 = vld [vmem:[%s8917 + $0x88] sm:$0xff]
        %v8936 = vld [vmem:[%s8917 + $0x90] sm:$0xff]
        %v8937 = vld [vmem:[%s8917 + $0x98] sm:$0xff]
        %v8938 = vld [vmem:[%s8917 + $0xa0] sm:$0xff]
        %v8939 = vld [vmem:[%s8917 + $0xa8] sm:$0xff]
        %v8940 = vld [vmem:[%s8917 + $0xb0] sm:$0xff]
        %v8941 = vld [vmem:[%s8917 + $0xb8] sm:$0xff]
        %v8942 = vld [vmem:[%s8917 + $0xc0] sm:$0xff]
        %v8943 = vld [vmem:[%s8917 + $0xc8] sm:$0xff]
        %v8944 = vld [vmem:[%s8917 + $0xd0] sm:$0xff]
        %v8945 = vld [vmem:[%s8917 + $0xd8] sm:$0xff]
        %v8946 = vld [vmem:[%s8917 + $0xe0] sm:$0xff]
        %v8947 = vld [vmem:[%s8917 + $0xe8] sm:$0xff]
        %v8948 = vld [vmem:[%s8917 + $0xf0] sm:$0xff]
        %v8949 = vld [vmem:[%s8917 + $0xf8] sm:$0xff]
        %v8950 = vld [vmem:[%s8917 + $0x100] sm:$0xff]
        %v8951 = vld [vmem:[%s8917 + $0x108] sm:$0xff]
        %v8952 = vld [vmem:[%s8917 + $0x110] sm:$0xff]
        %v8953 = vld [vmem:[%s8917 + $0x118] sm:$0xff]
        %v8954 = vld [vmem:[%s8917 + $0x120] sm:$0xff]
        %v8955 = vld [vmem:[%s8917 + $0x128] sm:$0xff]
        %v8956 = vld [vmem:[%s8917 + $0x130] sm:$0xff]
        %v8957 = vld [vmem:[%s8917 + $0x138] sm:$0xff]
        %v8958 = vld [vmem:[%s8917 + $0x140] sm:$0xff]
        %v8959 = vld [vmem:[%s8917 + $0x148] sm:$0xff]
        %v8960 = vld [vmem:[%s8917 + $0x150] sm:$0xff]
        %v8961 = vld [vmem:[%s8917 + $0x158] sm:$0xff]
        %v8962 = vld [vmem:[%s8917 + $0x160] sm:$0xff]
        %v8963 = vld [vmem:[%s8917 + $0x168] sm:$0xff]
        %v8964 = vld [vmem:[%s8917 + $0x170] sm:$0xff]
        %v8965 = vld [vmem:[%s8917 + $0x178] sm:$0xff]
        %v8966 = vrot.slane %v8124, 1
        %v9016 = vunpack.c.l.b16 %v8918
        %v9017 = vunpack.c.h.b16 %v8918
        %v9018 = vunpack.c.l.b16 %v8919
        %v9019 = vunpack.c.h.b16 %v8919
        %v9020 = vunpack.c.l.b16 %v8920
        %v9021 = vunpack.c.h.b16 %v8920
        %v9022 = vunpack.c.l.b16 %v8921
        %v9023 = vunpack.c.h.b16 %v8921
        %v9024 = vunpack.c.l.b16 %v8922
        %v9025 = vunpack.c.h.b16 %v8922
        %v9026 = vunpack.c.l.b16 %v8923
        %v9027 = vunpack.c.h.b16 %v8923
        %v9028 = vunpack.c.l.b16 %v8924
        %v9029 = vunpack.c.h.b16 %v8924
        %v9030 = vunpack.c.l.b16 %v8925
        %v9031 = vunpack.c.h.b16 %v8925
        %v9032 = vunpack.c.l.b16 %v8926
        %v9033 = vunpack.c.h.b16 %v8926
        %v9034 = vunpack.c.l.b16 %v8927
        %v9035 = vunpack.c.h.b16 %v8927
        %v9036 = vunpack.c.l.b16 %v8928
        %v9037 = vunpack.c.h.b16 %v8928
        %v9038 = vunpack.c.l.b16 %v8929
        %v9039 = vunpack.c.h.b16 %v8929
        %v9040 = vunpack.c.l.b16 %v8930
        %v9041 = vunpack.c.h.b16 %v8930
        %v9042 = vunpack.c.l.b16 %v8931
        %v9043 = vunpack.c.h.b16 %v8931
        %v9044 = vunpack.c.l.b16 %v8932
        %v9045 = vunpack.c.h.b16 %v8932
        %v9046 = vunpack.c.l.b16 %v8933
        %v9047 = vunpack.c.h.b16 %v8933
        %v9048 = vunpack.c.l.b16 %v8934
        %v9049 = vunpack.c.h.b16 %v8934
        %v9050 = vunpack.c.l.b16 %v8935
        %v9051 = vunpack.c.h.b16 %v8935
        %v9052 = vunpack.c.l.b16 %v8936
        %v9053 = vunpack.c.h.b16 %v8936
        %v9054 = vunpack.c.l.b16 %v8937
        %v9055 = vunpack.c.h.b16 %v8937
        %v9056 = vunpack.c.l.b16 %v8938
        %v9057 = vunpack.c.h.b16 %v8938
        %v9058 = vunpack.c.l.b16 %v8939
        %v9059 = vunpack.c.h.b16 %v8939
        %v9060 = vunpack.c.l.b16 %v8940
        %v9061 = vunpack.c.h.b16 %v8940
        %v9062 = vunpack.c.l.b16 %v8941
        %v9063 = vunpack.c.h.b16 %v8941
        %v9064 = vunpack.c.l.b16 %v8942
        %v9065 = vunpack.c.h.b16 %v8942
        %v9066 = vunpack.c.l.b16 %v8943
        %v9067 = vunpack.c.h.b16 %v8943
        %v9068 = vunpack.c.l.b16 %v8944
        %v9069 = vunpack.c.h.b16 %v8944
        %v9070 = vunpack.c.l.b16 %v8945
        %v9071 = vunpack.c.h.b16 %v8945
        %v9072 = vunpack.c.l.b16 %v8946
        %v9073 = vunpack.c.h.b16 %v8946
        %v9074 = vunpack.c.l.b16 %v8947
        %v9075 = vunpack.c.h.b16 %v8947
        %v9076 = vunpack.c.l.b16 %v8948
        %v9077 = vunpack.c.h.b16 %v8948
        %v9078 = vunpack.c.l.b16 %v8949
        %v9079 = vunpack.c.h.b16 %v8949
        %v9080 = vunpack.c.l.b16 %v8950
        %v9081 = vunpack.c.h.b16 %v8950
        %v9082 = vunpack.c.l.b16 %v8951
        %v9083 = vunpack.c.h.b16 %v8951
        %v9084 = vunpack.c.l.b16 %v8952
        %v9085 = vunpack.c.h.b16 %v8952
        %v9086 = vunpack.c.l.b16 %v8953
        %v9087 = vunpack.c.h.b16 %v8953
        %v9088 = vunpack.c.l.b16 %v8954
        %v9089 = vunpack.c.h.b16 %v8954
        %v9090 = vunpack.c.l.b16 %v8955
        %v9091 = vunpack.c.h.b16 %v8955
        %v9092 = vunpack.c.l.b16 %v8956
        %v9093 = vunpack.c.h.b16 %v8956
        %v9094 = vunpack.c.l.b16 %v8957
        %v9095 = vunpack.c.h.b16 %v8957
        %v9096 = vunpack.c.l.b16 %v8958
        %v9097 = vunpack.c.h.b16 %v8958
        %v9098 = vunpack.c.l.b16 %v8959
        %v9099 = vunpack.c.h.b16 %v8959
        %v9100 = vunpack.c.l.b16 %v8960
        %v9101 = vunpack.c.h.b16 %v8960
        %v9102 = vunpack.c.l.b16 %v8961
        %v9103 = vunpack.c.h.b16 %v8961
        %v9104 = vunpack.c.l.b16 %v8962
        %v9105 = vunpack.c.h.b16 %v8962
        %v9106 = vunpack.c.l.b16 %v8963
        %v9107 = vunpack.c.h.b16 %v8963
        %v9108 = vunpack.c.l.b16 %v8964
        %v9109 = vunpack.c.h.b16 %v8964
        %v9110 = vunpack.c.l.b16 %v8965
        %v9111 = vunpack.c.h.b16 %v8965
        %v9112 = vpack.c.b16 %v9022, %v9016
        %v9113 = vpack.c.b16 %v9023, %v9017
        %v9114 = vpack.c.b16 %v9024, %v9018
        %v9115 = vpack.c.b16 %v9025, %v9019
        %v9116 = vpack.c.b16 %v9026, %v9020
        %v9117 = vpack.c.b16 %v9027, %v9021
        %v9118 = vpack.c.b16 %v9034, %v9028
        %v9119 = vpack.c.b16 %v9035, %v9029
        %v9120 = vpack.c.b16 %v9036, %v9030
        %v9121 = vpack.c.b16 %v9037, %v9031
        %v9122 = vpack.c.b16 %v9038, %v9032
        %v9123 = vpack.c.b16 %v9039, %v9033
        %v9124 = vpack.c.b16 %v9046, %v9040
        %v9125 = vpack.c.b16 %v9047, %v9041
        %v9126 = vpack.c.b16 %v9048, %v9042
        %v9127 = vpack.c.b16 %v9049, %v9043
        %v9128 = vpack.c.b16 %v9050, %v9044
        %v9129 = vpack.c.b16 %v9051, %v9045
        %v9130 = vpack.c.b16 %v9058, %v9052
        %v9131 = vpack.c.b16 %v9059, %v9053
        %v9132 = vpack.c.b16 %v9060, %v9054
        %v9133 = vpack.c.b16 %v9061, %v9055
        %v9134 = vpack.c.b16 %v9062, %v9056
        %v9135 = vpack.c.b16 %v9063, %v9057
        %v9136 = vpack.c.b16 %v9070, %v9064
        %v9137 = vpack.c.b16 %v9071, %v9065
        %v9138 = vpack.c.b16 %v9072, %v9066
        %v9139 = vpack.c.b16 %v9073, %v9067
        %v9140 = vpack.c.b16 %v9074, %v9068
        %v9141 = vpack.c.b16 %v9075, %v9069
        %v9142 = vpack.c.b16 %v9082, %v9076
        %v9143 = vpack.c.b16 %v9083, %v9077
        %v9144 = vpack.c.b16 %v9084, %v9078
        %v9145 = vpack.c.b16 %v9085, %v9079
        %v9146 = vpack.c.b16 %v9086, %v9080
        %v9147 = vpack.c.b16 %v9087, %v9081
        %v9148 = vpack.c.b16 %v9094, %v9088
        %v9149 = vpack.c.b16 %v9095, %v9089
        %v9150 = vpack.c.b16 %v9096, %v9090
        %v9151 = vpack.c.b16 %v9097, %v9091
        %v9152 = vpack.c.b16 %v9098, %v9092
        %v9153 = vpack.c.b16 %v9099, %v9093
        %v9154 = vpack.c.b16 %v9106, %v9100
        %v9155 = vpack.c.b16 %v9107, %v9101
        %v9156 = vpack.c.b16 %v9108, %v9102
        %v9157 = vpack.c.b16 %v9109, %v9103
        %v9158 = vpack.c.b16 %v9110, %v9104
        %v9159 = vpack.c.b16 %v9111, %v9105
        %9208 = vmatprep.subr.bf16.mxu0 %v9113
        %9209 = vmatpush1.bf16.msra.mxu0 %v9112
        %9210 = vmatprep.subr.bf16.mxu0 %v9119
        %9211 = vmatpush1.bf16.msra.mxu0 %v9118
        %9212 = vmatprep.subr.bf16.mxu0 %v9125
        %9213 = vmatpush1.bf16.msra.mxu0 %v9124
        %9214 = vmatprep.subr.bf16.mxu0 %v9131
        %9215 = vmatpush1.bf16.msra.mxu0 %v9130
        %9216 = vmatprep.subr.bf16.mxu0 %v9137
        %9217 = vmatpush1.bf16.msra.mxu0 %v9136
        %9218 = vmatprep.subr.bf16.mxu0 %v9143
        %9219 = vmatpush1.bf16.msra.mxu0 %v9142
        %9220 = vmatprep.subr.bf16.mxu0 %v9149
        %9221 = vmatpush1.bf16.msra.mxu0 %v9148
        %9222 = vmatprep.subr.bf16.mxu0 %v9155
        %9223 = vmatpush1.bf16.msra.mxu0 %v9154
        %9224 = vmatprep.subr.bf16.mxu0 0
        %9225 = vmatpush1.bf16.msra.mxu0 0
        %9226 = vmatprep.subr.bf16.mxu0 0
        %9227 = vmatpush1.bf16.msra.mxu0 0
        %9228 = vmatprep.subr.bf16.mxu0 0
        %9229 = vmatpush1.bf16.msra.mxu0 0
        %9230 = vmatprep.subr.bf16.mxu0 0
        %9231 = vmatpush1.bf16.msra.mxu0 0
        %9232 = vmatprep.subr.bf16.mxu0 0
        %9233 = vmatpush1.bf16.msra.mxu0 0
        %9234 = vmatprep.subr.bf16.mxu0 0
        %9235 = vmatpush1.bf16.msra.mxu0 0
        %9236 = vmatprep.subr.bf16.mxu0 0
        %9237 = vmatpush1.bf16.msra.mxu0 0
        %9238 = vmatprep.subr.bf16.mxu0 0
        %9239 = vmatpush1.bf16.msra.mxu0 0
        %9240 = vmatprep.mubr.bf16.mxu0 0
        %9241 = vmatmul.mubr.bf16.gmra.mrb[0].mxu0 %v8966
        %v9242 = vpop.f32.mrb[0].mxu0
        %v9243 = vadd.f32 0.0, %v9242
        %v9244 = vpop.f32.mrb[0].mxu0
        %v9245 = vadd.f32 0.0, %v9244
        %v9246 = vpop.f32.mrb[0].mxu0
        %v9247 = vpop.f32.mrb[0].mxu0
        %9248 = vdwg.mxu0
        %9249 = vmatprep.subr.bf16.mxu0 %v9115
        %9250 = vmatpush1.bf16.msra.mxu0 %v9114
        %9251 = vmatprep.subr.bf16.mxu0 %v9121
        %9252 = vmatpush1.bf16.msra.mxu0 %v9120
        %9253 = vmatprep.subr.bf16.mxu0 %v9127
        %9254 = vmatpush1.bf16.msra.mxu0 %v9126
        %9255 = vmatprep.subr.bf16.mxu0 %v9133
        %9256 = vmatpush1.bf16.msra.mxu0 %v9132
        %9257 = vmatprep.subr.bf16.mxu0 %v9139
        %9258 = vmatpush1.bf16.msra.mxu0 %v9138
        %9259 = vmatprep.subr.bf16.mxu0 %v9145
        %9260 = vmatpush1.bf16.msra.mxu0 %v9144
        %9261 = vmatprep.subr.bf16.mxu0 %v9151
        %9262 = vmatpush1.bf16.msra.mxu0 %v9150
        %9263 = vmatprep.subr.bf16.mxu0 %v9157
        %9264 = vmatpush1.bf16.msra.mxu0 %v9156
        %9265 = vmatprep.subr.bf16.mxu0 0
        %9266 = vmatpush1.bf16.msra.mxu0 0
        %9267 = vmatprep.subr.bf16.mxu0 0
        %9268 = vmatpush1.bf16.msra.mxu0 0
        %9269 = vmatprep.subr.bf16.mxu0 0
        %9270 = vmatpush1.bf16.msra.mxu0 0
        %9271 = vmatprep.subr.bf16.mxu0 0
        %9272 = vmatpush1.bf16.msra.mxu0 0
        %9273 = vmatprep.subr.bf16.mxu0 0
        %9274 = vmatpush1.bf16.msra.mxu0 0
        %9275 = vmatprep.subr.bf16.mxu0 0
        %9276 = vmatpush1.bf16.msra.mxu0 0
        %9277 = vmatprep.subr.bf16.mxu0 0
        %9278 = vmatpush1.bf16.msra.mxu0 0
        %9279 = vmatprep.subr.bf16.mxu0 0
        %9280 = vmatpush1.bf16.msra.mxu0 0
        %9281 = vmatprep.mubr.bf16.mxu0 0
        %9282 = vmatmul.mubr.bf16.gmra.mrb[0].mxu0 %v8966
        %v9283 = vpop.f32.mrb[0].mxu0
        %v9284 = vadd.f32 0.0, %v9283
        %v9285 = vpop.f32.mrb[0].mxu0
        %v9286 = vadd.f32 0.0, %v9285
        %v9287 = vpop.f32.mrb[0].mxu0
        %v9288 = vpop.f32.mrb[0].mxu0
        %9289 = vdwg.mxu0
        %9290 = vmatprep.subr.bf16.mxu0 %v9117
        %9291 = vmatpush1.bf16.msra.mxu0 %v9116
        %9292 = vmatprep.subr.bf16.mxu0 %v9123
        %9293 = vmatpush1.bf16.msra.mxu0 %v9122
        %9294 = vmatprep.subr.bf16.mxu0 %v9129
        %9295 = vmatpush1.bf16.msra.mxu0 %v9128
        %9296 = vmatprep.subr.bf16.mxu0 %v9135
        %9297 = vmatpush1.bf16.msra.mxu0 %v9134
        %9298 = vmatprep.subr.bf16.mxu0 %v9141
        %9299 = vmatpush1.bf16.msra.mxu0 %v9140
        %9300 = vmatprep.subr.bf16.mxu0 %v9147
        %9301 = vmatpush1.bf16.msra.mxu0 %v9146
        %9302 = vmatprep.subr.bf16.mxu0 %v9153
        %9303 = vmatpush1.bf16.msra.mxu0 %v9152
        %9304 = vmatprep.subr.bf16.mxu0 %v9159
        %9305 = vmatpush1.bf16.msra.mxu0 %v9158
        %9306 = vmatprep.subr.bf16.mxu0 0
        %9307 = vmatpush1.bf16.msra.mxu0 0
        %9308 = vmatprep.subr.bf16.mxu0 0
        %9309 = vmatpush1.bf16.msra.mxu0 0
        %9310 = vmatprep.subr.bf16.mxu0 0
        %9311 = vmatpush1.bf16.msra.mxu0 0
        %9312 = vmatprep.subr.bf16.mxu0 0
        %9313 = vmatpush1.bf16.msra.mxu0 0
        %9314 = vmatprep.subr.bf16.mxu0 0
        %9315 = vmatpush1.bf16.msra.mxu0 0
        %9316 = vmatprep.subr.bf16.mxu0 0
        %9317 = vmatpush1.bf16.msra.mxu0 0
        %9318 = vmatprep.subr.bf16.mxu0 0
        %9319 = vmatpush1.bf16.msra.mxu0 0
        %9320 = vmatprep.subr.bf16.mxu0 0
        %9321 = vmatpush1.bf16.msra.mxu0 0
        %9322 = vmatprep.mubr.bf16.mxu0 0
        %9323 = vmatmul.mubr.bf16.gmra.mrb[0].mxu0 %v8966
        %v9324 = vpop.f32.mrb[0].mxu0
        %v9325 = vadd.f32 0.0, %v9324
        %v9326 = vpop.f32.mrb[0].mxu0
        %v9327 = vadd.f32 0.0, %v9326
        %v9328 = vpop.f32.mrb[0].mxu0
        %v9329 = vpop.f32.mrb[0].mxu0
        %9330 = vdwg.mxu0
        %v9331 = vadd.f32 %v8911, %v9243
        %v9332 = vadd.f32 %v8912, %v9245
        %v9333 = vadd.f32 %v8913, %v9284
        %v9334 = vadd.f32 %v8914, %v9286
        %v9335 = vadd.f32 %v8915, %v9325
        %v9336 = vadd.f32 %v8916, %v9327
        %s9337 = scalar_lea.vmem [#allocation10], 7680
        %v9338 = vld [vmem:[%s9337] sm:$0xff]
        %v9339 = vld [vmem:[%s9337 + $0x8] sm:$0xff]
        %v9340 = vld [vmem:[%s9337 + $0x10] sm:$0xff]
        %v9341 = vld [vmem:[%s9337 + $0x18] sm:$0xff]
        %v9342 = vld [vmem:[%s9337 + $0x20] sm:$0xff]
        %v9343 = vld [vmem:[%s9337 + $0x28] sm:$0xff]
        %v9344 = vld [vmem:[%s9337 + $0x30] sm:$0xff]
        %v9345 = vld [vmem:[%s9337 + $0x38] sm:$0xff]
        %v9346 = vld [vmem:[%s9337 + $0x40] sm:$0xff]
        %v9347 = vld [vmem:[%s9337 + $0x48] sm:$0xff]
        %v9348 = vld [vmem:[%s9337 + $0x50] sm:$0xff]
        %v9349 = vld [vmem:[%s9337 + $0x58] sm:$0xff]
        %v9350 = vld [vmem:[%s9337 + $0x60] sm:$0xff]
        %v9351 = vld [vmem:[%s9337 + $0x68] sm:$0xff]
        %v9352 = vld [vmem:[%s9337 + $0x70] sm:$0xff]
        %v9353 = vld [vmem:[%s9337 + $0x78] sm:$0xff]
        %v9354 = vld [vmem:[%s9337 + $0x80] sm:$0xff]
        %v9355 = vld [vmem:[%s9337 + $0x88] sm:$0xff]
        %v9356 = vld [vmem:[%s9337 + $0x90] sm:$0xff]
        %v9357 = vld [vmem:[%s9337 + $0x98] sm:$0xff]
        %v9358 = vld [vmem:[%s9337 + $0xa0] sm:$0xff]
        %v9359 = vld [vmem:[%s9337 + $0xa8] sm:$0xff]
        %v9360 = vld [vmem:[%s9337 + $0xb0] sm:$0xff]
        %v9361 = vld [vmem:[%s9337 + $0xb8] sm:$0xff]
        %v9362 = vld [vmem:[%s9337 + $0xc0] sm:$0xff]
        %v9363 = vld [vmem:[%s9337 + $0xc8] sm:$0xff]
        %v9364 = vld [vmem:[%s9337 + $0xd0] sm:$0xff]
        %v9365 = vld [vmem:[%s9337 + $0xd8] sm:$0xff]
        %v9366 = vld [vmem:[%s9337 + $0xe0] sm:$0xff]
        %v9367 = vld [vmem:[%s9337 + $0xe8] sm:$0xff]
        %v9368 = vld [vmem:[%s9337 + $0xf0] sm:$0xff]
        %v9369 = vld [vmem:[%s9337 + $0xf8] sm:$0xff]
        %v9370 = vld [vmem:[%s9337 + $0x100] sm:$0xff]
        %v9371 = vld [vmem:[%s9337 + $0x108] sm:$0xff]
        %v9372 = vld [vmem:[%s9337 + $0x110] sm:$0xff]
        %v9373 = vld [vmem:[%s9337 + $0x118] sm:$0xff]
        %v9374 = vld [vmem:[%s9337 + $0x120] sm:$0xff]
        %v9375 = vld [vmem:[%s9337 + $0x128] sm:$0xff]
        %v9376 = vld [vmem:[%s9337 + $0x130] sm:$0xff]
        %v9377 = vld [vmem:[%s9337 + $0x138] sm:$0xff]
        %v9378 = vld [vmem:[%s9337 + $0x140] sm:$0xff]
        %v9379 = vld [vmem:[%s9337 + $0x148] sm:$0xff]
        %v9380 = vld [vmem:[%s9337 + $0x150] sm:$0xff]
        %v9381 = vld [vmem:[%s9337 + $0x158] sm:$0xff]
        %v9382 = vld [vmem:[%s9337 + $0x160] sm:$0xff]
        %v9383 = vld [vmem:[%s9337 + $0x168] sm:$0xff]
        %v9384 = vld [vmem:[%s9337 + $0x170] sm:$0xff]
        %v9385 = vld [vmem:[%s9337 + $0x178] sm:$0xff]
        %v9386 = vrot.slane %v7655, 2
        %v9436 = vunpack.c.l.b16 %v9338
        %v9437 = vunpack.c.h.b16 %v9338
        %v9438 = vunpack.c.l.b16 %v9339
        %v9439 = vunpack.c.h.b16 %v9339
        %v9440 = vunpack.c.l.b16 %v9340
        %v9441 = vunpack.c.h.b16 %v9340
        %v9442 = vunpack.c.l.b16 %v9341
        %v9443 = vunpack.c.h.b16 %v9341
        %v9444 = vunpack.c.l.b16 %v9342
        %v9445 = vunpack.c.h.b16 %v9342
        %v9446 = vunpack.c.l.b16 %v9343
        %v9447 = vunpack.c.h.b16 %v9343
        %v9448 = vunpack.c.l.b16 %v9344
        %v9449 = vunpack.c.h.b16 %v9344
        %v9450 = vunpack.c.l.b16 %v9345
        %v9451 = vunpack.c.h.b16 %v9345
        %v9452 = vunpack.c.l.b16 %v9346
        %v9453 = vunpack.c.h.b16 %v9346
        %v9454 = vunpack.c.l.b16 %v9347
        %v9455 = vunpack.c.h.b16 %v9347
        %v9456 = vunpack.c.l.b16 %v9348
        %v9457 = vunpack.c.h.b16 %v9348
        %v9458 = vunpack.c.l.b16 %v9349
        %v9459 = vunpack.c.h.b16 %v9349
        %v9460 = vunpack.c.l.b16 %v9350
        %v9461 = vunpack.c.h.b16 %v9350
        %v9462 = vunpack.c.l.b16 %v9351
        %v9463 = vunpack.c.h.b16 %v9351
        %v9464 = vunpack.c.l.b16 %v9352
        %v9465 = vunpack.c.h.b16 %v9352
        %v9466 = vunpack.c.l.b16 %v9353
        %v9467 = vunpack.c.h.b16 %v9353
        %v9468 = vunpack.c.l.b16 %v9354
        %v9469 = vunpack.c.h.b16 %v9354
        %v9470 = vunpack.c.l.b16 %v9355
        %v9471 = vunpack.c.h.b16 %v9355
        %v9472 = vunpack.c.l.b16 %v9356
        %v9473 = vunpack.c.h.b16 %v9356
        %v9474 = vunpack.c.l.b16 %v9357
        %v9475 = vunpack.c.h.b16 %v9357
        %v9476 = vunpack.c.l.b16 %v9358
        %v9477 = vunpack.c.h.b16 %v9358
        %v9478 = vunpack.c.l.b16 %v9359
        %v9479 = vunpack.c.h.b16 %v9359
        %v9480 = vunpack.c.l.b16 %v9360
        %v9481 = vunpack.c.h.b16 %v9360
        %v9482 = vunpack.c.l.b16 %v9361
        %v9483 = vunpack.c.h.b16 %v9361
        %v9484 = vunpack.c.l.b16 %v9362
        %v9485 = vunpack.c.h.b16 %v9362
        %v9486 = vunpack.c.l.b16 %v9363
        %v9487 = vunpack.c.h.b16 %v9363
        %v9488 = vunpack.c.l.b16 %v9364
        %v9489 = vunpack.c.h.b16 %v9364
        %v9490 = vunpack.c.l.b16 %v9365
        %v9491 = vunpack.c.h.b16 %v9365
        %v9492 = vunpack.c.l.b16 %v9366
        %v9493 = vunpack.c.h.b16 %v9366
        %v9494 = vunpack.c.l.b16 %v9367
        %v9495 = vunpack.c.h.b16 %v9367
        %v9496 = vunpack.c.l.b16 %v9368
        %v9497 = vunpack.c.h.b16 %v9368
        %v9498 = vunpack.c.l.b16 %v9369
        %v9499 = vunpack.c.h.b16 %v9369
        %v9500 = vunpack.c.l.b16 %v9370
        %v9501 = vunpack.c.h.b16 %v9370
        %v9502 = vunpack.c.l.b16 %v9371
        %v9503 = vunpack.c.h.b16 %v9371
        %v9504 = vunpack.c.l.b16 %v9372
        %v9505 = vunpack.c.h.b16 %v9372
        %v9506 = vunpack.c.l.b16 %v9373
        %v9507 = vunpack.c.h.b16 %v9373
        %v9508 = vunpack.c.l.b16 %v9374
        %v9509 = vunpack.c.h.b16 %v9374
        %v9510 = vunpack.c.l.b16 %v9375
        %v9511 = vunpack.c.h.b16 %v9375
        %v9512 = vunpack.c.l.b16 %v9376
        %v9513 = vunpack.c.h.b16 %v9376
        %v9514 = vunpack.c.l.b16 %v9377
        %v9515 = vunpack.c.h.b16 %v9377
        %v9516 = vunpack.c.l.b16 %v9378
        %v9517 = vunpack.c.h.b16 %v9378
        %v9518 = vunpack.c.l.b16 %v9379
        %v9519 = vunpack.c.h.b16 %v9379
        %v9520 = vunpack.c.l.b16 %v9380
        %v9521 = vunpack.c.h.b16 %v9380
        %v9522 = vunpack.c.l.b16 %v9381
        %v9523 = vunpack.c.h.b16 %v9381
        %v9524 = vunpack.c.l.b16 %v9382
        %v9525 = vunpack.c.h.b16 %v9382
        %v9526 = vunpack.c.l.b16 %v9383
        %v9527 = vunpack.c.h.b16 %v9383
        %v9528 = vunpack.c.l.b16 %v9384
        %v9529 = vunpack.c.h.b16 %v9384
        %v9530 = vunpack.c.l.b16 %v9385
        %v9531 = vunpack.c.h.b16 %v9385
        %v9532 = vpack.c.b16 %v9442, %v9436
        %v9533 = vpack.c.b16 %v9443, %v9437
        %v9534 = vpack.c.b16 %v9444, %v9438
        %v9535 = vpack.c.b16 %v9445, %v9439
        %v9536 = vpack.c.b16 %v9446, %v9440
        %v9537 = vpack.c.b16 %v9447, %v9441
        %v9538 = vpack.c.b16 %v9454, %v9448
        %v9539 = vpack.c.b16 %v9455, %v9449
        %v9540 = vpack.c.b16 %v9456, %v9450
        %v9541 = vpack.c.b16 %v9457, %v9451
        %v9542 = vpack.c.b16 %v9458, %v9452
        %v9543 = vpack.c.b16 %v9459, %v9453
        %v9544 = vpack.c.b16 %v9466, %v9460
        %v9545 = vpack.c.b16 %v9467, %v9461
        %v9546 = vpack.c.b16 %v9468, %v9462
        %v9547 = vpack.c.b16 %v9469, %v9463
        %v9548 = vpack.c.b16 %v9470, %v9464
        %v9549 = vpack.c.b16 %v9471, %v9465
        %v9550 = vpack.c.b16 %v9478, %v9472
        %v9551 = vpack.c.b16 %v9479, %v9473
        %v9552 = vpack.c.b16 %v9480, %v9474
        %v9553 = vpack.c.b16 %v9481, %v9475
        %v9554 = vpack.c.b16 %v9482, %v9476
        %v9555 = vpack.c.b16 %v9483, %v9477
        %v9556 = vpack.c.b16 %v9490, %v9484
        %v9557 = vpack.c.b16 %v9491, %v9485
        %v9558 = vpack.c.b16 %v9492, %v9486
        %v9559 = vpack.c.b16 %v9493, %v9487
        %v9560 = vpack.c.b16 %v9494, %v9488
        %v9561 = vpack.c.b16 %v9495, %v9489
        %v9562 = vpack.c.b16 %v9502, %v9496
        %v9563 = vpack.c.b16 %v9503, %v9497
        %v9564 = vpack.c.b16 %v9504, %v9498
        %v9565 = vpack.c.b16 %v9505, %v9499
        %v9566 = vpack.c.b16 %v9506, %v9500
        %v9567 = vpack.c.b16 %v9507, %v9501
        %v9568 = vpack.c.b16 %v9514, %v9508
        %v9569 = vpack.c.b16 %v9515, %v9509
        %v9570 = vpack.c.b16 %v9516, %v9510
        %v9571 = vpack.c.b16 %v9517, %v9511
        %v9572 = vpack.c.b16 %v9518, %v9512
        %v9573 = vpack.c.b16 %v9519, %v9513
        %v9574 = vpack.c.b16 %v9526, %v9520
        %v9575 = vpack.c.b16 %v9527, %v9521
        %v9576 = vpack.c.b16 %v9528, %v9522
        %v9577 = vpack.c.b16 %v9529, %v9523
        %v9578 = vpack.c.b16 %v9530, %v9524
        %v9579 = vpack.c.b16 %v9531, %v9525
        %9628 = vmatprep.subr.bf16.mxu0 %v9533
        %9629 = vmatpush1.bf16.msra.mxu0 %v9532
        %9630 = vmatprep.subr.bf16.mxu0 %v9539
        %9631 = vmatpush1.bf16.msra.mxu0 %v9538
        %9632 = vmatprep.subr.bf16.mxu0 %v9545
        %9633 = vmatpush1.bf16.msra.mxu0 %v9544
        %9634 = vmatprep.subr.bf16.mxu0 %v9551
        %9635 = vmatpush1.bf16.msra.mxu0 %v9550
        %9636 = vmatprep.subr.bf16.mxu0 %v9557
        %9637 = vmatpush1.bf16.msra.mxu0 %v9556
        %9638 = vmatprep.subr.bf16.mxu0 %v9563
        %9639 = vmatpush1.bf16.msra.mxu0 %v9562
        %9640 = vmatprep.subr.bf16.mxu0 %v9569
        %9641 = vmatpush1.bf16.msra.mxu0 %v9568
        %9642 = vmatprep.subr.bf16.mxu0 %v9575
        %9643 = vmatpush1.bf16.msra.mxu0 %v9574
        %9644 = vmatprep.subr.bf16.mxu0 0
        %9645 = vmatpush1.bf16.msra.mxu0 0
        %9646 = vmatprep.subr.bf16.mxu0 0
        %9647 = vmatpush1.bf16.msra.mxu0 0
        %9648 = vmatprep.subr.bf16.mxu0 0
        %9649 = vmatpush1.bf16.msra.mxu0 0
        %9650 = vmatprep.subr.bf16.mxu0 0
        %9651 = vmatpush1.bf16.msra.mxu0 0
        %9652 = vmatprep.subr.bf16.mxu0 0
        %9653 = vmatpush1.bf16.msra.mxu0 0
        %9654 = vmatprep.subr.bf16.mxu0 0
        %9655 = vmatpush1.bf16.msra.mxu0 0
        %9656 = vmatprep.subr.bf16.mxu0 0
        %9657 = vmatpush1.bf16.msra.mxu0 0
        %9658 = vmatprep.subr.bf16.mxu0 0
        %9659 = vmatpush1.bf16.msra.mxu0 0
        %9660 = vmatprep.mubr.bf16.mxu0 0
        %9661 = vmatmul.mubr.bf16.gmra.mrb[0].mxu0 %v9386
        %v9662 = vpop.f32.mrb[0].mxu0
        %v9663 = vadd.f32 0.0, %v9662
        %v9664 = vpop.f32.mrb[0].mxu0
        %v9665 = vadd.f32 0.0, %v9664
        %v9666 = vpop.f32.mrb[0].mxu0
        %v9667 = vpop.f32.mrb[0].mxu0
        %9668 = vdwg.mxu0
        %9669 = vmatprep.subr.bf16.mxu0 %v9535
        %9670 = vmatpush1.bf16.msra.mxu0 %v9534
        %9671 = vmatprep.subr.bf16.mxu0 %v9541
        %9672 = vmatpush1.bf16.msra.mxu0 %v9540
        %9673 = vmatprep.subr.bf16.mxu0 %v9547
        %9674 = vmatpush1.bf16.msra.mxu0 %v9546
        %9675 = vmatprep.subr.bf16.mxu0 %v9553
        %9676 = vmatpush1.bf16.msra.mxu0 %v9552
        %9677 = vmatprep.subr.bf16.mxu0 %v9559
        %9678 = vmatpush1.bf16.msra.mxu0 %v9558
        %9679 = vmatprep.subr.bf16.mxu0 %v9565
        %9680 = vmatpush1.bf16.msra.mxu0 %v9564
        %9681 = vmatprep.subr.bf16.mxu0 %v9571
        %9682 = vmatpush1.bf16.msra.mxu0 %v9570
        %9683 = vmatprep.subr.bf16.mxu0 %v9577
        %9684 = vmatpush1.bf16.msra.mxu0 %v9576
        %9685 = vmatprep.subr.bf16.mxu0 0
        %9686 = vmatpush1.bf16.msra.mxu0 0
        %9687 = vmatprep.subr.bf16.mxu0 0
        %9688 = vmatpush1.bf16.msra.mxu0 0
        %9689 = vmatprep.subr.bf16.mxu0 0
        %9690 = vmatpush1.bf16.msra.mxu0 0
        %9691 = vmatprep.subr.bf16.mxu0 0
        %9692 = vmatpush1.bf16.msra.mxu0 0
        %9693 = vmatprep.subr.bf16.mxu0 0
        %9694 = vmatpush1.bf16.msra.mxu0 0
        %9695 = vmatprep.subr.bf16.mxu0 0
        %9696 = vmatpush1.bf16.msra.mxu0 0
        %9697 = vmatprep.subr.bf16.mxu0 0
        %9698 = vmatpush1.bf16.msra.mxu0 0
        %9699 = vmatprep.subr.bf16.mxu0 0
        %9700 = vmatpush1.bf16.msra.mxu0 0
        %9701 = vmatprep.mubr.bf16.mxu0 0
        %9702 = vmatmul.mubr.bf16.gmra.mrb[0].mxu0 %v9386
        %v9703 = vpop.f32.mrb[0].mxu0
        %v9704 = vadd.f32 0.0, %v9703
        %v9705 = vpop.f32.mrb[0].mxu0
        %v9706 = vadd.f32 0.0, %v9705
        %v9707 = vpop.f32.mrb[0].mxu0
        %v9708 = vpop.f32.mrb[0].mxu0
        %9709 = vdwg.mxu0
        %9710 = vmatprep.subr.bf16.mxu0 %v9537
        %9711 = vmatpush1.bf16.msra.mxu0 %v9536
        %9712 = vmatprep.subr.bf16.mxu0 %v9543
        %9713 = vmatpush1.bf16.msra.mxu0 %v9542
        %9714 = vmatprep.subr.bf16.mxu0 %v9549
        %9715 = vmatpush1.bf16.msra.mxu0 %v9548
        %9716 = vmatprep.subr.bf16.mxu0 %v9555
        %9717 = vmatpush1.bf16.msra.mxu0 %v9554
        %9718 = vmatprep.subr.bf16.mxu0 %v9561
        %9719 = vmatpush1.bf16.msra.mxu0 %v9560
        %9720 = vmatprep.subr.bf16.mxu0 %v9567
        %9721 = vmatpush1.bf16.msra.mxu0 %v9566
        %9722 = vmatprep.subr.bf16.mxu0 %v9573
        %9723 = vmatpush1.bf16.msra.mxu0 %v9572
        %9724 = vmatprep.subr.bf16.mxu0 %v9579
        %9725 = vmatpush1.bf16.msra.mxu0 %v9578
        %9726 = vmatprep.subr.bf16.mxu0 0
        %9727 = vmatpush1.bf16.msra.mxu0 0
        %9728 = vmatprep.subr.bf16.mxu0 0
        %9729 = vmatpush1.bf16.msra.mxu0 0
        %9730 = vmatprep.subr.bf16.mxu0 0
        %9731 = vmatpush1.bf16.msra.mxu0 0
        %9732 = vmatprep.subr.bf16.mxu0 0
        %9733 = vmatpush1.bf16.msra.mxu0 0
        %9734 = vmatprep.subr.bf16.mxu0 0
        %9735 = vmatpush1.bf16.msra.mxu0 0
        %9736 = vmatprep.subr.bf16.mxu0 0
        %9737 = vmatpush1.bf16.msra.mxu0 0
        %9738 = vmatprep.subr.bf16.mxu0 0
        %9739 = vmatpush1.bf16.msra.mxu0 0
        %9740 = vmatprep.subr.bf16.mxu0 0
        %9741 = vmatpush1.bf16.msra.mxu0 0
        %9742 = vmatprep.mubr.bf16.mxu0 0
        %9743 = vmatmul.mubr.bf16.gmra.mrb[0].mxu0 %v9386
        %v9744 = vpop.f32.mrb[0].mxu0
        %v9745 = vadd.f32 0.0, %v9744
        %v9746 = vpop.f32.mrb[0].mxu0
        %v9747 = vadd.f32 0.0, %v9746
        %v9748 = vpop.f32.mrb[0].mxu0
        %v9749 = vpop.f32.mrb[0].mxu0
        %9750 = vdwg.mxu0
        %v9751 = vadd.f32 %v9331, %v9663
        %v9752 = vadd.f32 %v9332, %v9665
        %v9753 = vadd.f32 %v9333, %v9704
        %v9754 = vadd.f32 %v9334, %v9706
        %v9755 = vadd.f32 %v9335, %v9745
        %v9756 = vadd.f32 %v9336, %v9747
        %s9757 = scalar_lea.vmem [#allocation10], 8064
        %v9758 = vld [vmem:[%s9757] sm:$0xff]
        %v9759 = vld [vmem:[%s9757 + $0x8] sm:$0xff]
        %v9760 = vld [vmem:[%s9757 + $0x10] sm:$0xff]
        %v9761 = vld [vmem:[%s9757 + $0x18] sm:$0xff]
        %v9762 = vld [vmem:[%s9757 + $0x20] sm:$0xff]
        %v9763 = vld [vmem:[%s9757 + $0x28] sm:$0xff]
        %v9764 = vld [vmem:[%s9757 + $0x30] sm:$0xff]
        %v9765 = vld [vmem:[%s9757 + $0x38] sm:$0xff]
        %v9766 = vld [vmem:[%s9757 + $0x40] sm:$0xff]
        %v9767 = vld [vmem:[%s9757 + $0x48] sm:$0xff]
        %v9768 = vld [vmem:[%s9757 + $0x50] sm:$0xff]
        %v9769 = vld [vmem:[%s9757 + $0x58] sm:$0xff]
        %v9770 = vld [vmem:[%s9757 + $0x60] sm:$0xff]
        %v9771 = vld [vmem:[%s9757 + $0x68] sm:$0xff]
        %v9772 = vld [vmem:[%s9757 + $0x70] sm:$0xff]
        %v9773 = vld [vmem:[%s9757 + $0x78] sm:$0xff]
        %v9774 = vld [vmem:[%s9757 + $0x80] sm:$0xff]
        %v9775 = vld [vmem:[%s9757 + $0x88] sm:$0xff]
        %v9776 = vld [vmem:[%s9757 + $0x90] sm:$0xff]
        %v9777 = vld [vmem:[%s9757 + $0x98] sm:$0xff]
        %v9778 = vld [vmem:[%s9757 + $0xa0] sm:$0xff]
        %v9779 = vld [vmem:[%s9757 + $0xa8] sm:$0xff]
        %v9780 = vld [vmem:[%s9757 + $0xb0] sm:$0xff]
        %v9781 = vld [vmem:[%s9757 + $0xb8] sm:$0xff]
        %v9782 = vld [vmem:[%s9757 + $0xc0] sm:$0xff]
        %v9783 = vld [vmem:[%s9757 + $0xc8] sm:$0xff]
        %v9784 = vld [vmem:[%s9757 + $0xd0] sm:$0xff]
        %v9785 = vld [vmem:[%s9757 + $0xd8] sm:$0xff]
        %v9786 = vld [vmem:[%s9757 + $0xe0] sm:$0xff]
        %v9787 = vld [vmem:[%s9757 + $0xe8] sm:$0xff]
        %v9788 = vld [vmem:[%s9757 + $0xf0] sm:$0xff]
        %v9789 = vld [vmem:[%s9757 + $0xf8] sm:$0xff]
        %v9790 = vld [vmem:[%s9757 + $0x100] sm:$0xff]
        %v9791 = vld [vmem:[%s9757 + $0x108] sm:$0xff]
        %v9792 = vld [vmem:[%s9757 + $0x110] sm:$0xff]
        %v9793 = vld [vmem:[%s9757 + $0x118] sm:$0xff]
        %v9794 = vld [vmem:[%s9757 + $0x120] sm:$0xff]
        %v9795 = vld [vmem:[%s9757 + $0x128] sm:$0xff]
        %v9796 = vld [vmem:[%s9757 + $0x130] sm:$0xff]
        %v9797 = vld [vmem:[%s9757 + $0x138] sm:$0xff]
        %v9798 = vld [vmem:[%s9757 + $0x140] sm:$0xff]
        %v9799 = vld [vmem:[%s9757 + $0x148] sm:$0xff]
        %v9800 = vld [vmem:[%s9757 + $0x150] sm:$0xff]
        %v9801 = vld [vmem:[%s9757 + $0x158] sm:$0xff]
        %v9802 = vld [vmem:[%s9757 + $0x160] sm:$0xff]
        %v9803 = vld [vmem:[%s9757 + $0x168] sm:$0xff]
        %v9804 = vld [vmem:[%s9757 + $0x170] sm:$0xff]
        %v9805 = vld [vmem:[%s9757 + $0x178] sm:$0xff]
        %v9806 = vrot.slane %v8124, 2
        %v9856 = vunpack.c.l.b16 %v9758
        %v9857 = vunpack.c.h.b16 %v9758
        %v9858 = vunpack.c.l.b16 %v9759
        %v9859 = vunpack.c.h.b16 %v9759
        %v9860 = vunpack.c.l.b16 %v9760
        %v9861 = vunpack.c.h.b16 %v9760
        %v9862 = vunpack.c.l.b16 %v9761
        %v9863 = vunpack.c.h.b16 %v9761
        %v9864 = vunpack.c.l.b16 %v9762
        %v9865 = vunpack.c.h.b16 %v9762
        %v9866 = vunpack.c.l.b16 %v9763
        %v9867 = vunpack.c.h.b16 %v9763
        %v9868 = vunpack.c.l.b16 %v9764
        %v9869 = vunpack.c.h.b16 %v9764
        %v9870 = vunpack.c.l.b16 %v9765
        %v9871 = vunpack.c.h.b16 %v9765
        %v9872 = vunpack.c.l.b16 %v9766
        %v9873 = vunpack.c.h.b16 %v9766
        %v9874 = vunpack.c.l.b16 %v9767
        %v9875 = vunpack.c.h.b16 %v9767
        %v9876 = vunpack.c.l.b16 %v9768
        %v9877 = vunpack.c.h.b16 %v9768
        %v9878 = vunpack.c.l.b16 %v9769
        %v9879 = vunpack.c.h.b16 %v9769
        %v9880 = vunpack.c.l.b16 %v9770
        %v9881 = vunpack.c.h.b16 %v9770
        %v9882 = vunpack.c.l.b16 %v9771
        %v9883 = vunpack.c.h.b16 %v9771
        %v9884 = vunpack.c.l.b16 %v9772
        %v9885 = vunpack.c.h.b16 %v9772
        %v9886 = vunpack.c.l.b16 %v9773
        %v9887 = vunpack.c.h.b16 %v9773
        %v9888 = vunpack.c.l.b16 %v9774
        %v9889 = vunpack.c.h.b16 %v9774
        %v9890 = vunpack.c.l.b16 %v9775
        %v9891 = vunpack.c.h.b16 %v9775
        %v9892 = vunpack.c.l.b16 %v9776
        %v9893 = vunpack.c.h.b16 %v9776
        %v9894 = vunpack.c.l.b16 %v9777
        %v9895 = vunpack.c.h.b16 %v9777
        %v9896 = vunpack.c.l.b16 %v9778
        %v9897 = vunpack.c.h.b16 %v9778
        %v9898 = vunpack.c.l.b16 %v9779
        %v9899 = vunpack.c.h.b16 %v9779
        %v9900 = vunpack.c.l.b16 %v9780
        %v9901 = vunpack.c.h.b16 %v9780
        %v9902 = vunpack.c.l.b16 %v9781
        %v9903 = vunpack.c.h.b16 %v9781
        %v9904 = vunpack.c.l.b16 %v9782
        %v9905 = vunpack.c.h.b16 %v9782
        %v9906 = vunpack.c.l.b16 %v9783
        %v9907 = vunpack.c.h.b16 %v9783
        %v9908 = vunpack.c.l.b16 %v9784
        %v9909 = vunpack.c.h.b16 %v9784
        %v9910 = vunpack.c.l.b16 %v9785
        %v9911 = vunpack.c.h.b16 %v9785
        %v9912 = vunpack.c.l.b16 %v9786
        %v9913 = vunpack.c.h.b16 %v9786
        %v9914 = vunpack.c.l.b16 %v9787
        %v9915 = vunpack.c.h.b16 %v9787
        %v9916 = vunpack.c.l.b16 %v9788
        %v9917 = vunpack.c.h.b16 %v9788
        %v9918 = vunpack.c.l.b16 %v9789
        %v9919 = vunpack.c.h.b16 %v9789
        %v9920 = vunpack.c.l.b16 %v9790
        %v9921 = vunpack.c.h.b16 %v9790
        %v9922 = vunpack.c.l.b16 %v9791
        %v9923 = vunpack.c.h.b16 %v9791
        %v9924 = vunpack.c.l.b16 %v9792
        %v9925 = vunpack.c.h.b16 %v9792
        %v9926 = vunpack.c.l.b16 %v9793
        %v9927 = vunpack.c.h.b16 %v9793
        %v9928 = vunpack.c.l.b16 %v9794
        %v9929 = vunpack.c.h.b16 %v9794
        %v9930 = vunpack.c.l.b16 %v9795
        %v9931 = vunpack.c.h.b16 %v9795
        %v9932 = vunpack.c.l.b16 %v9796
        %v9933 = vunpack.c.h.b16 %v9796
        %v9934 = vunpack.c.l.b16 %v9797
        %v9935 = vunpack.c.h.b16 %v9797
        %v9936 = vunpack.c.l.b16 %v9798
        %v9937 = vunpack.c.h.b16 %v9798
        %v9938 = vunpack.c.l.b16 %v9799
        %v9939 = vunpack.c.h.b16 %v9799
        %v9940 = vunpack.c.l.b16 %v9800
        %v9941 = vunpack.c.h.b16 %v9800
        %v9942 = vunpack.c.l.b16 %v9801
        %v9943 = vunpack.c.h.b16 %v9801
        %v9944 = vunpack.c.l.b16 %v9802
        %v9945 = vunpack.c.h.b16 %v9802
        %v9946 = vunpack.c.l.b16 %v9803
        %v9947 = vunpack.c.h.b16 %v9803
        %v9948 = vunpack.c.l.b16 %v9804
        %v9949 = vunpack.c.h.b16 %v9804
        %v9950 = vunpack.c.l.b16 %v9805
        %v9951 = vunpack.c.h.b16 %v9805
        %v9952 = vpack.c.b16 %v9862, %v9856
        %v9953 = vpack.c.b16 %v9863, %v9857
        %v9954 = vpack.c.b16 %v9864, %v9858
        %v9955 = vpack.c.b16 %v9865, %v9859
        %v9956 = vpack.c.b16 %v9866, %v9860
        %v9957 = vpack.c.b16 %v9867, %v9861
        %v9958 = vpack.c.b16 %v9874, %v9868
        %v9959 = vpack.c.b16 %v9875, %v9869
        %v9960 = vpack.c.b16 %v9876, %v9870
        %v9961 = vpack.c.b16 %v9877, %v9871
        %v9962 = vpack.c.b16 %v9878, %v9872
        %v9963 = vpack.c.b16 %v9879, %v9873
        %v9964 = vpack.c.b16 %v9886, %v9880
        %v9965 = vpack.c.b16 %v9887, %v9881
        %v9966 = vpack.c.b16 %v9888, %v9882
        %v9967 = vpack.c.b16 %v9889, %v9883
        %v9968 = vpack.c.b16 %v9890, %v9884
        %v9969 = vpack.c.b16 %v9891, %v9885
        %v9970 = vpack.c.b16 %v9898, %v9892
        %v9971 = vpack.c.b16 %v9899, %v9893
        %v9972 = vpack.c.b16 %v9900, %v9894
        %v9973 = vpack.c.b16 %v9901, %v9895
        %v9974 = vpack.c.b16 %v9902, %v9896
        %v9975 = vpack.c.b16 %v9903, %v9897
        %v9976 = vpack.c.b16 %v9910, %v9904
        %v9977 = vpack.c.b16 %v9911, %v9905
        %v9978 = vpack.c.b16 %v9912, %v9906
        %v9979 = vpack.c.b16 %v9913, %v9907
        %v9980 = vpack.c.b16 %v9914, %v9908
        %v9981 = vpack.c.b16 %v9915, %v9909
        %v9982 = vpack.c.b16 %v9922, %v9916
        %v9983 = vpack.c.b16 %v9923, %v9917
        %v9984 = vpack.c.b16 %v9924, %v9918
        %v9985 = vpack.c.b16 %v9925, %v9919
        %v9986 = vpack.c.b16 %v9926, %v9920
        %v9987 = vpack.c.b16 %v9927, %v9921
        %v9988 = vpack.c.b16 %v9934, %v9928
        %v9989 = vpack.c.b16 %v9935, %v9929
        %v9990 = vpack.c.b16 %v9936, %v9930
        %v9991 = vpack.c.b16 %v9937, %v9931
        %v9992 = vpack.c.b16 %v9938, %v9932
        %v9993 = vpack.c.b16 %v9939, %v9933
        %v9994 = vpack.c.b16 %v9946, %v9940
        %v9995 = vpack.c.b16 %v9947, %v9941
        %v9996 = vpack.c.b16 %v9948, %v9942
        %v9997 = vpack.c.b16 %v9949, %v9943
        %v9998 = vpack.c.b16 %v9950, %v9944
        %v9999 = vpack.c.b16 %v9951, %v9945
        %10048 = vmatprep.subr.bf16.mxu0 %v9953
        %10049 = vmatpush1.bf16.msra.mxu0 %v9952
        %10050 = vmatprep.subr.bf16.mxu0 %v9959
        %10051 = vmatpush1.bf16.msra.mxu0 %v9958
        %10052 = vmatprep.subr.bf16.mxu0 %v9965
        %10053 = vmatpush1.bf16.msra.mxu0 %v9964
        %10054 = vmatprep.subr.bf16.mxu0 %v9971
        %10055 = vmatpush1.bf16.msra.mxu0 %v9970
        %10056 = vmatprep.subr.bf16.mxu0 %v9977
        %10057 = vmatpush1.bf16.msra.mxu0 %v9976
        %10058 = vmatprep.subr.bf16.mxu0 %v9983
        %10059 = vmatpush1.bf16.msra.mxu0 %v9982
        %10060 = vmatprep.subr.bf16.mxu0 %v9989
        %10061 = vmatpush1.bf16.msra.mxu0 %v9988
        %10062 = vmatprep.subr.bf16.mxu0 %v9995
        %10063 = vmatpush1.bf16.msra.mxu0 %v9994
        %10064 = vmatprep.subr.bf16.mxu0 0
        %10065 = vmatpush1.bf16.msra.mxu0 0
        %10066 = vmatprep.subr.bf16.mxu0 0
        %10067 = vmatpush1.bf16.msra.mxu0 0
        %10068 = vmatprep.subr.bf16.mxu0 0
        %10069 = vmatpush1.bf16.msra.mxu0 0
        %10070 = vmatprep.subr.bf16.mxu0 0
        %10071 = vmatpush1.bf16.msra.mxu0 0
        %10072 = vmatprep.subr.bf16.mxu0 0
        %10073 = vmatpush1.bf16.msra.mxu0 0
        %10074 = vmatprep.subr.bf16.mxu0 0
        %10075 = vmatpush1.bf16.msra.mxu0 0
        %10076 = vmatprep.subr.bf16.mxu0 0
        %10077 = vmatpush1.bf16.msra.mxu0 0
        %10078 = vmatprep.subr.bf16.mxu0 0
        %10079 = vmatpush1.bf16.msra.mxu0 0
        %10080 = vmatprep.mubr.bf16.mxu0 0
        %10081 = vmatmul.mubr.bf16.gmra.mrb[0].mxu0 %v9806
        %v10082 = vpop.f32.mrb[0].mxu0
        %v10083 = vadd.f32 0.0, %v10082
        %v10084 = vpop.f32.mrb[0].mxu0
        %v10085 = vadd.f32 0.0, %v10084
        %v10086 = vpop.f32.mrb[0].mxu0
        %v10087 = vpop.f32.mrb[0].mxu0
        %10088 = vdwg.mxu0
        %10089 = vmatprep.subr.bf16.mxu0 %v9955
        %10090 = vmatpush1.bf16.msra.mxu0 %v9954
        %10091 = vmatprep.subr.bf16.mxu0 %v9961
        %10092 = vmatpush1.bf16.msra.mxu0 %v9960
        %10093 = vmatprep.subr.bf16.mxu0 %v9967
        %10094 = vmatpush1.bf16.msra.mxu0 %v9966
        %10095 = vmatprep.subr.bf16.mxu0 %v9973
        %10096 = vmatpush1.bf16.msra.mxu0 %v9972
        %10097 = vmatprep.subr.bf16.mxu0 %v9979
        %10098 = vmatpush1.bf16.msra.mxu0 %v9978
        %10099 = vmatprep.subr.bf16.mxu0 %v9985
        %10100 = vmatpush1.bf16.msra.mxu0 %v9984
        %10101 = vmatprep.subr.bf16.mxu0 %v9991
        %10102 = vmatpush1.bf16.msra.mxu0 %v9990
        %10103 = vmatprep.subr.bf16.mxu0 %v9997
        %10104 = vmatpush1.bf16.msra.mxu0 %v9996
        %10105 = vmatprep.subr.bf16.mxu0 0
        %10106 = vmatpush1.bf16.msra.mxu0 0
        %10107 = vmatprep.subr.bf16.mxu0 0
        %10108 = vmatpush1.bf16.msra.mxu0 0
        %10109 = vmatprep.subr.bf16.mxu0 0
        %10110 = vmatpush1.bf16.msra.mxu0 0
        %10111 = vmatprep.subr.bf16.mxu0 0
        %10112 = vmatpush1.bf16.msra.mxu0 0
        %10113 = vmatprep.subr.bf16.mxu0 0
        %10114 = vmatpush1.bf16.msra.mxu0 0
        %10115 = vmatprep.subr.bf16.mxu0 0
        %10116 = vmatpush1.bf16.msra.mxu0 0
        %10117 = vmatprep.subr.bf16.mxu0 0
        %10118 = vmatpush1.bf16.msra.mxu0 0
        %10119 = vmatprep.subr.bf16.mxu0 0
        %10120 = vmatpush1.bf16.msra.mxu0 0
        %10121 = vmatprep.mubr.bf16.mxu0 0
        %10122 = vmatmul.mubr.bf16.gmra.mrb[0].mxu0 %v9806
        %v10123 = vpop.f32.mrb[0].mxu0
        %v10124 = vadd.f32 0.0, %v10123
        %v10125 = vpop.f32.mrb[0].mxu0
        %v10126 = vadd.f32 0.0, %v10125
        %v10127 = vpop.f32.mrb[0].mxu0
        %v10128 = vpop.f32.mrb[0].mxu0
        %10129 = vdwg.mxu0
        %10130 = vmatprep.subr.bf16.mxu0 %v9957
        %10131 = vmatpush1.bf16.msra.mxu0 %v9956
        %10132 = vmatprep.subr.bf16.mxu0 %v9963
        %10133 = vmatpush1.bf16.msra.mxu0 %v9962
        %10134 = vmatprep.subr.bf16.mxu0 %v9969
        %10135 = vmatpush1.bf16.msra.mxu0 %v9968
        %10136 = vmatprep.subr.bf16.mxu0 %v9975
        %10137 = vmatpush1.bf16.msra.mxu0 %v9974
        %10138 = vmatprep.subr.bf16.mxu0 %v9981
        %10139 = vmatpush1.bf16.msra.mxu0 %v9980
        %10140 = vmatprep.subr.bf16.mxu0 %v9987
        %10141 = vmatpush1.bf16.msra.mxu0 %v9986
        %10142 = vmatprep.subr.bf16.mxu0 %v9993
        %10143 = vmatpush1.bf16.msra.mxu0 %v9992
        %10144 = vmatprep.subr.bf16.mxu0 %v9999
        %10145 = vmatpush1.bf16.msra.mxu0 %v9998
        %10146 = vmatprep.subr.bf16.mxu0 0
        %10147 = vmatpush1.bf16.msra.mxu0 0
        %10148 = vmatprep.subr.bf16.mxu0 0
        %10149 = vmatpush1.bf16.msra.mxu0 0
        %10150 = vmatprep.subr.bf16.mxu0 0
        %10151 = vmatpush1.bf16.msra.mxu0 0
        %10152 = vmatprep.subr.bf16.mxu0 0
        %10153 = vmatpush1.bf16.msra.mxu0 0
        %10154 = vmatprep.subr.bf16.mxu0 0
        %10155 = vmatpush1.bf16.msra.mxu0 0
        %10156 = vmatprep.subr.bf16.mxu0 0
        %10157 = vmatpush1.bf16.msra.mxu0 0
        %10158 = vmatprep.subr.bf16.mxu0 0
        %10159 = vmatpush1.bf16.msra.mxu0 0
        %10160 = vmatprep.subr.bf16.mxu0 0
        %10161 = vmatpush1.bf16.msra.mxu0 0
        %10162 = vmatprep.mubr.bf16.mxu0 0
        %10163 = vmatmul.mubr.bf16.gmra.mrb[0].mxu0 %v9806
        %v10164 = vpop.f32.mrb[0].mxu0
        %v10165 = vadd.f32 0.0, %v10164
        %v10166 = vpop.f32.mrb[0].mxu0
        %v10167 = vadd.f32 0.0, %v10166
        %v10168 = vpop.f32.mrb[0].mxu0
        %v10169 = vpop.f32.mrb[0].mxu0
        %10170 = vdwg.mxu0
        %v10171 = vadd.f32 %v9751, %v10083
        %v10172 = vadd.f32 %v9752, %v10085
        %v10173 = vadd.f32 %v9753, %v10124
        %v10174 = vadd.f32 %v9754, %v10126
        %v10175 = vadd.f32 %v9755, %v10165
        %v10176 = vadd.f32 %v9756, %v10167
        %s10177 = scalar_lea.vmem [#allocation10], 8448
        %v10178 = vld [vmem:[%s10177] sm:$0xff]
        %v10179 = vld [vmem:[%s10177 + $0x8] sm:$0xff]
        %v10180 = vld [vmem:[%s10177 + $0x10] sm:$0xff]
        %v10181 = vld [vmem:[%s10177 + $0x18] sm:$0xff]
        %v10182 = vld [vmem:[%s10177 + $0x20] sm:$0xff]
        %v10183 = vld [vmem:[%s10177 + $0x28] sm:$0xff]
        %v10184 = vld [vmem:[%s10177 + $0x30] sm:$0xff]
        %v10185 = vld [vmem:[%s10177 + $0x38] sm:$0xff]
        %v10186 = vld [vmem:[%s10177 + $0x40] sm:$0xff]
        %v10187 = vld [vmem:[%s10177 + $0x48] sm:$0xff]
        %v10188 = vld [vmem:[%s10177 + $0x50] sm:$0xff]
        %v10189 = vld [vmem:[%s10177 + $0x58] sm:$0xff]
        %v10190 = vld [vmem:[%s10177 + $0x60] sm:$0xff]
        %v10191 = vld [vmem:[%s10177 + $0x68] sm:$0xff]
        %v10192 = vld [vmem:[%s10177 + $0x70] sm:$0xff]
        %v10193 = vld [vmem:[%s10177 + $0x78] sm:$0xff]
        %v10194 = vld [vmem:[%s10177 + $0x80] sm:$0xff]
        %v10195 = vld [vmem:[%s10177 + $0x88] sm:$0xff]
        %v10196 = vld [vmem:[%s10177 + $0x90] sm:$0xff]
        %v10197 = vld [vmem:[%s10177 + $0x98] sm:$0xff]
        %v10198 = vld [vmem:[%s10177 + $0xa0] sm:$0xff]
        %v10199 = vld [vmem:[%s10177 + $0xa8] sm:$0xff]
        %v10200 = vld [vmem:[%s10177 + $0xb0] sm:$0xff]
        %v10201 = vld [vmem:[%s10177 + $0xb8] sm:$0xff]
        %v10202 = vld [vmem:[%s10177 + $0xc0] sm:$0xff]
        %v10203 = vld [vmem:[%s10177 + $0xc8] sm:$0xff]
        %v10204 = vld [vmem:[%s10177 + $0xd0] sm:$0xff]
        %v10205 = vld [vmem:[%s10177 + $0xd8] sm:$0xff]
        %v10206 = vld [vmem:[%s10177 + $0xe0] sm:$0xff]
        %v10207 = vld [vmem:[%s10177 + $0xe8] sm:$0xff]
        %v10208 = vld [vmem:[%s10177 + $0xf0] sm:$0xff]
        %v10209 = vld [vmem:[%s10177 + $0xf8] sm:$0xff]
        %v10210 = vld [vmem:[%s10177 + $0x100] sm:$0xff]
        %v10211 = vld [vmem:[%s10177 + $0x108] sm:$0xff]
        %v10212 = vld [vmem:[%s10177 + $0x110] sm:$0xff]
        %v10213 = vld [vmem:[%s10177 + $0x118] sm:$0xff]
        %v10214 = vld [vmem:[%s10177 + $0x120] sm:$0xff]
        %v10215 = vld [vmem:[%s10177 + $0x128] sm:$0xff]
        %v10216 = vld [vmem:[%s10177 + $0x130] sm:$0xff]
        %v10217 = vld [vmem:[%s10177 + $0x138] sm:$0xff]
        %v10218 = vld [vmem:[%s10177 + $0x140] sm:$0xff]
        %v10219 = vld [vmem:[%s10177 + $0x148] sm:$0xff]
        %v10220 = vld [vmem:[%s10177 + $0x150] sm:$0xff]
        %v10221 = vld [vmem:[%s10177 + $0x158] sm:$0xff]
        %v10222 = vld [vmem:[%s10177 + $0x160] sm:$0xff]
        %v10223 = vld [vmem:[%s10177 + $0x168] sm:$0xff]
        %v10224 = vld [vmem:[%s10177 + $0x170] sm:$0xff]
        %v10225 = vld [vmem:[%s10177 + $0x178] sm:$0xff]
        %v10226 = vrot.slane %v7655, 3
        %v10276 = vunpack.c.l.b16 %v10178
        %v10277 = vunpack.c.h.b16 %v10178
        %v10278 = vunpack.c.l.b16 %v10179
        %v10279 = vunpack.c.h.b16 %v10179
        %v10280 = vunpack.c.l.b16 %v10180
        %v10281 = vunpack.c.h.b16 %v10180
        %v10282 = vunpack.c.l.b16 %v10181
        %v10283 = vunpack.c.h.b16 %v10181
        %v10284 = vunpack.c.l.b16 %v10182
        %v10285 = vunpack.c.h.b16 %v10182
        %v10286 = vunpack.c.l.b16 %v10183
        %v10287 = vunpack.c.h.b16 %v10183
        %v10288 = vunpack.c.l.b16 %v10184
        %v10289 = vunpack.c.h.b16 %v10184
        %v10290 = vunpack.c.l.b16 %v10185
        %v10291 = vunpack.c.h.b16 %v10185
        %v10292 = vunpack.c.l.b16 %v10186
        %v10293 = vunpack.c.h.b16 %v10186
        %v10294 = vunpack.c.l.b16 %v10187
        %v10295 = vunpack.c.h.b16 %v10187
        %v10296 = vunpack.c.l.b16 %v10188
        %v10297 = vunpack.c.h.b16 %v10188
        %v10298 = vunpack.c.l.b16 %v10189
        %v10299 = vunpack.c.h.b16 %v10189
        %v10300 = vunpack.c.l.b16 %v10190
        %v10301 = vunpack.c.h.b16 %v10190
        %v10302 = vunpack.c.l.b16 %v10191
        %v10303 = vunpack.c.h.b16 %v10191
        %v10304 = vunpack.c.l.b16 %v10192
        %v10305 = vunpack.c.h.b16 %v10192
        %v10306 = vunpack.c.l.b16 %v10193
        %v10307 = vunpack.c.h.b16 %v10193
        %v10308 = vunpack.c.l.b16 %v10194
        %v10309 = vunpack.c.h.b16 %v10194
        %v10310 = vunpack.c.l.b16 %v10195
        %v10311 = vunpack.c.h.b16 %v10195
        %v10312 = vunpack.c.l.b16 %v10196
        %v10313 = vunpack.c.h.b16 %v10196
        %v10314 = vunpack.c.l.b16 %v10197
        %v10315 = vunpack.c.h.b16 %v10197
        %v10316 = vunpack.c.l.b16 %v10198
        %v10317 = vunpack.c.h.b16 %v10198
        %v10318 = vunpack.c.l.b16 %v10199
        %v10319 = vunpack.c.h.b16 %v10199
        %v10320 = vunpack.c.l.b16 %v10200
        %v10321 = vunpack.c.h.b16 %v10200
        %v10322 = vunpack.c.l.b16 %v10201
        %v10323 = vunpack.c.h.b16 %v10201
        %v10324 = vunpack.c.l.b16 %v10202
        %v10325 = vunpack.c.h.b16 %v10202
        %v10326 = vunpack.c.l.b16 %v10203
        %v10327 = vunpack.c.h.b16 %v10203
        %v10328 = vunpack.c.l.b16 %v10204
        %v10329 = vunpack.c.h.b16 %v10204
        %v10330 = vunpack.c.l.b16 %v10205
        %v10331 = vunpack.c.h.b16 %v10205
        %v10332 = vunpack.c.l.b16 %v10206
        %v10333 = vunpack.c.h.b16 %v10206
        %v10334 = vunpack.c.l.b16 %v10207
        %v10335 = vunpack.c.h.b16 %v10207
        %v10336 = vunpack.c.l.b16 %v10208
        %v10337 = vunpack.c.h.b16 %v10208
        %v10338 = vunpack.c.l.b16 %v10209
        %v10339 = vunpack.c.h.b16 %v10209
        %v10340 = vunpack.c.l.b16 %v10210
        %v10341 = vunpack.c.h.b16 %v10210
        %v10342 = vunpack.c.l.b16 %v10211
        %v10343 = vunpack.c.h.b16 %v10211
        %v10344 = vunpack.c.l.b16 %v10212
        %v10345 = vunpack.c.h.b16 %v10212
        %v10346 = vunpack.c.l.b16 %v10213
        %v10347 = vunpack.c.h.b16 %v10213
        %v10348 = vunpack.c.l.b16 %v10214
        %v10349 = vunpack.c.h.b16 %v10214
        %v10350 = vunpack.c.l.b16 %v10215
        %v10351 = vunpack.c.h.b16 %v10215
        %v10352 = vunpack.c.l.b16 %v10216
        %v10353 = vunpack.c.h.b16 %v10216
        %v10354 = vunpack.c.l.b16 %v10217
        %v10355 = vunpack.c.h.b16 %v10217
        %v10356 = vunpack.c.l.b16 %v10218
        %v10357 = vunpack.c.h.b16 %v10218
        %v10358 = vunpack.c.l.b16 %v10219
        %v10359 = vunpack.c.h.b16 %v10219
        %v10360 = vunpack.c.l.b16 %v10220
        %v10361 = vunpack.c.h.b16 %v10220
        %v10362 = vunpack.c.l.b16 %v10221
        %v10363 = vunpack.c.h.b16 %v10221
        %v10364 = vunpack.c.l.b16 %v10222
        %v10365 = vunpack.c.h.b16 %v10222
        %v10366 = vunpack.c.l.b16 %v10223
        %v10367 = vunpack.c.h.b16 %v10223
        %v10368 = vunpack.c.l.b16 %v10224
        %v10369 = vunpack.c.h.b16 %v10224
        %v10370 = vunpack.c.l.b16 %v10225
        %v10371 = vunpack.c.h.b16 %v10225
        %v10372 = vpack.c.b16 %v10282, %v10276
        %v10373 = vpack.c.b16 %v10283, %v10277
        %v10374 = vpack.c.b16 %v10284, %v10278
        %v10375 = vpack.c.b16 %v10285, %v10279
        %v10376 = vpack.c.b16 %v10286, %v10280
        %v10377 = vpack.c.b16 %v10287, %v10281
        %v10378 = vpack.c.b16 %v10294, %v10288
        %v10379 = vpack.c.b16 %v10295, %v10289
        %v10380 = vpack.c.b16 %v10296, %v10290
        %v10381 = vpack.c.b16 %v10297, %v10291
        %v10382 = vpack.c.b16 %v10298, %v10292
        %v10383 = vpack.c.b16 %v10299, %v10293
        %v10384 = vpack.c.b16 %v10306, %v10300
        %v10385 = vpack.c.b16 %v10307, %v10301
        %v10386 = vpack.c.b16 %v10308, %v10302
        %v10387 = vpack.c.b16 %v10309, %v10303
        %v10388 = vpack.c.b16 %v10310, %v10304
        %v10389 = vpack.c.b16 %v10311, %v10305
        %v10390 = vpack.c.b16 %v10318, %v10312
        %v10391 = vpack.c.b16 %v10319, %v10313
        %v10392 = vpack.c.b16 %v10320, %v10314
        %v10393 = vpack.c.b16 %v10321, %v10315
        %v10394 = vpack.c.b16 %v10322, %v10316
        %v10395 = vpack.c.b16 %v10323, %v10317
        %v10396 = vpack.c.b16 %v10330, %v10324
        %v10397 = vpack.c.b16 %v10331, %v10325
        %v10398 = vpack.c.b16 %v10332, %v10326
        %v10399 = vpack.c.b16 %v10333, %v10327
        %v10400 = vpack.c.b16 %v10334, %v10328
        %v10401 = vpack.c.b16 %v10335, %v10329
        %v10402 = vpack.c.b16 %v10342, %v10336
        %v10403 = vpack.c.b16 %v10343, %v10337
        %v10404 = vpack.c.b16 %v10344, %v10338
        %v10405 = vpack.c.b16 %v10345, %v10339
        %v10406 = vpack.c.b16 %v10346, %v10340
        %v10407 = vpack.c.b16 %v10347, %v10341
        %v10408 = vpack.c.b16 %v10354, %v10348
        %v10409 = vpack.c.b16 %v10355, %v10349
        %v10410 = vpack.c.b16 %v10356, %v10350
        %v10411 = vpack.c.b16 %v10357, %v10351
        %v10412 = vpack.c.b16 %v10358, %v10352
        %v10413 = vpack.c.b16 %v10359, %v10353
        %v10414 = vpack.c.b16 %v10366, %v10360
        %v10415 = vpack.c.b16 %v10367, %v10361
        %v10416 = vpack.c.b16 %v10368, %v10362
        %v10417 = vpack.c.b16 %v10369, %v10363
        %v10418 = vpack.c.b16 %v10370, %v10364
        %v10419 = vpack.c.b16 %v10371, %v10365
        %10468 = vmatprep.subr.bf16.mxu0 %v10373
        %10469 = vmatpush1.bf16.msra.mxu0 %v10372
        %10470 = vmatprep.subr.bf16.mxu0 %v10379
        %10471 = vmatpush1.bf16.msra.mxu0 %v10378
        %10472 = vmatprep.subr.bf16.mxu0 %v10385
        %10473 = vmatpush1.bf16.msra.mxu0 %v10384
        %10474 = vmatprep.subr.bf16.mxu0 %v10391
        %10475 = vmatpush1.bf16.msra.mxu0 %v10390
        %10476 = vmatprep.subr.bf16.mxu0 %v10397
        %10477 = vmatpush1.bf16.msra.mxu0 %v10396
        %10478 = vmatprep.subr.bf16.mxu0 %v10403
        %10479 = vmatpush1.bf16.msra.mxu0 %v10402
        %10480 = vmatprep.subr.bf16.mxu0 %v10409
        %10481 = vmatpush1.bf16.msra.mxu0 %v10408
        %10482 = vmatprep.subr.bf16.mxu0 %v10415
        %10483 = vmatpush1.bf16.msra.mxu0 %v10414
        %10484 = vmatprep.subr.bf16.mxu0 0
        %10485 = vmatpush1.bf16.msra.mxu0 0
        %10486 = vmatprep.subr.bf16.mxu0 0
        %10487 = vmatpush1.bf16.msra.mxu0 0
        %10488 = vmatprep.subr.bf16.mxu0 0
        %10489 = vmatpush1.bf16.msra.mxu0 0
        %10490 = vmatprep.subr.bf16.mxu0 0
        %10491 = vmatpush1.bf16.msra.mxu0 0
        %10492 = vmatprep.subr.bf16.mxu0 0
        %10493 = vmatpush1.bf16.msra.mxu0 0
        %10494 = vmatprep.subr.bf16.mxu0 0
        %10495 = vmatpush1.bf16.msra.mxu0 0
        %10496 = vmatprep.subr.bf16.mxu0 0
        %10497 = vmatpush1.bf16.msra.mxu0 0
        %10498 = vmatprep.subr.bf16.mxu0 0
        %10499 = vmatpush1.bf16.msra.mxu0 0
        %10500 = vmatprep.mubr.bf16.mxu0 0
        %10501 = vmatmul.mubr.bf16.gmra.mrb[0].mxu0 %v10226
        %v10502 = vpop.f32.mrb[0].mxu0
        %v10503 = vadd.f32 0.0, %v10502
        %v10504 = vpop.f32.mrb[0].mxu0
        %v10505 = vadd.f32 0.0, %v10504
        %v10506 = vpop.f32.mrb[0].mxu0
        %v10507 = vpop.f32.mrb[0].mxu0
        %10508 = vdwg.mxu0
        %10509 = vmatprep.subr.bf16.mxu0 %v10375
        %10510 = vmatpush1.bf16.msra.mxu0 %v10374
        %10511 = vmatprep.subr.bf16.mxu0 %v10381
        %10512 = vmatpush1.bf16.msra.mxu0 %v10380
        %10513 = vmatprep.subr.bf16.mxu0 %v10387
        %10514 = vmatpush1.bf16.msra.mxu0 %v10386
        %10515 = vmatprep.subr.bf16.mxu0 %v10393
        %10516 = vmatpush1.bf16.msra.mxu0 %v10392
        %10517 = vmatprep.subr.bf16.mxu0 %v10399
        %10518 = vmatpush1.bf16.msra.mxu0 %v10398
        %10519 = vmatprep.subr.bf16.mxu0 %v10405
        %10520 = vmatpush1.bf16.msra.mxu0 %v10404
        %10521 = vmatprep.subr.bf16.mxu0 %v10411
        %10522 = vmatpush1.bf16.msra.mxu0 %v10410
        %10523 = vmatprep.subr.bf16.mxu0 %v10417
        %10524 = vmatpush1.bf16.msra.mxu0 %v10416
        %10525 = vmatprep.subr.bf16.mxu0 0
        %10526 = vmatpush1.bf16.msra.mxu0 0
        %10527 = vmatprep.subr.bf16.mxu0 0
        %10528 = vmatpush1.bf16.msra.mxu0 0
        %10529 = vmatprep.subr.bf16.mxu0 0
        %10530 = vmatpush1.bf16.msra.mxu0 0
        %10531 = vmatprep.subr.bf16.mxu0 0
        %10532 = vmatpush1.bf16.msra.mxu0 0
        %10533 = vmatprep.subr.bf16.mxu0 0
        %10534 = vmatpush1.bf16.msra.mxu0 0
        %10535 = vmatprep.subr.bf16.mxu0 0
        %10536 = vmatpush1.bf16.msra.mxu0 0
        %10537 = vmatprep.subr.bf16.mxu0 0
        %10538 = vmatpush1.bf16.msra.mxu0 0
        %10539 = vmatprep.subr.bf16.mxu0 0
        %10540 = vmatpush1.bf16.msra.mxu0 0
        %10541 = vmatprep.mubr.bf16.mxu0 0
        %10542 = vmatmul.mubr.bf16.gmra.mrb[0].mxu0 %v10226
        %v10543 = vpop.f32.mrb[0].mxu0
        %v10544 = vadd.f32 0.0, %v10543
        %v10545 = vpop.f32.mrb[0].mxu0
        %v10546 = vadd.f32 0.0, %v10545
        %v10547 = vpop.f32.mrb[0].mxu0
        %v10548 = vpop.f32.mrb[0].mxu0
        %10549 = vdwg.mxu0
        %10550 = vmatprep.subr.bf16.mxu0 %v10377
        %10551 = vmatpush1.bf16.msra.mxu0 %v10376
        %10552 = vmatprep.subr.bf16.mxu0 %v10383
        %10553 = vmatpush1.bf16.msra.mxu0 %v10382
        %10554 = vmatprep.subr.bf16.mxu0 %v10389
        %10555 = vmatpush1.bf16.msra.mxu0 %v10388
        %10556 = vmatprep.subr.bf16.mxu0 %v10395
        %10557 = vmatpush1.bf16.msra.mxu0 %v10394
        %10558 = vmatprep.subr.bf16.mxu0 %v10401
        %10559 = vmatpush1.bf16.msra.mxu0 %v10400
        %10560 = vmatprep.subr.bf16.mxu0 %v10407
        %10561 = vmatpush1.bf16.msra.mxu0 %v10406
        %10562 = vmatprep.subr.bf16.mxu0 %v10413
        %10563 = vmatpush1.bf16.msra.mxu0 %v10412
        %10564 = vmatprep.subr.bf16.mxu0 %v10419
        %10565 = vmatpush1.bf16.msra.mxu0 %v10418
        %10566 = vmatprep.subr.bf16.mxu0 0
        %10567 = vmatpush1.bf16.msra.mxu0 0
        %10568 = vmatprep.subr.bf16.mxu0 0
        %10569 = vmatpush1.bf16.msra.mxu0 0
        %10570 = vmatprep.subr.bf16.mxu0 0
        %10571 = vmatpush1.bf16.msra.mxu0 0
        %10572 = vmatprep.subr.bf16.mxu0 0
        %10573 = vmatpush1.bf16.msra.mxu0 0
        %10574 = vmatprep.subr.bf16.mxu0 0
        %10575 = vmatpush1.bf16.msra.mxu0 0
        %10576 = vmatprep.subr.bf16.mxu0 0
        %10577 = vmatpush1.bf16.msra.mxu0 0
        %10578 = vmatprep.subr.bf16.mxu0 0
        %10579 = vmatpush1.bf16.msra.mxu0 0
        %10580 = vmatprep.subr.bf16.mxu0 0
        %10581 = vmatpush1.bf16.msra.mxu0 0
        %10582 = vmatprep.mubr.bf16.mxu0 0
        %10583 = vmatmul.mubr.bf16.gmra.mrb[0].mxu0 %v10226
        %v10584 = vpop.f32.mrb[0].mxu0
        %v10585 = vadd.f32 0.0, %v10584
        %v10586 = vpop.f32.mrb[0].mxu0
        %v10587 = vadd.f32 0.0, %v10586
        %v10588 = vpop.f32.mrb[0].mxu0
        %v10589 = vpop.f32.mrb[0].mxu0
        %10590 = vdwg.mxu0
        %v10591 = vadd.f32 %v10171, %v10503
        %v10592 = vadd.f32 %v10172, %v10505
        %v10593 = vadd.f32 %v10173, %v10544
        %v10594 = vadd.f32 %v10174, %v10546
        %v10595 = vadd.f32 %v10175, %v10585
        %v10596 = vadd.f32 %v10176, %v10587
        %s10597 = scalar_lea.vmem [#allocation10], 8832
        %v10598 = vld [vmem:[%s10597] sm:$0xff]
        %v10599 = vld [vmem:[%s10597 + $0x8] sm:$0xff]
        %v10600 = vld [vmem:[%s10597 + $0x10] sm:$0xff]
        %v10601 = vld [vmem:[%s10597 + $0x18] sm:$0xff]
        %v10602 = vld [vmem:[%s10597 + $0x20] sm:$0xff]
        %v10603 = vld [vmem:[%s10597 + $0x28] sm:$0xff]
        %v10604 = vld [vmem:[%s10597 + $0x30] sm:$0xff]
        %v10605 = vld [vmem:[%s10597 + $0x38] sm:$0xff]
        %v10606 = vld [vmem:[%s10597 + $0x40] sm:$0xff]
        %v10607 = vld [vmem:[%s10597 + $0x48] sm:$0xff]
        %v10608 = vld [vmem:[%s10597 + $0x50] sm:$0xff]
        %v10609 = vld [vmem:[%s10597 + $0x58] sm:$0xff]
        %v10610 = vld [vmem:[%s10597 + $0x60] sm:$0xff]
        %v10611 = vld [vmem:[%s10597 + $0x68] sm:$0xff]
        %v10612 = vld [vmem:[%s10597 + $0x70] sm:$0xff]
        %v10613 = vld [vmem:[%s10597 + $0x78] sm:$0xff]
        %v10614 = vld [vmem:[%s10597 + $0x80] sm:$0xff]
        %v10615 = vld [vmem:[%s10597 + $0x88] sm:$0xff]
        %v10616 = vld [vmem:[%s10597 + $0x90] sm:$0xff]
        %v10617 = vld [vmem:[%s10597 + $0x98] sm:$0xff]
        %v10618 = vld [vmem:[%s10597 + $0xa0] sm:$0xff]
        %v10619 = vld [vmem:[%s10597 + $0xa8] sm:$0xff]
        %v10620 = vld [vmem:[%s10597 + $0xb0] sm:$0xff]
        %v10621 = vld [vmem:[%s10597 + $0xb8] sm:$0xff]
        %v10622 = vld [vmem:[%s10597 + $0xc0] sm:$0xff]
        %v10623 = vld [vmem:[%s10597 + $0xc8] sm:$0xff]
        %v10624 = vld [vmem:[%s10597 + $0xd0] sm:$0xff]
        %v10625 = vld [vmem:[%s10597 + $0xd8] sm:$0xff]
        %v10626 = vld [vmem:[%s10597 + $0xe0] sm:$0xff]
        %v10627 = vld [vmem:[%s10597 + $0xe8] sm:$0xff]
        %v10628 = vld [vmem:[%s10597 + $0xf0] sm:$0xff]
        %v10629 = vld [vmem:[%s10597 + $0xf8] sm:$0xff]
        %v10630 = vld [vmem:[%s10597 + $0x100] sm:$0xff]
        %v10631 = vld [vmem:[%s10597 + $0x108] sm:$0xff]
        %v10632 = vld [vmem:[%s10597 + $0x110] sm:$0xff]
        %v10633 = vld [vmem:[%s10597 + $0x118] sm:$0xff]
        %v10634 = vld [vmem:[%s10597 + $0x120] sm:$0xff]
        %v10635 = vld [vmem:[%s10597 + $0x128] sm:$0xff]
        %v10636 = vld [vmem:[%s10597 + $0x130] sm:$0xff]
        %v10637 = vld [vmem:[%s10597 + $0x138] sm:$0xff]
        %v10638 = vld [vmem:[%s10597 + $0x140] sm:$0xff]
        %v10639 = vld [vmem:[%s10597 + $0x148] sm:$0xff]
        %v10640 = vld [vmem:[%s10597 + $0x150] sm:$0xff]
        %v10641 = vld [vmem:[%s10597 + $0x158] sm:$0xff]
        %v10642 = vld [vmem:[%s10597 + $0x160] sm:$0xff]
        %v10643 = vld [vmem:[%s10597 + $0x168] sm:$0xff]
        %v10644 = vld [vmem:[%s10597 + $0x170] sm:$0xff]
        %v10645 = vld [vmem:[%s10597 + $0x178] sm:$0xff]
        %v10646 = vrot.slane %v8124, 3
        %v10696 = vunpack.c.l.b16 %v10598
        %v10697 = vunpack.c.h.b16 %v10598
        %v10698 = vunpack.c.l.b16 %v10599
        %v10699 = vunpack.c.h.b16 %v10599
        %v10700 = vunpack.c.l.b16 %v10600
        %v10701 = vunpack.c.h.b16 %v10600
        %v10702 = vunpack.c.l.b16 %v10601
        %v10703 = vunpack.c.h.b16 %v10601
        %v10704 = vunpack.c.l.b16 %v10602
        %v10705 = vunpack.c.h.b16 %v10602
        %v10706 = vunpack.c.l.b16 %v10603
        %v10707 = vunpack.c.h.b16 %v10603
        %v10708 = vunpack.c.l.b16 %v10604
        %v10709 = vunpack.c.h.b16 %v10604
        %v10710 = vunpack.c.l.b16 %v10605
        %v10711 = vunpack.c.h.b16 %v10605
        %v10712 = vunpack.c.l.b16 %v10606
        %v10713 = vunpack.c.h.b16 %v10606
        %v10714 = vunpack.c.l.b16 %v10607
        %v10715 = vunpack.c.h.b16 %v10607
        %v10716 = vunpack.c.l.b16 %v10608
        %v10717 = vunpack.c.h.b16 %v10608
        %v10718 = vunpack.c.l.b16 %v10609
        %v10719 = vunpack.c.h.b16 %v10609
        %v10720 = vunpack.c.l.b16 %v10610
        %v10721 = vunpack.c.h.b16 %v10610
        %v10722 = vunpack.c.l.b16 %v10611
        %v10723 = vunpack.c.h.b16 %v10611
        %v10724 = vunpack.c.l.b16 %v10612
        %v10725 = vunpack.c.h.b16 %v10612
        %v10726 = vunpack.c.l.b16 %v10613
        %v10727 = vunpack.c.h.b16 %v10613
        %v10728 = vunpack.c.l.b16 %v10614
        %v10729 = vunpack.c.h.b16 %v10614
        %v10730 = vunpack.c.l.b16 %v10615
        %v10731 = vunpack.c.h.b16 %v10615
        %v10732 = vunpack.c.l.b16 %v10616
        %v10733 = vunpack.c.h.b16 %v10616
        %v10734 = vunpack.c.l.b16 %v10617
        %v10735 = vunpack.c.h.b16 %v10617
        %v10736 = vunpack.c.l.b16 %v10618
        %v10737 = vunpack.c.h.b16 %v10618
        %v10738 = vunpack.c.l.b16 %v10619
        %v10739 = vunpack.c.h.b16 %v10619
        %v10740 = vunpack.c.l.b16 %v10620
        %v10741 = vunpack.c.h.b16 %v10620
        %v10742 = vunpack.c.l.b16 %v10621
        %v10743 = vunpack.c.h.b16 %v10621
        %v10744 = vunpack.c.l.b16 %v10622
        %v10745 = vunpack.c.h.b16 %v10622
        %v10746 = vunpack.c.l.b16 %v10623
        %v10747 = vunpack.c.h.b16 %v10623
        %v10748 = vunpack.c.l.b16 %v10624
        %v10749 = vunpack.c.h.b16 %v10624
        %v10750 = vunpack.c.l.b16 %v10625
        %v10751 = vunpack.c.h.b16 %v10625
        %v10752 = vunpack.c.l.b16 %v10626
        %v10753 = vunpack.c.h.b16 %v10626
        %v10754 = vunpack.c.l.b16 %v10627
        %v10755 = vunpack.c.h.b16 %v10627
        %v10756 = vunpack.c.l.b16 %v10628
        %v10757 = vunpack.c.h.b16 %v10628
        %v10758 = vunpack.c.l.b16 %v10629
        %v10759 = vunpack.c.h.b16 %v10629
        %v10760 = vunpack.c.l.b16 %v10630
        %v10761 = vunpack.c.h.b16 %v10630
        %v10762 = vunpack.c.l.b16 %v10631
        %v10763 = vunpack.c.h.b16 %v10631
        %v10764 = vunpack.c.l.b16 %v10632
        %v10765 = vunpack.c.h.b16 %v10632
        %v10766 = vunpack.c.l.b16 %v10633
        %v10767 = vunpack.c.h.b16 %v10633
        %v10768 = vunpack.c.l.b16 %v10634
        %v10769 = vunpack.c.h.b16 %v10634
        %v10770 = vunpack.c.l.b16 %v10635
        %v10771 = vunpack.c.h.b16 %v10635
        %v10772 = vunpack.c.l.b16 %v10636
        %v10773 = vunpack.c.h.b16 %v10636
        %v10774 = vunpack.c.l.b16 %v10637
        %v10775 = vunpack.c.h.b16 %v10637
        %v10776 = vunpack.c.l.b16 %v10638
        %v10777 = vunpack.c.h.b16 %v10638
        %v10778 = vunpack.c.l.b16 %v10639
        %v10779 = vunpack.c.h.b16 %v10639
        %v10780 = vunpack.c.l.b16 %v10640
        %v10781 = vunpack.c.h.b16 %v10640
        %v10782 = vunpack.c.l.b16 %v10641
        %v10783 = vunpack.c.h.b16 %v10641
        %v10784 = vunpack.c.l.b16 %v10642
        %v10785 = vunpack.c.h.b16 %v10642
        %v10786 = vunpack.c.l.b16 %v10643
        %v10787 = vunpack.c.h.b16 %v10643
        %v10788 = vunpack.c.l.b16 %v10644
        %v10789 = vunpack.c.h.b16 %v10644
        %v10790 = vunpack.c.l.b16 %v10645
        %v10791 = vunpack.c.h.b16 %v10645
        %v10792 = vpack.c.b16 %v10702, %v10696
        %v10793 = vpack.c.b16 %v10703, %v10697
        %v10794 = vpack.c.b16 %v10704, %v10698
        %v10795 = vpack.c.b16 %v10705, %v10699
        %v10796 = vpack.c.b16 %v10706, %v10700
        %v10797 = vpack.c.b16 %v10707, %v10701
        %v10798 = vpack.c.b16 %v10714, %v10708
        %v10799 = vpack.c.b16 %v10715, %v10709
        %v10800 = vpack.c.b16 %v10716, %v10710
        %v10801 = vpack.c.b16 %v10717, %v10711
        %v10802 = vpack.c.b16 %v10718, %v10712
        %v10803 = vpack.c.b16 %v10719, %v10713
        %v10804 = vpack.c.b16 %v10726, %v10720
        %v10805 = vpack.c.b16 %v10727, %v10721
        %v10806 = vpack.c.b16 %v10728, %v10722
        %v10807 = vpack.c.b16 %v10729, %v10723
        %v10808 = vpack.c.b16 %v10730, %v10724
        %v10809 = vpack.c.b16 %v10731, %v10725
        %v10810 = vpack.c.b16 %v10738, %v10732
        %v10811 = vpack.c.b16 %v10739, %v10733
        %v10812 = vpack.c.b16 %v10740, %v10734
        %v10813 = vpack.c.b16 %v10741, %v10735
        %v10814 = vpack.c.b16 %v10742, %v10736
        %v10815 = vpack.c.b16 %v10743, %v10737
        %v10816 = vpack.c.b16 %v10750, %v10744
        %v10817 = vpack.c.b16 %v10751, %v10745
        %v10818 = vpack.c.b16 %v10752, %v10746
        %v10819 = vpack.c.b16 %v10753, %v10747
        %v10820 = vpack.c.b16 %v10754, %v10748
        %v10821 = vpack.c.b16 %v10755, %v10749
        %v10822 = vpack.c.b16 %v10762, %v10756
        %v10823 = vpack.c.b16 %v10763, %v10757
        %v10824 = vpack.c.b16 %v10764, %v10758
        %v10825 = vpack.c.b16 %v10765, %v10759
        %v10826 = vpack.c.b16 %v10766, %v10760
        %v10827 = vpack.c.b16 %v10767, %v10761
        %v10828 = vpack.c.b16 %v10774, %v10768
        %v10829 = vpack.c.b16 %v10775, %v10769
        %v10830 = vpack.c.b16 %v10776, %v10770
        %v10831 = vpack.c.b16 %v10777, %v10771
        %v10832 = vpack.c.b16 %v10778, %v10772
        %v10833 = vpack.c.b16 %v10779, %v10773
        %v10834 = vpack.c.b16 %v10786, %v10780
        %v10835 = vpack.c.b16 %v10787, %v10781
        %v10836 = vpack.c.b16 %v10788, %v10782
        %v10837 = vpack.c.b16 %v10789, %v10783
        %v10838 = vpack.c.b16 %v10790, %v10784
        %v10839 = vpack.c.b16 %v10791, %v10785
        %10888 = vmatprep.subr.bf16.mxu0 %v10793
        %10889 = vmatpush1.bf16.msra.mxu0 %v10792
        %10890 = vmatprep.subr.bf16.mxu0 %v10799
        %10891 = vmatpush1.bf16.msra.mxu0 %v10798
        %10892 = vmatprep.subr.bf16.mxu0 %v10805
        %10893 = vmatpush1.bf16.msra.mxu0 %v10804
        %10894 = vmatprep.subr.bf16.mxu0 %v10811
        %10895 = vmatpush1.bf16.msra.mxu0 %v10810
        %10896 = vmatprep.subr.bf16.mxu0 %v10817
        %10897 = vmatpush1.bf16.msra.mxu0 %v10816
        %10898 = vmatprep.subr.bf16.mxu0 %v10823
        %10899 = vmatpush1.bf16.msra.mxu0 %v10822
        %10900 = vmatprep.subr.bf16.mxu0 %v10829
        %10901 = vmatpush1.bf16.msra.mxu0 %v10828
        %10902 = vmatprep.subr.bf16.mxu0 %v10835
        %10903 = vmatpush1.bf16.msra.mxu0 %v10834
        %10904 = vmatprep.subr.bf16.mxu0 0
        %10905 = vmatpush1.bf16.msra.mxu0 0
        %10906 = vmatprep.subr.bf16.mxu0 0
        %10907 = vmatpush1.bf16.msra.mxu0 0
        %10908 = vmatprep.subr.bf16.mxu0 0
        %10909 = vmatpush1.bf16.msra.mxu0 0
        %10910 = vmatprep.subr.bf16.mxu0 0
        %10911 = vmatpush1.bf16.msra.mxu0 0
        %10912 = vmatprep.subr.bf16.mxu0 0
        %10913 = vmatpush1.bf16.msra.mxu0 0
        %10914 = vmatprep.subr.bf16.mxu0 0
        %10915 = vmatpush1.bf16.msra.mxu0 0
        %10916 = vmatprep.subr.bf16.mxu0 0
        %10917 = vmatpush1.bf16.msra.mxu0 0
        %10918 = vmatprep.subr.bf16.mxu0 0
        %10919 = vmatpush1.bf16.msra.mxu0 0
        %10920 = vmatprep.mubr.bf16.mxu0 0
        %10921 = vmatmul.mubr.bf16.gmra.mrb[0].mxu0 %v10646
        %v10922 = vpop.f32.mrb[0].mxu0
        %v10923 = vadd.f32 0.0, %v10922
        %v10924 = vpop.f32.mrb[0].mxu0
        %v10925 = vadd.f32 0.0, %v10924
        %v10926 = vpop.f32.mrb[0].mxu0
        %v10927 = vpop.f32.mrb[0].mxu0
        %10928 = vdwg.mxu0
        %10929 = vmatprep.subr.bf16.mxu0 %v10795
        %10930 = vmatpush1.bf16.msra.mxu0 %v10794
        %10931 = vmatprep.subr.bf16.mxu0 %v10801
        %10932 = vmatpush1.bf16.msra.mxu0 %v10800
        %10933 = vmatprep.subr.bf16.mxu0 %v10807
        %10934 = vmatpush1.bf16.msra.mxu0 %v10806
        %10935 = vmatprep.subr.bf16.mxu0 %v10813
        %10936 = vmatpush1.bf16.msra.mxu0 %v10812
        %10937 = vmatprep.subr.bf16.mxu0 %v10819
        %10938 = vmatpush1.bf16.msra.mxu0 %v10818
        %10939 = vmatprep.subr.bf16.mxu0 %v10825
        %10940 = vmatpush1.bf16.msra.mxu0 %v10824
        %10941 = vmatprep.subr.bf16.mxu0 %v10831
        %10942 = vmatpush1.bf16.msra.mxu0 %v10830
        %10943 = vmatprep.subr.bf16.mxu0 %v10837
        %10944 = vmatpush1.bf16.msra.mxu0 %v10836
        %10945 = vmatprep.subr.bf16.mxu0 0
        %10946 = vmatpush1.bf16.msra.mxu0 0
        %10947 = vmatprep.subr.bf16.mxu0 0
        %10948 = vmatpush1.bf16.msra.mxu0 0
        %10949 = vmatprep.subr.bf16.mxu0 0
        %10950 = vmatpush1.bf16.msra.mxu0 0
        %10951 = vmatprep.subr.bf16.mxu0 0
        %10952 = vmatpush1.bf16.msra.mxu0 0
        %10953 = vmatprep.subr.bf16.mxu0 0
        %10954 = vmatpush1.bf16.msra.mxu0 0
        %10955 = vmatprep.subr.bf16.mxu0 0
        %10956 = vmatpush1.bf16.msra.mxu0 0
        %10957 = vmatprep.subr.bf16.mxu0 0
        %10958 = vmatpush1.bf16.msra.mxu0 0
        %10959 = vmatprep.subr.bf16.mxu0 0
        %10960 = vmatpush1.bf16.msra.mxu0 0
        %10961 = vmatprep.mubr.bf16.mxu0 0
        %10962 = vmatmul.mubr.bf16.gmra.mrb[0].mxu0 %v10646
        %v10963 = vpop.f32.mrb[0].mxu0
        %v10964 = vadd.f32 0.0, %v10963
        %v10965 = vpop.f32.mrb[0].mxu0
        %v10966 = vadd.f32 0.0, %v10965
        %v10967 = vpop.f32.mrb[0].mxu0
        %v10968 = vpop.f32.mrb[0].mxu0
        %10969 = vdwg.mxu0
        %10970 = vmatprep.subr.bf16.mxu0 %v10797
        %10971 = vmatpush1.bf16.msra.mxu0 %v10796
        %10972 = vmatprep.subr.bf16.mxu0 %v10803
        %10973 = vmatpush1.bf16.msra.mxu0 %v10802
        %10974 = vmatprep.subr.bf16.mxu0 %v10809
        %10975 = vmatpush1.bf16.msra.mxu0 %v10808
        %10976 = vmatprep.subr.bf16.mxu0 %v10815
        %10977 = vmatpush1.bf16.msra.mxu0 %v10814
        %10978 = vmatprep.subr.bf16.mxu0 %v10821
        %10979 = vmatpush1.bf16.msra.mxu0 %v10820
        %10980 = vmatprep.subr.bf16.mxu0 %v10827
        %10981 = vmatpush1.bf16.msra.mxu0 %v10826
        %10982 = vmatprep.subr.bf16.mxu0 %v10833
        %10983 = vmatpush1.bf16.msra.mxu0 %v10832
        %10984 = vmatprep.subr.bf16.mxu0 %v10839
        %10985 = vmatpush1.bf16.msra.mxu0 %v10838
        %10986 = vmatprep.subr.bf16.mxu0 0
        %10987 = vmatpush1.bf16.msra.mxu0 0
        %10988 = vmatprep.subr.bf16.mxu0 0
        %10989 = vmatpush1.bf16.msra.mxu0 0
        %10990 = vmatprep.subr.bf16.mxu0 0
        %10991 = vmatpush1.bf16.msra.mxu0 0
        %10992 = vmatprep.subr.bf16.mxu0 0
        %10993 = vmatpush1.bf16.msra.mxu0 0
        %10994 = vmatprep.subr.bf16.mxu0 0
        %10995 = vmatpush1.bf16.msra.mxu0 0
        %10996 = vmatprep.subr.bf16.mxu0 0
        %10997 = vmatpush1.bf16.msra.mxu0 0
        %10998 = vmatprep.subr.bf16.mxu0 0
        %10999 = vmatpush1.bf16.msra.mxu0 0
        %11000 = vmatprep.subr.bf16.mxu0 0
        %11001 = vmatpush1.bf16.msra.mxu0 0
        %11002 = vmatprep.mubr.bf16.mxu0 0
        %11003 = vmatmul.mubr.bf16.gmra.mrb[0].mxu0 %v10646
        %v11004 = vpop.f32.mrb[0].mxu0
        %v11005 = vadd.f32 0.0, %v11004
        %v11006 = vpop.f32.mrb[0].mxu0
        %v11007 = vadd.f32 0.0, %v11006
        %v11008 = vpop.f32.mrb[0].mxu0
        %v11009 = vpop.f32.mrb[0].mxu0
        %11010 = vdwg.mxu0
        %v11011 = vadd.f32 %v10591, %v10923
        %v11012 = vadd.f32 %v10592, %v10925
        %v11013 = vadd.f32 %v10593, %v10964
        %v11014 = vadd.f32 %v10594, %v10966
        %v11015 = vadd.f32 %v10595, %v11005
        %v11016 = vadd.f32 %v10596, %v11007
        %v11017 = vpack.c.bf16 %v943, %v943
        %s11018 = scalar_lea.vmem [#allocation10], 9216
        %v11019 = vld [vmem:[%s11018] sm:$0xff]
        %v11020 = vld [vmem:[%s11018 + $0x8] sm:$0xff]
        %v11021 = vld [vmem:[%s11018 + $0x10] sm:$0xff]
        %v11022 = vld [vmem:[%s11018 + $0x18] sm:$0xff]
        %v11023 = vld [vmem:[%s11018 + $0x20] sm:$0xff]
        %v11024 = vld [vmem:[%s11018 + $0x28] sm:$0xff]
        %v11025 = vld [vmem:[%s11018 + $0x30] sm:$0xff]
        %v11026 = vld [vmem:[%s11018 + $0x38] sm:$0xff]
        %v11027 = vld [vmem:[%s11018 + $0x40] sm:$0xff]
        %v11028 = vld [vmem:[%s11018 + $0x48] sm:$0xff]
        %v11029 = vld [vmem:[%s11018 + $0x50] sm:$0xff]
        %v11030 = vld [vmem:[%s11018 + $0x58] sm:$0xff]
        %v11031 = vld [vmem:[%s11018 + $0x60] sm:$0xff]
        %v11032 = vld [vmem:[%s11018 + $0x68] sm:$0xff]
        %v11033 = vld [vmem:[%s11018 + $0x70] sm:$0xff]
        %v11034 = vld [vmem:[%s11018 + $0x78] sm:$0xff]
        %v11035 = vld [vmem:[%s11018 + $0x80] sm:$0xff]
        %v11036 = vld [vmem:[%s11018 + $0x88] sm:$0xff]
        %v11037 = vld [vmem:[%s11018 + $0x90] sm:$0xff]
        %v11038 = vld [vmem:[%s11018 + $0x98] sm:$0xff]
        %v11039 = vld [vmem:[%s11018 + $0xa0] sm:$0xff]
        %v11040 = vld [vmem:[%s11018 + $0xa8] sm:$0xff]
        %v11041 = vld [vmem:[%s11018 + $0xb0] sm:$0xff]
        %v11042 = vld [vmem:[%s11018 + $0xb8] sm:$0xff]
        %v11043 = vld [vmem:[%s11018 + $0xc0] sm:$0xff]
        %v11044 = vld [vmem:[%s11018 + $0xc8] sm:$0xff]
        %v11045 = vld [vmem:[%s11018 + $0xd0] sm:$0xff]
        %v11046 = vld [vmem:[%s11018 + $0xd8] sm:$0xff]
        %v11047 = vld [vmem:[%s11018 + $0xe0] sm:$0xff]
        %v11048 = vld [vmem:[%s11018 + $0xe8] sm:$0xff]
        %v11049 = vld [vmem:[%s11018 + $0xf0] sm:$0xff]
        %v11050 = vld [vmem:[%s11018 + $0xf8] sm:$0xff]
        %v11051 = vld [vmem:[%s11018 + $0x100] sm:$0xff]
        %v11052 = vld [vmem:[%s11018 + $0x108] sm:$0xff]
        %v11053 = vld [vmem:[%s11018 + $0x110] sm:$0xff]
        %v11054 = vld [vmem:[%s11018 + $0x118] sm:$0xff]
        %v11055 = vld [vmem:[%s11018 + $0x120] sm:$0xff]
        %v11056 = vld [vmem:[%s11018 + $0x128] sm:$0xff]
        %v11057 = vld [vmem:[%s11018 + $0x130] sm:$0xff]
        %v11058 = vld [vmem:[%s11018 + $0x138] sm:$0xff]
        %v11059 = vld [vmem:[%s11018 + $0x140] sm:$0xff]
        %v11060 = vld [vmem:[%s11018 + $0x148] sm:$0xff]
        %v11061 = vld [vmem:[%s11018 + $0x150] sm:$0xff]
        %v11062 = vld [vmem:[%s11018 + $0x158] sm:$0xff]
        %v11063 = vld [vmem:[%s11018 + $0x160] sm:$0xff]
        %v11064 = vld [vmem:[%s11018 + $0x168] sm:$0xff]
        %v11065 = vld [vmem:[%s11018 + $0x170] sm:$0xff]
        %v11066 = vld [vmem:[%s11018 + $0x178] sm:$0xff]
        %v11115 = vunpack.c.l.b16 %v11019
        %v11116 = vunpack.c.h.b16 %v11019
        %v11117 = vunpack.c.l.b16 %v11020
        %v11118 = vunpack.c.h.b16 %v11020
        %v11119 = vunpack.c.l.b16 %v11021
        %v11120 = vunpack.c.h.b16 %v11021
        %v11121 = vunpack.c.l.b16 %v11022
        %v11122 = vunpack.c.h.b16 %v11022
        %v11123 = vunpack.c.l.b16 %v11023
        %v11124 = vunpack.c.h.b16 %v11023
        %v11125 = vunpack.c.l.b16 %v11024
        %v11126 = vunpack.c.h.b16 %v11024
        %v11127 = vunpack.c.l.b16 %v11025
        %v11128 = vunpack.c.h.b16 %v11025
        %v11129 = vunpack.c.l.b16 %v11026
        %v11130 = vunpack.c.h.b16 %v11026
        %v11131 = vunpack.c.l.b16 %v11027
        %v11132 = vunpack.c.h.b16 %v11027
        %v11133 = vunpack.c.l.b16 %v11028
        %v11134 = vunpack.c.h.b16 %v11028
        %v11135 = vunpack.c.l.b16 %v11029
        %v11136 = vunpack.c.h.b16 %v11029
        %v11137 = vunpack.c.l.b16 %v11030
        %v11138 = vunpack.c.h.b16 %v11030
        %v11139 = vunpack.c.l.b16 %v11031
        %v11140 = vunpack.c.h.b16 %v11031
        %v11141 = vunpack.c.l.b16 %v11032
        %v11142 = vunpack.c.h.b16 %v11032
        %v11143 = vunpack.c.l.b16 %v11033
        %v11144 = vunpack.c.h.b16 %v11033
        %v11145 = vunpack.c.l.b16 %v11034
        %v11146 = vunpack.c.h.b16 %v11034
        %v11147 = vunpack.c.l.b16 %v11035
        %v11148 = vunpack.c.h.b16 %v11035
        %v11149 = vunpack.c.l.b16 %v11036
        %v11150 = vunpack.c.h.b16 %v11036
        %v11151 = vunpack.c.l.b16 %v11037
        %v11152 = vunpack.c.h.b16 %v11037
        %v11153 = vunpack.c.l.b16 %v11038
        %v11154 = vunpack.c.h.b16 %v11038
        %v11155 = vunpack.c.l.b16 %v11039
        %v11156 = vunpack.c.h.b16 %v11039
        %v11157 = vunpack.c.l.b16 %v11040
        %v11158 = vunpack.c.h.b16 %v11040
        %v11159 = vunpack.c.l.b16 %v11041
        %v11160 = vunpack.c.h.b16 %v11041
        %v11161 = vunpack.c.l.b16 %v11042
        %v11162 = vunpack.c.h.b16 %v11042
        %v11163 = vunpack.c.l.b16 %v11043
        %v11164 = vunpack.c.h.b16 %v11043
        %v11165 = vunpack.c.l.b16 %v11044
        %v11166 = vunpack.c.h.b16 %v11044
        %v11167 = vunpack.c.l.b16 %v11045
        %v11168 = vunpack.c.h.b16 %v11045
        %v11169 = vunpack.c.l.b16 %v11046
        %v11170 = vunpack.c.h.b16 %v11046
        %v11171 = vunpack.c.l.b16 %v11047
        %v11172 = vunpack.c.h.b16 %v11047
        %v11173 = vunpack.c.l.b16 %v11048
        %v11174 = vunpack.c.h.b16 %v11048
        %v11175 = vunpack.c.l.b16 %v11049
        %v11176 = vunpack.c.h.b16 %v11049
        %v11177 = vunpack.c.l.b16 %v11050
        %v11178 = vunpack.c.h.b16 %v11050
        %v11179 = vunpack.c.l.b16 %v11051
        %v11180 = vunpack.c.h.b16 %v11051
        %v11181 = vunpack.c.l.b16 %v11052
        %v11182 = vunpack.c.h.b16 %v11052
        %v11183 = vunpack.c.l.b16 %v11053
        %v11184 = vunpack.c.h.b16 %v11053
        %v11185 = vunpack.c.l.b16 %v11054
        %v11186 = vunpack.c.h.b16 %v11054
        %v11187 = vunpack.c.l.b16 %v11055
        %v11188 = vunpack.c.h.b16 %v11055
        %v11189 = vunpack.c.l.b16 %v11056
        %v11190 = vunpack.c.h.b16 %v11056
        %v11191 = vunpack.c.l.b16 %v11057
        %v11192 = vunpack.c.h.b16 %v11057
        %v11193 = vunpack.c.l.b16 %v11058
        %v11194 = vunpack.c.h.b16 %v11058
        %v11195 = vunpack.c.l.b16 %v11059
        %v11196 = vunpack.c.h.b16 %v11059
        %v11197 = vunpack.c.l.b16 %v11060
        %v11198 = vunpack.c.h.b16 %v11060
        %v11199 = vunpack.c.l.b16 %v11061
        %v11200 = vunpack.c.h.b16 %v11061
        %v11201 = vunpack.c.l.b16 %v11062
        %v11202 = vunpack.c.h.b16 %v11062
        %v11203 = vunpack.c.l.b16 %v11063
        %v11204 = vunpack.c.h.b16 %v11063
        %v11205 = vunpack.c.l.b16 %v11064
        %v11206 = vunpack.c.h.b16 %v11064
        %v11207 = vunpack.c.l.b16 %v11065
        %v11208 = vunpack.c.h.b16 %v11065
        %v11209 = vunpack.c.l.b16 %v11066
        %v11210 = vunpack.c.h.b16 %v11066
        %v11211 = vpack.c.b16 %v11121, %v11115
        %v11212 = vpack.c.b16 %v11122, %v11116
        %v11213 = vpack.c.b16 %v11123, %v11117
        %v11214 = vpack.c.b16 %v11124, %v11118
        %v11215 = vpack.c.b16 %v11125, %v11119
        %v11216 = vpack.c.b16 %v11126, %v11120
        %v11217 = vpack.c.b16 %v11133, %v11127
        %v11218 = vpack.c.b16 %v11134, %v11128
        %v11219 = vpack.c.b16 %v11135, %v11129
        %v11220 = vpack.c.b16 %v11136, %v11130
        %v11221 = vpack.c.b16 %v11137, %v11131
        %v11222 = vpack.c.b16 %v11138, %v11132
        %v11223 = vpack.c.b16 %v11145, %v11139
        %v11224 = vpack.c.b16 %v11146, %v11140
        %v11225 = vpack.c.b16 %v11147, %v11141
        %v11226 = vpack.c.b16 %v11148, %v11142
        %v11227 = vpack.c.b16 %v11149, %v11143
        %v11228 = vpack.c.b16 %v11150, %v11144
        %v11229 = vpack.c.b16 %v11157, %v11151
        %v11230 = vpack.c.b16 %v11158, %v11152
        %v11231 = vpack.c.b16 %v11159, %v11153
        %v11232 = vpack.c.b16 %v11160, %v11154
        %v11233 = vpack.c.b16 %v11161, %v11155
        %v11234 = vpack.c.b16 %v11162, %v11156
        %v11235 = vpack.c.b16 %v11169, %v11163
        %v11236 = vpack.c.b16 %v11170, %v11164
        %v11237 = vpack.c.b16 %v11171, %v11165
        %v11238 = vpack.c.b16 %v11172, %v11166
        %v11239 = vpack.c.b16 %v11173, %v11167
        %v11240 = vpack.c.b16 %v11174, %v11168
        %v11241 = vpack.c.b16 %v11181, %v11175
        %v11242 = vpack.c.b16 %v11182, %v11176
        %v11243 = vpack.c.b16 %v11183, %v11177
        %v11244 = vpack.c.b16 %v11184, %v11178
        %v11245 = vpack.c.b16 %v11185, %v11179
        %v11246 = vpack.c.b16 %v11186, %v11180
        %v11247 = vpack.c.b16 %v11193, %v11187
        %v11248 = vpack.c.b16 %v11194, %v11188
        %v11249 = vpack.c.b16 %v11195, %v11189
        %v11250 = vpack.c.b16 %v11196, %v11190
        %v11251 = vpack.c.b16 %v11197, %v11191
        %v11252 = vpack.c.b16 %v11198, %v11192
        %v11253 = vpack.c.b16 %v11205, %v11199
        %v11254 = vpack.c.b16 %v11206, %v11200
        %v11255 = vpack.c.b16 %v11207, %v11201
        %v11256 = vpack.c.b16 %v11208, %v11202
        %v11257 = vpack.c.b16 %v11209, %v11203
        %v11258 = vpack.c.b16 %v11210, %v11204
        %11307 = vmatprep.subr.bf16.mxu0 %v11212
        %11308 = vmatpush1.bf16.msra.mxu0 %v11211
        %11309 = vmatprep.subr.bf16.mxu0 %v11218
        %11310 = vmatpush1.bf16.msra.mxu0 %v11217
        %11311 = vmatprep.subr.bf16.mxu0 %v11224
        %11312 = vmatpush1.bf16.msra.mxu0 %v11223
        %11313 = vmatprep.subr.bf16.mxu0 %v11230
        %11314 = vmatpush1.bf16.msra.mxu0 %v11229
        %11315 = vmatprep.subr.bf16.mxu0 %v11236
        %11316 = vmatpush1.bf16.msra.mxu0 %v11235
        %11317 = vmatprep.subr.bf16.mxu0 %v11242
        %11318 = vmatpush1.bf16.msra.mxu0 %v11241
        %11319 = vmatprep.subr.bf16.mxu0 %v11248
        %11320 = vmatpush1.bf16.msra.mxu0 %v11247
        %11321 = vmatprep.subr.bf16.mxu0 %v11254
        %11322 = vmatpush1.bf16.msra.mxu0 %v11253
        %11323 = vmatprep.subr.bf16.mxu0 0
        %11324 = vmatpush1.bf16.msra.mxu0 0
        %11325 = vmatprep.subr.bf16.mxu0 0
        %11326 = vmatpush1.bf16.msra.mxu0 0
        %11327 = vmatprep.subr.bf16.mxu0 0
        %11328 = vmatpush1.bf16.msra.mxu0 0
        %11329 = vmatprep.subr.bf16.mxu0 0
        %11330 = vmatpush1.bf16.msra.mxu0 0
        %11331 = vmatprep.subr.bf16.mxu0 0
        %11332 = vmatpush1.bf16.msra.mxu0 0
        %11333 = vmatprep.subr.bf16.mxu0 0
        %11334 = vmatpush1.bf16.msra.mxu0 0
        %11335 = vmatprep.subr.bf16.mxu0 0
        %11336 = vmatpush1.bf16.msra.mxu0 0
        %11337 = vmatprep.subr.bf16.mxu0 0
        %11338 = vmatpush1.bf16.msra.mxu0 0
        %11339 = vmatprep.mubr.bf16.mxu0 0
        %11340 = vmatmul.mubr.bf16.gmra.mrb[0].mxu0 %v11017
        %v11341 = vpop.f32.mrb[0].mxu0
        %v11342 = vadd.f32 0.0, %v11341
        %v11343 = vpop.f32.mrb[0].mxu0
        %v11344 = vadd.f32 0.0, %v11343
        %v11345 = vpop.f32.mrb[0].mxu0
        %v11346 = vpop.f32.mrb[0].mxu0
        %11347 = vdwg.mxu0
        %11348 = vmatprep.subr.bf16.mxu0 %v11214
        %11349 = vmatpush1.bf16.msra.mxu0 %v11213
        %11350 = vmatprep.subr.bf16.mxu0 %v11220
        %11351 = vmatpush1.bf16.msra.mxu0 %v11219
        %11352 = vmatprep.subr.bf16.mxu0 %v11226
        %11353 = vmatpush1.bf16.msra.mxu0 %v11225
        %11354 = vmatprep.subr.bf16.mxu0 %v11232
        %11355 = vmatpush1.bf16.msra.mxu0 %v11231
        %11356 = vmatprep.subr.bf16.mxu0 %v11238
        %11357 = vmatpush1.bf16.msra.mxu0 %v11237
        %11358 = vmatprep.subr.bf16.mxu0 %v11244
        %11359 = vmatpush1.bf16.msra.mxu0 %v11243
        %11360 = vmatprep.subr.bf16.mxu0 %v11250
        %11361 = vmatpush1.bf16.msra.mxu0 %v11249
        %11362 = vmatprep.subr.bf16.mxu0 %v11256
        %11363 = vmatpush1.bf16.msra.mxu0 %v11255
        %11364 = vmatprep.subr.bf16.mxu0 0
        %11365 = vmatpush1.bf16.msra.mxu0 0
        %11366 = vmatprep.subr.bf16.mxu0 0
        %11367 = vmatpush1.bf16.msra.mxu0 0
        %11368 = vmatprep.subr.bf16.mxu0 0
        %11369 = vmatpush1.bf16.msra.mxu0 0
        %11370 = vmatprep.subr.bf16.mxu0 0
        %11371 = vmatpush1.bf16.msra.mxu0 0
        %11372 = vmatprep.subr.bf16.mxu0 0
        %11373 = vmatpush1.bf16.msra.mxu0 0
        %11374 = vmatprep.subr.bf16.mxu0 0
        %11375 = vmatpush1.bf16.msra.mxu0 0
        %11376 = vmatprep.subr.bf16.mxu0 0
        %11377 = vmatpush1.bf16.msra.mxu0 0
        %11378 = vmatprep.subr.bf16.mxu0 0
        %11379 = vmatpush1.bf16.msra.mxu0 0
        %11380 = vmatprep.mubr.bf16.mxu0 0
        %11381 = vmatmul.mubr.bf16.gmra.mrb[0].mxu0 %v11017
        %v11382 = vpop.f32.mrb[0].mxu0
        %v11383 = vadd.f32 0.0, %v11382
        %v11384 = vpop.f32.mrb[0].mxu0
        %v11385 = vadd.f32 0.0, %v11384
        %v11386 = vpop.f32.mrb[0].mxu0
        %v11387 = vpop.f32.mrb[0].mxu0
        %11388 = vdwg.mxu0
        %11389 = vmatprep.subr.bf16.mxu0 %v11216
        %11390 = vmatpush1.bf16.msra.mxu0 %v11215
        %11391 = vmatprep.subr.bf16.mxu0 %v11222
        %11392 = vmatpush1.bf16.msra.mxu0 %v11221
        %11393 = vmatprep.subr.bf16.mxu0 %v11228
        %11394 = vmatpush1.bf16.msra.mxu0 %v11227
        %11395 = vmatprep.subr.bf16.mxu0 %v11234
        %11396 = vmatpush1.bf16.msra.mxu0 %v11233
        %11397 = vmatprep.subr.bf16.mxu0 %v11240
        %11398 = vmatpush1.bf16.msra.mxu0 %v11239
        %11399 = vmatprep.subr.bf16.mxu0 %v11246
        %11400 = vmatpush1.bf16.msra.mxu0 %v11245
        %11401 = vmatprep.subr.bf16.mxu0 %v11252
        %11402 = vmatpush1.bf16.msra.mxu0 %v11251
        %11403 = vmatprep.subr.bf16.mxu0 %v11258
        %11404 = vmatpush1.bf16.msra.mxu0 %v11257
        %11405 = vmatprep.subr.bf16.mxu0 0
        %11406 = vmatpush1.bf16.msra.mxu0 0
        %11407 = vmatprep.subr.bf16.mxu0 0
        %11408 = vmatpush1.bf16.msra.mxu0 0
        %11409 = vmatprep.subr.bf16.mxu0 0
        %11410 = vmatpush1.bf16.msra.mxu0 0
        %11411 = vmatprep.subr.bf16.mxu0 0
        %11412 = vmatpush1.bf16.msra.mxu0 0
        %11413 = vmatprep.subr.bf16.mxu0 0
        %11414 = vmatpush1.bf16.msra.mxu0 0
        %11415 = vmatprep.subr.bf16.mxu0 0
        %11416 = vmatpush1.bf16.msra.mxu0 0
        %11417 = vmatprep.subr.bf16.mxu0 0
        %11418 = vmatpush1.bf16.msra.mxu0 0
        %11419 = vmatprep.subr.bf16.mxu0 0
        %11420 = vmatpush1.bf16.msra.mxu0 0
        %11421 = vmatprep.mubr.bf16.mxu0 0
        %11422 = vmatmul.mubr.bf16.gmra.mrb[0].mxu0 %v11017
        %v11423 = vpop.f32.mrb[0].mxu0
        %v11424 = vadd.f32 0.0, %v11423
        %v11425 = vpop.f32.mrb[0].mxu0
        %v11426 = vadd.f32 0.0, %v11425
        %v11427 = vpop.f32.mrb[0].mxu0
        %v11428 = vpop.f32.mrb[0].mxu0
        %11429 = vdwg.mxu0
        %v11430 = vadd.f32 %v11011, %v11342
        %v11431 = vadd.f32 %v11012, %v11344
        %v11432 = vadd.f32 %v11013, %v11383
        %v11433 = vadd.f32 %v11014, %v11385
        %v11434 = vadd.f32 %v11015, %v11424
        %v11435 = vadd.f32 %v11016, %v11426
        %v11436 = vld [vmem:[#allocation11] sm:$0x3f]
        %v11438 = vlaneseq
        %v11439 = vshrl.u32 %v11438, 7
        %v11440 = vsub.s32 0, %v11439
        %v11441 = vrot.slane %v11436, %v11440
        %v11442 = vlaneseq
        %v11443 = vshrl.u32 %v11442, 7
        %v11444 = vsub.s32 1, %v11443
        %v11445 = vrot.slane %v11436, %v11444
        %v11446 = vlaneseq
        %v11447 = vshrl.u32 %v11446, 7
        %v11448 = vsub.s32 2, %v11447
        %v11449 = vrot.slane %v11436, %v11448
        %v11450 = vlaneseq
        %v11451 = vshrl.u32 %v11450, 7
        %v11452 = vsub.s32 3, %v11451
        %v11453 = vrot.slane %v11436, %v11452
        %v11454 = vlaneseq
        %v11455 = vshrl.u32 %v11454, 7
        %v11456 = vsub.s32 4, %v11455
        %v11457 = vrot.slane %v11436, %v11456
        %v11458 = vlaneseq
        %v11459 = vshrl.u32 %v11458, 7
        %v11460 = vsub.s32 5, %v11459
        %v11461 = vrot.slane %v11436, %v11460
        %v11468 = vmul.f32 %v11430, %v11441
        %v11469 = vmul.f32 %v11431, %v11445
        %v11470 = vmul.f32 %v11432, %v11449
        %v11471 = vmul.f32 %v11433, %v11453
        %v11472 = vmul.f32 %v11434, %v11457
        %v11473 = vmul.f32 %v11435, %v11461
        %v11474 = vld [vmem:[#allocation13] sm:$0x3f]
        %v11476 = vlaneseq
        %v11477 = vshrl.u32 %v11476, 7
        %v11478 = vsub.s32 0, %v11477
        %v11479 = vrot.slane %v11474, %v11478
        %v11480 = vlaneseq
        %v11481 = vshrl.u32 %v11480, 7
        %v11482 = vsub.s32 1, %v11481
        %v11483 = vrot.slane %v11474, %v11482
        %v11484 = vlaneseq
        %v11485 = vshrl.u32 %v11484, 7
        %v11486 = vsub.s32 2, %v11485
        %v11487 = vrot.slane %v11474, %v11486
        %v11488 = vlaneseq
        %v11489 = vshrl.u32 %v11488, 7
        %v11490 = vsub.s32 3, %v11489
        %v11491 = vrot.slane %v11474, %v11490
        %v11492 = vlaneseq
        %v11493 = vshrl.u32 %v11492, 7
        %v11494 = vsub.s32 4, %v11493
        %v11495 = vrot.slane %v11474, %v11494
        %v11496 = vlaneseq
        %v11497 = vshrl.u32 %v11496, 7
        %v11498 = vsub.s32 5, %v11497
        %v11499 = vrot.slane %v11474, %v11498
        %v11506 = vadd.f32 %v11468, %v11479
        %v11507 = vadd.f32 %v11469, %v11483
        %v11508 = vadd.f32 %v11470, %v11487
        %v11509 = vadd.f32 %v11471, %v11491
        %v11510 = vadd.f32 %v11472, %v11495
        %v11511 = vadd.f32 %v11473, %v11499
        %v11512 = vmax.f32 %v11506, 0.0
        %v11513 = vmax.f32 %v11507, 0.0
        %v11514 = vmax.f32 %v11508, 0.0
        %v11515 = vmax.f32 %v11509, 0.0
        %v11516 = vmax.f32 %v11510, 0.0
        %v11517 = vmax.f32 %v11511, 0.0
        %v11518 = vpack.c.bf16 %v11512, %v11512
        %v11519 = vpack.c.bf16 %v11513, %v11513
        %v11520 = vpack.c.bf16 %v11514, %v11514
        %v11521 = vpack.c.bf16 %v11515, %v11515
        %v11522 = vpack.c.bf16 %v11516, %v11516
        %v11523 = vpack.c.bf16 %v11517, %v11517
        %v11524 = vld [vmem:[#allocation14] sm:$0xff]
        %v11525 = vld [vmem:[#allocation14 + $0x8] sm:$0xff]
        %v11526 = vld [vmem:[#allocation14 + $0x10] sm:$0xff]
        %v11527 = vld [vmem:[#allocation14 + $0x18] sm:$0xff]
        %v11528 = vld [vmem:[#allocation14 + $0x20] sm:$0xff]
        %v11529 = vld [vmem:[#allocation14 + $0x28] sm:$0xff]
        %v11530 = vld [vmem:[#allocation14 + $0x30] sm:$0xff]
        %v11531 = vld [vmem:[#allocation14 + $0x38] sm:$0xff]
        %v11532 = vld [vmem:[#allocation14 + $0x40] sm:$0xff]
        %v11533 = vld [vmem:[#allocation14 + $0x48] sm:$0xff]
        %v11534 = vld [vmem:[#allocation14 + $0x50] sm:$0xff]
        %v11535 = vld [vmem:[#allocation14 + $0x58] sm:$0xff]
        %v11536 = vld [vmem:[#allocation14 + $0x60] sm:$0xff]
        %v11537 = vld [vmem:[#allocation14 + $0x68] sm:$0xff]
        %v11538 = vld [vmem:[#allocation14 + $0x70] sm:$0xff]
        %v11539 = vld [vmem:[#allocation14 + $0x78] sm:$0xff]
        %v11540 = vld [vmem:[#allocation14 + $0x80] sm:$0xff]
        %v11541 = vld [vmem:[#allocation14 + $0x88] sm:$0xff]
        %v11542 = vld [vmem:[#allocation14 + $0x90] sm:$0xff]
        %v11543 = vld [vmem:[#allocation14 + $0x98] sm:$0xff]
        %v11544 = vld [vmem:[#allocation14 + $0xa0] sm:$0xff]
        %v11545 = vld [vmem:[#allocation14 + $0xa8] sm:$0xff]
        %v11546 = vld [vmem:[#allocation14 + $0xb0] sm:$0xff]
        %v11547 = vld [vmem:[#allocation14 + $0xb8] sm:$0xff]
        %v11548 = vld [vmem:[#allocation14 + $0xc0] sm:$0xff]
        %v11549 = vld [vmem:[#allocation14 + $0xc8] sm:$0xff]
        %v11550 = vld [vmem:[#allocation14 + $0xd0] sm:$0xff]
        %v11551 = vld [vmem:[#allocation14 + $0xd8] sm:$0xff]
        %v11552 = vld [vmem:[#allocation14 + $0xe0] sm:$0xff]
        %v11553 = vld [vmem:[#allocation14 + $0xe8] sm:$0xff]
        %v11554 = vld [vmem:[#allocation14 + $0xf0] sm:$0xff]
        %v11555 = vld [vmem:[#allocation14 + $0xf8] sm:$0xff]
        %v11556 = vld [vmem:[#allocation14 + $0x100] sm:$0xff]
        %v11557 = vld [vmem:[#allocation14 + $0x108] sm:$0xff]
        %v11558 = vld [vmem:[#allocation14 + $0x110] sm:$0xff]
        %v11559 = vld [vmem:[#allocation14 + $0x118] sm:$0xff]
        %v11560 = vld [vmem:[#allocation14 + $0x120] sm:$0xff]
        %v11561 = vld [vmem:[#allocation14 + $0x128] sm:$0xff]
        %v11562 = vld [vmem:[#allocation14 + $0x130] sm:$0xff]
        %v11563 = vld [vmem:[#allocation14 + $0x138] sm:$0xff]
        %v11564 = vld [vmem:[#allocation14 + $0x140] sm:$0xff]
        %v11565 = vld [vmem:[#allocation14 + $0x148] sm:$0xff]
        %v11566 = vld [vmem:[#allocation14 + $0x150] sm:$0xff]
        %v11567 = vld [vmem:[#allocation14 + $0x158] sm:$0xff]
        %v11568 = vld [vmem:[#allocation14 + $0x160] sm:$0xff]
        %v11569 = vld [vmem:[#allocation14 + $0x168] sm:$0xff]
        %v11570 = vld [vmem:[#allocation14 + $0x170] sm:$0xff]
        %v11571 = vld [vmem:[#allocation14 + $0x178] sm:$0xff]
        %v11572 = vld [vmem:[#allocation14 + $0x180] sm:$0xff]
        %v11573 = vld [vmem:[#allocation14 + $0x188] sm:$0xff]
        %v11574 = vld [vmem:[#allocation14 + $0x190] sm:$0xff]
        %v11575 = vld [vmem:[#allocation14 + $0x198] sm:$0xff]
        %v11576 = vld [vmem:[#allocation14 + $0x1a0] sm:$0xff]
        %v11577 = vld [vmem:[#allocation14 + $0x1a8] sm:$0xff]
        %v11578 = vld [vmem:[#allocation14 + $0x1b0] sm:$0xff]
        %v11579 = vld [vmem:[#allocation14 + $0x1b8] sm:$0xff]
        %v11580 = vld [vmem:[#allocation14 + $0x1c0] sm:$0xff]
        %v11581 = vld [vmem:[#allocation14 + $0x1c8] sm:$0xff]
        %v11582 = vld [vmem:[#allocation14 + $0x1d0] sm:$0xff]
        %v11583 = vld [vmem:[#allocation14 + $0x1d8] sm:$0xff]
        %v11584 = vld [vmem:[#allocation14 + $0x1e0] sm:$0xff]
        %v11585 = vld [vmem:[#allocation14 + $0x1e8] sm:$0xff]
        %v11586 = vld [vmem:[#allocation14 + $0x1f0] sm:$0xff]
        %v11587 = vld [vmem:[#allocation14 + $0x1f8] sm:$0xff]
        %v11588 = vld [vmem:[#allocation14 + $0x200] sm:$0xff]
        %v11589 = vld [vmem:[#allocation14 + $0x208] sm:$0xff]
        %v11590 = vld [vmem:[#allocation14 + $0x210] sm:$0xff]
        %v11591 = vld [vmem:[#allocation14 + $0x218] sm:$0xff]
        %v11592 = vld [vmem:[#allocation14 + $0x220] sm:$0xff]
        %v11593 = vld [vmem:[#allocation14 + $0x228] sm:$0xff]
        %v11594 = vld [vmem:[#allocation14 + $0x230] sm:$0xff]
        %v11595 = vld [vmem:[#allocation14 + $0x238] sm:$0xff]
        %v11596 = vld [vmem:[#allocation14 + $0x240] sm:$0xff]
        %v11597 = vld [vmem:[#allocation14 + $0x248] sm:$0xff]
        %v11598 = vld [vmem:[#allocation14 + $0x250] sm:$0xff]
        %v11599 = vld [vmem:[#allocation14 + $0x258] sm:$0xff]
        %v11600 = vld [vmem:[#allocation14 + $0x260] sm:$0xff]
        %v11601 = vld [vmem:[#allocation14 + $0x268] sm:$0xff]
        %v11602 = vld [vmem:[#allocation14 + $0x270] sm:$0xff]
        %v11603 = vld [vmem:[#allocation14 + $0x278] sm:$0xff]
        %v11604 = vld [vmem:[#allocation14 + $0x280] sm:$0xff]
        %v11605 = vld [vmem:[#allocation14 + $0x288] sm:$0xff]
        %v11606 = vld [vmem:[#allocation14 + $0x290] sm:$0xff]
        %v11607 = vld [vmem:[#allocation14 + $0x298] sm:$0xff]
        %v11608 = vld [vmem:[#allocation14 + $0x2a0] sm:$0xff]
        %v11609 = vld [vmem:[#allocation14 + $0x2a8] sm:$0xff]
        %v11610 = vld [vmem:[#allocation14 + $0x2b0] sm:$0xff]
        %v11611 = vld [vmem:[#allocation14 + $0x2b8] sm:$0xff]
        %v11612 = vld [vmem:[#allocation14 + $0x2c0] sm:$0xff]
        %v11613 = vld [vmem:[#allocation14 + $0x2c8] sm:$0xff]
        %v11614 = vld [vmem:[#allocation14 + $0x2d0] sm:$0xff]
        %v11615 = vld [vmem:[#allocation14 + $0x2d8] sm:$0xff]
        %v11616 = vld [vmem:[#allocation14 + $0x2e0] sm:$0xff]
        %v11617 = vld [vmem:[#allocation14 + $0x2e8] sm:$0xff]
        %v11618 = vld [vmem:[#allocation14 + $0x2f0] sm:$0xff]
        %v11619 = vld [vmem:[#allocation14 + $0x2f8] sm:$0xff]
        %v11620 = vld [vmem:[#allocation16] sm:$0x3]
        %v11717 = vunpack.c.l.b16 %v11524
        %v11718 = vunpack.c.h.b16 %v11524
        %v11719 = vunpack.c.l.b16 %v11525
        %v11720 = vunpack.c.h.b16 %v11525
        %v11721 = vunpack.c.l.b16 %v11526
        %v11722 = vunpack.c.h.b16 %v11526
        %v11723 = vunpack.c.l.b16 %v11527
        %v11724 = vunpack.c.h.b16 %v11527
        %v11725 = vunpack.c.l.b16 %v11528
        %v11726 = vunpack.c.h.b16 %v11528
        %v11727 = vunpack.c.l.b16 %v11529
        %v11728 = vunpack.c.h.b16 %v11529
        %v11729 = vunpack.c.l.b16 %v11530
        %v11730 = vunpack.c.h.b16 %v11530
        %v11731 = vunpack.c.l.b16 %v11531
        %v11732 = vunpack.c.h.b16 %v11531
        %v11733 = vunpack.c.l.b16 %v11532
        %v11734 = vunpack.c.h.b16 %v11532
        %v11735 = vunpack.c.l.b16 %v11533
        %v11736 = vunpack.c.h.b16 %v11533
        %v11737 = vunpack.c.l.b16 %v11534
        %v11738 = vunpack.c.h.b16 %v11534
        %v11739 = vunpack.c.l.b16 %v11535
        %v11740 = vunpack.c.h.b16 %v11535
        %v11741 = vunpack.c.l.b16 %v11536
        %v11742 = vunpack.c.h.b16 %v11536
        %v11743 = vunpack.c.l.b16 %v11537
        %v11744 = vunpack.c.h.b16 %v11537
        %v11745 = vunpack.c.l.b16 %v11538
        %v11746 = vunpack.c.h.b16 %v11538
        %v11747 = vunpack.c.l.b16 %v11539
        %v11748 = vunpack.c.h.b16 %v11539
        %v11749 = vunpack.c.l.b16 %v11540
        %v11750 = vunpack.c.h.b16 %v11540
        %v11751 = vunpack.c.l.b16 %v11541
        %v11752 = vunpack.c.h.b16 %v11541
        %v11753 = vunpack.c.l.b16 %v11542
        %v11754 = vunpack.c.h.b16 %v11542
        %v11755 = vunpack.c.l.b16 %v11543
        %v11756 = vunpack.c.h.b16 %v11543
        %v11757 = vunpack.c.l.b16 %v11544
        %v11758 = vunpack.c.h.b16 %v11544
        %v11759 = vunpack.c.l.b16 %v11545
        %v11760 = vunpack.c.h.b16 %v11545
        %v11761 = vunpack.c.l.b16 %v11546
        %v11762 = vunpack.c.h.b16 %v11546
        %v11763 = vunpack.c.l.b16 %v11547
        %v11764 = vunpack.c.h.b16 %v11547
        %v11765 = vunpack.c.l.b16 %v11548
        %v11766 = vunpack.c.h.b16 %v11548
        %v11767 = vunpack.c.l.b16 %v11549
        %v11768 = vunpack.c.h.b16 %v11549
        %v11769 = vunpack.c.l.b16 %v11550
        %v11770 = vunpack.c.h.b16 %v11550
        %v11771 = vunpack.c.l.b16 %v11551
        %v11772 = vunpack.c.h.b16 %v11551
        %v11773 = vunpack.c.l.b16 %v11552
        %v11774 = vunpack.c.h.b16 %v11552
        %v11775 = vunpack.c.l.b16 %v11553
        %v11776 = vunpack.c.h.b16 %v11553
        %v11777 = vunpack.c.l.b16 %v11554
        %v11778 = vunpack.c.h.b16 %v11554
        %v11779 = vunpack.c.l.b16 %v11555
        %v11780 = vunpack.c.h.b16 %v11555
        %v11781 = vunpack.c.l.b16 %v11556
        %v11782 = vunpack.c.h.b16 %v11556
        %v11783 = vunpack.c.l.b16 %v11557
        %v11784 = vunpack.c.h.b16 %v11557
        %v11785 = vunpack.c.l.b16 %v11558
        %v11786 = vunpack.c.h.b16 %v11558
        %v11787 = vunpack.c.l.b16 %v11559
        %v11788 = vunpack.c.h.b16 %v11559
        %v11789 = vunpack.c.l.b16 %v11560
        %v11790 = vunpack.c.h.b16 %v11560
        %v11791 = vunpack.c.l.b16 %v11561
        %v11792 = vunpack.c.h.b16 %v11561
        %v11793 = vunpack.c.l.b16 %v11562
        %v11794 = vunpack.c.h.b16 %v11562
        %v11795 = vunpack.c.l.b16 %v11563
        %v11796 = vunpack.c.h.b16 %v11563
        %v11797 = vunpack.c.l.b16 %v11564
        %v11798 = vunpack.c.h.b16 %v11564
        %v11799 = vunpack.c.l.b16 %v11565
        %v11800 = vunpack.c.h.b16 %v11565
        %v11801 = vunpack.c.l.b16 %v11566
        %v11802 = vunpack.c.h.b16 %v11566
        %v11803 = vunpack.c.l.b16 %v11567
        %v11804 = vunpack.c.h.b16 %v11567
        %v11805 = vunpack.c.l.b16 %v11568
        %v11806 = vunpack.c.h.b16 %v11568
        %v11807 = vunpack.c.l.b16 %v11569
        %v11808 = vunpack.c.h.b16 %v11569
        %v11809 = vunpack.c.l.b16 %v11570
        %v11810 = vunpack.c.h.b16 %v11570
        %v11811 = vunpack.c.l.b16 %v11571
        %v11812 = vunpack.c.h.b16 %v11571
        %v11813 = vunpack.c.l.b16 %v11572
        %v11814 = vunpack.c.h.b16 %v11572
        %v11815 = vunpack.c.l.b16 %v11573
        %v11816 = vunpack.c.h.b16 %v11573
        %v11817 = vunpack.c.l.b16 %v11574
        %v11818 = vunpack.c.h.b16 %v11574
        %v11819 = vunpack.c.l.b16 %v11575
        %v11820 = vunpack.c.h.b16 %v11575
        %v11821 = vunpack.c.l.b16 %v11576
        %v11822 = vunpack.c.h.b16 %v11576
        %v11823 = vunpack.c.l.b16 %v11577
        %v11824 = vunpack.c.h.b16 %v11577
        %v11825 = vunpack.c.l.b16 %v11578
        %v11826 = vunpack.c.h.b16 %v11578
        %v11827 = vunpack.c.l.b16 %v11579
        %v11828 = vunpack.c.h.b16 %v11579
        %v11829 = vunpack.c.l.b16 %v11580
        %v11830 = vunpack.c.h.b16 %v11580
        %v11831 = vunpack.c.l.b16 %v11581
        %v11832 = vunpack.c.h.b16 %v11581
        %v11833 = vunpack.c.l.b16 %v11582
        %v11834 = vunpack.c.h.b16 %v11582
        %v11835 = vunpack.c.l.b16 %v11583
        %v11836 = vunpack.c.h.b16 %v11583
        %v11837 = vunpack.c.l.b16 %v11584
        %v11838 = vunpack.c.h.b16 %v11584
        %v11839 = vunpack.c.l.b16 %v11585
        %v11840 = vunpack.c.h.b16 %v11585
        %v11841 = vunpack.c.l.b16 %v11586
        %v11842 = vunpack.c.h.b16 %v11586
        %v11843 = vunpack.c.l.b16 %v11587
        %v11844 = vunpack.c.h.b16 %v11587
        %v11845 = vunpack.c.l.b16 %v11588
        %v11846 = vunpack.c.h.b16 %v11588
        %v11847 = vunpack.c.l.b16 %v11589
        %v11848 = vunpack.c.h.b16 %v11589
        %v11849 = vunpack.c.l.b16 %v11590
        %v11850 = vunpack.c.h.b16 %v11590
        %v11851 = vunpack.c.l.b16 %v11591
        %v11852 = vunpack.c.h.b16 %v11591
        %v11853 = vunpack.c.l.b16 %v11592
        %v11854 = vunpack.c.h.b16 %v11592
        %v11855 = vunpack.c.l.b16 %v11593
        %v11856 = vunpack.c.h.b16 %v11593
        %v11857 = vunpack.c.l.b16 %v11594
        %v11858 = vunpack.c.h.b16 %v11594
        %v11859 = vunpack.c.l.b16 %v11595
        %v11860 = vunpack.c.h.b16 %v11595
        %v11861 = vunpack.c.l.b16 %v11596
        %v11862 = vunpack.c.h.b16 %v11596
        %v11863 = vunpack.c.l.b16 %v11597
        %v11864 = vunpack.c.h.b16 %v11597
        %v11865 = vunpack.c.l.b16 %v11598
        %v11866 = vunpack.c.h.b16 %v11598
        %v11867 = vunpack.c.l.b16 %v11599
        %v11868 = vunpack.c.h.b16 %v11599
        %v11869 = vunpack.c.l.b16 %v11600
        %v11870 = vunpack.c.h.b16 %v11600
        %v11871 = vunpack.c.l.b16 %v11601
        %v11872 = vunpack.c.h.b16 %v11601
        %v11873 = vunpack.c.l.b16 %v11602
        %v11874 = vunpack.c.h.b16 %v11602
        %v11875 = vunpack.c.l.b16 %v11603
        %v11876 = vunpack.c.h.b16 %v11603
        %v11877 = vunpack.c.l.b16 %v11604
        %v11878 = vunpack.c.h.b16 %v11604
        %v11879 = vunpack.c.l.b16 %v11605
        %v11880 = vunpack.c.h.b16 %v11605
        %v11881 = vunpack.c.l.b16 %v11606
        %v11882 = vunpack.c.h.b16 %v11606
        %v11883 = vunpack.c.l.b16 %v11607
        %v11884 = vunpack.c.h.b16 %v11607
        %v11885 = vunpack.c.l.b16 %v11608
        %v11886 = vunpack.c.h.b16 %v11608
        %v11887 = vunpack.c.l.b16 %v11609
        %v11888 = vunpack.c.h.b16 %v11609
        %v11889 = vunpack.c.l.b16 %v11610
        %v11890 = vunpack.c.h.b16 %v11610
        %v11891 = vunpack.c.l.b16 %v11611
        %v11892 = vunpack.c.h.b16 %v11611
        %v11893 = vunpack.c.l.b16 %v11612
        %v11894 = vunpack.c.h.b16 %v11612
        %v11895 = vunpack.c.l.b16 %v11613
        %v11896 = vunpack.c.h.b16 %v11613
        %v11897 = vunpack.c.l.b16 %v11614
        %v11898 = vunpack.c.h.b16 %v11614
        %v11899 = vunpack.c.l.b16 %v11615
        %v11900 = vunpack.c.h.b16 %v11615
        %v11901 = vunpack.c.l.b16 %v11616
        %v11902 = vunpack.c.h.b16 %v11616
        %v11903 = vunpack.c.l.b16 %v11617
        %v11904 = vunpack.c.h.b16 %v11617
        %v11905 = vunpack.c.l.b16 %v11618
        %v11906 = vunpack.c.h.b16 %v11618
        %v11907 = vunpack.c.l.b16 %v11619
        %v11908 = vunpack.c.h.b16 %v11619
        %v11909 = vpack.c.b16 %v11719, %v11717
        %v11910 = vpack.c.b16 %v11720, %v11718
        %v11911 = vpack.c.b16 %v11723, %v11721
        %v11912 = vpack.c.b16 %v11724, %v11722
        %v11913 = vpack.c.b16 %v11727, %v11725
        %v11914 = vpack.c.b16 %v11728, %v11726
        %v11915 = vpack.c.b16 %v11731, %v11729
        %v11916 = vpack.c.b16 %v11732, %v11730
        %v11917 = vpack.c.b16 %v11735, %v11733
        %v11918 = vpack.c.b16 %v11736, %v11734
        %v11919 = vpack.c.b16 %v11739, %v11737
        %v11920 = vpack.c.b16 %v11740, %v11738
        %v11921 = vpack.c.b16 %v11743, %v11741
        %v11922 = vpack.c.b16 %v11744, %v11742
        %v11923 = vpack.c.b16 %v11747, %v11745
        %v11924 = vpack.c.b16 %v11748, %v11746
        %v11925 = vpack.c.b16 %v11751, %v11749
        %v11926 = vpack.c.b16 %v11752, %v11750
        %v11927 = vpack.c.b16 %v11755, %v11753
        %v11928 = vpack.c.b16 %v11756, %v11754
        %v11929 = vpack.c.b16 %v11759, %v11757
        %v11930 = vpack.c.b16 %v11760, %v11758
        %v11931 = vpack.c.b16 %v11763, %v11761
        %v11932 = vpack.c.b16 %v11764, %v11762
        %v11933 = vpack.c.b16 %v11767, %v11765
        %v11934 = vpack.c.b16 %v11768, %v11766
        %v11935 = vpack.c.b16 %v11771, %v11769
        %v11936 = vpack.c.b16 %v11772, %v11770
        %v11937 = vpack.c.b16 %v11775, %v11773
        %v11938 = vpack.c.b16 %v11776, %v11774
        %v11939 = vpack.c.b16 %v11779, %v11777
        %v11940 = vpack.c.b16 %v11780, %v11778
        %v11941 = vpack.c.b16 %v11783, %v11781
        %v11942 = vpack.c.b16 %v11784, %v11782
        %v11943 = vpack.c.b16 %v11787, %v11785
        %v11944 = vpack.c.b16 %v11788, %v11786
        %v11945 = vpack.c.b16 %v11791, %v11789
        %v11946 = vpack.c.b16 %v11792, %v11790
        %v11947 = vpack.c.b16 %v11795, %v11793
        %v11948 = vpack.c.b16 %v11796, %v11794
        %v11949 = vpack.c.b16 %v11799, %v11797
        %v11950 = vpack.c.b16 %v11800, %v11798
        %v11951 = vpack.c.b16 %v11803, %v11801
        %v11952 = vpack.c.b16 %v11804, %v11802
        %v11953 = vpack.c.b16 %v11807, %v11805
        %v11954 = vpack.c.b16 %v11808, %v11806
        %v11955 = vpack.c.b16 %v11811, %v11809
        %v11956 = vpack.c.b16 %v11812, %v11810
        %v11957 = vpack.c.b16 %v11815, %v11813
        %v11958 = vpack.c.b16 %v11816, %v11814
        %v11959 = vpack.c.b16 %v11819, %v11817
        %v11960 = vpack.c.b16 %v11820, %v11818
        %v11961 = vpack.c.b16 %v11823, %v11821
        %v11962 = vpack.c.b16 %v11824, %v11822
        %v11963 = vpack.c.b16 %v11827, %v11825
        %v11964 = vpack.c.b16 %v11828, %v11826
        %v11965 = vpack.c.b16 %v11831, %v11829
        %v11966 = vpack.c.b16 %v11832, %v11830
        %v11967 = vpack.c.b16 %v11835, %v11833
        %v11968 = vpack.c.b16 %v11836, %v11834
        %v11969 = vpack.c.b16 %v11839, %v11837
        %v11970 = vpack.c.b16 %v11840, %v11838
        %v11971 = vpack.c.b16 %v11843, %v11841
        %v11972 = vpack.c.b16 %v11844, %v11842
        %v11973 = vpack.c.b16 %v11847, %v11845
        %v11974 = vpack.c.b16 %v11848, %v11846
        %v11975 = vpack.c.b16 %v11851, %v11849
        %v11976 = vpack.c.b16 %v11852, %v11850
        %v11977 = vpack.c.b16 %v11855, %v11853
        %v11978 = vpack.c.b16 %v11856, %v11854
        %v11979 = vpack.c.b16 %v11859, %v11857
        %v11980 = vpack.c.b16 %v11860, %v11858
        %v11981 = vpack.c.b16 %v11863, %v11861
        %v11982 = vpack.c.b16 %v11864, %v11862
        %v11983 = vpack.c.b16 %v11867, %v11865
        %v11984 = vpack.c.b16 %v11868, %v11866
        %v11985 = vpack.c.b16 %v11871, %v11869
        %v11986 = vpack.c.b16 %v11872, %v11870
        %v11987 = vpack.c.b16 %v11875, %v11873
        %v11988 = vpack.c.b16 %v11876, %v11874
        %v11989 = vpack.c.b16 %v11879, %v11877
        %v11990 = vpack.c.b16 %v11880, %v11878
        %v11991 = vpack.c.b16 %v11883, %v11881
        %v11992 = vpack.c.b16 %v11884, %v11882
        %v11993 = vpack.c.b16 %v11887, %v11885
        %v11994 = vpack.c.b16 %v11888, %v11886
        %v11995 = vpack.c.b16 %v11891, %v11889
        %v11996 = vpack.c.b16 %v11892, %v11890
        %v11997 = vpack.c.b16 %v11895, %v11893
        %v11998 = vpack.c.b16 %v11896, %v11894
        %v11999 = vpack.c.b16 %v11899, %v11897
        %v12000 = vpack.c.b16 %v11900, %v11898
        %v12001 = vpack.c.b16 %v11903, %v11901
        %v12002 = vpack.c.b16 %v11904, %v11902
        %v12003 = vpack.c.b16 %v11907, %v11905
        %v12004 = vpack.c.b16 %v11908, %v11906
        %v12102 = vlaneseq
        %v12103 = vshrl.u32 %v12102, 7
        %v12104 = vsub.s32 0, %v12103
        %v12105 = vrot.slane %v11620, %v12104
        %v12106 = vlaneseq
        %v12107 = vshrl.u32 %v12106, 7
        %v12108 = vsub.s32 1, %v12107
        %v12109 = vrot.slane %v11620, %v12108
        %12112 = vmatprep.subr.bf16.mxu0 %v11910
        %12113 = vmatpush1.bf16.msra.mxu0 %v11909
        %12114 = vmatprep.subr.bf16.mxu0 %v11912
        %12115 = vmatpush1.bf16.msra.mxu0 %v11911
        %12116 = vmatprep.subr.bf16.mxu0 %v11914
        %12117 = vmatpush1.bf16.msra.mxu0 %v11913
        %12118 = vmatprep.subr.bf16.mxu0 %v11916
        %12119 = vmatpush1.bf16.msra.mxu0 %v11915
        %12120 = vmatprep.subr.bf16.mxu0 %v11918
        %12121 = vmatpush1.bf16.msra.mxu0 %v11917
        %12122 = vmatprep.subr.bf16.mxu0 %v11920
        %12123 = vmatpush1.bf16.msra.mxu0 %v11919
        %12124 = vmatprep.subr.bf16.mxu0 %v11922
        %12125 = vmatpush1.bf16.msra.mxu0 %v11921
        %12126 = vmatprep.subr.bf16.mxu0 %v11924
        %12127 = vmatpush1.bf16.msra.mxu0 %v11923
        %12128 = vmatprep.subr.bf16.mxu0 %v11926
        %12129 = vmatpush1.bf16.msra.mxu0 %v11925
        %12130 = vmatprep.subr.bf16.mxu0 %v11928
        %12131 = vmatpush1.bf16.msra.mxu0 %v11927
        %12132 = vmatprep.subr.bf16.mxu0 %v11930
        %12133 = vmatpush1.bf16.msra.mxu0 %v11929
        %12134 = vmatprep.subr.bf16.mxu0 %v11932
        %12135 = vmatpush1.bf16.msra.mxu0 %v11931
        %12136 = vmatprep.subr.bf16.mxu0 %v11934
        %12137 = vmatpush1.bf16.msra.mxu0 %v11933
        %12138 = vmatprep.subr.bf16.mxu0 %v11936
        %12139 = vmatpush1.bf16.msra.mxu0 %v11935
        %12140 = vmatprep.subr.bf16.mxu0 %v11938
        %12141 = vmatpush1.bf16.msra.mxu0 %v11937
        %12142 = vmatprep.subr.bf16.mxu0 %v11940
        %12143 = vmatpush1.bf16.msra.mxu0 %v11939
        %12144 = vmatprep.mubr.bf16.mxu0 %v11519
        %12145 = vmatmul.mubr.bf16.gmra.mrb[0].mxu0 %v11518
        %v12146 = vpop.f32.mrb[0].mxu0
        %v12147 = vadd.f32 %v12105, %v12146
        %v12148 = vpop.f32.mrb[0].mxu0
        %v12149 = vadd.f32 %v12109, %v12148
        %v12150 = vpop.f32.mrb[0].mxu0
        %v12151 = vpop.f32.mrb[0].mxu0
        %12152 = vdwg.mxu0
        %12153 = vmatprep.subr.bf16.mxu0 %v11942
        %12154 = vmatpush1.bf16.msra.mxu0 %v11941
        %12155 = vmatprep.subr.bf16.mxu0 %v11944
        %12156 = vmatpush1.bf16.msra.mxu0 %v11943
        %12157 = vmatprep.subr.bf16.mxu0 %v11946
        %12158 = vmatpush1.bf16.msra.mxu0 %v11945
        %12159 = vmatprep.subr.bf16.mxu0 %v11948
        %12160 = vmatpush1.bf16.msra.mxu0 %v11947
        %12161 = vmatprep.subr.bf16.mxu0 %v11950
        %12162 = vmatpush1.bf16.msra.mxu0 %v11949
        %12163 = vmatprep.subr.bf16.mxu0 %v11952
        %12164 = vmatpush1.bf16.msra.mxu0 %v11951
        %12165 = vmatprep.subr.bf16.mxu0 %v11954
        %12166 = vmatpush1.bf16.msra.mxu0 %v11953
        %12167 = vmatprep.subr.bf16.mxu0 %v11956
        %12168 = vmatpush1.bf16.msra.mxu0 %v11955
        %12169 = vmatprep.subr.bf16.mxu0 %v11958
        %12170 = vmatpush1.bf16.msra.mxu0 %v11957
        %12171 = vmatprep.subr.bf16.mxu0 %v11960
        %12172 = vmatpush1.bf16.msra.mxu0 %v11959
        %12173 = vmatprep.subr.bf16.mxu0 %v11962
        %12174 = vmatpush1.bf16.msra.mxu0 %v11961
        %12175 = vmatprep.subr.bf16.mxu0 %v11964
        %12176 = vmatpush1.bf16.msra.mxu0 %v11963
        %12177 = vmatprep.subr.bf16.mxu0 %v11966
        %12178 = vmatpush1.bf16.msra.mxu0 %v11965
        %12179 = vmatprep.subr.bf16.mxu0 %v11968
        %12180 = vmatpush1.bf16.msra.mxu0 %v11967
        %12181 = vmatprep.subr.bf16.mxu0 %v11970
        %12182 = vmatpush1.bf16.msra.mxu0 %v11969
        %12183 = vmatprep.subr.bf16.mxu0 %v11972
        %12184 = vmatpush1.bf16.msra.mxu0 %v11971
        %12185 = vmatprep.mubr.bf16.mxu0 %v11521
        %12186 = vmatmul.mubr.bf16.gmra.mrb[0].mxu0 %v11520
        %v12187 = vpop.f32.mrb[0].mxu0
        %v12188 = vadd.f32 %v12147, %v12187
        %v12189 = vpop.f32.mrb[0].mxu0
        %v12190 = vadd.f32 %v12149, %v12189
        %v12191 = vpop.f32.mrb[0].mxu0
        %v12192 = vpop.f32.mrb[0].mxu0
        %12193 = vdwg.mxu0
        %12194 = vmatprep.subr.bf16.mxu0 %v11974
        %12195 = vmatpush1.bf16.msra.mxu0 %v11973
        %12196 = vmatprep.subr.bf16.mxu0 %v11976
        %12197 = vmatpush1.bf16.msra.mxu0 %v11975
        %12198 = vmatprep.subr.bf16.mxu0 %v11978
        %12199 = vmatpush1.bf16.msra.mxu0 %v11977
        %12200 = vmatprep.subr.bf16.mxu0 %v11980
        %12201 = vmatpush1.bf16.msra.mxu0 %v11979
        %12202 = vmatprep.subr.bf16.mxu0 %v11982
        %12203 = vmatpush1.bf16.msra.mxu0 %v11981
        %12204 = vmatprep.subr.bf16.mxu0 %v11984
        %12205 = vmatpush1.bf16.msra.mxu0 %v11983
        %12206 = vmatprep.subr.bf16.mxu0 %v11986
        %12207 = vmatpush1.bf16.msra.mxu0 %v11985
        %12208 = vmatprep.subr.bf16.mxu0 %v11988
        %12209 = vmatpush1.bf16.msra.mxu0 %v11987
        %12210 = vmatprep.subr.bf16.mxu0 %v11990
        %12211 = vmatpush1.bf16.msra.mxu0 %v11989
        %12212 = vmatprep.subr.bf16.mxu0 %v11992
        %12213 = vmatpush1.bf16.msra.mxu0 %v11991
        %12214 = vmatprep.subr.bf16.mxu0 %v11994
        %12215 = vmatpush1.bf16.msra.mxu0 %v11993
        %12216 = vmatprep.subr.bf16.mxu0 %v11996
        %12217 = vmatpush1.bf16.msra.mxu0 %v11995
        %12218 = vmatprep.subr.bf16.mxu0 %v11998
        %12219 = vmatpush1.bf16.msra.mxu0 %v11997
        %12220 = vmatprep.subr.bf16.mxu0 %v12000
        %12221 = vmatpush1.bf16.msra.mxu0 %v11999
        %12222 = vmatprep.subr.bf16.mxu0 %v12002
        %12223 = vmatpush1.bf16.msra.mxu0 %v12001
        %12224 = vmatprep.subr.bf16.mxu0 %v12004
        %12225 = vmatpush1.bf16.msra.mxu0 %v12003
        %12226 = vmatprep.mubr.bf16.mxu0 %v11523
        %12227 = vmatmul.mubr.bf16.gmra.mrb[0].mxu0 %v11522
        %v12228 = vpop.f32.mrb[0].mxu0
        %v12229 = vadd.f32 %v12188, %v12228
        %v12230 = vpop.f32.mrb[0].mxu0
        %v12231 = vadd.f32 %v12190, %v12230
        %v12232 = vpop.f32.mrb[0].mxu0
        %v12233 = vpop.f32.mrb[0].mxu0
        %12234 = vdwg.mxu0
        %v12235 = vmax.f32 %v12229, 0.0
        %v12236 = vmax.f32 %v12231, 0.0
        %v12237 = vpack.c.bf16 %v12235, %v12235
        %v12238 = vpack.c.bf16 %v12236, %v12236
        %v12239 = vld [vmem:[#allocation17] sm:$0xf]
        %v12240 = vld [vmem:[#allocation17 + $0x4] sm:$0xf]
        %v12241 = vld [vmem:[#allocation17 + $0x8] sm:$0xf]
        %v12242 = vld [vmem:[#allocation17 + $0xc] sm:$0xf]
        %v12243 = vld [vmem:[#allocation17 + $0x10] sm:$0xf]
        %v12244 = vld [vmem:[#allocation17 + $0x14] sm:$0xf]
        %v12245 = vld [vmem:[#allocation17 + $0x18] sm:$0xf]
        %v12246 = vld [vmem:[#allocation17 + $0x1c] sm:$0xf]
        %v12247 = vld [vmem:[#allocation17 + $0x20] sm:$0xf]
        %v12248 = vld [vmem:[#allocation17 + $0x24] sm:$0xf]
        %v12249 = vld [vmem:[#allocation17 + $0x28] sm:$0xf]
        %v12250 = vld [vmem:[#allocation17 + $0x2c] sm:$0xf]
        %v12251 = vld [vmem:[#allocation17 + $0x30] sm:$0xf]
        %v12252 = vld [vmem:[#allocation17 + $0x34] sm:$0xf]
        %v12253 = vld [vmem:[#allocation17 + $0x38] sm:$0xf]
        %v12254 = vld [vmem:[#allocation17 + $0x3c] sm:$0xf]
        %v12255 = vld [vmem:[#allocation17 + $0x40] sm:$0xf]
        %v12256 = vld [vmem:[#allocation17 + $0x44] sm:$0xf]
        %v12257 = vld [vmem:[#allocation17 + $0x48] sm:$0xf]
        %v12258 = vld [vmem:[#allocation17 + $0x4c] sm:$0xf]
        %v12259 = vld [vmem:[#allocation17 + $0x50] sm:$0xf]
        %v12260 = vld [vmem:[#allocation17 + $0x54] sm:$0xf]
        %v12261 = vld [vmem:[#allocation17 + $0x58] sm:$0xf]
        %v12262 = vld [vmem:[#allocation17 + $0x5c] sm:$0xf]
        %v12263 = vld [vmem:[#allocation17 + $0x60] sm:$0xf]
        %v12264 = vld [vmem:[#allocation17 + $0x64] sm:$0xf]
        %v12265 = vld [vmem:[#allocation17 + $0x68] sm:$0xf]
        %v12266 = vld [vmem:[#allocation17 + $0x6c] sm:$0xf]
        %v12267 = vld [vmem:[#allocation17 + $0x70] sm:$0xf]
        %v12268 = vld [vmem:[#allocation17 + $0x74] sm:$0xf]
        %v12269 = vld [vmem:[#allocation17 + $0x78] sm:$0xf]
        %v12270 = vld [vmem:[#allocation17 + $0x7c] sm:$0xf]
        %v12271 = vld [vmem:[#allocation19] sm:$0x1]
        %v12304 = vunpack.c.l.b16 %v12239
        %v12305 = vunpack.c.l.b16 %v12240
        %v12306 = vunpack.c.l.b16 %v12241
        %v12307 = vunpack.c.l.b16 %v12242
        %v12308 = vunpack.c.l.b16 %v12243
        %v12309 = vunpack.c.l.b16 %v12244
        %v12310 = vunpack.c.l.b16 %v12245
        %v12311 = vunpack.c.l.b16 %v12246
        %v12312 = vunpack.c.l.b16 %v12247
        %v12313 = vunpack.c.l.b16 %v12248
        %v12314 = vunpack.c.l.b16 %v12249
        %v12315 = vunpack.c.l.b16 %v12250
        %v12316 = vunpack.c.l.b16 %v12251
        %v12317 = vunpack.c.l.b16 %v12252
        %v12318 = vunpack.c.l.b16 %v12253
        %v12319 = vunpack.c.l.b16 %v12254
        %v12320 = vunpack.c.l.b16 %v12255
        %v12321 = vunpack.c.l.b16 %v12256
        %v12322 = vunpack.c.l.b16 %v12257
        %v12323 = vunpack.c.l.b16 %v12258
        %v12324 = vunpack.c.l.b16 %v12259
        %v12325 = vunpack.c.l.b16 %v12260
        %v12326 = vunpack.c.l.b16 %v12261
        %v12327 = vunpack.c.l.b16 %v12262
        %v12328 = vunpack.c.l.b16 %v12263
        %v12329 = vunpack.c.l.b16 %v12264
        %v12330 = vunpack.c.l.b16 %v12265
        %v12331 = vunpack.c.l.b16 %v12266
        %v12332 = vunpack.c.l.b16 %v12267
        %v12333 = vunpack.c.l.b16 %v12268
        %v12334 = vunpack.c.l.b16 %v12269
        %v12335 = vunpack.c.l.b16 %v12270
        %v12336 = vpack.c.b16 %v12305, %v12304
        %v12337 = vpack.c.b16 %v12307, %v12306
        %v12338 = vpack.c.b16 %v12309, %v12308
        %v12339 = vpack.c.b16 %v12311, %v12310
        %v12340 = vpack.c.b16 %v12313, %v12312
        %v12341 = vpack.c.b16 %v12315, %v12314
        %v12342 = vpack.c.b16 %v12317, %v12316
        %v12343 = vpack.c.b16 %v12319, %v12318
        %v12344 = vpack.c.b16 %v12321, %v12320
        %v12345 = vpack.c.b16 %v12323, %v12322
        %v12346 = vpack.c.b16 %v12325, %v12324
        %v12347 = vpack.c.b16 %v12327, %v12326
        %v12348 = vpack.c.b16 %v12329, %v12328
        %v12349 = vpack.c.b16 %v12331, %v12330
        %v12350 = vpack.c.b16 %v12333, %v12332
        %v12351 = vpack.c.b16 %v12335, %v12334
        %12368 = vmatprep.subr.bf16.mxu0 0
        %12369 = vmatpush1.bf16.msra.mxu0 %v12336
        %12370 = vmatprep.subr.bf16.mxu0 0
        %12371 = vmatpush1.bf16.msra.mxu0 %v12337
        %12372 = vmatprep.subr.bf16.mxu0 0
        %12373 = vmatpush1.bf16.msra.mxu0 %v12338
        %12374 = vmatprep.subr.bf16.mxu0 0
        %12375 = vmatpush1.bf16.msra.mxu0 %v12339
        %12376 = vmatprep.subr.bf16.mxu0 0
        %12377 = vmatpush1.bf16.msra.mxu0 %v12340
        %12378 = vmatprep.subr.bf16.mxu0 0
        %12379 = vmatpush1.bf16.msra.mxu0 %v12341
        %12380 = vmatprep.subr.bf16.mxu0 0
        %12381 = vmatpush1.bf16.msra.mxu0 %v12342
        %12382 = vmatprep.subr.bf16.mxu0 0
        %12383 = vmatpush1.bf16.msra.mxu0 %v12343
        %12384 = vmatprep.subr.bf16.mxu0 0
        %12385 = vmatpush1.bf16.msra.mxu0 %v12344
        %12386 = vmatprep.subr.bf16.mxu0 0
        %12387 = vmatpush1.bf16.msra.mxu0 %v12345
        %12388 = vmatprep.subr.bf16.mxu0 0
        %12389 = vmatpush1.bf16.msra.mxu0 %v12346
        %12390 = vmatprep.subr.bf16.mxu0 0
        %12391 = vmatpush1.bf16.msra.mxu0 %v12347
        %12392 = vmatprep.subr.bf16.mxu0 0
        %12393 = vmatpush1.bf16.msra.mxu0 %v12348
        %12394 = vmatprep.subr.bf16.mxu0 0
        %12395 = vmatpush1.bf16.msra.mxu0 %v12349
        %12396 = vmatprep.subr.bf16.mxu0 0
        %12397 = vmatpush1.bf16.msra.mxu0 %v12350
        %12398 = vmatprep.subr.bf16.mxu0 0
        %12399 = vmatpush1.bf16.msra.mxu0 %v12351
        %12400 = vmatprep.mubr.bf16.mxu0 %v12238
        %12401 = vmatmul.mubr.bf16.gmra.mrb[0].mxu0 %v12237
        %v12402 = vpop.f32.mrb[0].mxu0
        %v12403 = vadd.f32 %v12271, %v12402
        %v12404 = vpop.f32.mrb[0].mxu0
        %v12405 = vpop.f32.mrb[0].mxu0
        %v12406 = vpop.f32.mrb[0].mxu0
        %12407 = vdwg.mxu0
        %12408 = vst [vmem:[%s551] sm:$0x1] %v12403
        %s12409 = sand.u32 %s297, 1
        %s12410 = scalar_lea.sflag [#allocation4], %s12409
        %s12411 = sand.u32 %s297, 1
        %s12412 = scalar_lea.vmem [#allocation20], %s12411
        // Predicated region
        $region113: #{tpu_custom_call.1} parent=67 // pred_check
          %p12413 = pneg %p307
        $region114: #{tpu_custom_call.1} parent=67 // pred_check_branch
          %12415 = sbr.rel (%p12413) target = $region116
        $region115: #{tpu_custom_call.1} parent=67 // pred_region
          %s12417 = ssub.s32 16, 16
          %12418 = vsyncadd %s12410, %s12417
          %s12419 = smul.addr %s32, 16
          %s12420 = scalar_lea.hbm %s12, %s12419
          %s12422 = sshll.u32 %s12412, 4
          %s12423 = int_to_ptr.vmem [resolvable:$true] %s12422
          %12425 = dma.vmem_to_hbm [thread:$0]  %s12423, 16, %s12420, %s12410
        $region116: #{tpu_custom_call.1} parent=67 // pred_fallthru
          _
      $region68: #{tpu_custom_call.1} parent=5 // pred_fallthru
        _
      %p12426 = scmp.le.s32.totalorder 2, %s27
      // Predicated region
      $region117: #{tpu_custom_call.1} parent=5 // pred_check
        %p12427 = pneg %p12426
      $region118: #{tpu_custom_call.1} parent=5 // pred_check_branch
        %12429 = sbr.rel (%p12427) target = $region120
      $region119: #{tpu_custom_call.1} parent=5 // pred_region
        %s12430 = ssub.s32 %s27, 2
        // Predicated region
        $region121: #{tpu_custom_call.1} parent=119 // pred_check
          %p12431 = pneg %p313
        $region122: #{tpu_custom_call.1} parent=119 // pred_check_branch
          %12433 = sbr.rel (%p12431) target = $region124
        $region123: #{tpu_custom_call.1} parent=119 // pred_region
          %s12434 = sand.u32 %s298, 1
          %s12435 = scalar_lea.sflag [#allocation4], %s12434
          %s12436 = sand.u32 %s298, 1
          %s12437 = scalar_lea.vmem [#allocation20], %s12436
          %12438 = dma.done %s12435, 16
        $region124: #{tpu_custom_call.1} parent=119 // pred_fallthru
          _
      $region120: #{tpu_custom_call.1} parent=5 // pred_fallthru
        _
    $region6: #{tpu_custom_call.1} parent=1 // loop_footer
      %s31 = sadd.s32 1, %s27
    $region7: #{tpu_custom_call.1} parent=1 // loop_footer_branch
      %26 = sbr.rel target = $region3
    $region8: #{tpu_custom_call.1} parent=1 // loop_exit
      _
    %12439 = vsyncpa [#allocation3], 1
    %s12440 = scalar_lea.sflag [#allocation3], 1
    %12441 = vsyncpa %s12440, 1
    %12442 = vsyncpa [#allocation6], 1
    %12443 = vsyncpa [#allocation9], 1
    %12444 = vsyncpa [#allocation12], 1
    %12445 = vsyncpa [#allocation15], 1
    %12446 = vsyncpa [#allocation18], 1
    %12447 = vsyncpa [#allocation4], 1
    %s12448 = scalar_lea.sflag [#allocation4], 1
    %12449 = vsyncpa %s12448, 1

</llo_original>
